<compile_context>
chip_gen: v7x
topology: tpu7x:2x2x1
jax: 0.10.0
libtpu: 0.0.40
codegen_flags: <defaults>
</compile_context>

<pallas_src>
import jax
import jax.numpy as jnp
from jax.experimental import pallas as pl
from jax.experimental.pallas import tpu as pltpu

NEG_SLOPE = 0.01      # nn.LeakyReLU default negative_slope

NUM_USER = 24         # Sampler.user_num
NUM_CAND = 20         # Sampler.candidate_num
EMBED_DIM = 32        # embed_dim == hid_dim
NUM_LAYER = 2
ALL_LAYER = NUM_LAYER + 1
FTOT = EMBED_DIM * ALL_LAYER          # 96
FPAD = 128                            # FTOT padded to a full lane tile
NP = 32                               # padded node count (25 users / 21 items -> 32)
S_DIM = 48
ATT_DIM = 16
BATCH = 4
HIST_LEN = 6
N_FRIEND = 5
N_FRI_ITEM = 4


# --------------------------- fused Pallas kernel ---------------------------

def fused_forward_kernel(
    # tables / graphs (padded to NP rows)
    user_emb_ref, item_emb_ref,
    adj_soc_ref, adj_simu_ref, adj_simi_ref,
    w_gnn_ref, b_gnn_ref,                       # (6, E, E), (6, 1, E)
    # batch index tensors (int32)
    user_idx_ref, cand_idx_ref,                 # (B, 1)
    item_users_ref, user_items_ref,             # (B, HIST_LEN)
    friends_items_ref, friends_lens_ref,        # (B, NF*NI), (B, 1)
    # friend attention params (rows padded to FPAD)
    wau_ref, waf_ref, ba_ref, va_ref,           # (FPAD,A), (FPAD,A), (1,A), (1,A)
    # fused predictor params
    w1ug_ref, w1ul_ref, w1v_ref, w1il_ref,      # (FPAD, 3*S_DIM) each
    b1_ref, w2_ref, b2_ref,                     # (1,3*S), (1,3*S), (1,1)
    # output
    out_ref,                                    # (B, 1)
):
    f32 = jnp.float32

    def leaky(x):
        return jnp.where(x >= 0.0, x, NEG_SLOPE * x)

    node_iota = jax.lax.broadcasted_iota(jnp.int32, (1, NP), 1)                  # (1, NP)
    row_keep = (jax.lax.broadcasted_iota(jnp.int32, (NP, 1), 0) != 0).astype(f32)
    pad_cols = jnp.zeros((NP, FPAD - FTOT), f32)

    # ---- graph_aggregate (mean-neighbor agg -> linear -> LeakyReLU, L2-norm) ----
    def gnn_slab(adj, h0, g):
        h = h0
        pieces = [h0]                          # layer-0 = raw input embedding
        for l in range(NUM_LAYER):
            w = w_gnn_ref[g * NUM_LAYER + l]   # (E, E)
            b = b_gnn_ref[g * NUM_LAYER + l]   # (1, E)
            agg = jnp.dot(adj, h, preferred_element_type=f32)
            z = jnp.dot(agg, w, preferred_element_type=f32) + b
            z = leaky(z)
            nrm = jnp.sqrt(jnp.sum(z * z, axis=1, keepdims=True))
            pieces.append(z / jnp.maximum(nrm, 1e-12))   # F.normalize(p=2, dim=1)
            h = z                                        # next layer uses raw z
        return jnp.concatenate(pieces + [pad_cols], axis=1)   # (NP, FPAD)

    user_h0 = user_emb_ref[...]
    item_h0 = item_emb_ref[...]
    soc_tbl = gnn_slab(adj_soc_ref[...], user_h0, 0) * row_keep    # [0]-row zeroed
    simu_tbl = gnn_slab(adj_simu_ref[...], user_h0, 1) * row_keep
    simi_tbl = gnn_slab(adj_simi_ref[...], item_h0, 2) * row_keep
    ug_tbl = 0.5 * (simu_tbl + soc_tbl)                            # user_global_embedding

    # ---- in-kernel row gather: one-hot @ table --------------------------------
    def gather(idx_col, table):                 # idx_col (B,1) i32, table (NP,FPAD)
        onehot = (idx_col == node_iota).astype(f32)                # (B, NP)
        return jnp.dot(onehot, table, preferred_element_type=f32)  # (B, FPAD)

    user_global = gather(user_idx_ref[...], ug_tbl)
    item_sim_global = gather(cand_idx_ref[...], simi_tbl)

    # ---- 'max' history fusion (torch.max(items * target, dim=1)[0]) -----------
    def max_fuse(idx_ref, n_cols, table, target):
        acc = None
        for c in range(n_cols):
            emb = gather(idx_ref[:, pl.ds(c, 1)], table)
            prod = emb * target
            acc = prod if acc is None else jnp.maximum(acc, prod)
        return acc

    item_local = max_fuse(item_users_ref, HIST_LEN, ug_tbl, user_global)
    user_sim_local = max_fuse(user_items_ref, HIST_LEN, simi_tbl, item_sim_global)

    # ---- friend fusion: per-friend max over items + additive attention --------
    eu = jnp.dot(user_sim_local, wau_ref[...], preferred_element_type=f32)  # (B, A)
    lens = friends_lens_ref[...]                                            # (B, 1)

    fmax, s_list = [], []
    for j in range(N_FRIEND):
        acc = None
        for k in range(N_FRI_ITEM):
            emb = gather(friends_items_ref[:, pl.ds(j * N_FRI_ITEM + k, 1)], simi_tbl)
            prod = emb * item_sim_global
            acc = prod if acc is None else jnp.maximum(acc, prod)
        fmax.append(acc)                                                    # (B, FPAD)
        ef = jnp.dot(acc, waf_ref[...], preferred_element_type=f32)         # (B, A)
        e = leaky(eu + ef + ba_ref[...])
        s_j = jnp.sum(e * va_ref[...], axis=1, keepdims=True)               # VPU reduce
        # length masking (test guarantees lens >= 1; see correctness note)
        s_list.append(jnp.where(j < lens, s_j, -1e30))

    # masked softmax over friends, done on (B,1) vectors (no (B,nf) reshapes)
    m = s_list[0]
    for j in range(1, N_FRIEND):
        m = jnp.maximum(m, s_list[j])
    exps = [jnp.exp(s - m) for s in s_list]
    denom = exps[0]
    for j in range(1, N_FRIEND):
        denom = denom + exps[j]
    inv = 1.0 / denom

    user_fri_local = jnp.zeros_like(user_sim_local)
    for j in range(N_FRIEND):
        user_fri_local = user_fri_local + (exps[j] * inv) * fmax[j]

    user_local = 0.5 * (user_sim_local + user_fri_local)

    # ---- fused Predictor_1..3 + eval-mode mean --------------------------------
    # h = [h1 | h2 | h3], h_p = leaky(u_p @ W1u_p + v_p @ W1v_p + b1_p)
    h = (jnp.dot(user_global, w1ug_ref[...], preferred_element_type=f32)
         + jnp.dot(user_local, w1ul_ref[...], preferred_element_type=f32)
         + jnp.dot(item_sim_global, w1v_ref[...], preferred_element_type=f32)
         + jnp.dot(item_local, w1il_ref[...], preferred_element_type=f32)
         + b1_ref[...])
    h = leaky(h)
    # mean(s1,s2,s3) = (sum_p h_p . w2_p + sum_p b2_p) / 3   (VPU/XLU reduce)
    out_ref[...] = (jnp.sum(h * w2_ref[...], axis=1, keepdims=True)
                    + b2_ref[...]) * (1.0 / 3.0)


# ------------------------------ wrapper (glue) ------------------------------

def _pad2(x, rows, cols):
    return jnp.pad(x, ((0, rows - x.shape[0]), (0, cols - x.shape[1])))


def final_net_forward(params, user, candidate, adj_soc, adj_sim_u, adj_sim_i,
                      item_users, user_items, friends_items, friends_lens):
    user = user.reshape(-1).astype(jnp.int32)
    candidate = candidate.reshape(-1).astype(jnp.int32)
    B = user.shape[0]

    # pad tables / adjacencies to NP rows (padded rows never referenced)
    user_emb = _pad2(params["user_embedding"], NP, EMBED_DIM)
    item_emb = _pad2(params["item_embedding"], NP, EMBED_DIM)
    a_soc = _pad2(adj_soc, NP, NP)
    a_simu = _pad2(adj_sim_u, NP, NP)
    a_simi = _pad2(adj_sim_i, NP, NP)

    gnn_names = ("user_soc_GNNs", "user_sim_GNNs", "item_sim_GNNs")
    w_gnn = jnp.stack([w for name in gnn_names for (w, b) in params[name]])   # (6,E,E)
    b_gnn = jnp.stack([b for name in gnn_names for (w, b) in params[name]])   # (6,1,E)

    att = params["friend_att"]
    wau = _pad2(att["wau"], FPAD, ATT_DIM)
    waf = _pad2(att["waf"], FPAD, ATT_DIM)
    ba = att["ba"]
    va = att["va"].T                                                          # (1, A)

    # pack the three predictors column-wise: h = [h1 | h2 | h3]
    p1, p2, p3 = params["Predictor_1"], params["Predictor_2"], params["Predictor_3"]
    Z = jnp.zeros((FPAD, S_DIM), jnp.float32)
    pad_w = lambda w: _pad2(w, FPAD, S_DIM)
    w1ug = jnp.concatenate([pad_w(p1["w1u"]), Z, pad_w(p3["w1u"])], axis=1)   # user_global
    w1ul = jnp.concatenate([Z, pad_w(p2["w1u"]), Z], axis=1)                  # user_local
    w1v = jnp.concatenate([pad_w(p1["w1v"]), pad_w(p2["w1v"]), Z], axis=1)    # item_sim_global
    w1il = jnp.concatenate([Z, Z, pad_w(p3["w1v"])], axis=1)                  # item_local
    b1 = jnp.concatenate([p1["b1"], p2["b1"], p3["b1"]], axis=1)              # (1, 144)
    w2 = jnp.concatenate([p1["w2"].T, p2["w2"].T, p3["w2"].T], axis=1)        # (1, 144)
    b2 = p1["b2"] + p2["b2"] + p3["b2"]                                       # (1, 1)

    args = (user_emb, item_emb, a_soc, a_simu, a_simi, w_gnn, b_gnn,
            user.reshape(B, 1), candidate.reshape(B, 1),
            item_users.astype(jnp.int32), user_items.astype(jnp.int32),
            friends_items.reshape(B, -1).astype(jnp.int32),
            friends_lens.reshape(B, 1).astype(jnp.int32),
            wau, waf, ba, va, w1ug, w1ul, w1v, w1il, b1, w2, b2)

    vm = pl.BlockSpec(memory_space=pltpu.MemorySpace.VMEM)
    scores = pl.pallas_call(
        fused_forward_kernel,
        out_shape=jax.ShapeDtypeStruct((B, 1), jnp.float32),
        in_specs=[vm] * len(args),
        out_specs=vm,
    )(*args)
    return scores.reshape(-1)


# ------------------------------ params / data -------------------------------

def xavier(key, shape):
    fan_in, fan_out = shape[0], shape[1]
    limit = (6.0 / (fan_in + fan_out)) ** 0.5
    return jax.random.uniform(key, shape, jnp.float32, -limit, limit)


def init_params(key):
    ks = list(jax.random.split(key, 40))
    nxt = iter(ks).__next__
    params = {
        "user_embedding": xavier(nxt(), (NUM_USER + 1, EMBED_DIM)),
        "item_embedding": xavier(nxt(), (NUM_CAND + 1, EMBED_DIM)),
    }
    for name in ("user_soc_GNNs", "user_sim_GNNs", "item_sim_GNNs"):
        layers = []
        for _ in range(NUM_LAYER):
            layers.append((xavier(nxt(), (EMBED_DIM, EMBED_DIM)),
                           jnp.zeros((1, EMBED_DIM), jnp.float32)))
        params[name] = layers
    params["friend_att"] = {
        "wau": xavier(nxt(), (FTOT, ATT_DIM)),
        "waf": xavier(nxt(), (FTOT, ATT_DIM)),
        "ba": jnp.zeros((1, ATT_DIM), jnp.float32),
        "va": xavier(nxt(), (ATT_DIM, 1)),
    }
    for name in ("Predictor_1", "Predictor_2", "Predictor_3"):
        params[name] = {
            "w1u": xavier(nxt(), (FTOT, S_DIM)),
            "w1v": xavier(nxt(), (FTOT, S_DIM)),
            "b1": jnp.zeros((1, S_DIM), jnp.float32),
            "w2": xavier(nxt(), (S_DIM, 1)),
            "b2": jnp.zeros((1, 1), jnp.float32),
        }
    return params


def make_adj(key, n):
    a = (jax.random.uniform(key, (n, n)) < 0.25).astype(jnp.float32)
    a = jnp.minimum(a + jnp.eye(n, dtype=jnp.float32), 1.0)
    deg = jnp.sum(a, axis=1, keepdims=True)
    return a / deg


if __name__ == "__main__":
    key = jax.random.PRNGKey(0)
    (k_param, k_adj1, k_adj2, k_adj3, k_u, k_c,
     k_iu, k_ui, k_fi, k_fl) = jax.random.split(key, 10)

    params = init_params(k_param)

    adj_soc = make_adj(k_adj1, NUM_USER + 1)
    adj_sim_u = make_adj(k_adj2, NUM_USER + 1)
    adj_sim_i = make_adj(k_adj3, NUM_CAND + 1)

    user = jax.random.randint(k_u, (BATCH, 1), 1, NUM_USER + 1)
    candidate = jax.random.randint(k_c, (BATCH, 1), 1, NUM_CAND + 1)
    item_users = jax.random.randint(k_iu, (BATCH, HIST_LEN), 0, NUM_USER + 1)
    user_items = jax.random.randint(k_ui, (BATCH, HIST_LEN), 0, NUM_CAND + 1)
    friends_items = jax.random.randint(k_fi, (BATCH, N_FRIEND, N_FRI_ITEM), 0, NUM_CAND + 1)
    friends_lens = jax.random.randint(k_fl, (BATCH,), 1, N_FRIEND + 1)

    fwd = jax.jit(final_net_forward)
    scores = fwd(params, user, candidate, adj_soc, adj_sim_u, adj_sim_i,
                 item_users, user_items, friends_items, friends_lens)
    scores = jax.block_until_ready(scores)
    assert scores.shape == (BATCH,)
    print("KERNEL_OK")
</pallas_src>

<mosaic_0001>
module attributes {stable_mosaic.version = 11 : i64} {
  func.func @fused_forward_kernel(%arg0: memref<32x32xf32, #tpu.memory_space<vmem>>, %arg1: memref<32x32xf32, #tpu.memory_space<vmem>>, %arg2: memref<32x32xf32, #tpu.memory_space<vmem>>, %arg3: memref<32x32xf32, #tpu.memory_space<vmem>>, %arg4: memref<32x32xf32, #tpu.memory_space<vmem>>, %arg5: memref<6x32x32xf32, #tpu.memory_space<vmem>>, %arg6: memref<6x1x32xf32, #tpu.memory_space<vmem>>, %arg7: memref<4x1xi32, #tpu.memory_space<vmem>>, %arg8: memref<4x1xi32, #tpu.memory_space<vmem>>, %arg9: memref<4x6xi32, #tpu.memory_space<vmem>>, %arg10: memref<4x6xi32, #tpu.memory_space<vmem>>, %arg11: memref<4x20xi32, #tpu.memory_space<vmem>>, %arg12: memref<4x1xi32, #tpu.memory_space<vmem>>, %arg13: memref<128x16xf32, #tpu.memory_space<vmem>>, %arg14: memref<128x16xf32, #tpu.memory_space<vmem>>, %arg15: memref<1x16xf32, #tpu.memory_space<vmem>>, %arg16: memref<1x16xf32, #tpu.memory_space<vmem>>, %arg17: memref<128x144xf32, #tpu.memory_space<vmem>>, %arg18: memref<128x144xf32, #tpu.memory_space<vmem>>, %arg19: memref<128x144xf32, #tpu.memory_space<vmem>>, %arg20: memref<128x144xf32, #tpu.memory_space<vmem>>, %arg21: memref<1x144xf32, #tpu.memory_space<vmem>>, %arg22: memref<1x144xf32, #tpu.memory_space<vmem>>, %arg23: memref<1x1xf32, #tpu.memory_space<vmem>>, %arg24: memref<4x1xf32, #tpu.memory_space<vmem>>) attributes {dimension_semantics = [], scalar_prefetch = 0 : i64, scratch_operands = 0 : i64, tpu.core_type = #tpu.core_type<tc>} {
    %0 = tpu.iota {dimensions = array<i32: 1>} : vector<1x32xi32>
    %1 = tpu.iota {dimensions = array<i32: 0>} : vector<32x1xi32>
    %c0_i32 = arith.constant 0 : i32
    %2 = vector.broadcast %c0_i32 : i32 to vector<32x1xi32>
    %3 = arith.cmpi ne, %1, %2 : vector<32x1xi32>
    %4 = arith.extui %3 : vector<32x1xi1> to vector<32x1xi32>
    %5 = arith.sitofp %4 : vector<32x1xi32> to vector<32x1xf32>
    %cst = arith.constant 0.000000e+00 : f32
    %6 = vector.broadcast %cst : f32 to vector<32x32xf32>
    %c0 = arith.constant 0 : index
    %c0_0 = arith.constant 0 : index
    %7 = vector.load %arg0[%c0, %c0_0] : memref<32x32xf32, #tpu.memory_space<vmem>>, vector<32x32xf32>
    %c0_1 = arith.constant 0 : index
    %c0_2 = arith.constant 0 : index
    %8 = vector.load %arg1[%c0_1, %c0_2] : memref<32x32xf32, #tpu.memory_space<vmem>>, vector<32x32xf32>
    %c0_3 = arith.constant 0 : index
    %c0_4 = arith.constant 0 : index
    %9 = vector.load %arg2[%c0_3, %c0_4] : memref<32x32xf32, #tpu.memory_space<vmem>>, vector<32x32xf32>
    %c0_5 = arith.constant 0 : index
    %c0_6 = arith.constant 0 : index
    %c0_7 = arith.constant 0 : index
    %10 = vector.load %arg5[%c0_5, %c0_6, %c0_7] : memref<6x32x32xf32, #tpu.memory_space<vmem>>, vector<1x32x32xf32>
    %11 = vector.shape_cast %10 : vector<1x32x32xf32> to vector<32x32xf32>
    %c0_8 = arith.constant 0 : index
    %c0_9 = arith.constant 0 : index
    %c0_10 = arith.constant 0 : index
    %12 = vector.load %arg6[%c0_8, %c0_9, %c0_10] : memref<6x1x32xf32, #tpu.memory_space<vmem>>, vector<1x1x32xf32>
    %13 = vector.shape_cast %12 : vector<1x1x32xf32> to vector<1x32xf32>
    %cst_11 = arith.constant dense<0.000000e+00> : vector<32x32xf32>
    %14 = tpu.matmul %9, %7, %cst_11 {dimension_numbers = #tpu.dot_dimension_numbers<[1], [0], [0], [1], [0, 0, 1, 1], [], []>} : vector<32x32xf32>, vector<32x32xf32>, vector<32x32xf32> -> vector<32x32xf32>
    %cst_12 = arith.constant dense<0.000000e+00> : vector<32x32xf32>
    %15 = tpu.matmul %14, %11, %cst_12 {dimension_numbers = #tpu.dot_dimension_numbers<[1], [0], [0], [1], [0, 0, 1, 1], [], []>} : vector<32x32xf32>, vector<32x32xf32>, vector<32x32xf32> -> vector<32x32xf32>
    %16 = vector.broadcast %13 : vector<1x32xf32> to vector<32x32xf32>
    %17 = arith.addf %15, %16 : vector<32x32xf32>
    %cst_13 = arith.constant 0.000000e+00 : f32
    %18 = vector.broadcast %cst_13 : f32 to vector<32x32xf32>
    %19 = arith.cmpf oge, %17, %18 : vector<32x32xf32>
    %cst_14 = arith.constant 0.00999999977 : f32
    %20 = vector.broadcast %cst_14 : f32 to vector<32x32xf32>
    %21 = arith.mulf %20, %17 : vector<32x32xf32>
    %22 = arith.select %19, %17, %21 : vector<32x32xi1>, vector<32x32xf32>
    %23 = arith.mulf %22, %22 : vector<32x32xf32>
    %cst_15 = arith.constant dense<0.000000e+00> : vector<32xf32>
    %24 = vector.multi_reduction <add>, %23, %cst_15 [1] : vector<32x32xf32> to vector<32xf32>
    %25 = vector.shape_cast %24 : vector<32xf32> to vector<32x1xf32>
    %26 = math.sqrt %25 : vector<32x1xf32>
    %cst_16 = arith.constant 9.99999996E-13 : f32
    %27 = vector.broadcast %cst_16 : f32 to vector<32x1xf32>
    %28 = arith.maximumf %26, %27 : vector<32x1xf32>
    %29 = vector.broadcast %28 : vector<32x1xf32> to vector<32x32xf32>
    %30 = arith.divf %22, %29 : vector<32x32xf32>
    %c1 = arith.constant 1 : index
    %c0_17 = arith.constant 0 : index
    %c0_18 = arith.constant 0 : index
    %31 = vector.load %arg5[%c1, %c0_17, %c0_18] : memref<6x32x32xf32, #tpu.memory_space<vmem>>, vector<1x32x32xf32>
    %32 = vector.shape_cast %31 : vector<1x32x32xf32> to vector<32x32xf32>
    %c1_19 = arith.constant 1 : index
    %c0_20 = arith.constant 0 : index
    %c0_21 = arith.constant 0 : index
    %33 = vector.load %arg6[%c1_19, %c0_20, %c0_21] : memref<6x1x32xf32, #tpu.memory_space<vmem>>, vector<1x1x32xf32>
    %34 = vector.shape_cast %33 : vector<1x1x32xf32> to vector<1x32xf32>
    %cst_22 = arith.constant dense<0.000000e+00> : vector<32x32xf32>
    %35 = tpu.matmul %9, %22, %cst_22 {dimension_numbers = #tpu.dot_dimension_numbers<[1], [0], [0], [1], [0, 0, 1, 1], [], []>} : vector<32x32xf32>, vector<32x32xf32>, vector<32x32xf32> -> vector<32x32xf32>
    %cst_23 = arith.constant dense<0.000000e+00> : vector<32x32xf32>
    %36 = tpu.matmul %35, %32, %cst_23 {dimension_numbers = #tpu.dot_dimension_numbers<[1], [0], [0], [1], [0, 0, 1, 1], [], []>} : vector<32x32xf32>, vector<32x32xf32>, vector<32x32xf32> -> vector<32x32xf32>
    %37 = vector.broadcast %34 : vector<1x32xf32> to vector<32x32xf32>
    %38 = arith.addf %36, %37 : vector<32x32xf32>
    %cst_24 = arith.constant 0.000000e+00 : f32
    %39 = vector.broadcast %cst_24 : f32 to vector<32x32xf32>
    %40 = arith.cmpf oge, %38, %39 : vector<32x32xf32>
    %cst_25 = arith.constant 0.00999999977 : f32
    %41 = vector.broadcast %cst_25 : f32 to vector<32x32xf32>
    %42 = arith.mulf %41, %38 : vector<32x32xf32>
    %43 = arith.select %40, %38, %42 : vector<32x32xi1>, vector<32x32xf32>
    %44 = arith.mulf %43, %43 : vector<32x32xf32>
    %cst_26 = arith.constant dense<0.000000e+00> : vector<32xf32>
    %45 = vector.multi_reduction <add>, %44, %cst_26 [1] : vector<32x32xf32> to vector<32xf32>
    %46 = vector.shape_cast %45 : vector<32xf32> to vector<32x1xf32>
    %47 = math.sqrt %46 : vector<32x1xf32>
    %cst_27 = arith.constant 9.99999996E-13 : f32
    %48 = vector.broadcast %cst_27 : f32 to vector<32x1xf32>
    %49 = arith.maximumf %47, %48 : vector<32x1xf32>
    %50 = vector.broadcast %49 : vector<32x1xf32> to vector<32x32xf32>
    %51 = arith.divf %43, %50 : vector<32x32xf32>
    %52 = tpu.concatenate %7, %30, %51, %6 in 1 : vector<32x32xf32>, vector<32x32xf32>, vector<32x32xf32>, vector<32x32xf32> -> vector<32x128xf32>
    %53 = vector.broadcast %5 : vector<32x1xf32> to vector<32x128xf32>
    %54 = arith.mulf %52, %53 : vector<32x128xf32>
    %c0_28 = arith.constant 0 : index
    %c0_29 = arith.constant 0 : index
    %55 = vector.load %arg3[%c0_28, %c0_29] : memref<32x32xf32, #tpu.memory_space<vmem>>, vector<32x32xf32>
    %c2 = arith.constant 2 : index
    %c0_30 = arith.constant 0 : index
    %c0_31 = arith.constant 0 : index
    %56 = vector.load %arg5[%c2, %c0_30, %c0_31] : memref<6x32x32xf32, #tpu.memory_space<vmem>>, vector<1x32x32xf32>
    %57 = vector.shape_cast %56 : vector<1x32x32xf32> to vector<32x32xf32>
    %c2_32 = arith.constant 2 : index
    %c0_33 = arith.constant 0 : index
    %c0_34 = arith.constant 0 : index
    %58 = vector.load %arg6[%c2_32, %c0_33, %c0_34] : memref<6x1x32xf32, #tpu.memory_space<vmem>>, vector<1x1x32xf32>
    %59 = vector.shape_cast %58 : vector<1x1x32xf32> to vector<1x32xf32>
    %cst_35 = arith.constant dense<0.000000e+00> : vector<32x32xf32>
    %60 = tpu.matmul %55, %7, %cst_35 {dimension_numbers = #tpu.dot_dimension_numbers<[1], [0], [0], [1], [0, 0, 1, 1], [], []>} : vector<32x32xf32>, vector<32x32xf32>, vector<32x32xf32> -> vector<32x32xf32>
    %cst_36 = arith.constant dense<0.000000e+00> : vector<32x32xf32>
    %61 = tpu.matmul %60, %57, %cst_36 {dimension_numbers = #tpu.dot_dimension_numbers<[1], [0], [0], [1], [0, 0, 1, 1], [], []>} : vector<32x32xf32>, vector<32x32xf32>, vector<32x32xf32> -> vector<32x32xf32>
    %62 = vector.broadcast %59 : vector<1x32xf32> to vector<32x32xf32>
    %63 = arith.addf %61, %62 : vector<32x32xf32>
    %cst_37 = arith.constant 0.000000e+00 : f32
    %64 = vector.broadcast %cst_37 : f32 to vector<32x32xf32>
    %65 = arith.cmpf oge, %63, %64 : vector<32x32xf32>
    %cst_38 = arith.constant 0.00999999977 : f32
    %66 = vector.broadcast %cst_38 : f32 to vector<32x32xf32>
    %67 = arith.mulf %66, %63 : vector<32x32xf32>
    %68 = arith.select %65, %63, %67 : vector<32x32xi1>, vector<32x32xf32>
    %69 = arith.mulf %68, %68 : vector<32x32xf32>
    %cst_39 = arith.constant dense<0.000000e+00> : vector<32xf32>
    %70 = vector.multi_reduction <add>, %69, %cst_39 [1] : vector<32x32xf32> to vector<32xf32>
    %71 = vector.shape_cast %70 : vector<32xf32> to vector<32x1xf32>
    %72 = math.sqrt %71 : vector<32x1xf32>
    %cst_40 = arith.constant 9.99999996E-13 : f32
    %73 = vector.broadcast %cst_40 : f32 to vector<32x1xf32>
    %74 = arith.maximumf %72, %73 : vector<32x1xf32>
    %75 = vector.broadcast %74 : vector<32x1xf32> to vector<32x32xf32>
    %76 = arith.divf %68, %75 : vector<32x32xf32>
    %c3 = arith.constant 3 : index
    %c0_41 = arith.constant 0 : index
    %c0_42 = arith.constant 0 : index
    %77 = vector.load %arg5[%c3, %c0_41, %c0_42] : memref<6x32x32xf32, #tpu.memory_space<vmem>>, vector<1x32x32xf32>
    %78 = vector.shape_cast %77 : vector<1x32x32xf32> to vector<32x32xf32>
    %c3_43 = arith.constant 3 : index
    %c0_44 = arith.constant 0 : index
    %c0_45 = arith.constant 0 : index
    %79 = vector.load %arg6[%c3_43, %c0_44, %c0_45] : memref<6x1x32xf32, #tpu.memory_space<vmem>>, vector<1x1x32xf32>
    %80 = vector.shape_cast %79 : vector<1x1x32xf32> to vector<1x32xf32>
    %cst_46 = arith.constant dense<0.000000e+00> : vector<32x32xf32>
    %81 = tpu.matmul %55, %68, %cst_46 {dimension_numbers = #tpu.dot_dimension_numbers<[1], [0], [0], [1], [0, 0, 1, 1], [], []>} : vector<32x32xf32>, vector<32x32xf32>, vector<32x32xf32> -> vector<32x32xf32>
    %cst_47 = arith.constant dense<0.000000e+00> : vector<32x32xf32>
    %82 = tpu.matmul %81, %78, %cst_47 {dimension_numbers = #tpu.dot_dimension_numbers<[1], [0], [0], [1], [0, 0, 1, 1], [], []>} : vector<32x32xf32>, vector<32x32xf32>, vector<32x32xf32> -> vector<32x32xf32>
    %83 = vector.broadcast %80 : vector<1x32xf32> to vector<32x32xf32>
    %84 = arith.addf %82, %83 : vector<32x32xf32>
    %cst_48 = arith.constant 0.000000e+00 : f32
    %85 = vector.broadcast %cst_48 : f32 to vector<32x32xf32>
    %86 = arith.cmpf oge, %84, %85 : vector<32x32xf32>
    %cst_49 = arith.constant 0.00999999977 : f32
    %87 = vector.broadcast %cst_49 : f32 to vector<32x32xf32>
    %88 = arith.mulf %87, %84 : vector<32x32xf32>
    %89 = arith.select %86, %84, %88 : vector<32x32xi1>, vector<32x32xf32>
    %90 = arith.mulf %89, %89 : vector<32x32xf32>
    %cst_50 = arith.constant dense<0.000000e+00> : vector<32xf32>
    %91 = vector.multi_reduction <add>, %90, %cst_50 [1] : vector<32x32xf32> to vector<32xf32>
    %92 = vector.shape_cast %91 : vector<32xf32> to vector<32x1xf32>
    %93 = math.sqrt %92 : vector<32x1xf32>
    %cst_51 = arith.constant 9.99999996E-13 : f32
    %94 = vector.broadcast %cst_51 : f32 to vector<32x1xf32>
    %95 = arith.maximumf %93, %94 : vector<32x1xf32>
    %96 = vector.broadcast %95 : vector<32x1xf32> to vector<32x32xf32>
    %97 = arith.divf %89, %96 : vector<32x32xf32>
    %98 = tpu.concatenate %7, %76, %97, %6 in 1 : vector<32x32xf32>, vector<32x32xf32>, vector<32x32xf32>, vector<32x32xf32> -> vector<32x128xf32>
    %99 = vector.broadcast %5 : vector<32x1xf32> to vector<32x128xf32>
    %100 = arith.mulf %98, %99 : vector<32x128xf32>
    %c0_52 = arith.constant 0 : index
    %c0_53 = arith.constant 0 : index
    %101 = vector.load %arg4[%c0_52, %c0_53] : memref<32x32xf32, #tpu.memory_space<vmem>>, vector<32x32xf32>
    %c4 = arith.constant 4 : index
    %c0_54 = arith.constant 0 : index
    %c0_55 = arith.constant 0 : index
    %102 = vector.load %arg5[%c4, %c0_54, %c0_55] : memref<6x32x32xf32, #tpu.memory_space<vmem>>, vector<1x32x32xf32>
    %103 = vector.shape_cast %102 : vector<1x32x32xf32> to vector<32x32xf32>
    %c4_56 = arith.constant 4 : index
    %c0_57 = arith.constant 0 : index
    %c0_58 = arith.constant 0 : index
    %104 = vector.load %arg6[%c4_56, %c0_57, %c0_58] : memref<6x1x32xf32, #tpu.memory_space<vmem>>, vector<1x1x32xf32>
    %105 = vector.shape_cast %104 : vector<1x1x32xf32> to vector<1x32xf32>
    %cst_59 = arith.constant dense<0.000000e+00> : vector<32x32xf32>
    %106 = tpu.matmul %101, %8, %cst_59 {dimension_numbers = #tpu.dot_dimension_numbers<[1], [0], [0], [1], [0, 0, 1, 1], [], []>} : vector<32x32xf32>, vector<32x32xf32>, vector<32x32xf32> -> vector<32x32xf32>
    %cst_60 = arith.constant dense<0.000000e+00> : vector<32x32xf32>
    %107 = tpu.matmul %106, %103, %cst_60 {dimension_numbers = #tpu.dot_dimension_numbers<[1], [0], [0], [1], [0, 0, 1, 1], [], []>} : vector<32x32xf32>, vector<32x32xf32>, vector<32x32xf32> -> vector<32x32xf32>
    %108 = vector.broadcast %105 : vector<1x32xf32> to vector<32x32xf32>
    %109 = arith.addf %107, %108 : vector<32x32xf32>
    %cst_61 = arith.constant 0.000000e+00 : f32
    %110 = vector.broadcast %cst_61 : f32 to vector<32x32xf32>
    %111 = arith.cmpf oge, %109, %110 : vector<32x32xf32>
    %cst_62 = arith.constant 0.00999999977 : f32
    %112 = vector.broadcast %cst_62 : f32 to vector<32x32xf32>
    %113 = arith.mulf %112, %109 : vector<32x32xf32>
    %114 = arith.select %111, %109, %113 : vector<32x32xi1>, vector<32x32xf32>
    %115 = arith.mulf %114, %114 : vector<32x32xf32>
    %cst_63 = arith.constant dense<0.000000e+00> : vector<32xf32>
    %116 = vector.multi_reduction <add>, %115, %cst_63 [1] : vector<32x32xf32> to vector<32xf32>
    %117 = vector.shape_cast %116 : vector<32xf32> to vector<32x1xf32>
    %118 = math.sqrt %117 : vector<32x1xf32>
    %cst_64 = arith.constant 9.99999996E-13 : f32
    %119 = vector.broadcast %cst_64 : f32 to vector<32x1xf32>
    %120 = arith.maximumf %118, %119 : vector<32x1xf32>
    %121 = vector.broadcast %120 : vector<32x1xf32> to vector<32x32xf32>
    %122 = arith.divf %114, %121 : vector<32x32xf32>
    %c5 = arith.constant 5 : index
    %c0_65 = arith.constant 0 : index
    %c0_66 = arith.constant 0 : index
    %123 = vector.load %arg5[%c5, %c0_65, %c0_66] : memref<6x32x32xf32, #tpu.memory_space<vmem>>, vector<1x32x32xf32>
    %124 = vector.shape_cast %123 : vector<1x32x32xf32> to vector<32x32xf32>
    %c5_67 = arith.constant 5 : index
    %c0_68 = arith.constant 0 : index
    %c0_69 = arith.constant 0 : index
    %125 = vector.load %arg6[%c5_67, %c0_68, %c0_69] : memref<6x1x32xf32, #tpu.memory_space<vmem>>, vector<1x1x32xf32>
    %126 = vector.shape_cast %125 : vector<1x1x32xf32> to vector<1x32xf32>
    %cst_70 = arith.constant dense<0.000000e+00> : vector<32x32xf32>
    %127 = tpu.matmul %101, %114, %cst_70 {dimension_numbers = #tpu.dot_dimension_numbers<[1], [0], [0], [1], [0, 0, 1, 1], [], []>} : vector<32x32xf32>, vector<32x32xf32>, vector<32x32xf32> -> vector<32x32xf32>
    %cst_71 = arith.constant dense<0.000000e+00> : vector<32x32xf32>
    %128 = tpu.matmul %127, %124, %cst_71 {dimension_numbers = #tpu.dot_dimension_numbers<[1], [0], [0], [1], [0, 0, 1, 1], [], []>} : vector<32x32xf32>, vector<32x32xf32>, vector<32x32xf32> -> vector<32x32xf32>
    %129 = vector.broadcast %126 : vector<1x32xf32> to vector<32x32xf32>
    %130 = arith.addf %128, %129 : vector<32x32xf32>
    %cst_72 = arith.constant 0.000000e+00 : f32
    %131 = vector.broadcast %cst_72 : f32 to vector<32x32xf32>
    %132 = arith.cmpf oge, %130, %131 : vector<32x32xf32>
    %cst_73 = arith.constant 0.00999999977 : f32
    %133 = vector.broadcast %cst_73 : f32 to vector<32x32xf32>
    %134 = arith.mulf %133, %130 : vector<32x32xf32>
    %135 = arith.select %132, %130, %134 : vector<32x32xi1>, vector<32x32xf32>
    %136 = arith.mulf %135, %135 : vector<32x32xf32>
    %cst_74 = arith.constant dense<0.000000e+00> : vector<32xf32>
    %137 = vector.multi_reduction <add>, %136, %cst_74 [1] : vector<32x32xf32> to vector<32xf32>
    %138 = vector.shape_cast %137 : vector<32xf32> to vector<32x1xf32>
    %139 = math.sqrt %138 : vector<32x1xf32>
    %cst_75 = arith.constant 9.99999996E-13 : f32
    %140 = vector.broadcast %cst_75 : f32 to vector<32x1xf32>
    %141 = arith.maximumf %139, %140 : vector<32x1xf32>
    %142 = vector.broadcast %141 : vector<32x1xf32> to vector<32x32xf32>
    %143 = arith.divf %135, %142 : vector<32x32xf32>
    %144 = tpu.concatenate %8, %122, %143, %6 in 1 : vector<32x32xf32>, vector<32x32xf32>, vector<32x32xf32>, vector<32x32xf32> -> vector<32x128xf32>
    %145 = vector.broadcast %5 : vector<32x1xf32> to vector<32x128xf32>
    %146 = arith.mulf %144, %145 : vector<32x128xf32>
    %147 = arith.addf %100, %54 : vector<32x128xf32>
    %cst_76 = arith.constant 5.000000e-01 : f32
    %148 = vector.broadcast %cst_76 : f32 to vector<32x128xf32>
    %149 = arith.mulf %148, %147 : vector<32x128xf32>
    %c0_77 = arith.constant 0 : index
    %c0_78 = arith.constant 0 : index
    %150 = vector.load %arg7[%c0_77, %c0_78] : memref<4x1xi32, #tpu.memory_space<vmem>>, vector<4x1xi32>
    %151 = vector.broadcast %150 : vector<4x1xi32> to vector<4x32xi32>
    %152 = vector.broadcast %0 : vector<1x32xi32> to vector<4x32xi32>
    %153 = arith.cmpi eq, %151, %152 : vector<4x32xi32>
    %154 = arith.extui %153 : vector<4x32xi1> to vector<4x32xi32>
    %155 = arith.sitofp %154 : vector<4x32xi32> to vector<4x32xf32>
    %cst_79 = arith.constant dense<0.000000e+00> : vector<4x128xf32>
    %156 = tpu.matmul %155, %149, %cst_79 {dimension_numbers = #tpu.dot_dimension_numbers<[1], [0], [0], [1], [0, 0, 1, 1], [], []>} : vector<4x32xf32>, vector<32x128xf32>, vector<4x128xf32> -> vector<4x128xf32>
    %c0_80 = arith.constant 0 : index
    %c0_81 = arith.constant 0 : index
    %157 = vector.load %arg8[%c0_80, %c0_81] : memref<4x1xi32, #tpu.memory_space<vmem>>, vector<4x1xi32>
    %158 = vector.broadcast %157 : vector<4x1xi32> to vector<4x32xi32>
    %159 = vector.broadcast %0 : vector<1x32xi32> to vector<4x32xi32>
    %160 = arith.cmpi eq, %158, %159 : vector<4x32xi32>
    %161 = arith.extui %160 : vector<4x32xi1> to vector<4x32xi32>
    %162 = arith.sitofp %161 : vector<4x32xi32> to vector<4x32xf32>
    %cst_82 = arith.constant dense<0.000000e+00> : vector<4x128xf32>
    %163 = tpu.matmul %162, %146, %cst_82 {dimension_numbers = #tpu.dot_dimension_numbers<[1], [0], [0], [1], [0, 0, 1, 1], [], []>} : vector<4x32xf32>, vector<32x128xf32>, vector<4x128xf32> -> vector<4x128xf32>
    %c0_83 = arith.constant 0 : index
    %c0_84 = arith.constant 0 : index
    %164 = vector.load %arg9[%c0_83, %c0_84] : memref<4x6xi32, #tpu.memory_space<vmem>>, vector<4x1xi32>
    %165 = vector.broadcast %164 : vector<4x1xi32> to vector<4x32xi32>
    %166 = vector.broadcast %0 : vector<1x32xi32> to vector<4x32xi32>
    %167 = arith.cmpi eq, %165, %166 : vector<4x32xi32>
    %168 = arith.extui %167 : vector<4x32xi1> to vector<4x32xi32>
    %169 = arith.sitofp %168 : vector<4x32xi32> to vector<4x32xf32>
    %cst_85 = arith.constant dense<0.000000e+00> : vector<4x128xf32>
    %170 = tpu.matmul %169, %149, %cst_85 {dimension_numbers = #tpu.dot_dimension_numbers<[1], [0], [0], [1], [0, 0, 1, 1], [], []>} : vector<4x32xf32>, vector<32x128xf32>, vector<4x128xf32> -> vector<4x128xf32>
    %171 = arith.mulf %170, %156 : vector<4x128xf32>
    %c0_86 = arith.constant 0 : index
    %c1_87 = arith.constant 1 : index
    %172 = vector.load %arg9[%c0_86, %c1_87] : memref<4x6xi32, #tpu.memory_space<vmem>>, vector<4x1xi32>
    %173 = vector.broadcast %172 : vector<4x1xi32> to vector<4x32xi32>
    %174 = vector.broadcast %0 : vector<1x32xi32> to vector<4x32xi32>
    %175 = arith.cmpi eq, %173, %174 : vector<4x32xi32>
    %176 = arith.extui %175 : vector<4x32xi1> to vector<4x32xi32>
    %177 = arith.sitofp %176 : vector<4x32xi32> to vector<4x32xf32>
    %cst_88 = arith.constant dense<0.000000e+00> : vector<4x128xf32>
    %178 = tpu.matmul %177, %149, %cst_88 {dimension_numbers = #tpu.dot_dimension_numbers<[1], [0], [0], [1], [0, 0, 1, 1], [], []>} : vector<4x32xf32>, vector<32x128xf32>, vector<4x128xf32> -> vector<4x128xf32>
    %179 = arith.mulf %178, %156 : vector<4x128xf32>
    %180 = arith.maximumf %171, %179 : vector<4x128xf32>
    %c0_89 = arith.constant 0 : index
    %c2_90 = arith.constant 2 : index
    %181 = vector.load %arg9[%c0_89, %c2_90] : memref<4x6xi32, #tpu.memory_space<vmem>>, vector<4x1xi32>
    %182 = vector.broadcast %181 : vector<4x1xi32> to vector<4x32xi32>
    %183 = vector.broadcast %0 : vector<1x32xi32> to vector<4x32xi32>
    %184 = arith.cmpi eq, %182, %183 : vector<4x32xi32>
    %185 = arith.extui %184 : vector<4x32xi1> to vector<4x32xi32>
    %186 = arith.sitofp %185 : vector<4x32xi32> to vector<4x32xf32>
    %cst_91 = arith.constant dense<0.000000e+00> : vector<4x128xf32>
    %187 = tpu.matmul %186, %149, %cst_91 {dimension_numbers = #tpu.dot_dimension_numbers<[1], [0], [0], [1], [0, 0, 1, 1], [], []>} : vector<4x32xf32>, vector<32x128xf32>, vector<4x128xf32> -> vector<4x128xf32>
    %188 = arith.mulf %187, %156 : vector<4x128xf32>
    %189 = arith.maximumf %180, %188 : vector<4x128xf32>
    %c0_92 = arith.constant 0 : index
    %c3_93 = arith.constant 3 : index
    %190 = vector.load %arg9[%c0_92, %c3_93] : memref<4x6xi32, #tpu.memory_space<vmem>>, vector<4x1xi32>
    %191 = vector.broadcast %190 : vector<4x1xi32> to vector<4x32xi32>
    %192 = vector.broadcast %0 : vector<1x32xi32> to vector<4x32xi32>
    %193 = arith.cmpi eq, %191, %192 : vector<4x32xi32>
    %194 = arith.extui %193 : vector<4x32xi1> to vector<4x32xi32>
    %195 = arith.sitofp %194 : vector<4x32xi32> to vector<4x32xf32>
    %cst_94 = arith.constant dense<0.000000e+00> : vector<4x128xf32>
    %196 = tpu.matmul %195, %149, %cst_94 {dimension_numbers = #tpu.dot_dimension_numbers<[1], [0], [0], [1], [0, 0, 1, 1], [], []>} : vector<4x32xf32>, vector<32x128xf32>, vector<4x128xf32> -> vector<4x128xf32>
    %197 = arith.mulf %196, %156 : vector<4x128xf32>
    %198 = arith.maximumf %189, %197 : vector<4x128xf32>
    %c0_95 = arith.constant 0 : index
    %c4_96 = arith.constant 4 : index
    %199 = vector.load %arg9[%c0_95, %c4_96] : memref<4x6xi32, #tpu.memory_space<vmem>>, vector<4x1xi32>
    %200 = vector.broadcast %199 : vector<4x1xi32> to vector<4x32xi32>
    %201 = vector.broadcast %0 : vector<1x32xi32> to vector<4x32xi32>
    %202 = arith.cmpi eq, %200, %201 : vector<4x32xi32>
    %203 = arith.extui %202 : vector<4x32xi1> to vector<4x32xi32>
    %204 = arith.sitofp %203 : vector<4x32xi32> to vector<4x32xf32>
    %cst_97 = arith.constant dense<0.000000e+00> : vector<4x128xf32>
    %205 = tpu.matmul %204, %149, %cst_97 {dimension_numbers = #tpu.dot_dimension_numbers<[1], [0], [0], [1], [0, 0, 1, 1], [], []>} : vector<4x32xf32>, vector<32x128xf32>, vector<4x128xf32> -> vector<4x128xf32>
    %206 = arith.mulf %205, %156 : vector<4x128xf32>
    %207 = arith.maximumf %198, %206 : vector<4x128xf32>
    %c0_98 = arith.constant 0 : index
    %c5_99 = arith.constant 5 : index
    %208 = vector.load %arg9[%c0_98, %c5_99] : memref<4x6xi32, #tpu.memory_space<vmem>>, vector<4x1xi32>
    %209 = vector.broadcast %208 : vector<4x1xi32> to vector<4x32xi32>
    %210 = vector.broadcast %0 : vector<1x32xi32> to vector<4x32xi32>
    %211 = arith.cmpi eq, %209, %210 : vector<4x32xi32>
    %212 = arith.extui %211 : vector<4x32xi1> to vector<4x32xi32>
    %213 = arith.sitofp %212 : vector<4x32xi32> to vector<4x32xf32>
    %cst_100 = arith.constant dense<0.000000e+00> : vector<4x128xf32>
    %214 = tpu.matmul %213, %149, %cst_100 {dimension_numbers = #tpu.dot_dimension_numbers<[1], [0], [0], [1], [0, 0, 1, 1], [], []>} : vector<4x32xf32>, vector<32x128xf32>, vector<4x128xf32> -> vector<4x128xf32>
    %215 = arith.mulf %214, %156 : vector<4x128xf32>
    %216 = arith.maximumf %207, %215 : vector<4x128xf32>
    %c0_101 = arith.constant 0 : index
    %c0_102 = arith.constant 0 : index
    %217 = vector.load %arg10[%c0_101, %c0_102] : memref<4x6xi32, #tpu.memory_space<vmem>>, vector<4x1xi32>
    %218 = vector.broadcast %217 : vector<4x1xi32> to vector<4x32xi32>
    %219 = vector.broadcast %0 : vector<1x32xi32> to vector<4x32xi32>
    %220 = arith.cmpi eq, %218, %219 : vector<4x32xi32>
    %221 = arith.extui %220 : vector<4x32xi1> to vector<4x32xi32>
    %222 = arith.sitofp %221 : vector<4x32xi32> to vector<4x32xf32>
    %cst_103 = arith.constant dense<0.000000e+00> : vector<4x128xf32>
    %223 = tpu.matmul %222, %146, %cst_103 {dimension_numbers = #tpu.dot_dimension_numbers<[1], [0], [0], [1], [0, 0, 1, 1], [], []>} : vector<4x32xf32>, vector<32x128xf32>, vector<4x128xf32> -> vector<4x128xf32>
    %224 = arith.mulf %223, %163 : vector<4x128xf32>
    %c0_104 = arith.constant 0 : index
    %c1_105 = arith.constant 1 : index
    %225 = vector.load %arg10[%c0_104, %c1_105] : memref<4x6xi32, #tpu.memory_space<vmem>>, vector<4x1xi32>
    %226 = vector.broadcast %225 : vector<4x1xi32> to vector<4x32xi32>
    %227 = vector.broadcast %0 : vector<1x32xi32> to vector<4x32xi32>
    %228 = arith.cmpi eq, %226, %227 : vector<4x32xi32>
    %229 = arith.extui %228 : vector<4x32xi1> to vector<4x32xi32>
    %230 = arith.sitofp %229 : vector<4x32xi32> to vector<4x32xf32>
    %cst_106 = arith.constant dense<0.000000e+00> : vector<4x128xf32>
    %231 = tpu.matmul %230, %146, %cst_106 {dimension_numbers = #tpu.dot_dimension_numbers<[1], [0], [0], [1], [0, 0, 1, 1], [], []>} : vector<4x32xf32>, vector<32x128xf32>, vector<4x128xf32> -> vector<4x128xf32>
    %232 = arith.mulf %231, %163 : vector<4x128xf32>
    %233 = arith.maximumf %224, %232 : vector<4x128xf32>
    %c0_107 = arith.constant 0 : index
    %c2_108 = arith.constant 2 : index
    %234 = vector.load %arg10[%c0_107, %c2_108] : memref<4x6xi32, #tpu.memory_space<vmem>>, vector<4x1xi32>
    %235 = vector.broadcast %234 : vector<4x1xi32> to vector<4x32xi32>
    %236 = vector.broadcast %0 : vector<1x32xi32> to vector<4x32xi32>
    %237 = arith.cmpi eq, %235, %236 : vector<4x32xi32>
    %238 = arith.extui %237 : vector<4x32xi1> to vector<4x32xi32>
    %239 = arith.sitofp %238 : vector<4x32xi32> to vector<4x32xf32>
    %cst_109 = arith.constant dense<0.000000e+00> : vector<4x128xf32>
    %240 = tpu.matmul %239, %146, %cst_109 {dimension_numbers = #tpu.dot_dimension_numbers<[1], [0], [0], [1], [0, 0, 1, 1], [], []>} : vector<4x32xf32>, vector<32x128xf32>, vector<4x128xf32> -> vector<4x128xf32>
    %241 = arith.mulf %240, %163 : vector<4x128xf32>
    %242 = arith.maximumf %233, %241 : vector<4x128xf32>
    %c0_110 = arith.constant 0 : index
    %c3_111 = arith.constant 3 : index
    %243 = vector.load %arg10[%c0_110, %c3_111] : memref<4x6xi32, #tpu.memory_space<vmem>>, vector<4x1xi32>
    %244 = vector.broadcast %243 : vector<4x1xi32> to vector<4x32xi32>
    %245 = vector.broadcast %0 : vector<1x32xi32> to vector<4x32xi32>
    %246 = arith.cmpi eq, %244, %245 : vector<4x32xi32>
    %247 = arith.extui %246 : vector<4x32xi1> to vector<4x32xi32>
    %248 = arith.sitofp %247 : vector<4x32xi32> to vector<4x32xf32>
    %cst_112 = arith.constant dense<0.000000e+00> : vector<4x128xf32>
    %249 = tpu.matmul %248, %146, %cst_112 {dimension_numbers = #tpu.dot_dimension_numbers<[1], [0], [0], [1], [0, 0, 1, 1], [], []>} : vector<4x32xf32>, vector<32x128xf32>, vector<4x128xf32> -> vector<4x128xf32>
    %250 = arith.mulf %249, %163 : vector<4x128xf32>
    %251 = arith.maximumf %242, %250 : vector<4x128xf32>
    %c0_113 = arith.constant 0 : index
    %c4_114 = arith.constant 4 : index
    %252 = vector.load %arg10[%c0_113, %c4_114] : memref<4x6xi32, #tpu.memory_space<vmem>>, vector<4x1xi32>
    %253 = vector.broadcast %252 : vector<4x1xi32> to vector<4x32xi32>
    %254 = vector.broadcast %0 : vector<1x32xi32> to vector<4x32xi32>
    %255 = arith.cmpi eq, %253, %254 : vector<4x32xi32>
    %256 = arith.extui %255 : vector<4x32xi1> to vector<4x32xi32>
    %257 = arith.sitofp %256 : vector<4x32xi32> to vector<4x32xf32>
    %cst_115 = arith.constant dense<0.000000e+00> : vector<4x128xf32>
    %258 = tpu.matmul %257, %146, %cst_115 {dimension_numbers = #tpu.dot_dimension_numbers<[1], [0], [0], [1], [0, 0, 1, 1], [], []>} : vector<4x32xf32>, vector<32x128xf32>, vector<4x128xf32> -> vector<4x128xf32>
    %259 = arith.mulf %258, %163 : vector<4x128xf32>
    %260 = arith.maximumf %251, %259 : vector<4x128xf32>
    %c0_116 = arith.constant 0 : index
    %c5_117 = arith.constant 5 : index
    %261 = vector.load %arg10[%c0_116, %c5_117] : memref<4x6xi32, #tpu.memory_space<vmem>>, vector<4x1xi32>
    %262 = vector.broadcast %261 : vector<4x1xi32> to vector<4x32xi32>
    %263 = vector.broadcast %0 : vector<1x32xi32> to vector<4x32xi32>
    %264 = arith.cmpi eq, %262, %263 : vector<4x32xi32>
    %265 = arith.extui %264 : vector<4x32xi1> to vector<4x32xi32>
    %266 = arith.sitofp %265 : vector<4x32xi32> to vector<4x32xf32>
    %cst_118 = arith.constant dense<0.000000e+00> : vector<4x128xf32>
    %267 = tpu.matmul %266, %146, %cst_118 {dimension_numbers = #tpu.dot_dimension_numbers<[1], [0], [0], [1], [0, 0, 1, 1], [], []>} : vector<4x32xf32>, vector<32x128xf32>, vector<4x128xf32> -> vector<4x128xf32>
    %268 = arith.mulf %267, %163 : vector<4x128xf32>
    %269 = arith.maximumf %260, %268 : vector<4x128xf32>
    %c0_119 = arith.constant 0 : index
    %c0_120 = arith.constant 0 : index
    %270 = vector.load %arg13[%c0_119, %c0_120] : memref<128x16xf32, #tpu.memory_space<vmem>>, vector<128x16xf32>
    %cst_121 = arith.constant dense<0.000000e+00> : vector<4x16xf32>
    %271 = tpu.matmul %269, %270, %cst_121 {dimension_numbers = #tpu.dot_dimension_numbers<[1], [0], [0], [1], [0, 0, 1, 1], [], []>} : vector<4x128xf32>, vector<128x16xf32>, vector<4x16xf32> -> vector<4x16xf32>
    %c0_122 = arith.constant 0 : index
    %c0_123 = arith.constant 0 : index
    %272 = vector.load %arg12[%c0_122, %c0_123] : memref<4x1xi32, #tpu.memory_space<vmem>>, vector<4x1xi32>
    %c0_124 = arith.constant 0 : index
    %c0_125 = arith.constant 0 : index
    %273 = vector.load %arg11[%c0_124, %c0_125] : memref<4x20xi32, #tpu.memory_space<vmem>>, vector<4x1xi32>
    %274 = vector.broadcast %273 : vector<4x1xi32> to vector<4x32xi32>
    %275 = vector.broadcast %0 : vector<1x32xi32> to vector<4x32xi32>
    %276 = arith.cmpi eq, %274, %275 : vector<4x32xi32>
    %277 = arith.extui %276 : vector<4x32xi1> to vector<4x32xi32>
    %278 = arith.sitofp %277 : vector<4x32xi32> to vector<4x32xf32>
    %cst_126 = arith.constant dense<0.000000e+00> : vector<4x128xf32>
    %279 = tpu.matmul %278, %146, %cst_126 {dimension_numbers = #tpu.dot_dimension_numbers<[1], [0], [0], [1], [0, 0, 1, 1], [], []>} : vector<4x32xf32>, vector<32x128xf32>, vector<4x128xf32> -> vector<4x128xf32>
    %280 = arith.mulf %279, %163 : vector<4x128xf32>
    %c0_127 = arith.constant 0 : index
    %c1_128 = arith.constant 1 : index
    %281 = vector.load %arg11[%c0_127, %c1_128] : memref<4x20xi32, #tpu.memory_space<vmem>>, vector<4x1xi32>
    %282 = vector.broadcast %281 : vector<4x1xi32> to vector<4x32xi32>
    %283 = vector.broadcast %0 : vector<1x32xi32> to vector<4x32xi32>
    %284 = arith.cmpi eq, %282, %283 : vector<4x32xi32>
    %285 = arith.extui %284 : vector<4x32xi1> to vector<4x32xi32>
    %286 = arith.sitofp %285 : vector<4x32xi32> to vector<4x32xf32>
    %cst_129 = arith.constant dense<0.000000e+00> : vector<4x128xf32>
    %287 = tpu.matmul %286, %146, %cst_129 {dimension_numbers = #tpu.dot_dimension_numbers<[1], [0], [0], [1], [0, 0, 1, 1], [], []>} : vector<4x32xf32>, vector<32x128xf32>, vector<4x128xf32> -> vector<4x128xf32>
    %288 = arith.mulf %287, %163 : vector<4x128xf32>
    %289 = arith.maximumf %280, %288 : vector<4x128xf32>
    %c0_130 = arith.constant 0 : index
    %c2_131 = arith.constant 2 : index
    %290 = vector.load %arg11[%c0_130, %c2_131] : memref<4x20xi32, #tpu.memory_space<vmem>>, vector<4x1xi32>
    %291 = vector.broadcast %290 : vector<4x1xi32> to vector<4x32xi32>
    %292 = vector.broadcast %0 : vector<1x32xi32> to vector<4x32xi32>
    %293 = arith.cmpi eq, %291, %292 : vector<4x32xi32>
    %294 = arith.extui %293 : vector<4x32xi1> to vector<4x32xi32>
    %295 = arith.sitofp %294 : vector<4x32xi32> to vector<4x32xf32>
    %cst_132 = arith.constant dense<0.000000e+00> : vector<4x128xf32>
    %296 = tpu.matmul %295, %146, %cst_132 {dimension_numbers = #tpu.dot_dimension_numbers<[1], [0], [0], [1], [0, 0, 1, 1], [], []>} : vector<4x32xf32>, vector<32x128xf32>, vector<4x128xf32> -> vector<4x128xf32>
    %297 = arith.mulf %296, %163 : vector<4x128xf32>
    %298 = arith.maximumf %289, %297 : vector<4x128xf32>
    %c0_133 = arith.constant 0 : index
    %c3_134 = arith.constant 3 : index
    %299 = vector.load %arg11[%c0_133, %c3_134] : memref<4x20xi32, #tpu.memory_space<vmem>>, vector<4x1xi32>
    %300 = vector.broadcast %299 : vector<4x1xi32> to vector<4x32xi32>
    %301 = vector.broadcast %0 : vector<1x32xi32> to vector<4x32xi32>
    %302 = arith.cmpi eq, %300, %301 : vector<4x32xi32>
    %303 = arith.extui %302 : vector<4x32xi1> to vector<4x32xi32>
    %304 = arith.sitofp %303 : vector<4x32xi32> to vector<4x32xf32>
    %cst_135 = arith.constant dense<0.000000e+00> : vector<4x128xf32>
    %305 = tpu.matmul %304, %146, %cst_135 {dimension_numbers = #tpu.dot_dimension_numbers<[1], [0], [0], [1], [0, 0, 1, 1], [], []>} : vector<4x32xf32>, vector<32x128xf32>, vector<4x128xf32> -> vector<4x128xf32>
    %306 = arith.mulf %305, %163 : vector<4x128xf32>
    %307 = arith.maximumf %298, %306 : vector<4x128xf32>
    %c0_136 = arith.constant 0 : index
    %c0_137 = arith.constant 0 : index
    %308 = vector.load %arg14[%c0_136, %c0_137] : memref<128x16xf32, #tpu.memory_space<vmem>>, vector<128x16xf32>
    %cst_138 = arith.constant dense<0.000000e+00> : vector<4x16xf32>
    %309 = tpu.matmul %307, %308, %cst_138 {dimension_numbers = #tpu.dot_dimension_numbers<[1], [0], [0], [1], [0, 0, 1, 1], [], []>} : vector<4x128xf32>, vector<128x16xf32>, vector<4x16xf32> -> vector<4x16xf32>
    %310 = arith.addf %271, %309 : vector<4x16xf32>
    %c0_139 = arith.constant 0 : index
    %c0_140 = arith.constant 0 : index
    %311 = vector.load %arg15[%c0_139, %c0_140] : memref<1x16xf32, #tpu.memory_space<vmem>>, vector<1x16xf32>
    %312 = vector.broadcast %311 : vector<1x16xf32> to vector<4x16xf32>
    %313 = arith.addf %310, %312 : vector<4x16xf32>
    %cst_141 = arith.constant 0.000000e+00 : f32
    %314 = vector.broadcast %cst_141 : f32 to vector<4x16xf32>
    %315 = arith.cmpf oge, %313, %314 : vector<4x16xf32>
    %cst_142 = arith.constant 0.00999999977 : f32
    %316 = vector.broadcast %cst_142 : f32 to vector<4x16xf32>
    %317 = arith.mulf %316, %313 : vector<4x16xf32>
    %318 = arith.select %315, %313, %317 : vector<4x16xi1>, vector<4x16xf32>
    %c0_143 = arith.constant 0 : index
    %c0_144 = arith.constant 0 : index
    %319 = vector.load %arg16[%c0_143, %c0_144] : memref<1x16xf32, #tpu.memory_space<vmem>>, vector<1x16xf32>
    %320 = vector.broadcast %319 : vector<1x16xf32> to vector<4x16xf32>
    %321 = arith.mulf %318, %320 : vector<4x16xf32>
    %cst_145 = arith.constant dense<0.000000e+00> : vector<4xf32>
    %322 = vector.multi_reduction <add>, %321, %cst_145 [1] : vector<4x16xf32> to vector<4xf32>
    %323 = vector.shape_cast %322 : vector<4xf32> to vector<4x1xf32>
    %c0_i32_146 = arith.constant 0 : i32
    %324 = vector.broadcast %c0_i32_146 : i32 to vector<4x1xi32>
    %325 = arith.cmpi sgt, %272, %324 : vector<4x1xi32>
    %cst_147 = arith.constant -1.000000e+30 : f32
    %326 = vector.broadcast %cst_147 : f32 to vector<4x1xf32>
    %327 = arith.select %325, %323, %326 : vector<4x1xi1>, vector<4x1xf32>
    %c0_148 = arith.constant 0 : index
    %c4_149 = arith.constant 4 : index
    %328 = vector.load %arg11[%c0_148, %c4_149] : memref<4x20xi32, #tpu.memory_space<vmem>>, vector<4x1xi32>
    %329 = vector.broadcast %328 : vector<4x1xi32> to vector<4x32xi32>
    %330 = vector.broadcast %0 : vector<1x32xi32> to vector<4x32xi32>
    %331 = arith.cmpi eq, %329, %330 : vector<4x32xi32>
    %332 = arith.extui %331 : vector<4x32xi1> to vector<4x32xi32>
    %333 = arith.sitofp %332 : vector<4x32xi32> to vector<4x32xf32>
    %cst_150 = arith.constant dense<0.000000e+00> : vector<4x128xf32>
    %334 = tpu.matmul %333, %146, %cst_150 {dimension_numbers = #tpu.dot_dimension_numbers<[1], [0], [0], [1], [0, 0, 1, 1], [], []>} : vector<4x32xf32>, vector<32x128xf32>, vector<4x128xf32> -> vector<4x128xf32>
    %335 = arith.mulf %334, %163 : vector<4x128xf32>
    %c0_151 = arith.constant 0 : index
    %c5_152 = arith.constant 5 : index
    %336 = vector.load %arg11[%c0_151, %c5_152] : memref<4x20xi32, #tpu.memory_space<vmem>>, vector<4x1xi32>
    %337 = vector.broadcast %336 : vector<4x1xi32> to vector<4x32xi32>
    %338 = vector.broadcast %0 : vector<1x32xi32> to vector<4x32xi32>
    %339 = arith.cmpi eq, %337, %338 : vector<4x32xi32>
    %340 = arith.extui %339 : vector<4x32xi1> to vector<4x32xi32>
    %341 = arith.sitofp %340 : vector<4x32xi32> to vector<4x32xf32>
    %cst_153 = arith.constant dense<0.000000e+00> : vector<4x128xf32>
    %342 = tpu.matmul %341, %146, %cst_153 {dimension_numbers = #tpu.dot_dimension_numbers<[1], [0], [0], [1], [0, 0, 1, 1], [], []>} : vector<4x32xf32>, vector<32x128xf32>, vector<4x128xf32> -> vector<4x128xf32>
    %343 = arith.mulf %342, %163 : vector<4x128xf32>
    %344 = arith.maximumf %335, %343 : vector<4x128xf32>
    %c0_154 = arith.constant 0 : index
    %c6 = arith.constant 6 : index
    %345 = vector.load %arg11[%c0_154, %c6] : memref<4x20xi32, #tpu.memory_space<vmem>>, vector<4x1xi32>
    %346 = vector.broadcast %345 : vector<4x1xi32> to vector<4x32xi32>
    %347 = vector.broadcast %0 : vector<1x32xi32> to vector<4x32xi32>
    %348 = arith.cmpi eq, %346, %347 : vector<4x32xi32>
    %349 = arith.extui %348 : vector<4x32xi1> to vector<4x32xi32>
    %350 = arith.sitofp %349 : vector<4x32xi32> to vector<4x32xf32>
    %cst_155 = arith.constant dense<0.000000e+00> : vector<4x128xf32>
    %351 = tpu.matmul %350, %146, %cst_155 {dimension_numbers = #tpu.dot_dimension_numbers<[1], [0], [0], [1], [0, 0, 1, 1], [], []>} : vector<4x32xf32>, vector<32x128xf32>, vector<4x128xf32> -> vector<4x128xf32>
    %352 = arith.mulf %351, %163 : vector<4x128xf32>
    %353 = arith.maximumf %344, %352 : vector<4x128xf32>
    %c0_156 = arith.constant 0 : index
    %c7 = arith.constant 7 : index
    %354 = vector.load %arg11[%c0_156, %c7] : memref<4x20xi32, #tpu.memory_space<vmem>>, vector<4x1xi32>
    %355 = vector.broadcast %354 : vector<4x1xi32> to vector<4x32xi32>
    %356 = vector.broadcast %0 : vector<1x32xi32> to vector<4x32xi32>
    %357 = arith.cmpi eq, %355, %356 : vector<4x32xi32>
    %358 = arith.extui %357 : vector<4x32xi1> to vector<4x32xi32>
    %359 = arith.sitofp %358 : vector<4x32xi32> to vector<4x32xf32>
    %cst_157 = arith.constant dense<0.000000e+00> : vector<4x128xf32>
    %360 = tpu.matmul %359, %146, %cst_157 {dimension_numbers = #tpu.dot_dimension_numbers<[1], [0], [0], [1], [0, 0, 1, 1], [], []>} : vector<4x32xf32>, vector<32x128xf32>, vector<4x128xf32> -> vector<4x128xf32>
    %361 = arith.mulf %360, %163 : vector<4x128xf32>
    %362 = arith.maximumf %353, %361 : vector<4x128xf32>
    %c0_158 = arith.constant 0 : index
    %c0_159 = arith.constant 0 : index
    %363 = vector.load %arg14[%c0_158, %c0_159] : memref<128x16xf32, #tpu.memory_space<vmem>>, vector<128x16xf32>
    %cst_160 = arith.constant dense<0.000000e+00> : vector<4x16xf32>
    %364 = tpu.matmul %362, %363, %cst_160 {dimension_numbers = #tpu.dot_dimension_numbers<[1], [0], [0], [1], [0, 0, 1, 1], [], []>} : vector<4x128xf32>, vector<128x16xf32>, vector<4x16xf32> -> vector<4x16xf32>
    %365 = arith.addf %271, %364 : vector<4x16xf32>
    %c0_161 = arith.constant 0 : index
    %c0_162 = arith.constant 0 : index
    %366 = vector.load %arg15[%c0_161, %c0_162] : memref<1x16xf32, #tpu.memory_space<vmem>>, vector<1x16xf32>
    %367 = vector.broadcast %366 : vector<1x16xf32> to vector<4x16xf32>
    %368 = arith.addf %365, %367 : vector<4x16xf32>
    %cst_163 = arith.constant 0.000000e+00 : f32
    %369 = vector.broadcast %cst_163 : f32 to vector<4x16xf32>
    %370 = arith.cmpf oge, %368, %369 : vector<4x16xf32>
    %cst_164 = arith.constant 0.00999999977 : f32
    %371 = vector.broadcast %cst_164 : f32 to vector<4x16xf32>
    %372 = arith.mulf %371, %368 : vector<4x16xf32>
    %373 = arith.select %370, %368, %372 : vector<4x16xi1>, vector<4x16xf32>
    %c0_165 = arith.constant 0 : index
    %c0_166 = arith.constant 0 : index
    %374 = vector.load %arg16[%c0_165, %c0_166] : memref<1x16xf32, #tpu.memory_space<vmem>>, vector<1x16xf32>
    %375 = vector.broadcast %374 : vector<1x16xf32> to vector<4x16xf32>
    %376 = arith.mulf %373, %375 : vector<4x16xf32>
    %cst_167 = arith.constant dense<0.000000e+00> : vector<4xf32>
    %377 = vector.multi_reduction <add>, %376, %cst_167 [1] : vector<4x16xf32> to vector<4xf32>
    %378 = vector.shape_cast %377 : vector<4xf32> to vector<4x1xf32>
    %c1_i32 = arith.constant 1 : i32
    %379 = vector.broadcast %c1_i32 : i32 to vector<4x1xi32>
    %380 = arith.cmpi sgt, %272, %379 : vector<4x1xi32>
    %cst_168 = arith.constant -1.000000e+30 : f32
    %381 = vector.broadcast %cst_168 : f32 to vector<4x1xf32>
    %382 = arith.select %380, %378, %381 : vector<4x1xi1>, vector<4x1xf32>
    %c0_169 = arith.constant 0 : index
    %c8 = arith.constant 8 : index
    %383 = vector.load %arg11[%c0_169, %c8] : memref<4x20xi32, #tpu.memory_space<vmem>>, vector<4x1xi32>
    %384 = vector.broadcast %383 : vector<4x1xi32> to vector<4x32xi32>
    %385 = vector.broadcast %0 : vector<1x32xi32> to vector<4x32xi32>
    %386 = arith.cmpi eq, %384, %385 : vector<4x32xi32>
    %387 = arith.extui %386 : vector<4x32xi1> to vector<4x32xi32>
    %388 = arith.sitofp %387 : vector<4x32xi32> to vector<4x32xf32>
    %cst_170 = arith.constant dense<0.000000e+00> : vector<4x128xf32>
    %389 = tpu.matmul %388, %146, %cst_170 {dimension_numbers = #tpu.dot_dimension_numbers<[1], [0], [0], [1], [0, 0, 1, 1], [], []>} : vector<4x32xf32>, vector<32x128xf32>, vector<4x128xf32> -> vector<4x128xf32>
    %390 = arith.mulf %389, %163 : vector<4x128xf32>
    %c0_171 = arith.constant 0 : index
    %c9 = arith.constant 9 : index
    %391 = vector.load %arg11[%c0_171, %c9] : memref<4x20xi32, #tpu.memory_space<vmem>>, vector<4x1xi32>
    %392 = vector.broadcast %391 : vector<4x1xi32> to vector<4x32xi32>
    %393 = vector.broadcast %0 : vector<1x32xi32> to vector<4x32xi32>
    %394 = arith.cmpi eq, %392, %393 : vector<4x32xi32>
    %395 = arith.extui %394 : vector<4x32xi1> to vector<4x32xi32>
    %396 = arith.sitofp %395 : vector<4x32xi32> to vector<4x32xf32>
    %cst_172 = arith.constant dense<0.000000e+00> : vector<4x128xf32>
    %397 = tpu.matmul %396, %146, %cst_172 {dimension_numbers = #tpu.dot_dimension_numbers<[1], [0], [0], [1], [0, 0, 1, 1], [], []>} : vector<4x32xf32>, vector<32x128xf32>, vector<4x128xf32> -> vector<4x128xf32>
    %398 = arith.mulf %397, %163 : vector<4x128xf32>
    %399 = arith.maximumf %390, %398 : vector<4x128xf32>
    %c0_173 = arith.constant 0 : index
    %c10 = arith.constant 10 : index
    %400 = vector.load %arg11[%c0_173, %c10] : memref<4x20xi32, #tpu.memory_space<vmem>>, vector<4x1xi32>
    %401 = vector.broadcast %400 : vector<4x1xi32> to vector<4x32xi32>
    %402 = vector.broadcast %0 : vector<1x32xi32> to vector<4x32xi32>
    %403 = arith.cmpi eq, %401, %402 : vector<4x32xi32>
    %404 = arith.extui %403 : vector<4x32xi1> to vector<4x32xi32>
    %405 = arith.sitofp %404 : vector<4x32xi32> to vector<4x32xf32>
    %cst_174 = arith.constant dense<0.000000e+00> : vector<4x128xf32>
    %406 = tpu.matmul %405, %146, %cst_174 {dimension_numbers = #tpu.dot_dimension_numbers<[1], [0], [0], [1], [0, 0, 1, 1], [], []>} : vector<4x32xf32>, vector<32x128xf32>, vector<4x128xf32> -> vector<4x128xf32>
    %407 = arith.mulf %406, %163 : vector<4x128xf32>
    %408 = arith.maximumf %399, %407 : vector<4x128xf32>
    %c0_175 = arith.constant 0 : index
    %c11 = arith.constant 11 : index
    %409 = vector.load %arg11[%c0_175, %c11] : memref<4x20xi32, #tpu.memory_space<vmem>>, vector<4x1xi32>
    %410 = vector.broadcast %409 : vector<4x1xi32> to vector<4x32xi32>
    %411 = vector.broadcast %0 : vector<1x32xi32> to vector<4x32xi32>
    %412 = arith.cmpi eq, %410, %411 : vector<4x32xi32>
    %413 = arith.extui %412 : vector<4x32xi1> to vector<4x32xi32>
    %414 = arith.sitofp %413 : vector<4x32xi32> to vector<4x32xf32>
    %cst_176 = arith.constant dense<0.000000e+00> : vector<4x128xf32>
    %415 = tpu.matmul %414, %146, %cst_176 {dimension_numbers = #tpu.dot_dimension_numbers<[1], [0], [0], [1], [0, 0, 1, 1], [], []>} : vector<4x32xf32>, vector<32x128xf32>, vector<4x128xf32> -> vector<4x128xf32>
    %416 = arith.mulf %415, %163 : vector<4x128xf32>
    %417 = arith.maximumf %408, %416 : vector<4x128xf32>
    %c0_177 = arith.constant 0 : index
    %c0_178 = arith.constant 0 : index
    %418 = vector.load %arg14[%c0_177, %c0_178] : memref<128x16xf32, #tpu.memory_space<vmem>>, vector<128x16xf32>
    %cst_179 = arith.constant dense<0.000000e+00> : vector<4x16xf32>
    %419 = tpu.matmul %417, %418, %cst_179 {dimension_numbers = #tpu.dot_dimension_numbers<[1], [0], [0], [1], [0, 0, 1, 1], [], []>} : vector<4x128xf32>, vector<128x16xf32>, vector<4x16xf32> -> vector<4x16xf32>
    %420 = arith.addf %271, %419 : vector<4x16xf32>
    %c0_180 = arith.constant 0 : index
    %c0_181 = arith.constant 0 : index
    %421 = vector.load %arg15[%c0_180, %c0_181] : memref<1x16xf32, #tpu.memory_space<vmem>>, vector<1x16xf32>
    %422 = vector.broadcast %421 : vector<1x16xf32> to vector<4x16xf32>
    %423 = arith.addf %420, %422 : vector<4x16xf32>
    %cst_182 = arith.constant 0.000000e+00 : f32
    %424 = vector.broadcast %cst_182 : f32 to vector<4x16xf32>
    %425 = arith.cmpf oge, %423, %424 : vector<4x16xf32>
    %cst_183 = arith.constant 0.00999999977 : f32
    %426 = vector.broadcast %cst_183 : f32 to vector<4x16xf32>
    %427 = arith.mulf %426, %423 : vector<4x16xf32>
    %428 = arith.select %425, %423, %427 : vector<4x16xi1>, vector<4x16xf32>
    %c0_184 = arith.constant 0 : index
    %c0_185 = arith.constant 0 : index
    %429 = vector.load %arg16[%c0_184, %c0_185] : memref<1x16xf32, #tpu.memory_space<vmem>>, vector<1x16xf32>
    %430 = vector.broadcast %429 : vector<1x16xf32> to vector<4x16xf32>
    %431 = arith.mulf %428, %430 : vector<4x16xf32>
    %cst_186 = arith.constant dense<0.000000e+00> : vector<4xf32>
    %432 = vector.multi_reduction <add>, %431, %cst_186 [1] : vector<4x16xf32> to vector<4xf32>
    %433 = vector.shape_cast %432 : vector<4xf32> to vector<4x1xf32>
    %c2_i32 = arith.constant 2 : i32
    %434 = vector.broadcast %c2_i32 : i32 to vector<4x1xi32>
    %435 = arith.cmpi sgt, %272, %434 : vector<4x1xi32>
    %cst_187 = arith.constant -1.000000e+30 : f32
    %436 = vector.broadcast %cst_187 : f32 to vector<4x1xf32>
    %437 = arith.select %435, %433, %436 : vector<4x1xi1>, vector<4x1xf32>
    %c0_188 = arith.constant 0 : index
    %c12 = arith.constant 12 : index
    %438 = vector.load %arg11[%c0_188, %c12] : memref<4x20xi32, #tpu.memory_space<vmem>>, vector<4x1xi32>
    %439 = vector.broadcast %438 : vector<4x1xi32> to vector<4x32xi32>
    %440 = vector.broadcast %0 : vector<1x32xi32> to vector<4x32xi32>
    %441 = arith.cmpi eq, %439, %440 : vector<4x32xi32>
    %442 = arith.extui %441 : vector<4x32xi1> to vector<4x32xi32>
    %443 = arith.sitofp %442 : vector<4x32xi32> to vector<4x32xf32>
    %cst_189 = arith.constant dense<0.000000e+00> : vector<4x128xf32>
    %444 = tpu.matmul %443, %146, %cst_189 {dimension_numbers = #tpu.dot_dimension_numbers<[1], [0], [0], [1], [0, 0, 1, 1], [], []>} : vector<4x32xf32>, vector<32x128xf32>, vector<4x128xf32> -> vector<4x128xf32>
    %445 = arith.mulf %444, %163 : vector<4x128xf32>
    %c0_190 = arith.constant 0 : index
    %c13 = arith.constant 13 : index
    %446 = vector.load %arg11[%c0_190, %c13] : memref<4x20xi32, #tpu.memory_space<vmem>>, vector<4x1xi32>
    %447 = vector.broadcast %446 : vector<4x1xi32> to vector<4x32xi32>
    %448 = vector.broadcast %0 : vector<1x32xi32> to vector<4x32xi32>
    %449 = arith.cmpi eq, %447, %448 : vector<4x32xi32>
    %450 = arith.extui %449 : vector<4x32xi1> to vector<4x32xi32>
    %451 = arith.sitofp %450 : vector<4x32xi32> to vector<4x32xf32>
    %cst_191 = arith.constant dense<0.000000e+00> : vector<4x128xf32>
    %452 = tpu.matmul %451, %146, %cst_191 {dimension_numbers = #tpu.dot_dimension_numbers<[1], [0], [0], [1], [0, 0, 1, 1], [], []>} : vector<4x32xf32>, vector<32x128xf32>, vector<4x128xf32> -> vector<4x128xf32>
    %453 = arith.mulf %452, %163 : vector<4x128xf32>
    %454 = arith.maximumf %445, %453 : vector<4x128xf32>
    %c0_192 = arith.constant 0 : index
    %c14 = arith.constant 14 : index
    %455 = vector.load %arg11[%c0_192, %c14] : memref<4x20xi32, #tpu.memory_space<vmem>>, vector<4x1xi32>
    %456 = vector.broadcast %455 : vector<4x1xi32> to vector<4x32xi32>
    %457 = vector.broadcast %0 : vector<1x32xi32> to vector<4x32xi32>
    %458 = arith.cmpi eq, %456, %457 : vector<4x32xi32>
    %459 = arith.extui %458 : vector<4x32xi1> to vector<4x32xi32>
    %460 = arith.sitofp %459 : vector<4x32xi32> to vector<4x32xf32>
    %cst_193 = arith.constant dense<0.000000e+00> : vector<4x128xf32>
    %461 = tpu.matmul %460, %146, %cst_193 {dimension_numbers = #tpu.dot_dimension_numbers<[1], [0], [0], [1], [0, 0, 1, 1], [], []>} : vector<4x32xf32>, vector<32x128xf32>, vector<4x128xf32> -> vector<4x128xf32>
    %462 = arith.mulf %461, %163 : vector<4x128xf32>
    %463 = arith.maximumf %454, %462 : vector<4x128xf32>
    %c0_194 = arith.constant 0 : index
    %c15 = arith.constant 15 : index
    %464 = vector.load %arg11[%c0_194, %c15] : memref<4x20xi32, #tpu.memory_space<vmem>>, vector<4x1xi32>
    %465 = vector.broadcast %464 : vector<4x1xi32> to vector<4x32xi32>
    %466 = vector.broadcast %0 : vector<1x32xi32> to vector<4x32xi32>
    %467 = arith.cmpi eq, %465, %466 : vector<4x32xi32>
    %468 = arith.extui %467 : vector<4x32xi1> to vector<4x32xi32>
    %469 = arith.sitofp %468 : vector<4x32xi32> to vector<4x32xf32>
    %cst_195 = arith.constant dense<0.000000e+00> : vector<4x128xf32>
    %470 = tpu.matmul %469, %146, %cst_195 {dimension_numbers = #tpu.dot_dimension_numbers<[1], [0], [0], [1], [0, 0, 1, 1], [], []>} : vector<4x32xf32>, vector<32x128xf32>, vector<4x128xf32> -> vector<4x128xf32>
    %471 = arith.mulf %470, %163 : vector<4x128xf32>
    %472 = arith.maximumf %463, %471 : vector<4x128xf32>
    %c0_196 = arith.constant 0 : index
    %c0_197 = arith.constant 0 : index
    %473 = vector.load %arg14[%c0_196, %c0_197] : memref<128x16xf32, #tpu.memory_space<vmem>>, vector<128x16xf32>
    %cst_198 = arith.constant dense<0.000000e+00> : vector<4x16xf32>
    %474 = tpu.matmul %472, %473, %cst_198 {dimension_numbers = #tpu.dot_dimension_numbers<[1], [0], [0], [1], [0, 0, 1, 1], [], []>} : vector<4x128xf32>, vector<128x16xf32>, vector<4x16xf32> -> vector<4x16xf32>
    %475 = arith.addf %271, %474 : vector<4x16xf32>
    %c0_199 = arith.constant 0 : index
    %c0_200 = arith.constant 0 : index
    %476 = vector.load %arg15[%c0_199, %c0_200] : memref<1x16xf32, #tpu.memory_space<vmem>>, vector<1x16xf32>
    %477 = vector.broadcast %476 : vector<1x16xf32> to vector<4x16xf32>
    %478 = arith.addf %475, %477 : vector<4x16xf32>
    %cst_201 = arith.constant 0.000000e+00 : f32
    %479 = vector.broadcast %cst_201 : f32 to vector<4x16xf32>
    %480 = arith.cmpf oge, %478, %479 : vector<4x16xf32>
    %cst_202 = arith.constant 0.00999999977 : f32
    %481 = vector.broadcast %cst_202 : f32 to vector<4x16xf32>
    %482 = arith.mulf %481, %478 : vector<4x16xf32>
    %483 = arith.select %480, %478, %482 : vector<4x16xi1>, vector<4x16xf32>
    %c0_203 = arith.constant 0 : index
    %c0_204 = arith.constant 0 : index
    %484 = vector.load %arg16[%c0_203, %c0_204] : memref<1x16xf32, #tpu.memory_space<vmem>>, vector<1x16xf32>
    %485 = vector.broadcast %484 : vector<1x16xf32> to vector<4x16xf32>
    %486 = arith.mulf %483, %485 : vector<4x16xf32>
    %cst_205 = arith.constant dense<0.000000e+00> : vector<4xf32>
    %487 = vector.multi_reduction <add>, %486, %cst_205 [1] : vector<4x16xf32> to vector<4xf32>
    %488 = vector.shape_cast %487 : vector<4xf32> to vector<4x1xf32>
    %c3_i32 = arith.constant 3 : i32
    %489 = vector.broadcast %c3_i32 : i32 to vector<4x1xi32>
    %490 = arith.cmpi sgt, %272, %489 : vector<4x1xi32>
    %cst_206 = arith.constant -1.000000e+30 : f32
    %491 = vector.broadcast %cst_206 : f32 to vector<4x1xf32>
    %492 = arith.select %490, %488, %491 : vector<4x1xi1>, vector<4x1xf32>
    %c0_207 = arith.constant 0 : index
    %c16 = arith.constant 16 : index
    %493 = vector.load %arg11[%c0_207, %c16] : memref<4x20xi32, #tpu.memory_space<vmem>>, vector<4x1xi32>
    %494 = vector.broadcast %493 : vector<4x1xi32> to vector<4x32xi32>
    %495 = vector.broadcast %0 : vector<1x32xi32> to vector<4x32xi32>
    %496 = arith.cmpi eq, %494, %495 : vector<4x32xi32>
    %497 = arith.extui %496 : vector<4x32xi1> to vector<4x32xi32>
    %498 = arith.sitofp %497 : vector<4x32xi32> to vector<4x32xf32>
    %cst_208 = arith.constant dense<0.000000e+00> : vector<4x128xf32>
    %499 = tpu.matmul %498, %146, %cst_208 {dimension_numbers = #tpu.dot_dimension_numbers<[1], [0], [0], [1], [0, 0, 1, 1], [], []>} : vector<4x32xf32>, vector<32x128xf32>, vector<4x128xf32> -> vector<4x128xf32>
    %500 = arith.mulf %499, %163 : vector<4x128xf32>
    %c0_209 = arith.constant 0 : index
    %c17 = arith.constant 17 : index
    %501 = vector.load %arg11[%c0_209, %c17] : memref<4x20xi32, #tpu.memory_space<vmem>>, vector<4x1xi32>
    %502 = vector.broadcast %501 : vector<4x1xi32> to vector<4x32xi32>
    %503 = vector.broadcast %0 : vector<1x32xi32> to vector<4x32xi32>
    %504 = arith.cmpi eq, %502, %503 : vector<4x32xi32>
    %505 = arith.extui %504 : vector<4x32xi1> to vector<4x32xi32>
    %506 = arith.sitofp %505 : vector<4x32xi32> to vector<4x32xf32>
    %cst_210 = arith.constant dense<0.000000e+00> : vector<4x128xf32>
    %507 = tpu.matmul %506, %146, %cst_210 {dimension_numbers = #tpu.dot_dimension_numbers<[1], [0], [0], [1], [0, 0, 1, 1], [], []>} : vector<4x32xf32>, vector<32x128xf32>, vector<4x128xf32> -> vector<4x128xf32>
    %508 = arith.mulf %507, %163 : vector<4x128xf32>
    %509 = arith.maximumf %500, %508 : vector<4x128xf32>
    %c0_211 = arith.constant 0 : index
    %c18 = arith.constant 18 : index
    %510 = vector.load %arg11[%c0_211, %c18] : memref<4x20xi32, #tpu.memory_space<vmem>>, vector<4x1xi32>
    %511 = vector.broadcast %510 : vector<4x1xi32> to vector<4x32xi32>
    %512 = vector.broadcast %0 : vector<1x32xi32> to vector<4x32xi32>
    %513 = arith.cmpi eq, %511, %512 : vector<4x32xi32>
    %514 = arith.extui %513 : vector<4x32xi1> to vector<4x32xi32>
    %515 = arith.sitofp %514 : vector<4x32xi32> to vector<4x32xf32>
    %cst_212 = arith.constant dense<0.000000e+00> : vector<4x128xf32>
    %516 = tpu.matmul %515, %146, %cst_212 {dimension_numbers = #tpu.dot_dimension_numbers<[1], [0], [0], [1], [0, 0, 1, 1], [], []>} : vector<4x32xf32>, vector<32x128xf32>, vector<4x128xf32> -> vector<4x128xf32>
    %517 = arith.mulf %516, %163 : vector<4x128xf32>
    %518 = arith.maximumf %509, %517 : vector<4x128xf32>
    %c0_213 = arith.constant 0 : index
    %c19 = arith.constant 19 : index
    %519 = vector.load %arg11[%c0_213, %c19] : memref<4x20xi32, #tpu.memory_space<vmem>>, vector<4x1xi32>
    %520 = vector.broadcast %519 : vector<4x1xi32> to vector<4x32xi32>
    %521 = vector.broadcast %0 : vector<1x32xi32> to vector<4x32xi32>
    %522 = arith.cmpi eq, %520, %521 : vector<4x32xi32>
    %523 = arith.extui %522 : vector<4x32xi1> to vector<4x32xi32>
    %524 = arith.sitofp %523 : vector<4x32xi32> to vector<4x32xf32>
    %cst_214 = arith.constant dense<0.000000e+00> : vector<4x128xf32>
    %525 = tpu.matmul %524, %146, %cst_214 {dimension_numbers = #tpu.dot_dimension_numbers<[1], [0], [0], [1], [0, 0, 1, 1], [], []>} : vector<4x32xf32>, vector<32x128xf32>, vector<4x128xf32> -> vector<4x128xf32>
    %526 = arith.mulf %525, %163 : vector<4x128xf32>
    %527 = arith.maximumf %518, %526 : vector<4x128xf32>
    %c0_215 = arith.constant 0 : index
    %c0_216 = arith.constant 0 : index
    %528 = vector.load %arg14[%c0_215, %c0_216] : memref<128x16xf32, #tpu.memory_space<vmem>>, vector<128x16xf32>
    %cst_217 = arith.constant dense<0.000000e+00> : vector<4x16xf32>
    %529 = tpu.matmul %527, %528, %cst_217 {dimension_numbers = #tpu.dot_dimension_numbers<[1], [0], [0], [1], [0, 0, 1, 1], [], []>} : vector<4x128xf32>, vector<128x16xf32>, vector<4x16xf32> -> vector<4x16xf32>
    %530 = arith.addf %271, %529 : vector<4x16xf32>
    %c0_218 = arith.constant 0 : index
    %c0_219 = arith.constant 0 : index
    %531 = vector.load %arg15[%c0_218, %c0_219] : memref<1x16xf32, #tpu.memory_space<vmem>>, vector<1x16xf32>
    %532 = vector.broadcast %531 : vector<1x16xf32> to vector<4x16xf32>
    %533 = arith.addf %530, %532 : vector<4x16xf32>
    %cst_220 = arith.constant 0.000000e+00 : f32
    %534 = vector.broadcast %cst_220 : f32 to vector<4x16xf32>
    %535 = arith.cmpf oge, %533, %534 : vector<4x16xf32>
    %cst_221 = arith.constant 0.00999999977 : f32
    %536 = vector.broadcast %cst_221 : f32 to vector<4x16xf32>
    %537 = arith.mulf %536, %533 : vector<4x16xf32>
    %538 = arith.select %535, %533, %537 : vector<4x16xi1>, vector<4x16xf32>
    %c0_222 = arith.constant 0 : index
    %c0_223 = arith.constant 0 : index
    %539 = vector.load %arg16[%c0_222, %c0_223] : memref<1x16xf32, #tpu.memory_space<vmem>>, vector<1x16xf32>
    %540 = vector.broadcast %539 : vector<1x16xf32> to vector<4x16xf32>
    %541 = arith.mulf %538, %540 : vector<4x16xf32>
    %cst_224 = arith.constant dense<0.000000e+00> : vector<4xf32>
    %542 = vector.multi_reduction <add>, %541, %cst_224 [1] : vector<4x16xf32> to vector<4xf32>
    %543 = vector.shape_cast %542 : vector<4xf32> to vector<4x1xf32>
    %c4_i32 = arith.constant 4 : i32
    %544 = vector.broadcast %c4_i32 : i32 to vector<4x1xi32>
    %545 = arith.cmpi sgt, %272, %544 : vector<4x1xi32>
    %cst_225 = arith.constant -1.000000e+30 : f32
    %546 = vector.broadcast %cst_225 : f32 to vector<4x1xf32>
    %547 = arith.select %545, %543, %546 : vector<4x1xi1>, vector<4x1xf32>
    %548 = arith.maximumf %327, %382 : vector<4x1xf32>
    %549 = arith.maximumf %548, %437 : vector<4x1xf32>
    %550 = arith.maximumf %549, %492 : vector<4x1xf32>
    %551 = arith.maximumf %550, %547 : vector<4x1xf32>
    %552 = arith.subf %327, %551 : vector<4x1xf32>
    %553 = math.exp %552 : vector<4x1xf32>
    %554 = arith.subf %382, %551 : vector<4x1xf32>
    %555 = math.exp %554 : vector<4x1xf32>
    %556 = arith.subf %437, %551 : vector<4x1xf32>
    %557 = math.exp %556 : vector<4x1xf32>
    %558 = arith.subf %492, %551 : vector<4x1xf32>
    %559 = math.exp %558 : vector<4x1xf32>
    %560 = arith.subf %547, %551 : vector<4x1xf32>
    %561 = math.exp %560 : vector<4x1xf32>
    %562 = arith.addf %553, %555 : vector<4x1xf32>
    %563 = arith.addf %562, %557 : vector<4x1xf32>
    %564 = arith.addf %563, %559 : vector<4x1xf32>
    %565 = arith.addf %564, %561 : vector<4x1xf32>
    %cst_226 = arith.constant 1.000000e+00 : f32
    %566 = vector.broadcast %cst_226 : f32 to vector<4x1xf32>
    %567 = arith.divf %566, %565 : vector<4x1xf32>
    %cst_227 = arith.constant 0.000000e+00 : f32
    %568 = vector.broadcast %cst_227 : f32 to vector<4x128xf32>
    %569 = arith.mulf %553, %567 : vector<4x1xf32>
    %570 = vector.broadcast %569 : vector<4x1xf32> to vector<4x128xf32>
    %571 = arith.mulf %570, %307 : vector<4x128xf32>
    %572 = arith.addf %568, %571 : vector<4x128xf32>
    %573 = arith.mulf %555, %567 : vector<4x1xf32>
    %574 = vector.broadcast %573 : vector<4x1xf32> to vector<4x128xf32>
    %575 = arith.mulf %574, %362 : vector<4x128xf32>
    %576 = arith.addf %572, %575 : vector<4x128xf32>
    %577 = arith.mulf %557, %567 : vector<4x1xf32>
    %578 = vector.broadcast %577 : vector<4x1xf32> to vector<4x128xf32>
    %579 = arith.mulf %578, %417 : vector<4x128xf32>
    %580 = arith.addf %576, %579 : vector<4x128xf32>
    %581 = arith.mulf %559, %567 : vector<4x1xf32>
    %582 = vector.broadcast %581 : vector<4x1xf32> to vector<4x128xf32>
    %583 = arith.mulf %582, %472 : vector<4x128xf32>
    %584 = arith.addf %580, %583 : vector<4x128xf32>
    %585 = arith.mulf %561, %567 : vector<4x1xf32>
    %586 = vector.broadcast %585 : vector<4x1xf32> to vector<4x128xf32>
    %587 = arith.mulf %586, %527 : vector<4x128xf32>
    %588 = arith.addf %584, %587 : vector<4x128xf32>
    %589 = arith.addf %269, %588 : vector<4x128xf32>
    %cst_228 = arith.constant 5.000000e-01 : f32
    %590 = vector.broadcast %cst_228 : f32 to vector<4x128xf32>
    %591 = arith.mulf %590, %589 : vector<4x128xf32>
    %c0_229 = arith.constant 0 : index
    %c0_230 = arith.constant 0 : index
    %592 = vector.load %arg17[%c0_229, %c0_230] : memref<128x144xf32, #tpu.memory_space<vmem>>, vector<128x144xf32>
    %cst_231 = arith.constant dense<0.000000e+00> : vector<4x144xf32>
    %593 = tpu.matmul %156, %592, %cst_231 {dimension_numbers = #tpu.dot_dimension_numbers<[1], [0], [0], [1], [0, 0, 1, 1], [], []>} : vector<4x128xf32>, vector<128x144xf32>, vector<4x144xf32> -> vector<4x144xf32>
    %c0_232 = arith.constant 0 : index
    %c0_233 = arith.constant 0 : index
    %594 = vector.load %arg18[%c0_232, %c0_233] : memref<128x144xf32, #tpu.memory_space<vmem>>, vector<128x144xf32>
    %cst_234 = arith.constant dense<0.000000e+00> : vector<4x144xf32>
    %595 = tpu.matmul %591, %594, %cst_234 {dimension_numbers = #tpu.dot_dimension_numbers<[1], [0], [0], [1], [0, 0, 1, 1], [], []>} : vector<4x128xf32>, vector<128x144xf32>, vector<4x144xf32> -> vector<4x144xf32>
    %596 = arith.addf %593, %595 : vector<4x144xf32>
    %c0_235 = arith.constant 0 : index
    %c0_236 = arith.constant 0 : index
    %597 = vector.load %arg19[%c0_235, %c0_236] : memref<128x144xf32, #tpu.memory_space<vmem>>, vector<128x144xf32>
    %cst_237 = arith.constant dense<0.000000e+00> : vector<4x144xf32>
    %598 = tpu.matmul %163, %597, %cst_237 {dimension_numbers = #tpu.dot_dimension_numbers<[1], [0], [0], [1], [0, 0, 1, 1], [], []>} : vector<4x128xf32>, vector<128x144xf32>, vector<4x144xf32> -> vector<4x144xf32>
    %599 = arith.addf %596, %598 : vector<4x144xf32>
    %c0_238 = arith.constant 0 : index
    %c0_239 = arith.constant 0 : index
    %600 = vector.load %arg20[%c0_238, %c0_239] : memref<128x144xf32, #tpu.memory_space<vmem>>, vector<128x144xf32>
    %cst_240 = arith.constant dense<0.000000e+00> : vector<4x144xf32>
    %601 = tpu.matmul %216, %600, %cst_240 {dimension_numbers = #tpu.dot_dimension_numbers<[1], [0], [0], [1], [0, 0, 1, 1], [], []>} : vector<4x128xf32>, vector<128x144xf32>, vector<4x144xf32> -> vector<4x144xf32>
    %602 = arith.addf %599, %601 : vector<4x144xf32>
    %c0_241 = arith.constant 0 : index
    %c0_242 = arith.constant 0 : index
    %603 = vector.load %arg21[%c0_241, %c0_242] : memref<1x144xf32, #tpu.memory_space<vmem>>, vector<1x144xf32>
    %604 = vector.broadcast %603 : vector<1x144xf32> to vector<4x144xf32>
    %605 = arith.addf %602, %604 : vector<4x144xf32>
    %cst_243 = arith.constant 0.000000e+00 : f32
    %606 = vector.broadcast %cst_243 : f32 to vector<4x144xf32>
    %607 = arith.cmpf oge, %605, %606 : vector<4x144xf32>
    %cst_244 = arith.constant 0.00999999977 : f32
    %608 = vector.broadcast %cst_244 : f32 to vector<4x144xf32>
    %609 = arith.mulf %608, %605 : vector<4x144xf32>
    %610 = arith.select %607, %605, %609 : vector<4x144xi1>, vector<4x144xf32>
    %c0_245 = arith.constant 0 : index
    %c0_246 = arith.constant 0 : index
    %611 = vector.load %arg22[%c0_245, %c0_246] : memref<1x144xf32, #tpu.memory_space<vmem>>, vector<1x144xf32>
    %612 = vector.broadcast %611 : vector<1x144xf32> to vector<4x144xf32>
    %613 = arith.mulf %610, %612 : vector<4x144xf32>
    %cst_247 = arith.constant dense<0.000000e+00> : vector<4xf32>
    %614 = vector.multi_reduction <add>, %613, %cst_247 [1] : vector<4x144xf32> to vector<4xf32>
    %615 = vector.shape_cast %614 : vector<4xf32> to vector<4x1xf32>
    %c0_248 = arith.constant 0 : index
    %c0_249 = arith.constant 0 : index
    %616 = vector.load %arg23[%c0_248, %c0_249] : memref<1x1xf32, #tpu.memory_space<vmem>>, vector<1x1xf32>
    %617 = vector.broadcast %616 : vector<1x1xf32> to vector<4x1xf32>
    %618 = arith.addf %615, %617 : vector<4x1xf32>
    %cst_250 = arith.constant 0.333333343 : f32
    %619 = vector.broadcast %cst_250 : f32 to vector<4x1xf32>
    %620 = arith.mulf %618, %619 : vector<4x1xf32>
    %c0_251 = arith.constant 0 : index
    %c0_252 = arith.constant 0 : index
    %621 = vector.load %arg24[%c0_251, %c0_252] : memref<4x1xf32, #tpu.memory_space<vmem>>, vector<4x1xf32>
    tpu.vector_store %arg24[%c0_251, %c0_252], %620 {strides = array<i32>} : memref<4x1xf32, #tpu.memory_space<vmem>>, vector<4x1xf32>,
    return
  }
}

</mosaic_0001>

<llo_original>
// kernel: final_net_forward.1
$region0: #{final_net_forward.1}
  #allocation0 [shape = 'u32[]', space=smem, size = 0x4, offset = 0x4, fixed_abs, tag = 'smem constant byte address 0x4 - core index']
  #allocation1 [shape = 'u32[144,128]{1,0:T(1,128)}', space=vmem, size = 0x12000, scoped, tag = 'internal scratch']
  #allocation2 [shape = 'f32[1,1]{1,0:T(1,128)S(1)}', space=vmem, size = 0x200, scoped, tag = 'scoped memory for final_net_forward.1']
  %s0 = inlined_call_operand.vmem [shape: f32[32,32], index: 0, kind: input, shape index: {}]
  %s1 = inlined_call_operand.vmem [shape: f32[32,32], index: 1, kind: input, shape index: {}]
  %s2 = inlined_call_operand.vmem [shape: f32[32,32], index: 2, kind: input, shape index: {}]
  %s3 = inlined_call_operand.vmem [shape: f32[32,32], index: 3, kind: input, shape index: {}]
  %s4 = inlined_call_operand.vmem [shape: f32[32,32], index: 4, kind: input, shape index: {}]
  %s5 = inlined_call_operand.vmem [shape: f32[6,32,32], index: 5, kind: input, shape index: {}]
  %s6 = inlined_call_operand.vmem [shape: f32[6,1,32], index: 6, kind: input, shape index: {}]
  %s7 = inlined_call_operand.vmem [shape: s32[4,1], index: 7, kind: input, shape index: {}]
  %s8 = inlined_call_operand.vmem [shape: s32[4,1], index: 8, kind: input, shape index: {}]
  %s9 = inlined_call_operand.vmem [shape: s32[4,6], index: 9, kind: input, shape index: {}]
  %s10 = inlined_call_operand.vmem [shape: s32[4,6], index: 10, kind: input, shape index: {}]
  %s11 = inlined_call_operand.vmem [shape: s32[4,20], index: 11, kind: input, shape index: {}]
  %s12 = inlined_call_operand.vmem [shape: s32[4,1], index: 12, kind: input, shape index: {}]
  %s13 = inlined_call_operand.vmem [shape: f32[128,16], index: 13, kind: input, shape index: {}]
  %s14 = inlined_call_operand.vmem [shape: f32[128,16], index: 14, kind: input, shape index: {}]
  %s15 = inlined_call_operand.vmem [shape: f32[1,16], index: 15, kind: input, shape index: {}]
  %s16 = inlined_call_operand.vmem [shape: f32[1,16], index: 16, kind: input, shape index: {}]
  %s17 = inlined_call_operand.vmem [shape: f32[128,144], index: 17, kind: input, shape index: {}]
  %s18 = inlined_call_operand.vmem [shape: f32[128,144], index: 18, kind: input, shape index: {}]
  %s19 = inlined_call_operand.vmem [shape: f32[128,144], index: 19, kind: input, shape index: {}]
  %s20 = inlined_call_operand.vmem [shape: f32[128,144], index: 20, kind: input, shape index: {}]
  %s21 = inlined_call_operand.vmem [shape: f32[1,144], index: 21, kind: input, shape index: {}]
  %s22 = inlined_call_operand.vmem [shape: f32[1,144], index: 22, kind: input, shape index: {}]
  %s23 = inlined_call_operand.<no memory space> [shape: f32[1,1], index: 23, kind: input, shape index: {}]
  %s24 = inlined_call_operand.vmem [shape: f32[4,1], index: 24, kind: output, shape index: {}]
  %s25 = sld [smem:[#allocation0]]
  $region106: #{final_net_forward.1} parent=0
    _
  %s27 = ssub.s32 1, %s25
  %s28 = scalar_select 0, %s27, %s25
  %v29 = vstv %s23
  %30 = vst [vmem:[#allocation2] sm:$0x1] %v29
  // Predicated region
  $region2: #{final_net_forward.1} parent=0 // pred_check
    _
  $region3: #{final_net_forward.1} parent=0 // pred_check_branch
    %32 = sbr.rel (0) target = $region5
  $region4: #{final_net_forward.1} parent=0 // pred_region
    _
  $region5: #{final_net_forward.1} parent=0 // pred_fallthru
    _
  // Predicated region
  $region6: #{final_net_forward.1} parent=0 // pred_check
    _
  $region7: #{final_net_forward.1} parent=0 // pred_check_branch
    %34 = sbr.rel (0) target = $region9
  $region8: #{final_net_forward.1} parent=0 // pred_region
    _
  $region9: #{final_net_forward.1} parent=0 // pred_fallthru
    _
  // Predicated region
  $region10: #{final_net_forward.1} parent=0 // pred_check
    _
  $region11: #{final_net_forward.1} parent=0 // pred_check_branch
    %36 = sbr.rel (0) target = $region13
  $region12: #{final_net_forward.1} parent=0 // pred_region
    _
  $region13: #{final_net_forward.1} parent=0 // pred_fallthru
    _
  // Predicated region
  $region14: #{final_net_forward.1} parent=0 // pred_check
    _
  $region15: #{final_net_forward.1} parent=0 // pred_check_branch
    %38 = sbr.rel (0) target = $region17
  $region16: #{final_net_forward.1} parent=0 // pred_region
    _
  $region17: #{final_net_forward.1} parent=0 // pred_fallthru
    _
  // Predicated region
  $region18: #{final_net_forward.1} parent=0 // pred_check
    _
  $region19: #{final_net_forward.1} parent=0 // pred_check_branch
    %40 = sbr.rel (0) target = $region21
  $region20: #{final_net_forward.1} parent=0 // pred_region
    _
  $region21: #{final_net_forward.1} parent=0 // pred_fallthru
    _
  // Predicated region
  $region22: #{final_net_forward.1} parent=0 // pred_check
    _
  $region23: #{final_net_forward.1} parent=0 // pred_check_branch
    %42 = sbr.rel (0) target = $region25
  $region24: #{final_net_forward.1} parent=0 // pred_region
    _
  $region25: #{final_net_forward.1} parent=0 // pred_fallthru
    _
  // Predicated region
  $region26: #{final_net_forward.1} parent=0 // pred_check
    _
  $region27: #{final_net_forward.1} parent=0 // pred_check_branch
    %44 = sbr.rel (0) target = $region29
  $region28: #{final_net_forward.1} parent=0 // pred_region
    _
  $region29: #{final_net_forward.1} parent=0 // pred_fallthru
    _
  // Predicated region
  $region30: #{final_net_forward.1} parent=0 // pred_check
    _
  $region31: #{final_net_forward.1} parent=0 // pred_check_branch
    %46 = sbr.rel (0) target = $region33
  $region32: #{final_net_forward.1} parent=0 // pred_region
    _
  $region33: #{final_net_forward.1} parent=0 // pred_fallthru
    _
  // Predicated region
  $region34: #{final_net_forward.1} parent=0 // pred_check
    _
  $region35: #{final_net_forward.1} parent=0 // pred_check_branch
    %48 = sbr.rel (0) target = $region37
  $region36: #{final_net_forward.1} parent=0 // pred_region
    _
  $region37: #{final_net_forward.1} parent=0 // pred_fallthru
    _
  // Predicated region
  $region38: #{final_net_forward.1} parent=0 // pred_check
    _
  $region39: #{final_net_forward.1} parent=0 // pred_check_branch
    %50 = sbr.rel (0) target = $region41
  $region40: #{final_net_forward.1} parent=0 // pred_region
    _
  $region41: #{final_net_forward.1} parent=0 // pred_fallthru
    _
  // Predicated region
  $region42: #{final_net_forward.1} parent=0 // pred_check
    _
  $region43: #{final_net_forward.1} parent=0 // pred_check_branch
    %52 = sbr.rel (0) target = $region45
  $region44: #{final_net_forward.1} parent=0 // pred_region
    _
  $region45: #{final_net_forward.1} parent=0 // pred_fallthru
    _
  // Predicated region
  $region46: #{final_net_forward.1} parent=0 // pred_check
    _
  $region47: #{final_net_forward.1} parent=0 // pred_check_branch
    %54 = sbr.rel (0) target = $region49
  $region48: #{final_net_forward.1} parent=0 // pred_region
    _
  $region49: #{final_net_forward.1} parent=0 // pred_fallthru
    _
  // Predicated region
  $region50: #{final_net_forward.1} parent=0 // pred_check
    _
  $region51: #{final_net_forward.1} parent=0 // pred_check_branch
    %56 = sbr.rel (0) target = $region53
  $region52: #{final_net_forward.1} parent=0 // pred_region
    _
  $region53: #{final_net_forward.1} parent=0 // pred_fallthru
    _
  // Predicated region
  $region54: #{final_net_forward.1} parent=0 // pred_check
    _
  $region55: #{final_net_forward.1} parent=0 // pred_check_branch
    %58 = sbr.rel (0) target = $region57
  $region56: #{final_net_forward.1} parent=0 // pred_region
    _
  $region57: #{final_net_forward.1} parent=0 // pred_fallthru
    _
  // Predicated region
  $region58: #{final_net_forward.1} parent=0 // pred_check
    _
  $region59: #{final_net_forward.1} parent=0 // pred_check_branch
    %60 = sbr.rel (0) target = $region61
  $region60: #{final_net_forward.1} parent=0 // pred_region
    _
  $region61: #{final_net_forward.1} parent=0 // pred_fallthru
    _
  // Predicated region
  $region62: #{final_net_forward.1} parent=0 // pred_check
    _
  $region63: #{final_net_forward.1} parent=0 // pred_check_branch
    %62 = sbr.rel (0) target = $region65
  $region64: #{final_net_forward.1} parent=0 // pred_region
    _
  $region65: #{final_net_forward.1} parent=0 // pred_fallthru
    _
  // Predicated region
  $region66: #{final_net_forward.1} parent=0 // pred_check
    _
  $region67: #{final_net_forward.1} parent=0 // pred_check_branch
    %64 = sbr.rel (0) target = $region69
  $region68: #{final_net_forward.1} parent=0 // pred_region
    _
  $region69: #{final_net_forward.1} parent=0 // pred_fallthru
    _
  // Predicated region
  $region70: #{final_net_forward.1} parent=0 // pred_check
    _
  $region71: #{final_net_forward.1} parent=0 // pred_check_branch
    %66 = sbr.rel (0) target = $region73
  $region72: #{final_net_forward.1} parent=0 // pred_region
    _
  $region73: #{final_net_forward.1} parent=0 // pred_fallthru
    _
  // Predicated region
  $region74: #{final_net_forward.1} parent=0 // pred_check
    _
  $region75: #{final_net_forward.1} parent=0 // pred_check_branch
    %68 = sbr.rel (0) target = $region77
  $region76: #{final_net_forward.1} parent=0 // pred_region
    _
  $region77: #{final_net_forward.1} parent=0 // pred_fallthru
    _
  // Predicated region
  $region78: #{final_net_forward.1} parent=0 // pred_check
    _
  $region79: #{final_net_forward.1} parent=0 // pred_check_branch
    %70 = sbr.rel (0) target = $region81
  $region80: #{final_net_forward.1} parent=0 // pred_region
    _
  $region81: #{final_net_forward.1} parent=0 // pred_fallthru
    _
  // Predicated region
  $region82: #{final_net_forward.1} parent=0 // pred_check
    _
  $region83: #{final_net_forward.1} parent=0 // pred_check_branch
    %72 = sbr.rel (0) target = $region85
  $region84: #{final_net_forward.1} parent=0 // pred_region
    _
  $region85: #{final_net_forward.1} parent=0 // pred_fallthru
    _
  // Predicated region
  $region86: #{final_net_forward.1} parent=0 // pred_check
    _
  $region87: #{final_net_forward.1} parent=0 // pred_check_branch
    %74 = sbr.rel (0) target = $region89
  $region88: #{final_net_forward.1} parent=0 // pred_region
    _
  $region89: #{final_net_forward.1} parent=0 // pred_fallthru
    _
  // Predicated region
  $region90: #{final_net_forward.1} parent=0 // pred_check
    _
  $region91: #{final_net_forward.1} parent=0 // pred_check_branch
    %76 = sbr.rel (0) target = $region93
  $region92: #{final_net_forward.1} parent=0 // pred_region
    _
  $region93: #{final_net_forward.1} parent=0 // pred_fallthru
    _
  // Predicated region
  $region94: #{final_net_forward.1} parent=0 // pred_check
    _
  $region95: #{final_net_forward.1} parent=0 // pred_check_branch
    %78 = sbr.rel (0) target = $region97
  $region96: #{final_net_forward.1} parent=0 // pred_region
    _
  $region97: #{final_net_forward.1} parent=0 // pred_fallthru
    _
  %v79 = vlaneseq
  %v80 = vand.u32 %v79, 127
  %v81 = vlaneseq
  %v82 = vshrl.u32 %v81, 7
  %v83 = vadd.s32 %v82, 8
  %v84 = vadd.s32 %v82, 16
  %v85 = vadd.s32 %v82, 24
  %vm86 = vcmp.ne.s32.totalorder %v82, 0
  %vm87 = vcmp.ne.s32.totalorder %v83, 0
  %vm88 = vcmp.ne.s32.totalorder %v84, 0
  %vm89 = vcmp.ne.s32.totalorder %v85, 0
  %v90 = vsel %vm86, 1, 0
  %v91 = vsel %vm87, 1, 0
  %v92 = vsel %vm88, 1, 0
  %v93 = vsel %vm89, 1, 0
  %v94 = vcvt.s32.f32 %v90
  %v95 = vcvt.s32.f32 %v91
  %v96 = vcvt.s32.f32 %v92
  %v97 = vcvt.s32.f32 %v93
  %v98 = vld [vmem:[%s0] sm:$0xff]
  %v99 = vld [vmem:[%s0 + $0x8] sm:$0xff]
  %v100 = vld [vmem:[%s0 + $0x10] sm:$0xff]
  %v101 = vld [vmem:[%s0 + $0x18] sm:$0xff]
  %v102 = vld [vmem:[%s1] sm:$0xff]
  %v103 = vld [vmem:[%s1 + $0x8] sm:$0xff]
  %v104 = vld [vmem:[%s1 + $0x10] sm:$0xff]
  %v105 = vld [vmem:[%s1 + $0x18] sm:$0xff]
  %v106 = vld [vmem:[%s2] sm:$0xff]
  %v107 = vld [vmem:[%s2 + $0x8] sm:$0xff]
  %v108 = vld [vmem:[%s2 + $0x10] sm:$0xff]
  %v109 = vld [vmem:[%s2 + $0x18] sm:$0xff]
  %v110 = vld [vmem:[%s5] sm:$0xff]
  %v111 = vld [vmem:[%s5 + $0x8] sm:$0xff]
  %v112 = vld [vmem:[%s5 + $0x10] sm:$0xff]
  %v113 = vld [vmem:[%s5 + $0x18] sm:$0xff]
  %v114 = vld [vmem:[%s6] sm:$0x1]
  %vm115 = vcmask 261120
  %v117 = vsel %vm115, %v106, 0
  %v120 = vsel %vm115, %v107, 0
  %v123 = vsel %vm115, %v108, 0
  %v126 = vsel %vm115, %v109, 0
  %128 = vmatprep.subr.mxu0 0.0
  %129 = vmatpush1.msra.mxu0 %v98
  %130 = vmatprep.subr.mxu0 0.0
  %131 = vmatpush1.msra.mxu0 %v99
  %132 = vmatprep.subr.mxu0 0.0
  %133 = vmatpush1.msra.mxu0 %v100
  %134 = vmatprep.subr.mxu0 0.0
  %135 = vmatpush1.msra.mxu0 %v101
  %136 = vmatprep.subr.mxu0 0.0
  %137 = vmatpush1.msra.mxu0 0.0
  %138 = vmatprep.subr.mxu0 0.0
  %139 = vmatpush1.msra.mxu0 0.0
  %140 = vmatprep.subr.mxu0 0.0
  %141 = vmatpush1.msra.mxu0 0.0
  %142 = vmatprep.subr.mxu0 0.0
  %143 = vmatpush1.msra.mxu0 0.0
  %144 = vmatprep.subr.mxu0 0.0
  %145 = vmatpush1.msra.mxu0 0.0
  %146 = vmatprep.subr.mxu0 0.0
  %147 = vmatpush1.msra.mxu0 0.0
  %148 = vmatprep.subr.mxu0 0.0
  %149 = vmatpush1.msra.mxu0 0.0
  %150 = vmatprep.subr.mxu0 0.0
  %151 = vmatpush1.msra.mxu0 0.0
  %152 = vmatprep.subr.mxu0 0.0
  %153 = vmatpush1.msra.mxu0 0.0
  %154 = vmatprep.subr.mxu0 0.0
  %155 = vmatpush1.msra.mxu0 0.0
  %156 = vmatprep.subr.mxu0 0.0
  %157 = vmatpush1.msra.mxu0 0.0
  %158 = vmatprep.subr.mxu0 0.0
  %159 = vmatpush1.msra.mxu0 0.0
  %160 = vmatprep.subr.mxu0 0.0
  %161 = vmatpush1.msra.mxu0 0.0
  %162 = vmatprep.subr.mxu0 0.0
  %163 = vmatpush1.msra.mxu0 0.0
  %164 = vmatprep.subr.mxu0 0.0
  %165 = vmatpush1.msra.mxu0 0.0
  %166 = vmatprep.subr.mxu0 0.0
  %167 = vmatpush1.msra.mxu0 0.0
  %168 = vmatprep.subr.mxu0 0.0
  %169 = vmatpush1.msra.mxu0 0.0
  %170 = vmatprep.subr.mxu0 0.0
  %171 = vmatpush1.msra.mxu0 0.0
  %172 = vmatprep.subr.mxu0 0.0
  %173 = vmatpush1.msra.mxu0 0.0
  %174 = vmatprep.subr.mxu0 0.0
  %175 = vmatpush1.msra.mxu0 0.0
  %176 = vmatprep.subr.mxu0 0.0
  %177 = vmatpush1.msra.mxu0 0.0
  %178 = vmatprep.subr.mxu0 0.0
  %179 = vmatpush1.msra.mxu0 0.0
  %180 = vmatprep.subr.mxu0 0.0
  %181 = vmatpush1.msra.mxu0 0.0
  %182 = vmatprep.subr.mxu0 0.0
  %183 = vmatpush1.msra.mxu0 0.0
  %184 = vmatprep.subr.mxu0 0.0
  %185 = vmatpush1.msra.mxu0 0.0
  %186 = vmatprep.subr.mxu0 0.0
  %187 = vmatpush1.msra.mxu0 0.0
  %188 = vmatprep.subr.mxu0 0.0
  %189 = vmatpush1.msra.mxu0 0.0
  %190 = vmatprep.subr.mxu0 0.0
  %191 = vmatpush1.msra.mxu0 0.0
  %192 = vmatprep.mubr.f32.mxu0 0.0
  %193 = vmatmul.mubr.f32.gmra.mrb[0].mxu0 %v117
  %v194 = vpop.f32.mrb[0].mxu0
  %v195 = vadd.f32 0.0, %v194
  %v196 = vpop.f32.mrb[0].mxu0
  %197 = vmatprep.mubr.f32.mxu0 0.0
  %198 = vmatmul.mubr.f32.gmra.mrb[0].mxu0 %v120
  %v199 = vpop.f32.mrb[0].mxu0
  %v200 = vadd.f32 0.0, %v199
  %v201 = vpop.f32.mrb[0].mxu0
  %202 = vmatprep.mubr.f32.mxu0 0.0
  %203 = vmatmul.mubr.f32.gmra.mrb[0].mxu0 %v123
  %v204 = vpop.f32.mrb[0].mxu0
  %v205 = vadd.f32 0.0, %v204
  %v206 = vpop.f32.mrb[0].mxu0
  %207 = vmatprep.mubr.f32.mxu0 0.0
  %208 = vmatmul.mubr.f32.gmra.mrb[0].mxu0 %v126
  %v209 = vpop.f32.mrb[0].mxu0
  %v210 = vadd.f32 0.0, %v209
  %v211 = vpop.f32.mrb[0].mxu0
  %212 = vdwg.mxu0
  %v214 = vlaneseq
  %v215 = vshrl.u32 %v214, 7
  %v216 = vsub.s32 0, %v215
  %v217 = vrot.slane %v114, %v216
  %v220 = vsel %vm115, %v195, 0
  %v223 = vsel %vm115, %v200, 0
  %v226 = vsel %vm115, %v205, 0
  %v229 = vsel %vm115, %v210, 0
  %231 = vmatprep.subr.mxu0 0.0
  %232 = vmatpush1.msra.mxu0 %v110
  %233 = vmatprep.subr.mxu0 0.0
  %234 = vmatpush1.msra.mxu0 %v111
  %235 = vmatprep.subr.mxu0 0.0
  %236 = vmatpush1.msra.mxu0 %v112
  %237 = vmatprep.subr.mxu0 0.0
  %238 = vmatpush1.msra.mxu0 %v113
  %239 = vmatprep.subr.mxu0 0.0
  %240 = vmatpush1.msra.mxu0 0.0
  %241 = vmatprep.subr.mxu0 0.0
  %242 = vmatpush1.msra.mxu0 0.0
  %243 = vmatprep.subr.mxu0 0.0
  %244 = vmatpush1.msra.mxu0 0.0
  %245 = vmatprep.subr.mxu0 0.0
  %246 = vmatpush1.msra.mxu0 0.0
  %247 = vmatprep.subr.mxu0 0.0
  %248 = vmatpush1.msra.mxu0 0.0
  %249 = vmatprep.subr.mxu0 0.0
  %250 = vmatpush1.msra.mxu0 0.0
  %251 = vmatprep.subr.mxu0 0.0
  %252 = vmatpush1.msra.mxu0 0.0
  %253 = vmatprep.subr.mxu0 0.0
  %254 = vmatpush1.msra.mxu0 0.0
  %255 = vmatprep.subr.mxu0 0.0
  %256 = vmatpush1.msra.mxu0 0.0
  %257 = vmatprep.subr.mxu0 0.0
  %258 = vmatpush1.msra.mxu0 0.0
  %259 = vmatprep.subr.mxu0 0.0
  %260 = vmatpush1.msra.mxu0 0.0
  %261 = vmatprep.subr.mxu0 0.0
  %262 = vmatpush1.msra.mxu0 0.0
  %263 = vmatprep.subr.mxu0 0.0
  %264 = vmatpush1.msra.mxu0 0.0
  %265 = vmatprep.subr.mxu0 0.0
  %266 = vmatpush1.msra.mxu0 0.0
  %267 = vmatprep.subr.mxu0 0.0
  %268 = vmatpush1.msra.mxu0 0.0
  %269 = vmatprep.subr.mxu0 0.0
  %270 = vmatpush1.msra.mxu0 0.0
  %271 = vmatprep.subr.mxu0 0.0
  %272 = vmatpush1.msra.mxu0 0.0
  %273 = vmatprep.subr.mxu0 0.0
  %274 = vmatpush1.msra.mxu0 0.0
  %275 = vmatprep.subr.mxu0 0.0
  %276 = vmatpush1.msra.mxu0 0.0
  %277 = vmatprep.subr.mxu0 0.0
  %278 = vmatpush1.msra.mxu0 0.0
  %279 = vmatprep.subr.mxu0 0.0
  %280 = vmatpush1.msra.mxu0 0.0
  %281 = vmatprep.subr.mxu0 0.0
  %282 = vmatpush1.msra.mxu0 0.0
  %283 = vmatprep.subr.mxu0 0.0
  %284 = vmatpush1.msra.mxu0 0.0
  %285 = vmatprep.subr.mxu0 0.0
  %286 = vmatpush1.msra.mxu0 0.0
  %287 = vmatprep.subr.mxu0 0.0
  %288 = vmatpush1.msra.mxu0 0.0
  %289 = vmatprep.subr.mxu0 0.0
  %290 = vmatpush1.msra.mxu0 0.0
  %291 = vmatprep.subr.mxu0 0.0
  %292 = vmatpush1.msra.mxu0 0.0
  %293 = vmatprep.subr.mxu0 0.0
  %294 = vmatpush1.msra.mxu0 0.0
  %295 = vmatprep.mubr.f32.mxu0 0.0
  %296 = vmatmul.mubr.f32.gmra.mrb[0].mxu0 %v220
  %v297 = vpop.f32.mrb[0].mxu0
  %v298 = vadd.f32 %v217, %v297
  %v299 = vpop.f32.mrb[0].mxu0
  %300 = vmatprep.mubr.f32.mxu0 0.0
  %301 = vmatmul.mubr.f32.gmra.mrb[0].mxu0 %v223
  %v302 = vpop.f32.mrb[0].mxu0
  %v303 = vadd.f32 %v217, %v302
  %v304 = vpop.f32.mrb[0].mxu0
  %305 = vmatprep.mubr.f32.mxu0 0.0
  %306 = vmatmul.mubr.f32.gmra.mrb[0].mxu0 %v226
  %v307 = vpop.f32.mrb[0].mxu0
  %v308 = vadd.f32 %v217, %v307
  %v309 = vpop.f32.mrb[0].mxu0
  %310 = vmatprep.mubr.f32.mxu0 0.0
  %311 = vmatmul.mubr.f32.gmra.mrb[0].mxu0 %v229
  %v312 = vpop.f32.mrb[0].mxu0
  %v313 = vadd.f32 %v217, %v312
  %v314 = vpop.f32.mrb[0].mxu0
  %315 = vdwg.mxu0
  %vm316 = vcmp.ge.f32.partialorder %v298, 0.0
  %vm317 = vcmp.ge.f32.partialorder %v303, 0.0
  %vm318 = vcmp.ge.f32.partialorder %v308, 0.0
  %vm319 = vcmp.ge.f32.partialorder %v313, 0.0
  %v320 = vmul.f32 %v298, 0.01
  %v321 = vmul.f32 %v303, 0.01
  %v322 = vmul.f32 %v308, 0.01
  %v323 = vmul.f32 %v313, 0.01
  %v324 = vsel %vm316, %v298, %v320
  %v325 = vsel %vm317, %v303, %v321
  %v326 = vsel %vm318, %v308, %v322
  %v327 = vsel %vm319, %v313, %v323
  %v328 = vmul.f32 %v324, %v324
  %v329 = vmul.f32 %v325, %v325
  %v330 = vmul.f32 %v326, %v326
  %v331 = vmul.f32 %v327, %v327
  %v332 = vsel %vm115, %v328, 0.0
  %333 = vadd.xlane.f32.xlu0 %v332
  %v334 = vpop.xlane.xlu0 %333
  %v335 = vsel %vm115, %v329, 0.0
  %336 = vadd.xlane.f32.xlu0 %v335
  %v337 = vpop.xlane.xlu0 %336
  %v338 = vsel %vm115, %v330, 0.0
  %339 = vadd.xlane.f32.xlu0 %v338
  %v340 = vpop.xlane.xlu0 %339
  %v341 = vsel %vm115, %v331, 0.0
  %342 = vadd.xlane.f32.xlu0 %v341
  %v343 = vpop.xlane.xlu0 %342
  %v344 = vrsqrt.pop %v334
  %v345 = vmul.f32 %v334, %v344
  %vm346 = vcmp.eq.f32.partialorder %v334, inf
  %v347 = vsel %vm346, %v334, %v345
  %vm348 = vcmp.eq.f32.partialorder %v334, 0.0
  %v349 = vand.u32 %v334, 2147483648
  %v350 = vsel %vm348, %v349, %v347
  %v351 = vrsqrt.pop %v337
  %v352 = vmul.f32 %v337, %v351
  %vm353 = vcmp.eq.f32.partialorder %v337, inf
  %v354 = vsel %vm353, %v337, %v352
  %vm355 = vcmp.eq.f32.partialorder %v337, 0.0
  %v356 = vand.u32 %v337, 2147483648
  %v357 = vsel %vm355, %v356, %v354
  %v358 = vrsqrt.pop %v340
  %v359 = vmul.f32 %v340, %v358
  %vm360 = vcmp.eq.f32.partialorder %v340, inf
  %v361 = vsel %vm360, %v340, %v359
  %vm362 = vcmp.eq.f32.partialorder %v340, 0.0
  %v363 = vand.u32 %v340, 2147483648
  %v364 = vsel %vm362, %v363, %v361
  %v365 = vrsqrt.pop %v343
  %v366 = vmul.f32 %v343, %v365
  %vm367 = vcmp.eq.f32.partialorder %v343, inf
  %v368 = vsel %vm367, %v343, %v366
  %vm369 = vcmp.eq.f32.partialorder %v343, 0.0
  %v370 = vand.u32 %v343, 2147483648
  %v371 = vsel %vm369, %v370, %v368
  %v372 = vmax.f32 %v350, 1e-12
  %v373 = vmax.f32 %v357, 1e-12
  %v374 = vmax.f32 %v364, 1e-12
  %v375 = vmax.f32 %v371, 1e-12
  %v376 = vrcp.pop %v372
  %v377 = vmul.f32 %v324, %v376
  %v378 = vrcp.pop %v373
  %v379 = vmul.f32 %v325, %v378
  %v380 = vrcp.pop %v374
  %v381 = vmul.f32 %v326, %v380
  %v382 = vrcp.pop %v375
  %v383 = vmul.f32 %v327, %v382
  %s384 = scalar_lea.vmem %s5, 32
  %v385 = vld [vmem:[%s384] sm:$0xff]
  %v386 = vld [vmem:[%s384 + $0x8] sm:$0xff]
  %v387 = vld [vmem:[%s384 + $0x10] sm:$0xff]
  %v388 = vld [vmem:[%s384 + $0x18] sm:$0xff]
  %s389 = scalar_lea.vmem %s6, 1
  %v390 = vld [vmem:[%s389] sm:$0x1]
  %391 = vmatprep.subr.mxu0 0.0
  %392 = vmatpush1.msra.mxu0 %v324
  %393 = vmatprep.subr.mxu0 0.0
  %394 = vmatpush1.msra.mxu0 %v325
  %395 = vmatprep.subr.mxu0 0.0
  %396 = vmatpush1.msra.mxu0 %v326
  %397 = vmatprep.subr.mxu0 0.0
  %398 = vmatpush1.msra.mxu0 %v327
  %399 = vmatprep.subr.mxu0 0.0
  %400 = vmatpush1.msra.mxu0 0.0
  %401 = vmatprep.subr.mxu0 0.0
  %402 = vmatpush1.msra.mxu0 0.0
  %403 = vmatprep.subr.mxu0 0.0
  %404 = vmatpush1.msra.mxu0 0.0
  %405 = vmatprep.subr.mxu0 0.0
  %406 = vmatpush1.msra.mxu0 0.0
  %407 = vmatprep.subr.mxu0 0.0
  %408 = vmatpush1.msra.mxu0 0.0
  %409 = vmatprep.subr.mxu0 0.0
  %410 = vmatpush1.msra.mxu0 0.0
  %411 = vmatprep.subr.mxu0 0.0
  %412 = vmatpush1.msra.mxu0 0.0
  %413 = vmatprep.subr.mxu0 0.0
  %414 = vmatpush1.msra.mxu0 0.0
  %415 = vmatprep.subr.mxu0 0.0
  %416 = vmatpush1.msra.mxu0 0.0
  %417 = vmatprep.subr.mxu0 0.0
  %418 = vmatpush1.msra.mxu0 0.0
  %419 = vmatprep.subr.mxu0 0.0
  %420 = vmatpush1.msra.mxu0 0.0
  %421 = vmatprep.subr.mxu0 0.0
  %422 = vmatpush1.msra.mxu0 0.0
  %423 = vmatprep.subr.mxu0 0.0
  %424 = vmatpush1.msra.mxu0 0.0
  %425 = vmatprep.subr.mxu0 0.0
  %426 = vmatpush1.msra.mxu0 0.0
  %427 = vmatprep.subr.mxu0 0.0
  %428 = vmatpush1.msra.mxu0 0.0
  %429 = vmatprep.subr.mxu0 0.0
  %430 = vmatpush1.msra.mxu0 0.0
  %431 = vmatprep.subr.mxu0 0.0
  %432 = vmatpush1.msra.mxu0 0.0
  %433 = vmatprep.subr.mxu0 0.0
  %434 = vmatpush1.msra.mxu0 0.0
  %435 = vmatprep.subr.mxu0 0.0
  %436 = vmatpush1.msra.mxu0 0.0
  %437 = vmatprep.subr.mxu0 0.0
  %438 = vmatpush1.msra.mxu0 0.0
  %439 = vmatprep.subr.mxu0 0.0
  %440 = vmatpush1.msra.mxu0 0.0
  %441 = vmatprep.subr.mxu0 0.0
  %442 = vmatpush1.msra.mxu0 0.0
  %443 = vmatprep.subr.mxu0 0.0
  %444 = vmatpush1.msra.mxu0 0.0
  %445 = vmatprep.subr.mxu0 0.0
  %446 = vmatpush1.msra.mxu0 0.0
  %447 = vmatprep.subr.mxu0 0.0
  %448 = vmatpush1.msra.mxu0 0.0
  %449 = vmatprep.subr.mxu0 0.0
  %450 = vmatpush1.msra.mxu0 0.0
  %451 = vmatprep.subr.mxu0 0.0
  %452 = vmatpush1.msra.mxu0 0.0
  %453 = vmatprep.subr.mxu0 0.0
  %454 = vmatpush1.msra.mxu0 0.0
  %455 = vmatprep.mubr.f32.mxu0 0.0
  %456 = vmatmul.mubr.f32.gmra.mrb[0].mxu0 %v117
  %v457 = vpop.f32.mrb[0].mxu0
  %v458 = vadd.f32 0.0, %v457
  %v459 = vpop.f32.mrb[0].mxu0
  %460 = vmatprep.mubr.f32.mxu0 0.0
  %461 = vmatmul.mubr.f32.gmra.mrb[0].mxu0 %v120
  %v462 = vpop.f32.mrb[0].mxu0
  %v463 = vadd.f32 0.0, %v462
  %v464 = vpop.f32.mrb[0].mxu0
  %465 = vmatprep.mubr.f32.mxu0 0.0
  %466 = vmatmul.mubr.f32.gmra.mrb[0].mxu0 %v123
  %v467 = vpop.f32.mrb[0].mxu0
  %v468 = vadd.f32 0.0, %v467
  %v469 = vpop.f32.mrb[0].mxu0
  %470 = vmatprep.mubr.f32.mxu0 0.0
  %471 = vmatmul.mubr.f32.gmra.mrb[0].mxu0 %v126
  %v472 = vpop.f32.mrb[0].mxu0
  %v473 = vadd.f32 0.0, %v472
  %v474 = vpop.f32.mrb[0].mxu0
  %475 = vdwg.mxu0
  %v477 = vlaneseq
  %v478 = vshrl.u32 %v477, 7
  %v479 = vsub.s32 0, %v478
  %v480 = vrot.slane %v390, %v479
  %v483 = vsel %vm115, %v458, 0
  %v486 = vsel %vm115, %v463, 0
  %v489 = vsel %vm115, %v468, 0
  %v492 = vsel %vm115, %v473, 0
  %494 = vmatprep.subr.mxu0 0.0
  %495 = vmatpush1.msra.mxu0 %v385
  %496 = vmatprep.subr.mxu0 0.0
  %497 = vmatpush1.msra.mxu0 %v386
  %498 = vmatprep.subr.mxu0 0.0
  %499 = vmatpush1.msra.mxu0 %v387
  %500 = vmatprep.subr.mxu0 0.0
  %501 = vmatpush1.msra.mxu0 %v388
  %502 = vmatprep.subr.mxu0 0.0
  %503 = vmatpush1.msra.mxu0 0.0
  %504 = vmatprep.subr.mxu0 0.0
  %505 = vmatpush1.msra.mxu0 0.0
  %506 = vmatprep.subr.mxu0 0.0
  %507 = vmatpush1.msra.mxu0 0.0
  %508 = vmatprep.subr.mxu0 0.0
  %509 = vmatpush1.msra.mxu0 0.0
  %510 = vmatprep.subr.mxu0 0.0
  %511 = vmatpush1.msra.mxu0 0.0
  %512 = vmatprep.subr.mxu0 0.0
  %513 = vmatpush1.msra.mxu0 0.0
  %514 = vmatprep.subr.mxu0 0.0
  %515 = vmatpush1.msra.mxu0 0.0
  %516 = vmatprep.subr.mxu0 0.0
  %517 = vmatpush1.msra.mxu0 0.0
  %518 = vmatprep.subr.mxu0 0.0
  %519 = vmatpush1.msra.mxu0 0.0
  %520 = vmatprep.subr.mxu0 0.0
  %521 = vmatpush1.msra.mxu0 0.0
  %522 = vmatprep.subr.mxu0 0.0
  %523 = vmatpush1.msra.mxu0 0.0
  %524 = vmatprep.subr.mxu0 0.0
  %525 = vmatpush1.msra.mxu0 0.0
  %526 = vmatprep.subr.mxu0 0.0
  %527 = vmatpush1.msra.mxu0 0.0
  %528 = vmatprep.subr.mxu0 0.0
  %529 = vmatpush1.msra.mxu0 0.0
  %530 = vmatprep.subr.mxu0 0.0
  %531 = vmatpush1.msra.mxu0 0.0
  %532 = vmatprep.subr.mxu0 0.0
  %533 = vmatpush1.msra.mxu0 0.0
  %534 = vmatprep.subr.mxu0 0.0
  %535 = vmatpush1.msra.mxu0 0.0
  %536 = vmatprep.subr.mxu0 0.0
  %537 = vmatpush1.msra.mxu0 0.0
  %538 = vmatprep.subr.mxu0 0.0
  %539 = vmatpush1.msra.mxu0 0.0
  %540 = vmatprep.subr.mxu0 0.0
  %541 = vmatpush1.msra.mxu0 0.0
  %542 = vmatprep.subr.mxu0 0.0
  %543 = vmatpush1.msra.mxu0 0.0
  %544 = vmatprep.subr.mxu0 0.0
  %545 = vmatpush1.msra.mxu0 0.0
  %546 = vmatprep.subr.mxu0 0.0
  %547 = vmatpush1.msra.mxu0 0.0
  %548 = vmatprep.subr.mxu0 0.0
  %549 = vmatpush1.msra.mxu0 0.0
  %550 = vmatprep.subr.mxu0 0.0
  %551 = vmatpush1.msra.mxu0 0.0
  %552 = vmatprep.subr.mxu0 0.0
  %553 = vmatpush1.msra.mxu0 0.0
  %554 = vmatprep.subr.mxu0 0.0
  %555 = vmatpush1.msra.mxu0 0.0
  %556 = vmatprep.subr.mxu0 0.0
  %557 = vmatpush1.msra.mxu0 0.0
  %558 = vmatprep.mubr.f32.mxu0 0.0
  %559 = vmatmul.mubr.f32.gmra.mrb[0].mxu0 %v483
  %v560 = vpop.f32.mrb[0].mxu0
  %v561 = vadd.f32 %v480, %v560
  %v562 = vpop.f32.mrb[0].mxu0
  %563 = vmatprep.mubr.f32.mxu0 0.0
  %564 = vmatmul.mubr.f32.gmra.mrb[0].mxu0 %v486
  %v565 = vpop.f32.mrb[0].mxu0
  %v566 = vadd.f32 %v480, %v565
  %v567 = vpop.f32.mrb[0].mxu0
  %568 = vmatprep.mubr.f32.mxu0 0.0
  %569 = vmatmul.mubr.f32.gmra.mrb[0].mxu0 %v489
  %v570 = vpop.f32.mrb[0].mxu0
  %v571 = vadd.f32 %v480, %v570
  %v572 = vpop.f32.mrb[0].mxu0
  %573 = vmatprep.mubr.f32.mxu0 0.0
  %574 = vmatmul.mubr.f32.gmra.mrb[0].mxu0 %v492
  %v575 = vpop.f32.mrb[0].mxu0
  %v576 = vadd.f32 %v480, %v575
  %v577 = vpop.f32.mrb[0].mxu0
  %578 = vdwg.mxu0
  %vm579 = vcmp.ge.f32.partialorder %v561, 0.0
  %vm580 = vcmp.ge.f32.partialorder %v566, 0.0
  %vm581 = vcmp.ge.f32.partialorder %v571, 0.0
  %vm582 = vcmp.ge.f32.partialorder %v576, 0.0
  %v583 = vmul.f32 %v561, 0.01
  %v584 = vmul.f32 %v566, 0.01
  %v585 = vmul.f32 %v571, 0.01
  %v586 = vmul.f32 %v576, 0.01
  %v587 = vsel %vm579, %v561, %v583
  %v588 = vsel %vm580, %v566, %v584
  %v589 = vsel %vm581, %v571, %v585
  %v590 = vsel %vm582, %v576, %v586
  %v591 = vmul.f32 %v587, %v587
  %v592 = vmul.f32 %v588, %v588
  %v593 = vmul.f32 %v589, %v589
  %v594 = vmul.f32 %v590, %v590
  %v595 = vsel %vm115, %v591, 0.0
  %596 = vadd.xlane.f32.xlu0 %v595
  %v597 = vpop.xlane.xlu0 %596
  %v598 = vsel %vm115, %v592, 0.0
  %599 = vadd.xlane.f32.xlu0 %v598
  %v600 = vpop.xlane.xlu0 %599
  %v601 = vsel %vm115, %v593, 0.0
  %602 = vadd.xlane.f32.xlu0 %v601
  %v603 = vpop.xlane.xlu0 %602
  %v604 = vsel %vm115, %v594, 0.0
  %605 = vadd.xlane.f32.xlu0 %v604
  %v606 = vpop.xlane.xlu0 %605
  %v607 = vrsqrt.pop %v597
  %v608 = vmul.f32 %v597, %v607
  %vm609 = vcmp.eq.f32.partialorder %v597, inf
  %v610 = vsel %vm609, %v597, %v608
  %vm611 = vcmp.eq.f32.partialorder %v597, 0.0
  %v612 = vand.u32 %v597, 2147483648
  %v613 = vsel %vm611, %v612, %v610
  %v614 = vrsqrt.pop %v600
  %v615 = vmul.f32 %v600, %v614
  %vm616 = vcmp.eq.f32.partialorder %v600, inf
  %v617 = vsel %vm616, %v600, %v615
  %vm618 = vcmp.eq.f32.partialorder %v600, 0.0
  %v619 = vand.u32 %v600, 2147483648
  %v620 = vsel %vm618, %v619, %v617
  %v621 = vrsqrt.pop %v603
  %v622 = vmul.f32 %v603, %v621
  %vm623 = vcmp.eq.f32.partialorder %v603, inf
  %v624 = vsel %vm623, %v603, %v622
  %vm625 = vcmp.eq.f32.partialorder %v603, 0.0
  %v626 = vand.u32 %v603, 2147483648
  %v627 = vsel %vm625, %v626, %v624
  %v628 = vrsqrt.pop %v606
  %v629 = vmul.f32 %v606, %v628
  %vm630 = vcmp.eq.f32.partialorder %v606, inf
  %v631 = vsel %vm630, %v606, %v629
  %vm632 = vcmp.eq.f32.partialorder %v606, 0.0
  %v633 = vand.u32 %v606, 2147483648
  %v634 = vsel %vm632, %v633, %v631
  %v635 = vmax.f32 %v613, 1e-12
  %v636 = vmax.f32 %v620, 1e-12
  %v637 = vmax.f32 %v627, 1e-12
  %v638 = vmax.f32 %v634, 1e-12
  %v639 = vrcp.pop %v635
  %v640 = vmul.f32 %v587, %v639
  %v641 = vrcp.pop %v636
  %v642 = vmul.f32 %v588, %v641
  %v643 = vrcp.pop %v637
  %v644 = vmul.f32 %v589, %v643
  %v645 = vrcp.pop %v638
  %v646 = vmul.f32 %v590, %v645
  %651 = vrot.lane.b32.xlu0 %v377, 32
  %v652 = vpop.permute.xlu0 %651
  %653 = vrot.lane.b32.xlu0 %v379, 32
  %v654 = vpop.permute.xlu0 %653
  %655 = vrot.lane.b32.xlu0 %v381, 32
  %v656 = vpop.permute.xlu0 %655
  %657 = vrot.lane.b32.xlu0 %v383, 32
  %v658 = vpop.permute.xlu0 %657
  %667 = vrot.lane.b32.xlu0 %v640, 64
  %v668 = vpop.permute.xlu0 %667
  %669 = vrot.lane.b32.xlu0 %v642, 64
  %v670 = vpop.permute.xlu0 %669
  %671 = vrot.lane.b32.xlu0 %v644, 64
  %v672 = vpop.permute.xlu0 %671
  %673 = vrot.lane.b32.xlu0 %v646, 64
  %v674 = vpop.permute.xlu0 %673
  %v679 = vsel %vm115, %v98, %v652
  %v680 = vsel %vm115, %v99, %v654
  %v681 = vsel %vm115, %v100, %v656
  %v682 = vsel %vm115, %v101, %v658
  %vm683 = vcmask 523264
  %v684 = vsel %vm683, %v679, %v668
  %v685 = vsel %vm683, %v680, %v670
  %v686 = vsel %vm683, %v681, %v672
  %v687 = vsel %vm683, %v682, %v674
  %vm688 = vcmask 785408
  %v689 = vsel %vm688, %v684, 0.0
  %v690 = vsel %vm688, %v685, 0.0
  %v691 = vsel %vm688, %v686, 0.0
  %v692 = vsel %vm688, %v687, 0.0
  %v693 = vmul.f32 %v689, %v94
  %v694 = vmul.f32 %v690, %v95
  %v695 = vmul.f32 %v691, %v96
  %v696 = vmul.f32 %v692, %v97
  %v697 = vld [vmem:[%s3] sm:$0xff]
  %v698 = vld [vmem:[%s3 + $0x8] sm:$0xff]
  %v699 = vld [vmem:[%s3 + $0x10] sm:$0xff]
  %v700 = vld [vmem:[%s3 + $0x18] sm:$0xff]
  %s701 = scalar_lea.vmem %s5, 64
  %v702 = vld [vmem:[%s701] sm:$0xff]
  %v703 = vld [vmem:[%s701 + $0x8] sm:$0xff]
  %v704 = vld [vmem:[%s701 + $0x10] sm:$0xff]
  %v705 = vld [vmem:[%s701 + $0x18] sm:$0xff]
  %s706 = scalar_lea.vmem %s6, 2
  %v707 = vld [vmem:[%s706] sm:$0x1]
  %v709 = vsel %vm115, %v697, 0
  %v712 = vsel %vm115, %v698, 0
  %v715 = vsel %vm115, %v699, 0
  %v718 = vsel %vm115, %v700, 0
  %720 = vmatprep.subr.mxu0 0.0
  %721 = vmatpush1.msra.mxu0 %v98
  %722 = vmatprep.subr.mxu0 0.0
  %723 = vmatpush1.msra.mxu0 %v99
  %724 = vmatprep.subr.mxu0 0.0
  %725 = vmatpush1.msra.mxu0 %v100
  %726 = vmatprep.subr.mxu0 0.0
  %727 = vmatpush1.msra.mxu0 %v101
  %728 = vmatprep.subr.mxu0 0.0
  %729 = vmatpush1.msra.mxu0 0.0
  %730 = vmatprep.subr.mxu0 0.0
  %731 = vmatpush1.msra.mxu0 0.0
  %732 = vmatprep.subr.mxu0 0.0
  %733 = vmatpush1.msra.mxu0 0.0
  %734 = vmatprep.subr.mxu0 0.0
  %735 = vmatpush1.msra.mxu0 0.0
  %736 = vmatprep.subr.mxu0 0.0
  %737 = vmatpush1.msra.mxu0 0.0
  %738 = vmatprep.subr.mxu0 0.0
  %739 = vmatpush1.msra.mxu0 0.0
  %740 = vmatprep.subr.mxu0 0.0
  %741 = vmatpush1.msra.mxu0 0.0
  %742 = vmatprep.subr.mxu0 0.0
  %743 = vmatpush1.msra.mxu0 0.0
  %744 = vmatprep.subr.mxu0 0.0
  %745 = vmatpush1.msra.mxu0 0.0
  %746 = vmatprep.subr.mxu0 0.0
  %747 = vmatpush1.msra.mxu0 0.0
  %748 = vmatprep.subr.mxu0 0.0
  %749 = vmatpush1.msra.mxu0 0.0
  %750 = vmatprep.subr.mxu0 0.0
  %751 = vmatpush1.msra.mxu0 0.0
  %752 = vmatprep.subr.mxu0 0.0
  %753 = vmatpush1.msra.mxu0 0.0
  %754 = vmatprep.subr.mxu0 0.0
  %755 = vmatpush1.msra.mxu0 0.0
  %756 = vmatprep.subr.mxu0 0.0
  %757 = vmatpush1.msra.mxu0 0.0
  %758 = vmatprep.subr.mxu0 0.0
  %759 = vmatpush1.msra.mxu0 0.0
  %760 = vmatprep.subr.mxu0 0.0
  %761 = vmatpush1.msra.mxu0 0.0
  %762 = vmatprep.subr.mxu0 0.0
  %763 = vmatpush1.msra.mxu0 0.0
  %764 = vmatprep.subr.mxu0 0.0
  %765 = vmatpush1.msra.mxu0 0.0
  %766 = vmatprep.subr.mxu0 0.0
  %767 = vmatpush1.msra.mxu0 0.0
  %768 = vmatprep.subr.mxu0 0.0
  %769 = vmatpush1.msra.mxu0 0.0
  %770 = vmatprep.subr.mxu0 0.0
  %771 = vmatpush1.msra.mxu0 0.0
  %772 = vmatprep.subr.mxu0 0.0
  %773 = vmatpush1.msra.mxu0 0.0
  %774 = vmatprep.subr.mxu0 0.0
  %775 = vmatpush1.msra.mxu0 0.0
  %776 = vmatprep.subr.mxu0 0.0
  %777 = vmatpush1.msra.mxu0 0.0
  %778 = vmatprep.subr.mxu0 0.0
  %779 = vmatpush1.msra.mxu0 0.0
  %780 = vmatprep.subr.mxu0 0.0
  %781 = vmatpush1.msra.mxu0 0.0
  %782 = vmatprep.subr.mxu0 0.0
  %783 = vmatpush1.msra.mxu0 0.0
  %784 = vmatprep.mubr.f32.mxu0 0.0
  %785 = vmatmul.mubr.f32.gmra.mrb[0].mxu0 %v709
  %v786 = vpop.f32.mrb[0].mxu0
  %v787 = vadd.f32 0.0, %v786
  %v788 = vpop.f32.mrb[0].mxu0
  %789 = vmatprep.mubr.f32.mxu0 0.0
  %790 = vmatmul.mubr.f32.gmra.mrb[0].mxu0 %v712
  %v791 = vpop.f32.mrb[0].mxu0
  %v792 = vadd.f32 0.0, %v791
  %v793 = vpop.f32.mrb[0].mxu0
  %794 = vmatprep.mubr.f32.mxu0 0.0
  %795 = vmatmul.mubr.f32.gmra.mrb[0].mxu0 %v715
  %v796 = vpop.f32.mrb[0].mxu0
  %v797 = vadd.f32 0.0, %v796
  %v798 = vpop.f32.mrb[0].mxu0
  %799 = vmatprep.mubr.f32.mxu0 0.0
  %800 = vmatmul.mubr.f32.gmra.mrb[0].mxu0 %v718
  %v801 = vpop.f32.mrb[0].mxu0
  %v802 = vadd.f32 0.0, %v801
  %v803 = vpop.f32.mrb[0].mxu0
  %804 = vdwg.mxu0
  %v806 = vlaneseq
  %v807 = vshrl.u32 %v806, 7
  %v808 = vsub.s32 0, %v807
  %v809 = vrot.slane %v707, %v808
  %v812 = vsel %vm115, %v787, 0
  %v815 = vsel %vm115, %v792, 0
  %v818 = vsel %vm115, %v797, 0
  %v821 = vsel %vm115, %v802, 0
  %823 = vmatprep.subr.mxu0 0.0
  %824 = vmatpush1.msra.mxu0 %v702
  %825 = vmatprep.subr.mxu0 0.0
  %826 = vmatpush1.msra.mxu0 %v703
  %827 = vmatprep.subr.mxu0 0.0
  %828 = vmatpush1.msra.mxu0 %v704
  %829 = vmatprep.subr.mxu0 0.0
  %830 = vmatpush1.msra.mxu0 %v705
  %831 = vmatprep.subr.mxu0 0.0
  %832 = vmatpush1.msra.mxu0 0.0
  %833 = vmatprep.subr.mxu0 0.0
  %834 = vmatpush1.msra.mxu0 0.0
  %835 = vmatprep.subr.mxu0 0.0
  %836 = vmatpush1.msra.mxu0 0.0
  %837 = vmatprep.subr.mxu0 0.0
  %838 = vmatpush1.msra.mxu0 0.0
  %839 = vmatprep.subr.mxu0 0.0
  %840 = vmatpush1.msra.mxu0 0.0
  %841 = vmatprep.subr.mxu0 0.0
  %842 = vmatpush1.msra.mxu0 0.0
  %843 = vmatprep.subr.mxu0 0.0
  %844 = vmatpush1.msra.mxu0 0.0
  %845 = vmatprep.subr.mxu0 0.0
  %846 = vmatpush1.msra.mxu0 0.0
  %847 = vmatprep.subr.mxu0 0.0
  %848 = vmatpush1.msra.mxu0 0.0
  %849 = vmatprep.subr.mxu0 0.0
  %850 = vmatpush1.msra.mxu0 0.0
  %851 = vmatprep.subr.mxu0 0.0
  %852 = vmatpush1.msra.mxu0 0.0
  %853 = vmatprep.subr.mxu0 0.0
  %854 = vmatpush1.msra.mxu0 0.0
  %855 = vmatprep.subr.mxu0 0.0
  %856 = vmatpush1.msra.mxu0 0.0
  %857 = vmatprep.subr.mxu0 0.0
  %858 = vmatpush1.msra.mxu0 0.0
  %859 = vmatprep.subr.mxu0 0.0
  %860 = vmatpush1.msra.mxu0 0.0
  %861 = vmatprep.subr.mxu0 0.0
  %862 = vmatpush1.msra.mxu0 0.0
  %863 = vmatprep.subr.mxu0 0.0
  %864 = vmatpush1.msra.mxu0 0.0
  %865 = vmatprep.subr.mxu0 0.0
  %866 = vmatpush1.msra.mxu0 0.0
  %867 = vmatprep.subr.mxu0 0.0
  %868 = vmatpush1.msra.mxu0 0.0
  %869 = vmatprep.subr.mxu0 0.0
  %870 = vmatpush1.msra.mxu0 0.0
  %871 = vmatprep.subr.mxu0 0.0
  %872 = vmatpush1.msra.mxu0 0.0
  %873 = vmatprep.subr.mxu0 0.0
  %874 = vmatpush1.msra.mxu0 0.0
  %875 = vmatprep.subr.mxu0 0.0
  %876 = vmatpush1.msra.mxu0 0.0
  %877 = vmatprep.subr.mxu0 0.0
  %878 = vmatpush1.msra.mxu0 0.0
  %879 = vmatprep.subr.mxu0 0.0
  %880 = vmatpush1.msra.mxu0 0.0
  %881 = vmatprep.subr.mxu0 0.0
  %882 = vmatpush1.msra.mxu0 0.0
  %883 = vmatprep.subr.mxu0 0.0
  %884 = vmatpush1.msra.mxu0 0.0
  %885 = vmatprep.subr.mxu0 0.0
  %886 = vmatpush1.msra.mxu0 0.0
  %887 = vmatprep.mubr.f32.mxu0 0.0
  %888 = vmatmul.mubr.f32.gmra.mrb[0].mxu0 %v812
  %v889 = vpop.f32.mrb[0].mxu0
  %v890 = vadd.f32 %v809, %v889
  %v891 = vpop.f32.mrb[0].mxu0
  %892 = vmatprep.mubr.f32.mxu0 0.0
  %893 = vmatmul.mubr.f32.gmra.mrb[0].mxu0 %v815
  %v894 = vpop.f32.mrb[0].mxu0
  %v895 = vadd.f32 %v809, %v894
  %v896 = vpop.f32.mrb[0].mxu0
  %897 = vmatprep.mubr.f32.mxu0 0.0
  %898 = vmatmul.mubr.f32.gmra.mrb[0].mxu0 %v818
  %v899 = vpop.f32.mrb[0].mxu0
  %v900 = vadd.f32 %v809, %v899
  %v901 = vpop.f32.mrb[0].mxu0
  %902 = vmatprep.mubr.f32.mxu0 0.0
  %903 = vmatmul.mubr.f32.gmra.mrb[0].mxu0 %v821
  %v904 = vpop.f32.mrb[0].mxu0
  %v905 = vadd.f32 %v809, %v904
  %v906 = vpop.f32.mrb[0].mxu0
  %907 = vdwg.mxu0
  %vm908 = vcmp.ge.f32.partialorder %v890, 0.0
  %vm909 = vcmp.ge.f32.partialorder %v895, 0.0
  %vm910 = vcmp.ge.f32.partialorder %v900, 0.0
  %vm911 = vcmp.ge.f32.partialorder %v905, 0.0
  %v912 = vmul.f32 %v890, 0.01
  %v913 = vmul.f32 %v895, 0.01
  %v914 = vmul.f32 %v900, 0.01
  %v915 = vmul.f32 %v905, 0.01
  %v916 = vsel %vm908, %v890, %v912
  %v917 = vsel %vm909, %v895, %v913
  %v918 = vsel %vm910, %v900, %v914
  %v919 = vsel %vm911, %v905, %v915
  %v920 = vmul.f32 %v916, %v916
  %v921 = vmul.f32 %v917, %v917
  %v922 = vmul.f32 %v918, %v918
  %v923 = vmul.f32 %v919, %v919
  %v924 = vsel %vm115, %v920, 0.0
  %925 = vadd.xlane.f32.xlu0 %v924
  %v926 = vpop.xlane.xlu0 %925
  %v927 = vsel %vm115, %v921, 0.0
  %928 = vadd.xlane.f32.xlu0 %v927
  %v929 = vpop.xlane.xlu0 %928
  %v930 = vsel %vm115, %v922, 0.0
  %931 = vadd.xlane.f32.xlu0 %v930
  %v932 = vpop.xlane.xlu0 %931
  %v933 = vsel %vm115, %v923, 0.0
  %934 = vadd.xlane.f32.xlu0 %v933
  %v935 = vpop.xlane.xlu0 %934
  %v936 = vrsqrt.pop %v926
  %v937 = vmul.f32 %v926, %v936
  %vm938 = vcmp.eq.f32.partialorder %v926, inf
  %v939 = vsel %vm938, %v926, %v937
  %vm940 = vcmp.eq.f32.partialorder %v926, 0.0
  %v941 = vand.u32 %v926, 2147483648
  %v942 = vsel %vm940, %v941, %v939
  %v943 = vrsqrt.pop %v929
  %v944 = vmul.f32 %v929, %v943
  %vm945 = vcmp.eq.f32.partialorder %v929, inf
  %v946 = vsel %vm945, %v929, %v944
  %vm947 = vcmp.eq.f32.partialorder %v929, 0.0
  %v948 = vand.u32 %v929, 2147483648
  %v949 = vsel %vm947, %v948, %v946
  %v950 = vrsqrt.pop %v932
  %v951 = vmul.f32 %v932, %v950
  %vm952 = vcmp.eq.f32.partialorder %v932, inf
  %v953 = vsel %vm952, %v932, %v951
  %vm954 = vcmp.eq.f32.partialorder %v932, 0.0
  %v955 = vand.u32 %v932, 2147483648
  %v956 = vsel %vm954, %v955, %v953
  %v957 = vrsqrt.pop %v935
  %v958 = vmul.f32 %v935, %v957
  %vm959 = vcmp.eq.f32.partialorder %v935, inf
  %v960 = vsel %vm959, %v935, %v958
  %vm961 = vcmp.eq.f32.partialorder %v935, 0.0
  %v962 = vand.u32 %v935, 2147483648
  %v963 = vsel %vm961, %v962, %v960
  %v964 = vmax.f32 %v942, 1e-12
  %v965 = vmax.f32 %v949, 1e-12
  %v966 = vmax.f32 %v956, 1e-12
  %v967 = vmax.f32 %v963, 1e-12
  %v968 = vrcp.pop %v964
  %v969 = vmul.f32 %v916, %v968
  %v970 = vrcp.pop %v965
  %v971 = vmul.f32 %v917, %v970
  %v972 = vrcp.pop %v966
  %v973 = vmul.f32 %v918, %v972
  %v974 = vrcp.pop %v967
  %v975 = vmul.f32 %v919, %v974
  %s976 = scalar_lea.vmem %s5, 96
  %v977 = vld [vmem:[%s976] sm:$0xff]
  %v978 = vld [vmem:[%s976 + $0x8] sm:$0xff]
  %v979 = vld [vmem:[%s976 + $0x10] sm:$0xff]
  %v980 = vld [vmem:[%s976 + $0x18] sm:$0xff]
  %s981 = scalar_lea.vmem %s6, 3
  %v982 = vld [vmem:[%s981] sm:$0x1]
  %983 = vmatprep.subr.mxu0 0.0
  %984 = vmatpush1.msra.mxu0 %v916
  %985 = vmatprep.subr.mxu0 0.0
  %986 = vmatpush1.msra.mxu0 %v917
  %987 = vmatprep.subr.mxu0 0.0
  %988 = vmatpush1.msra.mxu0 %v918
  %989 = vmatprep.subr.mxu0 0.0
  %990 = vmatpush1.msra.mxu0 %v919
  %991 = vmatprep.subr.mxu0 0.0
  %992 = vmatpush1.msra.mxu0 0.0
  %993 = vmatprep.subr.mxu0 0.0
  %994 = vmatpush1.msra.mxu0 0.0
  %995 = vmatprep.subr.mxu0 0.0
  %996 = vmatpush1.msra.mxu0 0.0
  %997 = vmatprep.subr.mxu0 0.0
  %998 = vmatpush1.msra.mxu0 0.0
  %999 = vmatprep.subr.mxu0 0.0
  %1000 = vmatpush1.msra.mxu0 0.0
  %1001 = vmatprep.subr.mxu0 0.0
  %1002 = vmatpush1.msra.mxu0 0.0
  %1003 = vmatprep.subr.mxu0 0.0
  %1004 = vmatpush1.msra.mxu0 0.0
  %1005 = vmatprep.subr.mxu0 0.0
  %1006 = vmatpush1.msra.mxu0 0.0
  %1007 = vmatprep.subr.mxu0 0.0
  %1008 = vmatpush1.msra.mxu0 0.0
  %1009 = vmatprep.subr.mxu0 0.0
  %1010 = vmatpush1.msra.mxu0 0.0
  %1011 = vmatprep.subr.mxu0 0.0
  %1012 = vmatpush1.msra.mxu0 0.0
  %1013 = vmatprep.subr.mxu0 0.0
  %1014 = vmatpush1.msra.mxu0 0.0
  %1015 = vmatprep.subr.mxu0 0.0
  %1016 = vmatpush1.msra.mxu0 0.0
  %1017 = vmatprep.subr.mxu0 0.0
  %1018 = vmatpush1.msra.mxu0 0.0
  %1019 = vmatprep.subr.mxu0 0.0
  %1020 = vmatpush1.msra.mxu0 0.0
  %1021 = vmatprep.subr.mxu0 0.0
  %1022 = vmatpush1.msra.mxu0 0.0
  %1023 = vmatprep.subr.mxu0 0.0
  %1024 = vmatpush1.msra.mxu0 0.0
  %1025 = vmatprep.subr.mxu0 0.0
  %1026 = vmatpush1.msra.mxu0 0.0
  %1027 = vmatprep.subr.mxu0 0.0
  %1028 = vmatpush1.msra.mxu0 0.0
  %1029 = vmatprep.subr.mxu0 0.0
  %1030 = vmatpush1.msra.mxu0 0.0
  %1031 = vmatprep.subr.mxu0 0.0
  %1032 = vmatpush1.msra.mxu0 0.0
  %1033 = vmatprep.subr.mxu0 0.0
  %1034 = vmatpush1.msra.mxu0 0.0
  %1035 = vmatprep.subr.mxu0 0.0
  %1036 = vmatpush1.msra.mxu0 0.0
  %1037 = vmatprep.subr.mxu0 0.0
  %1038 = vmatpush1.msra.mxu0 0.0
  %1039 = vmatprep.subr.mxu0 0.0
  %1040 = vmatpush1.msra.mxu0 0.0
  %1041 = vmatprep.subr.mxu0 0.0
  %1042 = vmatpush1.msra.mxu0 0.0
  %1043 = vmatprep.subr.mxu0 0.0
  %1044 = vmatpush1.msra.mxu0 0.0
  %1045 = vmatprep.subr.mxu0 0.0
  %1046 = vmatpush1.msra.mxu0 0.0
  %1047 = vmatprep.mubr.f32.mxu0 0.0
  %1048 = vmatmul.mubr.f32.gmra.mrb[0].mxu0 %v709
  %v1049 = vpop.f32.mrb[0].mxu0
  %v1050 = vadd.f32 0.0, %v1049
  %v1051 = vpop.f32.mrb[0].mxu0
  %1052 = vmatprep.mubr.f32.mxu0 0.0
  %1053 = vmatmul.mubr.f32.gmra.mrb[0].mxu0 %v712
  %v1054 = vpop.f32.mrb[0].mxu0
  %v1055 = vadd.f32 0.0, %v1054
  %v1056 = vpop.f32.mrb[0].mxu0
  %1057 = vmatprep.mubr.f32.mxu0 0.0
  %1058 = vmatmul.mubr.f32.gmra.mrb[0].mxu0 %v715
  %v1059 = vpop.f32.mrb[0].mxu0
  %v1060 = vadd.f32 0.0, %v1059
  %v1061 = vpop.f32.mrb[0].mxu0
  %1062 = vmatprep.mubr.f32.mxu0 0.0
  %1063 = vmatmul.mubr.f32.gmra.mrb[0].mxu0 %v718
  %v1064 = vpop.f32.mrb[0].mxu0
  %v1065 = vadd.f32 0.0, %v1064
  %v1066 = vpop.f32.mrb[0].mxu0
  %1067 = vdwg.mxu0
  %v1069 = vlaneseq
  %v1070 = vshrl.u32 %v1069, 7
  %v1071 = vsub.s32 0, %v1070
  %v1072 = vrot.slane %v982, %v1071
  %v1075 = vsel %vm115, %v1050, 0
  %v1078 = vsel %vm115, %v1055, 0
  %v1081 = vsel %vm115, %v1060, 0
  %v1084 = vsel %vm115, %v1065, 0
  %1086 = vmatprep.subr.mxu0 0.0
  %1087 = vmatpush1.msra.mxu0 %v977
  %1088 = vmatprep.subr.mxu0 0.0
  %1089 = vmatpush1.msra.mxu0 %v978
  %1090 = vmatprep.subr.mxu0 0.0
  %1091 = vmatpush1.msra.mxu0 %v979
  %1092 = vmatprep.subr.mxu0 0.0
  %1093 = vmatpush1.msra.mxu0 %v980
  %1094 = vmatprep.subr.mxu0 0.0
  %1095 = vmatpush1.msra.mxu0 0.0
  %1096 = vmatprep.subr.mxu0 0.0
  %1097 = vmatpush1.msra.mxu0 0.0
  %1098 = vmatprep.subr.mxu0 0.0
  %1099 = vmatpush1.msra.mxu0 0.0
  %1100 = vmatprep.subr.mxu0 0.0
  %1101 = vmatpush1.msra.mxu0 0.0
  %1102 = vmatprep.subr.mxu0 0.0
  %1103 = vmatpush1.msra.mxu0 0.0
  %1104 = vmatprep.subr.mxu0 0.0
  %1105 = vmatpush1.msra.mxu0 0.0
  %1106 = vmatprep.subr.mxu0 0.0
  %1107 = vmatpush1.msra.mxu0 0.0
  %1108 = vmatprep.subr.mxu0 0.0
  %1109 = vmatpush1.msra.mxu0 0.0
  %1110 = vmatprep.subr.mxu0 0.0
  %1111 = vmatpush1.msra.mxu0 0.0
  %1112 = vmatprep.subr.mxu0 0.0
  %1113 = vmatpush1.msra.mxu0 0.0
  %1114 = vmatprep.subr.mxu0 0.0
  %1115 = vmatpush1.msra.mxu0 0.0
  %1116 = vmatprep.subr.mxu0 0.0
  %1117 = vmatpush1.msra.mxu0 0.0
  %1118 = vmatprep.subr.mxu0 0.0
  %1119 = vmatpush1.msra.mxu0 0.0
  %1120 = vmatprep.subr.mxu0 0.0
  %1121 = vmatpush1.msra.mxu0 0.0
  %1122 = vmatprep.subr.mxu0 0.0
  %1123 = vmatpush1.msra.mxu0 0.0
  %1124 = vmatprep.subr.mxu0 0.0
  %1125 = vmatpush1.msra.mxu0 0.0
  %1126 = vmatprep.subr.mxu0 0.0
  %1127 = vmatpush1.msra.mxu0 0.0
  %1128 = vmatprep.subr.mxu0 0.0
  %1129 = vmatpush1.msra.mxu0 0.0
  %1130 = vmatprep.subr.mxu0 0.0
  %1131 = vmatpush1.msra.mxu0 0.0
  %1132 = vmatprep.subr.mxu0 0.0
  %1133 = vmatpush1.msra.mxu0 0.0
  %1134 = vmatprep.subr.mxu0 0.0
  %1135 = vmatpush1.msra.mxu0 0.0
  %1136 = vmatprep.subr.mxu0 0.0
  %1137 = vmatpush1.msra.mxu0 0.0
  %1138 = vmatprep.subr.mxu0 0.0
  %1139 = vmatpush1.msra.mxu0 0.0
  %1140 = vmatprep.subr.mxu0 0.0
  %1141 = vmatpush1.msra.mxu0 0.0
  %1142 = vmatprep.subr.mxu0 0.0
  %1143 = vmatpush1.msra.mxu0 0.0
  %1144 = vmatprep.subr.mxu0 0.0
  %1145 = vmatpush1.msra.mxu0 0.0
  %1146 = vmatprep.subr.mxu0 0.0
  %1147 = vmatpush1.msra.mxu0 0.0
  %1148 = vmatprep.subr.mxu0 0.0
  %1149 = vmatpush1.msra.mxu0 0.0
  %1150 = vmatprep.mubr.f32.mxu0 0.0
  %1151 = vmatmul.mubr.f32.gmra.mrb[0].mxu0 %v1075
  %v1152 = vpop.f32.mrb[0].mxu0
  %v1153 = vadd.f32 %v1072, %v1152
  %v1154 = vpop.f32.mrb[0].mxu0
  %1155 = vmatprep.mubr.f32.mxu0 0.0
  %1156 = vmatmul.mubr.f32.gmra.mrb[0].mxu0 %v1078
  %v1157 = vpop.f32.mrb[0].mxu0
  %v1158 = vadd.f32 %v1072, %v1157
  %v1159 = vpop.f32.mrb[0].mxu0
  %1160 = vmatprep.mubr.f32.mxu0 0.0
  %1161 = vmatmul.mubr.f32.gmra.mrb[0].mxu0 %v1081
  %v1162 = vpop.f32.mrb[0].mxu0
  %v1163 = vadd.f32 %v1072, %v1162
  %v1164 = vpop.f32.mrb[0].mxu0
  %1165 = vmatprep.mubr.f32.mxu0 0.0
  %1166 = vmatmul.mubr.f32.gmra.mrb[0].mxu0 %v1084
  %v1167 = vpop.f32.mrb[0].mxu0
  %v1168 = vadd.f32 %v1072, %v1167
  %v1169 = vpop.f32.mrb[0].mxu0
  %1170 = vdwg.mxu0
  %vm1171 = vcmp.ge.f32.partialorder %v1153, 0.0
  %vm1172 = vcmp.ge.f32.partialorder %v1158, 0.0
  %vm1173 = vcmp.ge.f32.partialorder %v1163, 0.0
  %vm1174 = vcmp.ge.f32.partialorder %v1168, 0.0
  %v1175 = vmul.f32 %v1153, 0.01
  %v1176 = vmul.f32 %v1158, 0.01
  %v1177 = vmul.f32 %v1163, 0.01
  %v1178 = vmul.f32 %v1168, 0.01
  %v1179 = vsel %vm1171, %v1153, %v1175
  %v1180 = vsel %vm1172, %v1158, %v1176
  %v1181 = vsel %vm1173, %v1163, %v1177
  %v1182 = vsel %vm1174, %v1168, %v1178
  %v1183 = vmul.f32 %v1179, %v1179
  %v1184 = vmul.f32 %v1180, %v1180
  %v1185 = vmul.f32 %v1181, %v1181
  %v1186 = vmul.f32 %v1182, %v1182
  %v1187 = vsel %vm115, %v1183, 0.0
  %1188 = vadd.xlane.f32.xlu0 %v1187
  %v1189 = vpop.xlane.xlu0 %1188
  %v1190 = vsel %vm115, %v1184, 0.0
  %1191 = vadd.xlane.f32.xlu0 %v1190
  %v1192 = vpop.xlane.xlu0 %1191
  %v1193 = vsel %vm115, %v1185, 0.0
  %1194 = vadd.xlane.f32.xlu0 %v1193
  %v1195 = vpop.xlane.xlu0 %1194
  %v1196 = vsel %vm115, %v1186, 0.0
  %1197 = vadd.xlane.f32.xlu0 %v1196
  %v1198 = vpop.xlane.xlu0 %1197
  %v1199 = vrsqrt.pop %v1189
  %v1200 = vmul.f32 %v1189, %v1199
  %vm1201 = vcmp.eq.f32.partialorder %v1189, inf
  %v1202 = vsel %vm1201, %v1189, %v1200
  %vm1203 = vcmp.eq.f32.partialorder %v1189, 0.0
  %v1204 = vand.u32 %v1189, 2147483648
  %v1205 = vsel %vm1203, %v1204, %v1202
  %v1206 = vrsqrt.pop %v1192
  %v1207 = vmul.f32 %v1192, %v1206
  %vm1208 = vcmp.eq.f32.partialorder %v1192, inf
  %v1209 = vsel %vm1208, %v1192, %v1207
  %vm1210 = vcmp.eq.f32.partialorder %v1192, 0.0
  %v1211 = vand.u32 %v1192, 2147483648
  %v1212 = vsel %vm1210, %v1211, %v1209
  %v1213 = vrsqrt.pop %v1195
  %v1214 = vmul.f32 %v1195, %v1213
  %vm1215 = vcmp.eq.f32.partialorder %v1195, inf
  %v1216 = vsel %vm1215, %v1195, %v1214
  %vm1217 = vcmp.eq.f32.partialorder %v1195, 0.0
  %v1218 = vand.u32 %v1195, 2147483648
  %v1219 = vsel %vm1217, %v1218, %v1216
  %v1220 = vrsqrt.pop %v1198
  %v1221 = vmul.f32 %v1198, %v1220
  %vm1222 = vcmp.eq.f32.partialorder %v1198, inf
  %v1223 = vsel %vm1222, %v1198, %v1221
  %vm1224 = vcmp.eq.f32.partialorder %v1198, 0.0
  %v1225 = vand.u32 %v1198, 2147483648
  %v1226 = vsel %vm1224, %v1225, %v1223
  %v1227 = vmax.f32 %v1205, 1e-12
  %v1228 = vmax.f32 %v1212, 1e-12
  %v1229 = vmax.f32 %v1219, 1e-12
  %v1230 = vmax.f32 %v1226, 1e-12
  %v1231 = vrcp.pop %v1227
  %v1232 = vmul.f32 %v1179, %v1231
  %v1233 = vrcp.pop %v1228
  %v1234 = vmul.f32 %v1180, %v1233
  %v1235 = vrcp.pop %v1229
  %v1236 = vmul.f32 %v1181, %v1235
  %v1237 = vrcp.pop %v1230
  %v1238 = vmul.f32 %v1182, %v1237
  %1243 = vrot.lane.b32.xlu0 %v969, 32
  %v1244 = vpop.permute.xlu0 %1243
  %1245 = vrot.lane.b32.xlu0 %v971, 32
  %v1246 = vpop.permute.xlu0 %1245
  %1247 = vrot.lane.b32.xlu0 %v973, 32
  %v1248 = vpop.permute.xlu0 %1247
  %1249 = vrot.lane.b32.xlu0 %v975, 32
  %v1250 = vpop.permute.xlu0 %1249
  %1259 = vrot.lane.b32.xlu0 %v1232, 64
  %v1260 = vpop.permute.xlu0 %1259
  %1261 = vrot.lane.b32.xlu0 %v1234, 64
  %v1262 = vpop.permute.xlu0 %1261
  %1263 = vrot.lane.b32.xlu0 %v1236, 64
  %v1264 = vpop.permute.xlu0 %1263
  %1265 = vrot.lane.b32.xlu0 %v1238, 64
  %v1266 = vpop.permute.xlu0 %1265
  %v1271 = vsel %vm115, %v98, %v1244
  %v1272 = vsel %vm115, %v99, %v1246
  %v1273 = vsel %vm115, %v100, %v1248
  %v1274 = vsel %vm115, %v101, %v1250
  %v1275 = vsel %vm683, %v1271, %v1260
  %v1276 = vsel %vm683, %v1272, %v1262
  %v1277 = vsel %vm683, %v1273, %v1264
  %v1278 = vsel %vm683, %v1274, %v1266
  %v1279 = vsel %vm688, %v1275, 0.0
  %v1280 = vsel %vm688, %v1276, 0.0
  %v1281 = vsel %vm688, %v1277, 0.0
  %v1282 = vsel %vm688, %v1278, 0.0
  %v1283 = vmul.f32 %v1279, %v94
  %v1284 = vmul.f32 %v1280, %v95
  %v1285 = vmul.f32 %v1281, %v96
  %v1286 = vmul.f32 %v1282, %v97
  %v1287 = vld [vmem:[%s4] sm:$0xff]
  %v1288 = vld [vmem:[%s4 + $0x8] sm:$0xff]
  %v1289 = vld [vmem:[%s4 + $0x10] sm:$0xff]
  %v1290 = vld [vmem:[%s4 + $0x18] sm:$0xff]
  %s1291 = scalar_lea.vmem %s5, 128
  %v1292 = vld [vmem:[%s1291] sm:$0xff]
  %v1293 = vld [vmem:[%s1291 + $0x8] sm:$0xff]
  %v1294 = vld [vmem:[%s1291 + $0x10] sm:$0xff]
  %v1295 = vld [vmem:[%s1291 + $0x18] sm:$0xff]
  %s1296 = scalar_lea.vmem %s6, 4
  %v1297 = vld [vmem:[%s1296] sm:$0x1]
  %v1299 = vsel %vm115, %v1287, 0
  %v1302 = vsel %vm115, %v1288, 0
  %v1305 = vsel %vm115, %v1289, 0
  %v1308 = vsel %vm115, %v1290, 0
  %1310 = vmatprep.subr.mxu0 0.0
  %1311 = vmatpush1.msra.mxu0 %v102
  %1312 = vmatprep.subr.mxu0 0.0
  %1313 = vmatpush1.msra.mxu0 %v103
  %1314 = vmatprep.subr.mxu0 0.0
  %1315 = vmatpush1.msra.mxu0 %v104
  %1316 = vmatprep.subr.mxu0 0.0
  %1317 = vmatpush1.msra.mxu0 %v105
  %1318 = vmatprep.subr.mxu0 0.0
  %1319 = vmatpush1.msra.mxu0 0.0
  %1320 = vmatprep.subr.mxu0 0.0
  %1321 = vmatpush1.msra.mxu0 0.0
  %1322 = vmatprep.subr.mxu0 0.0
  %1323 = vmatpush1.msra.mxu0 0.0
  %1324 = vmatprep.subr.mxu0 0.0
  %1325 = vmatpush1.msra.mxu0 0.0
  %1326 = vmatprep.subr.mxu0 0.0
  %1327 = vmatpush1.msra.mxu0 0.0
  %1328 = vmatprep.subr.mxu0 0.0
  %1329 = vmatpush1.msra.mxu0 0.0
  %1330 = vmatprep.subr.mxu0 0.0
  %1331 = vmatpush1.msra.mxu0 0.0
  %1332 = vmatprep.subr.mxu0 0.0
  %1333 = vmatpush1.msra.mxu0 0.0
  %1334 = vmatprep.subr.mxu0 0.0
  %1335 = vmatpush1.msra.mxu0 0.0
  %1336 = vmatprep.subr.mxu0 0.0
  %1337 = vmatpush1.msra.mxu0 0.0
  %1338 = vmatprep.subr.mxu0 0.0
  %1339 = vmatpush1.msra.mxu0 0.0
  %1340 = vmatprep.subr.mxu0 0.0
  %1341 = vmatpush1.msra.mxu0 0.0
  %1342 = vmatprep.subr.mxu0 0.0
  %1343 = vmatpush1.msra.mxu0 0.0
  %1344 = vmatprep.subr.mxu0 0.0
  %1345 = vmatpush1.msra.mxu0 0.0
  %1346 = vmatprep.subr.mxu0 0.0
  %1347 = vmatpush1.msra.mxu0 0.0
  %1348 = vmatprep.subr.mxu0 0.0
  %1349 = vmatpush1.msra.mxu0 0.0
  %1350 = vmatprep.subr.mxu0 0.0
  %1351 = vmatpush1.msra.mxu0 0.0
  %1352 = vmatprep.subr.mxu0 0.0
  %1353 = vmatpush1.msra.mxu0 0.0
  %1354 = vmatprep.subr.mxu0 0.0
  %1355 = vmatpush1.msra.mxu0 0.0
  %1356 = vmatprep.subr.mxu0 0.0
  %1357 = vmatpush1.msra.mxu0 0.0
  %1358 = vmatprep.subr.mxu0 0.0
  %1359 = vmatpush1.msra.mxu0 0.0
  %1360 = vmatprep.subr.mxu0 0.0
  %1361 = vmatpush1.msra.mxu0 0.0
  %1362 = vmatprep.subr.mxu0 0.0
  %1363 = vmatpush1.msra.mxu0 0.0
  %1364 = vmatprep.subr.mxu0 0.0
  %1365 = vmatpush1.msra.mxu0 0.0
  %1366 = vmatprep.subr.mxu0 0.0
  %1367 = vmatpush1.msra.mxu0 0.0
  %1368 = vmatprep.subr.mxu0 0.0
  %1369 = vmatpush1.msra.mxu0 0.0
  %1370 = vmatprep.subr.mxu0 0.0
  %1371 = vmatpush1.msra.mxu0 0.0
  %1372 = vmatprep.subr.mxu0 0.0
  %1373 = vmatpush1.msra.mxu0 0.0
  %1374 = vmatprep.mubr.f32.mxu0 0.0
  %1375 = vmatmul.mubr.f32.gmra.mrb[0].mxu0 %v1299
  %v1376 = vpop.f32.mrb[0].mxu0
  %v1377 = vadd.f32 0.0, %v1376
  %v1378 = vpop.f32.mrb[0].mxu0
  %1379 = vmatprep.mubr.f32.mxu0 0.0
  %1380 = vmatmul.mubr.f32.gmra.mrb[0].mxu0 %v1302
  %v1381 = vpop.f32.mrb[0].mxu0
  %v1382 = vadd.f32 0.0, %v1381
  %v1383 = vpop.f32.mrb[0].mxu0
  %1384 = vmatprep.mubr.f32.mxu0 0.0
  %1385 = vmatmul.mubr.f32.gmra.mrb[0].mxu0 %v1305
  %v1386 = vpop.f32.mrb[0].mxu0
  %v1387 = vadd.f32 0.0, %v1386
  %v1388 = vpop.f32.mrb[0].mxu0
  %1389 = vmatprep.mubr.f32.mxu0 0.0
  %1390 = vmatmul.mubr.f32.gmra.mrb[0].mxu0 %v1308
  %v1391 = vpop.f32.mrb[0].mxu0
  %v1392 = vadd.f32 0.0, %v1391
  %v1393 = vpop.f32.mrb[0].mxu0
  %1394 = vdwg.mxu0
  %v1396 = vlaneseq
  %v1397 = vshrl.u32 %v1396, 7
  %v1398 = vsub.s32 0, %v1397
  %v1399 = vrot.slane %v1297, %v1398
  %v1402 = vsel %vm115, %v1377, 0
  %v1405 = vsel %vm115, %v1382, 0
  %v1408 = vsel %vm115, %v1387, 0
  %v1411 = vsel %vm115, %v1392, 0
  %1413 = vmatprep.subr.mxu0 0.0
  %1414 = vmatpush1.msra.mxu0 %v1292
  %1415 = vmatprep.subr.mxu0 0.0
  %1416 = vmatpush1.msra.mxu0 %v1293
  %1417 = vmatprep.subr.mxu0 0.0
  %1418 = vmatpush1.msra.mxu0 %v1294
  %1419 = vmatprep.subr.mxu0 0.0
  %1420 = vmatpush1.msra.mxu0 %v1295
  %1421 = vmatprep.subr.mxu0 0.0
  %1422 = vmatpush1.msra.mxu0 0.0
  %1423 = vmatprep.subr.mxu0 0.0
  %1424 = vmatpush1.msra.mxu0 0.0
  %1425 = vmatprep.subr.mxu0 0.0
  %1426 = vmatpush1.msra.mxu0 0.0
  %1427 = vmatprep.subr.mxu0 0.0
  %1428 = vmatpush1.msra.mxu0 0.0
  %1429 = vmatprep.subr.mxu0 0.0
  %1430 = vmatpush1.msra.mxu0 0.0
  %1431 = vmatprep.subr.mxu0 0.0
  %1432 = vmatpush1.msra.mxu0 0.0
  %1433 = vmatprep.subr.mxu0 0.0
  %1434 = vmatpush1.msra.mxu0 0.0
  %1435 = vmatprep.subr.mxu0 0.0
  %1436 = vmatpush1.msra.mxu0 0.0
  %1437 = vmatprep.subr.mxu0 0.0
  %1438 = vmatpush1.msra.mxu0 0.0
  %1439 = vmatprep.subr.mxu0 0.0
  %1440 = vmatpush1.msra.mxu0 0.0
  %1441 = vmatprep.subr.mxu0 0.0
  %1442 = vmatpush1.msra.mxu0 0.0
  %1443 = vmatprep.subr.mxu0 0.0
  %1444 = vmatpush1.msra.mxu0 0.0
  %1445 = vmatprep.subr.mxu0 0.0
  %1446 = vmatpush1.msra.mxu0 0.0
  %1447 = vmatprep.subr.mxu0 0.0
  %1448 = vmatpush1.msra.mxu0 0.0
  %1449 = vmatprep.subr.mxu0 0.0
  %1450 = vmatpush1.msra.mxu0 0.0
  %1451 = vmatprep.subr.mxu0 0.0
  %1452 = vmatpush1.msra.mxu0 0.0
  %1453 = vmatprep.subr.mxu0 0.0
  %1454 = vmatpush1.msra.mxu0 0.0
  %1455 = vmatprep.subr.mxu0 0.0
  %1456 = vmatpush1.msra.mxu0 0.0
  %1457 = vmatprep.subr.mxu0 0.0
  %1458 = vmatpush1.msra.mxu0 0.0
  %1459 = vmatprep.subr.mxu0 0.0
  %1460 = vmatpush1.msra.mxu0 0.0
  %1461 = vmatprep.subr.mxu0 0.0
  %1462 = vmatpush1.msra.mxu0 0.0
  %1463 = vmatprep.subr.mxu0 0.0
  %1464 = vmatpush1.msra.mxu0 0.0
  %1465 = vmatprep.subr.mxu0 0.0
  %1466 = vmatpush1.msra.mxu0 0.0
  %1467 = vmatprep.subr.mxu0 0.0
  %1468 = vmatpush1.msra.mxu0 0.0
  %1469 = vmatprep.subr.mxu0 0.0
  %1470 = vmatpush1.msra.mxu0 0.0
  %1471 = vmatprep.subr.mxu0 0.0
  %1472 = vmatpush1.msra.mxu0 0.0
  %1473 = vmatprep.subr.mxu0 0.0
  %1474 = vmatpush1.msra.mxu0 0.0
  %1475 = vmatprep.subr.mxu0 0.0
  %1476 = vmatpush1.msra.mxu0 0.0
  %1477 = vmatprep.mubr.f32.mxu0 0.0
  %1478 = vmatmul.mubr.f32.gmra.mrb[0].mxu0 %v1402
  %v1479 = vpop.f32.mrb[0].mxu0
  %v1480 = vadd.f32 %v1399, %v1479
  %v1481 = vpop.f32.mrb[0].mxu0
  %1482 = vmatprep.mubr.f32.mxu0 0.0
  %1483 = vmatmul.mubr.f32.gmra.mrb[0].mxu0 %v1405
  %v1484 = vpop.f32.mrb[0].mxu0
  %v1485 = vadd.f32 %v1399, %v1484
  %v1486 = vpop.f32.mrb[0].mxu0
  %1487 = vmatprep.mubr.f32.mxu0 0.0
  %1488 = vmatmul.mubr.f32.gmra.mrb[0].mxu0 %v1408
  %v1489 = vpop.f32.mrb[0].mxu0
  %v1490 = vadd.f32 %v1399, %v1489
  %v1491 = vpop.f32.mrb[0].mxu0
  %1492 = vmatprep.mubr.f32.mxu0 0.0
  %1493 = vmatmul.mubr.f32.gmra.mrb[0].mxu0 %v1411
  %v1494 = vpop.f32.mrb[0].mxu0
  %v1495 = vadd.f32 %v1399, %v1494
  %v1496 = vpop.f32.mrb[0].mxu0
  %1497 = vdwg.mxu0
  %vm1498 = vcmp.ge.f32.partialorder %v1480, 0.0
  %vm1499 = vcmp.ge.f32.partialorder %v1485, 0.0
  %vm1500 = vcmp.ge.f32.partialorder %v1490, 0.0
  %vm1501 = vcmp.ge.f32.partialorder %v1495, 0.0
  %v1502 = vmul.f32 %v1480, 0.01
  %v1503 = vmul.f32 %v1485, 0.01
  %v1504 = vmul.f32 %v1490, 0.01
  %v1505 = vmul.f32 %v1495, 0.01
  %v1506 = vsel %vm1498, %v1480, %v1502
  %v1507 = vsel %vm1499, %v1485, %v1503
  %v1508 = vsel %vm1500, %v1490, %v1504
  %v1509 = vsel %vm1501, %v1495, %v1505
  %v1510 = vmul.f32 %v1506, %v1506
  %v1511 = vmul.f32 %v1507, %v1507
  %v1512 = vmul.f32 %v1508, %v1508
  %v1513 = vmul.f32 %v1509, %v1509
  %v1514 = vsel %vm115, %v1510, 0.0
  %1515 = vadd.xlane.f32.xlu0 %v1514
  %v1516 = vpop.xlane.xlu0 %1515
  %v1517 = vsel %vm115, %v1511, 0.0
  %1518 = vadd.xlane.f32.xlu0 %v1517
  %v1519 = vpop.xlane.xlu0 %1518
  %v1520 = vsel %vm115, %v1512, 0.0
  %1521 = vadd.xlane.f32.xlu0 %v1520
  %v1522 = vpop.xlane.xlu0 %1521
  %v1523 = vsel %vm115, %v1513, 0.0
  %1524 = vadd.xlane.f32.xlu0 %v1523
  %v1525 = vpop.xlane.xlu0 %1524
  %v1526 = vrsqrt.pop %v1516
  %v1527 = vmul.f32 %v1516, %v1526
  %vm1528 = vcmp.eq.f32.partialorder %v1516, inf
  %v1529 = vsel %vm1528, %v1516, %v1527
  %vm1530 = vcmp.eq.f32.partialorder %v1516, 0.0
  %v1531 = vand.u32 %v1516, 2147483648
  %v1532 = vsel %vm1530, %v1531, %v1529
  %v1533 = vrsqrt.pop %v1519
  %v1534 = vmul.f32 %v1519, %v1533
  %vm1535 = vcmp.eq.f32.partialorder %v1519, inf
  %v1536 = vsel %vm1535, %v1519, %v1534
  %vm1537 = vcmp.eq.f32.partialorder %v1519, 0.0
  %v1538 = vand.u32 %v1519, 2147483648
  %v1539 = vsel %vm1537, %v1538, %v1536
  %v1540 = vrsqrt.pop %v1522
  %v1541 = vmul.f32 %v1522, %v1540
  %vm1542 = vcmp.eq.f32.partialorder %v1522, inf
  %v1543 = vsel %vm1542, %v1522, %v1541
  %vm1544 = vcmp.eq.f32.partialorder %v1522, 0.0
  %v1545 = vand.u32 %v1522, 2147483648
  %v1546 = vsel %vm1544, %v1545, %v1543
  %v1547 = vrsqrt.pop %v1525
  %v1548 = vmul.f32 %v1525, %v1547
  %vm1549 = vcmp.eq.f32.partialorder %v1525, inf
  %v1550 = vsel %vm1549, %v1525, %v1548
  %vm1551 = vcmp.eq.f32.partialorder %v1525, 0.0
  %v1552 = vand.u32 %v1525, 2147483648
  %v1553 = vsel %vm1551, %v1552, %v1550
  %v1554 = vmax.f32 %v1532, 1e-12
  %v1555 = vmax.f32 %v1539, 1e-12
  %v1556 = vmax.f32 %v1546, 1e-12
  %v1557 = vmax.f32 %v1553, 1e-12
  %v1558 = vrcp.pop %v1554
  %v1559 = vmul.f32 %v1506, %v1558
  %v1560 = vrcp.pop %v1555
  %v1561 = vmul.f32 %v1507, %v1560
  %v1562 = vrcp.pop %v1556
  %v1563 = vmul.f32 %v1508, %v1562
  %v1564 = vrcp.pop %v1557
  %v1565 = vmul.f32 %v1509, %v1564
  %s1566 = scalar_lea.vmem %s5, 160
  %v1567 = vld [vmem:[%s1566] sm:$0xff]
  %v1568 = vld [vmem:[%s1566 + $0x8] sm:$0xff]
  %v1569 = vld [vmem:[%s1566 + $0x10] sm:$0xff]
  %v1570 = vld [vmem:[%s1566 + $0x18] sm:$0xff]
  %s1571 = scalar_lea.vmem %s6, 5
  %v1572 = vld [vmem:[%s1571] sm:$0x1]
  %1573 = vmatprep.subr.mxu0 0.0
  %1574 = vmatpush1.msra.mxu0 %v1506
  %1575 = vmatprep.subr.mxu0 0.0
  %1576 = vmatpush1.msra.mxu0 %v1507
  %1577 = vmatprep.subr.mxu0 0.0
  %1578 = vmatpush1.msra.mxu0 %v1508
  %1579 = vmatprep.subr.mxu0 0.0
  %1580 = vmatpush1.msra.mxu0 %v1509
  %1581 = vmatprep.subr.mxu0 0.0
  %1582 = vmatpush1.msra.mxu0 0.0
  %1583 = vmatprep.subr.mxu0 0.0
  %1584 = vmatpush1.msra.mxu0 0.0
  %1585 = vmatprep.subr.mxu0 0.0
  %1586 = vmatpush1.msra.mxu0 0.0
  %1587 = vmatprep.subr.mxu0 0.0
  %1588 = vmatpush1.msra.mxu0 0.0
  %1589 = vmatprep.subr.mxu0 0.0
  %1590 = vmatpush1.msra.mxu0 0.0
  %1591 = vmatprep.subr.mxu0 0.0
  %1592 = vmatpush1.msra.mxu0 0.0
  %1593 = vmatprep.subr.mxu0 0.0
  %1594 = vmatpush1.msra.mxu0 0.0
  %1595 = vmatprep.subr.mxu0 0.0
  %1596 = vmatpush1.msra.mxu0 0.0
  %1597 = vmatprep.subr.mxu0 0.0
  %1598 = vmatpush1.msra.mxu0 0.0
  %1599 = vmatprep.subr.mxu0 0.0
  %1600 = vmatpush1.msra.mxu0 0.0
  %1601 = vmatprep.subr.mxu0 0.0
  %1602 = vmatpush1.msra.mxu0 0.0
  %1603 = vmatprep.subr.mxu0 0.0
  %1604 = vmatpush1.msra.mxu0 0.0
  %1605 = vmatprep.subr.mxu0 0.0
  %1606 = vmatpush1.msra.mxu0 0.0
  %1607 = vmatprep.subr.mxu0 0.0
  %1608 = vmatpush1.msra.mxu0 0.0
  %1609 = vmatprep.subr.mxu0 0.0
  %1610 = vmatpush1.msra.mxu0 0.0
  %1611 = vmatprep.subr.mxu0 0.0
  %1612 = vmatpush1.msra.mxu0 0.0
  %1613 = vmatprep.subr.mxu0 0.0
  %1614 = vmatpush1.msra.mxu0 0.0
  %1615 = vmatprep.subr.mxu0 0.0
  %1616 = vmatpush1.msra.mxu0 0.0
  %1617 = vmatprep.subr.mxu0 0.0
  %1618 = vmatpush1.msra.mxu0 0.0
  %1619 = vmatprep.subr.mxu0 0.0
  %1620 = vmatpush1.msra.mxu0 0.0
  %1621 = vmatprep.subr.mxu0 0.0
  %1622 = vmatpush1.msra.mxu0 0.0
  %1623 = vmatprep.subr.mxu0 0.0
  %1624 = vmatpush1.msra.mxu0 0.0
  %1625 = vmatprep.subr.mxu0 0.0
  %1626 = vmatpush1.msra.mxu0 0.0
  %1627 = vmatprep.subr.mxu0 0.0
  %1628 = vmatpush1.msra.mxu0 0.0
  %1629 = vmatprep.subr.mxu0 0.0
  %1630 = vmatpush1.msra.mxu0 0.0
  %1631 = vmatprep.subr.mxu0 0.0
  %1632 = vmatpush1.msra.mxu0 0.0
  %1633 = vmatprep.subr.mxu0 0.0
  %1634 = vmatpush1.msra.mxu0 0.0
  %1635 = vmatprep.subr.mxu0 0.0
  %1636 = vmatpush1.msra.mxu0 0.0
  %1637 = vmatprep.mubr.f32.mxu0 0.0
  %1638 = vmatmul.mubr.f32.gmra.mrb[0].mxu0 %v1299
  %v1639 = vpop.f32.mrb[0].mxu0
  %v1640 = vadd.f32 0.0, %v1639
  %v1641 = vpop.f32.mrb[0].mxu0
  %1642 = vmatprep.mubr.f32.mxu0 0.0
  %1643 = vmatmul.mubr.f32.gmra.mrb[0].mxu0 %v1302
  %v1644 = vpop.f32.mrb[0].mxu0
  %v1645 = vadd.f32 0.0, %v1644
  %v1646 = vpop.f32.mrb[0].mxu0
  %1647 = vmatprep.mubr.f32.mxu0 0.0
  %1648 = vmatmul.mubr.f32.gmra.mrb[0].mxu0 %v1305
  %v1649 = vpop.f32.mrb[0].mxu0
  %v1650 = vadd.f32 0.0, %v1649
  %v1651 = vpop.f32.mrb[0].mxu0
  %1652 = vmatprep.mubr.f32.mxu0 0.0
  %1653 = vmatmul.mubr.f32.gmra.mrb[0].mxu0 %v1308
  %v1654 = vpop.f32.mrb[0].mxu0
  %v1655 = vadd.f32 0.0, %v1654
  %v1656 = vpop.f32.mrb[0].mxu0
  %1657 = vdwg.mxu0
  %v1659 = vlaneseq
  %v1660 = vshrl.u32 %v1659, 7
  %v1661 = vsub.s32 0, %v1660
  %v1662 = vrot.slane %v1572, %v1661
  %v1665 = vsel %vm115, %v1640, 0
  %v1668 = vsel %vm115, %v1645, 0
  %v1671 = vsel %vm115, %v1650, 0
  %v1674 = vsel %vm115, %v1655, 0
  %1676 = vmatprep.subr.mxu0 0.0
  %1677 = vmatpush1.msra.mxu0 %v1567
  %1678 = vmatprep.subr.mxu0 0.0
  %1679 = vmatpush1.msra.mxu0 %v1568
  %1680 = vmatprep.subr.mxu0 0.0
  %1681 = vmatpush1.msra.mxu0 %v1569
  %1682 = vmatprep.subr.mxu0 0.0
  %1683 = vmatpush1.msra.mxu0 %v1570
  %1684 = vmatprep.subr.mxu0 0.0
  %1685 = vmatpush1.msra.mxu0 0.0
  %1686 = vmatprep.subr.mxu0 0.0
  %1687 = vmatpush1.msra.mxu0 0.0
  %1688 = vmatprep.subr.mxu0 0.0
  %1689 = vmatpush1.msra.mxu0 0.0
  %1690 = vmatprep.subr.mxu0 0.0
  %1691 = vmatpush1.msra.mxu0 0.0
  %1692 = vmatprep.subr.mxu0 0.0
  %1693 = vmatpush1.msra.mxu0 0.0
  %1694 = vmatprep.subr.mxu0 0.0
  %1695 = vmatpush1.msra.mxu0 0.0
  %1696 = vmatprep.subr.mxu0 0.0
  %1697 = vmatpush1.msra.mxu0 0.0
  %1698 = vmatprep.subr.mxu0 0.0
  %1699 = vmatpush1.msra.mxu0 0.0
  %1700 = vmatprep.subr.mxu0 0.0
  %1701 = vmatpush1.msra.mxu0 0.0
  %1702 = vmatprep.subr.mxu0 0.0
  %1703 = vmatpush1.msra.mxu0 0.0
  %1704 = vmatprep.subr.mxu0 0.0
  %1705 = vmatpush1.msra.mxu0 0.0
  %1706 = vmatprep.subr.mxu0 0.0
  %1707 = vmatpush1.msra.mxu0 0.0
  %1708 = vmatprep.subr.mxu0 0.0
  %1709 = vmatpush1.msra.mxu0 0.0
  %1710 = vmatprep.subr.mxu0 0.0
  %1711 = vmatpush1.msra.mxu0 0.0
  %1712 = vmatprep.subr.mxu0 0.0
  %1713 = vmatpush1.msra.mxu0 0.0
  %1714 = vmatprep.subr.mxu0 0.0
  %1715 = vmatpush1.msra.mxu0 0.0
  %1716 = vmatprep.subr.mxu0 0.0
  %1717 = vmatpush1.msra.mxu0 0.0
  %1718 = vmatprep.subr.mxu0 0.0
  %1719 = vmatpush1.msra.mxu0 0.0
  %1720 = vmatprep.subr.mxu0 0.0
  %1721 = vmatpush1.msra.mxu0 0.0
  %1722 = vmatprep.subr.mxu0 0.0
  %1723 = vmatpush1.msra.mxu0 0.0
  %1724 = vmatprep.subr.mxu0 0.0
  %1725 = vmatpush1.msra.mxu0 0.0
  %1726 = vmatprep.subr.mxu0 0.0
  %1727 = vmatpush1.msra.mxu0 0.0
  %1728 = vmatprep.subr.mxu0 0.0
  %1729 = vmatpush1.msra.mxu0 0.0
  %1730 = vmatprep.subr.mxu0 0.0
  %1731 = vmatpush1.msra.mxu0 0.0
  %1732 = vmatprep.subr.mxu0 0.0
  %1733 = vmatpush1.msra.mxu0 0.0
  %1734 = vmatprep.subr.mxu0 0.0
  %1735 = vmatpush1.msra.mxu0 0.0
  %1736 = vmatprep.subr.mxu0 0.0
  %1737 = vmatpush1.msra.mxu0 0.0
  %1738 = vmatprep.subr.mxu0 0.0
  %1739 = vmatpush1.msra.mxu0 0.0
  %1740 = vmatprep.mubr.f32.mxu0 0.0
  %1741 = vmatmul.mubr.f32.gmra.mrb[0].mxu0 %v1665
  %v1742 = vpop.f32.mrb[0].mxu0
  %v1743 = vadd.f32 %v1662, %v1742
  %v1744 = vpop.f32.mrb[0].mxu0
  %1745 = vmatprep.mubr.f32.mxu0 0.0
  %1746 = vmatmul.mubr.f32.gmra.mrb[0].mxu0 %v1668
  %v1747 = vpop.f32.mrb[0].mxu0
  %v1748 = vadd.f32 %v1662, %v1747
  %v1749 = vpop.f32.mrb[0].mxu0
  %1750 = vmatprep.mubr.f32.mxu0 0.0
  %1751 = vmatmul.mubr.f32.gmra.mrb[0].mxu0 %v1671
  %v1752 = vpop.f32.mrb[0].mxu0
  %v1753 = vadd.f32 %v1662, %v1752
  %v1754 = vpop.f32.mrb[0].mxu0
  %1755 = vmatprep.mubr.f32.mxu0 0.0
  %1756 = vmatmul.mubr.f32.gmra.mrb[0].mxu0 %v1674
  %v1757 = vpop.f32.mrb[0].mxu0
  %v1758 = vadd.f32 %v1662, %v1757
  %v1759 = vpop.f32.mrb[0].mxu0
  %1760 = vdwg.mxu0
  %vm1761 = vcmp.ge.f32.partialorder %v1743, 0.0
  %vm1762 = vcmp.ge.f32.partialorder %v1748, 0.0
  %vm1763 = vcmp.ge.f32.partialorder %v1753, 0.0
  %vm1764 = vcmp.ge.f32.partialorder %v1758, 0.0
  %v1765 = vmul.f32 %v1743, 0.01
  %v1766 = vmul.f32 %v1748, 0.01
  %v1767 = vmul.f32 %v1753, 0.01
  %v1768 = vmul.f32 %v1758, 0.01
  %v1769 = vsel %vm1761, %v1743, %v1765
  %v1770 = vsel %vm1762, %v1748, %v1766
  %v1771 = vsel %vm1763, %v1753, %v1767
  %v1772 = vsel %vm1764, %v1758, %v1768
  %v1773 = vmul.f32 %v1769, %v1769
  %v1774 = vmul.f32 %v1770, %v1770
  %v1775 = vmul.f32 %v1771, %v1771
  %v1776 = vmul.f32 %v1772, %v1772
  %v1777 = vsel %vm115, %v1773, 0.0
  %1778 = vadd.xlane.f32.xlu0 %v1777
  %v1779 = vpop.xlane.xlu0 %1778
  %v1780 = vsel %vm115, %v1774, 0.0
  %1781 = vadd.xlane.f32.xlu0 %v1780
  %v1782 = vpop.xlane.xlu0 %1781
  %v1783 = vsel %vm115, %v1775, 0.0
  %1784 = vadd.xlane.f32.xlu0 %v1783
  %v1785 = vpop.xlane.xlu0 %1784
  %v1786 = vsel %vm115, %v1776, 0.0
  %1787 = vadd.xlane.f32.xlu0 %v1786
  %v1788 = vpop.xlane.xlu0 %1787
  %v1789 = vrsqrt.pop %v1779
  %v1790 = vmul.f32 %v1779, %v1789
  %vm1791 = vcmp.eq.f32.partialorder %v1779, inf
  %v1792 = vsel %vm1791, %v1779, %v1790
  %vm1793 = vcmp.eq.f32.partialorder %v1779, 0.0
  %v1794 = vand.u32 %v1779, 2147483648
  %v1795 = vsel %vm1793, %v1794, %v1792
  %v1796 = vrsqrt.pop %v1782
  %v1797 = vmul.f32 %v1782, %v1796
  %vm1798 = vcmp.eq.f32.partialorder %v1782, inf
  %v1799 = vsel %vm1798, %v1782, %v1797
  %vm1800 = vcmp.eq.f32.partialorder %v1782, 0.0
  %v1801 = vand.u32 %v1782, 2147483648
  %v1802 = vsel %vm1800, %v1801, %v1799
  %v1803 = vrsqrt.pop %v1785
  %v1804 = vmul.f32 %v1785, %v1803
  %vm1805 = vcmp.eq.f32.partialorder %v1785, inf
  %v1806 = vsel %vm1805, %v1785, %v1804
  %vm1807 = vcmp.eq.f32.partialorder %v1785, 0.0
  %v1808 = vand.u32 %v1785, 2147483648
  %v1809 = vsel %vm1807, %v1808, %v1806
  %v1810 = vrsqrt.pop %v1788
  %v1811 = vmul.f32 %v1788, %v1810
  %vm1812 = vcmp.eq.f32.partialorder %v1788, inf
  %v1813 = vsel %vm1812, %v1788, %v1811
  %vm1814 = vcmp.eq.f32.partialorder %v1788, 0.0
  %v1815 = vand.u32 %v1788, 2147483648
  %v1816 = vsel %vm1814, %v1815, %v1813
  %v1817 = vmax.f32 %v1795, 1e-12
  %v1818 = vmax.f32 %v1802, 1e-12
  %v1819 = vmax.f32 %v1809, 1e-12
  %v1820 = vmax.f32 %v1816, 1e-12
  %v1821 = vrcp.pop %v1817
  %v1822 = vmul.f32 %v1769, %v1821
  %v1823 = vrcp.pop %v1818
  %v1824 = vmul.f32 %v1770, %v1823
  %v1825 = vrcp.pop %v1819
  %v1826 = vmul.f32 %v1771, %v1825
  %v1827 = vrcp.pop %v1820
  %v1828 = vmul.f32 %v1772, %v1827
  %1833 = vrot.lane.b32.xlu0 %v1559, 32
  %v1834 = vpop.permute.xlu0 %1833
  %1835 = vrot.lane.b32.xlu0 %v1561, 32
  %v1836 = vpop.permute.xlu0 %1835
  %1837 = vrot.lane.b32.xlu0 %v1563, 32
  %v1838 = vpop.permute.xlu0 %1837
  %1839 = vrot.lane.b32.xlu0 %v1565, 32
  %v1840 = vpop.permute.xlu0 %1839
  %1849 = vrot.lane.b32.xlu0 %v1822, 64
  %v1850 = vpop.permute.xlu0 %1849
  %1851 = vrot.lane.b32.xlu0 %v1824, 64
  %v1852 = vpop.permute.xlu0 %1851
  %1853 = vrot.lane.b32.xlu0 %v1826, 64
  %v1854 = vpop.permute.xlu0 %1853
  %1855 = vrot.lane.b32.xlu0 %v1828, 64
  %v1856 = vpop.permute.xlu0 %1855
  %v1861 = vsel %vm115, %v102, %v1834
  %v1862 = vsel %vm115, %v103, %v1836
  %v1863 = vsel %vm115, %v104, %v1838
  %v1864 = vsel %vm115, %v105, %v1840
  %v1865 = vsel %vm683, %v1861, %v1850
  %v1866 = vsel %vm683, %v1862, %v1852
  %v1867 = vsel %vm683, %v1863, %v1854
  %v1868 = vsel %vm683, %v1864, %v1856
  %v1869 = vsel %vm688, %v1865, 0.0
  %v1870 = vsel %vm688, %v1866, 0.0
  %v1871 = vsel %vm688, %v1867, 0.0
  %v1872 = vsel %vm688, %v1868, 0.0
  %v1873 = vmul.f32 %v1869, %v94
  %v1874 = vmul.f32 %v1870, %v95
  %v1875 = vmul.f32 %v1871, %v96
  %v1876 = vmul.f32 %v1872, %v97
  %v1877 = vadd.f32 %v1283, %v693
  %v1878 = vadd.f32 %v1284, %v694
  %v1879 = vadd.f32 %v1285, %v695
  %v1880 = vadd.f32 %v1286, %v696
  %v1881 = vmul.f32 %v1877, 0.5
  %v1882 = vmul.f32 %v1878, 0.5
  %v1883 = vmul.f32 %v1879, 0.5
  %v1884 = vmul.f32 %v1880, 0.5
  %v1885 = vld [vmem:[%s7] sm:$0xf]
  %1886 = vset.pattern.permute.xlu0 0
  %1887 = vperm.xlu0 %1886, %v1885
  %v1888 = vpop.permute.xlu0 %1887
  %vm1889 = vcmp.eq.s32.totalorder %v1888, %v80
  %v1890 = vsel %vm1889, 1, 0
  %v1891 = vcvt.s32.f32 %v1890
  %v1893 = vsel %vm115, %v1891, 0
  %1895 = vmatprep.subr.mxu0 0.0
  %1896 = vmatpush1.msra.mxu0 %v1881
  %1897 = vmatprep.subr.mxu0 0.0
  %1898 = vmatpush1.msra.mxu0 %v1882
  %1899 = vmatprep.subr.mxu0 0.0
  %1900 = vmatpush1.msra.mxu0 %v1883
  %1901 = vmatprep.subr.mxu0 0.0
  %1902 = vmatpush1.msra.mxu0 %v1884
  %1903 = vmatprep.subr.mxu0 0.0
  %1904 = vmatpush1.msra.mxu0 0.0
  %1905 = vmatprep.subr.mxu0 0.0
  %1906 = vmatpush1.msra.mxu0 0.0
  %1907 = vmatprep.subr.mxu0 0.0
  %1908 = vmatpush1.msra.mxu0 0.0
  %1909 = vmatprep.subr.mxu0 0.0
  %1910 = vmatpush1.msra.mxu0 0.0
  %1911 = vmatprep.subr.mxu0 0.0
  %1912 = vmatpush1.msra.mxu0 0.0
  %1913 = vmatprep.subr.mxu0 0.0
  %1914 = vmatpush1.msra.mxu0 0.0
  %1915 = vmatprep.subr.mxu0 0.0
  %1916 = vmatpush1.msra.mxu0 0.0
  %1917 = vmatprep.subr.mxu0 0.0
  %1918 = vmatpush1.msra.mxu0 0.0
  %1919 = vmatprep.subr.mxu0 0.0
  %1920 = vmatpush1.msra.mxu0 0.0
  %1921 = vmatprep.subr.mxu0 0.0
  %1922 = vmatpush1.msra.mxu0 0.0
  %1923 = vmatprep.subr.mxu0 0.0
  %1924 = vmatpush1.msra.mxu0 0.0
  %1925 = vmatprep.subr.mxu0 0.0
  %1926 = vmatpush1.msra.mxu0 0.0
  %1927 = vmatprep.subr.mxu0 0.0
  %1928 = vmatpush1.msra.mxu0 0.0
  %1929 = vmatprep.subr.mxu0 0.0
  %1930 = vmatpush1.msra.mxu0 0.0
  %1931 = vmatprep.subr.mxu0 0.0
  %1932 = vmatpush1.msra.mxu0 0.0
  %1933 = vmatprep.subr.mxu0 0.0
  %1934 = vmatpush1.msra.mxu0 0.0
  %1935 = vmatprep.subr.mxu0 0.0
  %1936 = vmatpush1.msra.mxu0 0.0
  %1937 = vmatprep.subr.mxu0 0.0
  %1938 = vmatpush1.msra.mxu0 0.0
  %1939 = vmatprep.subr.mxu0 0.0
  %1940 = vmatpush1.msra.mxu0 0.0
  %1941 = vmatprep.subr.mxu0 0.0
  %1942 = vmatpush1.msra.mxu0 0.0
  %1943 = vmatprep.subr.mxu0 0.0
  %1944 = vmatpush1.msra.mxu0 0.0
  %1945 = vmatprep.subr.mxu0 0.0
  %1946 = vmatpush1.msra.mxu0 0.0
  %1947 = vmatprep.subr.mxu0 0.0
  %1948 = vmatpush1.msra.mxu0 0.0
  %1949 = vmatprep.subr.mxu0 0.0
  %1950 = vmatpush1.msra.mxu0 0.0
  %1951 = vmatprep.subr.mxu0 0.0
  %1952 = vmatpush1.msra.mxu0 0.0
  %1953 = vmatprep.subr.mxu0 0.0
  %1954 = vmatpush1.msra.mxu0 0.0
  %1955 = vmatprep.subr.mxu0 0.0
  %1956 = vmatpush1.msra.mxu0 0.0
  %1957 = vmatprep.subr.mxu0 0.0
  %1958 = vmatpush1.msra.mxu0 0.0
  %1959 = vmatprep.mubr.f32.mxu0 0.0
  %1960 = vmatmul.mubr.f32.gmra.mrb[0].mxu0 %v1893
  %v1961 = vpop.f32.mrb[0].mxu0
  %v1962 = vadd.f32 0.0, %v1961
  %v1963 = vpop.f32.mrb[0].mxu0
  %1964 = vdwg.mxu0
  %v1965 = vld [vmem:[%s8] sm:$0xf]
  %1966 = vset.pattern.permute.xlu0 0
  %1967 = vperm.xlu0 %1966, %v1965
  %v1968 = vpop.permute.xlu0 %1967
  %vm1969 = vcmp.eq.s32.totalorder %v1968, %v80
  %v1970 = vsel %vm1969, 1, 0
  %v1971 = vcvt.s32.f32 %v1970
  %v1973 = vsel %vm115, %v1971, 0
  %1975 = vmatprep.subr.mxu0 0.0
  %1976 = vmatpush1.msra.mxu0 %v1873
  %1977 = vmatprep.subr.mxu0 0.0
  %1978 = vmatpush1.msra.mxu0 %v1874
  %1979 = vmatprep.subr.mxu0 0.0
  %1980 = vmatpush1.msra.mxu0 %v1875
  %1981 = vmatprep.subr.mxu0 0.0
  %1982 = vmatpush1.msra.mxu0 %v1876
  %1983 = vmatprep.subr.mxu0 0.0
  %1984 = vmatpush1.msra.mxu0 0.0
  %1985 = vmatprep.subr.mxu0 0.0
  %1986 = vmatpush1.msra.mxu0 0.0
  %1987 = vmatprep.subr.mxu0 0.0
  %1988 = vmatpush1.msra.mxu0 0.0
  %1989 = vmatprep.subr.mxu0 0.0
  %1990 = vmatpush1.msra.mxu0 0.0
  %1991 = vmatprep.subr.mxu0 0.0
  %1992 = vmatpush1.msra.mxu0 0.0
  %1993 = vmatprep.subr.mxu0 0.0
  %1994 = vmatpush1.msra.mxu0 0.0
  %1995 = vmatprep.subr.mxu0 0.0
  %1996 = vmatpush1.msra.mxu0 0.0
  %1997 = vmatprep.subr.mxu0 0.0
  %1998 = vmatpush1.msra.mxu0 0.0
  %1999 = vmatprep.subr.mxu0 0.0
  %2000 = vmatpush1.msra.mxu0 0.0
  %2001 = vmatprep.subr.mxu0 0.0
  %2002 = vmatpush1.msra.mxu0 0.0
  %2003 = vmatprep.subr.mxu0 0.0
  %2004 = vmatpush1.msra.mxu0 0.0
  %2005 = vmatprep.subr.mxu0 0.0
  %2006 = vmatpush1.msra.mxu0 0.0
  %2007 = vmatprep.subr.mxu0 0.0
  %2008 = vmatpush1.msra.mxu0 0.0
  %2009 = vmatprep.subr.mxu0 0.0
  %2010 = vmatpush1.msra.mxu0 0.0
  %2011 = vmatprep.subr.mxu0 0.0
  %2012 = vmatpush1.msra.mxu0 0.0
  %2013 = vmatprep.subr.mxu0 0.0
  %2014 = vmatpush1.msra.mxu0 0.0
  %2015 = vmatprep.subr.mxu0 0.0
  %2016 = vmatpush1.msra.mxu0 0.0
  %2017 = vmatprep.subr.mxu0 0.0
  %2018 = vmatpush1.msra.mxu0 0.0
  %2019 = vmatprep.subr.mxu0 0.0
  %2020 = vmatpush1.msra.mxu0 0.0
  %2021 = vmatprep.subr.mxu0 0.0
  %2022 = vmatpush1.msra.mxu0 0.0
  %2023 = vmatprep.subr.mxu0 0.0
  %2024 = vmatpush1.msra.mxu0 0.0
  %2025 = vmatprep.subr.mxu0 0.0
  %2026 = vmatpush1.msra.mxu0 0.0
  %2027 = vmatprep.subr.mxu0 0.0
  %2028 = vmatpush1.msra.mxu0 0.0
  %2029 = vmatprep.subr.mxu0 0.0
  %2030 = vmatpush1.msra.mxu0 0.0
  %2031 = vmatprep.subr.mxu0 0.0
  %2032 = vmatpush1.msra.mxu0 0.0
  %2033 = vmatprep.subr.mxu0 0.0
  %2034 = vmatpush1.msra.mxu0 0.0
  %2035 = vmatprep.subr.mxu0 0.0
  %2036 = vmatpush1.msra.mxu0 0.0
  %2037 = vmatprep.subr.mxu0 0.0
  %2038 = vmatpush1.msra.mxu0 0.0
  %2039 = vmatprep.mubr.f32.mxu0 0.0
  %2040 = vmatmul.mubr.f32.gmra.mrb[0].mxu0 %v1973
  %v2041 = vpop.f32.mrb[0].mxu0
  %v2042 = vadd.f32 0.0, %v2041
  %v2043 = vpop.f32.mrb[0].mxu0
  %2044 = vdwg.mxu0
  %v2045 = vld [vmem:[%s9] sm:$0xf]
  %2046 = vset.pattern.permute.xlu0 0
  %2047 = vperm.xlu0 %2046, %v2045
  %v2048 = vpop.permute.xlu0 %2047
  %vm2049 = vcmp.eq.s32.totalorder %v2048, %v80
  %v2050 = vsel %vm2049, 1, 0
  %v2051 = vcvt.s32.f32 %v2050
  %v2053 = vsel %vm115, %v2051, 0
  %2055 = vmatprep.subr.mxu0 0.0
  %2056 = vmatpush1.msra.mxu0 %v1881
  %2057 = vmatprep.subr.mxu0 0.0
  %2058 = vmatpush1.msra.mxu0 %v1882
  %2059 = vmatprep.subr.mxu0 0.0
  %2060 = vmatpush1.msra.mxu0 %v1883
  %2061 = vmatprep.subr.mxu0 0.0
  %2062 = vmatpush1.msra.mxu0 %v1884
  %2063 = vmatprep.subr.mxu0 0.0
  %2064 = vmatpush1.msra.mxu0 0.0
  %2065 = vmatprep.subr.mxu0 0.0
  %2066 = vmatpush1.msra.mxu0 0.0
  %2067 = vmatprep.subr.mxu0 0.0
  %2068 = vmatpush1.msra.mxu0 0.0
  %2069 = vmatprep.subr.mxu0 0.0
  %2070 = vmatpush1.msra.mxu0 0.0
  %2071 = vmatprep.subr.mxu0 0.0
  %2072 = vmatpush1.msra.mxu0 0.0
  %2073 = vmatprep.subr.mxu0 0.0
  %2074 = vmatpush1.msra.mxu0 0.0
  %2075 = vmatprep.subr.mxu0 0.0
  %2076 = vmatpush1.msra.mxu0 0.0
  %2077 = vmatprep.subr.mxu0 0.0
  %2078 = vmatpush1.msra.mxu0 0.0
  %2079 = vmatprep.subr.mxu0 0.0
  %2080 = vmatpush1.msra.mxu0 0.0
  %2081 = vmatprep.subr.mxu0 0.0
  %2082 = vmatpush1.msra.mxu0 0.0
  %2083 = vmatprep.subr.mxu0 0.0
  %2084 = vmatpush1.msra.mxu0 0.0
  %2085 = vmatprep.subr.mxu0 0.0
  %2086 = vmatpush1.msra.mxu0 0.0
  %2087 = vmatprep.subr.mxu0 0.0
  %2088 = vmatpush1.msra.mxu0 0.0
  %2089 = vmatprep.subr.mxu0 0.0
  %2090 = vmatpush1.msra.mxu0 0.0
  %2091 = vmatprep.subr.mxu0 0.0
  %2092 = vmatpush1.msra.mxu0 0.0
  %2093 = vmatprep.subr.mxu0 0.0
  %2094 = vmatpush1.msra.mxu0 0.0
  %2095 = vmatprep.subr.mxu0 0.0
  %2096 = vmatpush1.msra.mxu0 0.0
  %2097 = vmatprep.subr.mxu0 0.0
  %2098 = vmatpush1.msra.mxu0 0.0
  %2099 = vmatprep.subr.mxu0 0.0
  %2100 = vmatpush1.msra.mxu0 0.0
  %2101 = vmatprep.subr.mxu0 0.0
  %2102 = vmatpush1.msra.mxu0 0.0
  %2103 = vmatprep.subr.mxu0 0.0
  %2104 = vmatpush1.msra.mxu0 0.0
  %2105 = vmatprep.subr.mxu0 0.0
  %2106 = vmatpush1.msra.mxu0 0.0
  %2107 = vmatprep.subr.mxu0 0.0
  %2108 = vmatpush1.msra.mxu0 0.0
  %2109 = vmatprep.subr.mxu0 0.0
  %2110 = vmatpush1.msra.mxu0 0.0
  %2111 = vmatprep.subr.mxu0 0.0
  %2112 = vmatpush1.msra.mxu0 0.0
  %2113 = vmatprep.subr.mxu0 0.0
  %2114 = vmatpush1.msra.mxu0 0.0
  %2115 = vmatprep.subr.mxu0 0.0
  %2116 = vmatpush1.msra.mxu0 0.0
  %2117 = vmatprep.subr.mxu0 0.0
  %2118 = vmatpush1.msra.mxu0 0.0
  %2119 = vmatprep.mubr.f32.mxu0 0.0
  %2120 = vmatmul.mubr.f32.gmra.mrb[0].mxu0 %v2053
  %v2121 = vpop.f32.mrb[0].mxu0
  %v2122 = vadd.f32 0.0, %v2121
  %v2123 = vpop.f32.mrb[0].mxu0
  %2124 = vdwg.mxu0
  %v2125 = vmul.f32 %v2122, %v1962
  %2126 = vset.pattern.permute.xlu0 1
  %2127 = vperm.xlu0 %2126, %v2045
  %v2128 = vpop.permute.xlu0 %2127
  %vm2129 = vcmp.eq.s32.totalorder %v2128, %v80
  %v2130 = vsel %vm2129, 1, 0
  %v2131 = vcvt.s32.f32 %v2130
  %v2133 = vsel %vm115, %v2131, 0
  %2135 = vmatprep.subr.mxu0 0.0
  %2136 = vmatpush1.msra.mxu0 %v1881
  %2137 = vmatprep.subr.mxu0 0.0
  %2138 = vmatpush1.msra.mxu0 %v1882
  %2139 = vmatprep.subr.mxu0 0.0
  %2140 = vmatpush1.msra.mxu0 %v1883
  %2141 = vmatprep.subr.mxu0 0.0
  %2142 = vmatpush1.msra.mxu0 %v1884
  %2143 = vmatprep.subr.mxu0 0.0
  %2144 = vmatpush1.msra.mxu0 0.0
  %2145 = vmatprep.subr.mxu0 0.0
  %2146 = vmatpush1.msra.mxu0 0.0
  %2147 = vmatprep.subr.mxu0 0.0
  %2148 = vmatpush1.msra.mxu0 0.0
  %2149 = vmatprep.subr.mxu0 0.0
  %2150 = vmatpush1.msra.mxu0 0.0
  %2151 = vmatprep.subr.mxu0 0.0
  %2152 = vmatpush1.msra.mxu0 0.0
  %2153 = vmatprep.subr.mxu0 0.0
  %2154 = vmatpush1.msra.mxu0 0.0
  %2155 = vmatprep.subr.mxu0 0.0
  %2156 = vmatpush1.msra.mxu0 0.0
  %2157 = vmatprep.subr.mxu0 0.0
  %2158 = vmatpush1.msra.mxu0 0.0
  %2159 = vmatprep.subr.mxu0 0.0
  %2160 = vmatpush1.msra.mxu0 0.0
  %2161 = vmatprep.subr.mxu0 0.0
  %2162 = vmatpush1.msra.mxu0 0.0
  %2163 = vmatprep.subr.mxu0 0.0
  %2164 = vmatpush1.msra.mxu0 0.0
  %2165 = vmatprep.subr.mxu0 0.0
  %2166 = vmatpush1.msra.mxu0 0.0
  %2167 = vmatprep.subr.mxu0 0.0
  %2168 = vmatpush1.msra.mxu0 0.0
  %2169 = vmatprep.subr.mxu0 0.0
  %2170 = vmatpush1.msra.mxu0 0.0
  %2171 = vmatprep.subr.mxu0 0.0
  %2172 = vmatpush1.msra.mxu0 0.0
  %2173 = vmatprep.subr.mxu0 0.0
  %2174 = vmatpush1.msra.mxu0 0.0
  %2175 = vmatprep.subr.mxu0 0.0
  %2176 = vmatpush1.msra.mxu0 0.0
  %2177 = vmatprep.subr.mxu0 0.0
  %2178 = vmatpush1.msra.mxu0 0.0
  %2179 = vmatprep.subr.mxu0 0.0
  %2180 = vmatpush1.msra.mxu0 0.0
  %2181 = vmatprep.subr.mxu0 0.0
  %2182 = vmatpush1.msra.mxu0 0.0
  %2183 = vmatprep.subr.mxu0 0.0
  %2184 = vmatpush1.msra.mxu0 0.0
  %2185 = vmatprep.subr.mxu0 0.0
  %2186 = vmatpush1.msra.mxu0 0.0
  %2187 = vmatprep.subr.mxu0 0.0
  %2188 = vmatpush1.msra.mxu0 0.0
  %2189 = vmatprep.subr.mxu0 0.0
  %2190 = vmatpush1.msra.mxu0 0.0
  %2191 = vmatprep.subr.mxu0 0.0
  %2192 = vmatpush1.msra.mxu0 0.0
  %2193 = vmatprep.subr.mxu0 0.0
  %2194 = vmatpush1.msra.mxu0 0.0
  %2195 = vmatprep.subr.mxu0 0.0
  %2196 = vmatpush1.msra.mxu0 0.0
  %2197 = vmatprep.subr.mxu0 0.0
  %2198 = vmatpush1.msra.mxu0 0.0
  %2199 = vmatprep.mubr.f32.mxu0 0.0
  %2200 = vmatmul.mubr.f32.gmra.mrb[0].mxu0 %v2133
  %v2201 = vpop.f32.mrb[0].mxu0
  %v2202 = vadd.f32 0.0, %v2201
  %v2203 = vpop.f32.mrb[0].mxu0
  %2204 = vdwg.mxu0
  %v2205 = vmul.f32 %v2202, %v1962
  %v2206 = vmax.f32 %v2125, %v2205
  %2207 = vset.pattern.permute.xlu0 2
  %2208 = vperm.xlu0 %2207, %v2045
  %v2209 = vpop.permute.xlu0 %2208
  %vm2210 = vcmp.eq.s32.totalorder %v2209, %v80
  %v2211 = vsel %vm2210, 1, 0
  %v2212 = vcvt.s32.f32 %v2211
  %v2214 = vsel %vm115, %v2212, 0
  %2216 = vmatprep.subr.mxu0 0.0
  %2217 = vmatpush1.msra.mxu0 %v1881
  %2218 = vmatprep.subr.mxu0 0.0
  %2219 = vmatpush1.msra.mxu0 %v1882
  %2220 = vmatprep.subr.mxu0 0.0
  %2221 = vmatpush1.msra.mxu0 %v1883
  %2222 = vmatprep.subr.mxu0 0.0
  %2223 = vmatpush1.msra.mxu0 %v1884
  %2224 = vmatprep.subr.mxu0 0.0
  %2225 = vmatpush1.msra.mxu0 0.0
  %2226 = vmatprep.subr.mxu0 0.0
  %2227 = vmatpush1.msra.mxu0 0.0
  %2228 = vmatprep.subr.mxu0 0.0
  %2229 = vmatpush1.msra.mxu0 0.0
  %2230 = vmatprep.subr.mxu0 0.0
  %2231 = vmatpush1.msra.mxu0 0.0
  %2232 = vmatprep.subr.mxu0 0.0
  %2233 = vmatpush1.msra.mxu0 0.0
  %2234 = vmatprep.subr.mxu0 0.0
  %2235 = vmatpush1.msra.mxu0 0.0
  %2236 = vmatprep.subr.mxu0 0.0
  %2237 = vmatpush1.msra.mxu0 0.0
  %2238 = vmatprep.subr.mxu0 0.0
  %2239 = vmatpush1.msra.mxu0 0.0
  %2240 = vmatprep.subr.mxu0 0.0
  %2241 = vmatpush1.msra.mxu0 0.0
  %2242 = vmatprep.subr.mxu0 0.0
  %2243 = vmatpush1.msra.mxu0 0.0
  %2244 = vmatprep.subr.mxu0 0.0
  %2245 = vmatpush1.msra.mxu0 0.0
  %2246 = vmatprep.subr.mxu0 0.0
  %2247 = vmatpush1.msra.mxu0 0.0
  %2248 = vmatprep.subr.mxu0 0.0
  %2249 = vmatpush1.msra.mxu0 0.0
  %2250 = vmatprep.subr.mxu0 0.0
  %2251 = vmatpush1.msra.mxu0 0.0
  %2252 = vmatprep.subr.mxu0 0.0
  %2253 = vmatpush1.msra.mxu0 0.0
  %2254 = vmatprep.subr.mxu0 0.0
  %2255 = vmatpush1.msra.mxu0 0.0
  %2256 = vmatprep.subr.mxu0 0.0
  %2257 = vmatpush1.msra.mxu0 0.0
  %2258 = vmatprep.subr.mxu0 0.0
  %2259 = vmatpush1.msra.mxu0 0.0
  %2260 = vmatprep.subr.mxu0 0.0
  %2261 = vmatpush1.msra.mxu0 0.0
  %2262 = vmatprep.subr.mxu0 0.0
  %2263 = vmatpush1.msra.mxu0 0.0
  %2264 = vmatprep.subr.mxu0 0.0
  %2265 = vmatpush1.msra.mxu0 0.0
  %2266 = vmatprep.subr.mxu0 0.0
  %2267 = vmatpush1.msra.mxu0 0.0
  %2268 = vmatprep.subr.mxu0 0.0
  %2269 = vmatpush1.msra.mxu0 0.0
  %2270 = vmatprep.subr.mxu0 0.0
  %2271 = vmatpush1.msra.mxu0 0.0
  %2272 = vmatprep.subr.mxu0 0.0
  %2273 = vmatpush1.msra.mxu0 0.0
  %2274 = vmatprep.subr.mxu0 0.0
  %2275 = vmatpush1.msra.mxu0 0.0
  %2276 = vmatprep.subr.mxu0 0.0
  %2277 = vmatpush1.msra.mxu0 0.0
  %2278 = vmatprep.subr.mxu0 0.0
  %2279 = vmatpush1.msra.mxu0 0.0
  %2280 = vmatprep.mubr.f32.mxu0 0.0
  %2281 = vmatmul.mubr.f32.gmra.mrb[0].mxu0 %v2214
  %v2282 = vpop.f32.mrb[0].mxu0
  %v2283 = vadd.f32 0.0, %v2282
  %v2284 = vpop.f32.mrb[0].mxu0
  %2285 = vdwg.mxu0
  %v2286 = vmul.f32 %v2283, %v1962
  %v2287 = vmax.f32 %v2206, %v2286
  %2288 = vset.pattern.permute.xlu0 3
  %2289 = vperm.xlu0 %2288, %v2045
  %v2290 = vpop.permute.xlu0 %2289
  %vm2291 = vcmp.eq.s32.totalorder %v2290, %v80
  %v2292 = vsel %vm2291, 1, 0
  %v2293 = vcvt.s32.f32 %v2292
  %v2295 = vsel %vm115, %v2293, 0
  %2297 = vmatprep.subr.mxu0 0.0
  %2298 = vmatpush1.msra.mxu0 %v1881
  %2299 = vmatprep.subr.mxu0 0.0
  %2300 = vmatpush1.msra.mxu0 %v1882
  %2301 = vmatprep.subr.mxu0 0.0
  %2302 = vmatpush1.msra.mxu0 %v1883
  %2303 = vmatprep.subr.mxu0 0.0
  %2304 = vmatpush1.msra.mxu0 %v1884
  %2305 = vmatprep.subr.mxu0 0.0
  %2306 = vmatpush1.msra.mxu0 0.0
  %2307 = vmatprep.subr.mxu0 0.0
  %2308 = vmatpush1.msra.mxu0 0.0
  %2309 = vmatprep.subr.mxu0 0.0
  %2310 = vmatpush1.msra.mxu0 0.0
  %2311 = vmatprep.subr.mxu0 0.0
  %2312 = vmatpush1.msra.mxu0 0.0
  %2313 = vmatprep.subr.mxu0 0.0
  %2314 = vmatpush1.msra.mxu0 0.0
  %2315 = vmatprep.subr.mxu0 0.0
  %2316 = vmatpush1.msra.mxu0 0.0
  %2317 = vmatprep.subr.mxu0 0.0
  %2318 = vmatpush1.msra.mxu0 0.0
  %2319 = vmatprep.subr.mxu0 0.0
  %2320 = vmatpush1.msra.mxu0 0.0
  %2321 = vmatprep.subr.mxu0 0.0
  %2322 = vmatpush1.msra.mxu0 0.0
  %2323 = vmatprep.subr.mxu0 0.0
  %2324 = vmatpush1.msra.mxu0 0.0
  %2325 = vmatprep.subr.mxu0 0.0
  %2326 = vmatpush1.msra.mxu0 0.0
  %2327 = vmatprep.subr.mxu0 0.0
  %2328 = vmatpush1.msra.mxu0 0.0
  %2329 = vmatprep.subr.mxu0 0.0
  %2330 = vmatpush1.msra.mxu0 0.0
  %2331 = vmatprep.subr.mxu0 0.0
  %2332 = vmatpush1.msra.mxu0 0.0
  %2333 = vmatprep.subr.mxu0 0.0
  %2334 = vmatpush1.msra.mxu0 0.0
  %2335 = vmatprep.subr.mxu0 0.0
  %2336 = vmatpush1.msra.mxu0 0.0
  %2337 = vmatprep.subr.mxu0 0.0
  %2338 = vmatpush1.msra.mxu0 0.0
  %2339 = vmatprep.subr.mxu0 0.0
  %2340 = vmatpush1.msra.mxu0 0.0
  %2341 = vmatprep.subr.mxu0 0.0
  %2342 = vmatpush1.msra.mxu0 0.0
  %2343 = vmatprep.subr.mxu0 0.0
  %2344 = vmatpush1.msra.mxu0 0.0
  %2345 = vmatprep.subr.mxu0 0.0
  %2346 = vmatpush1.msra.mxu0 0.0
  %2347 = vmatprep.subr.mxu0 0.0
  %2348 = vmatpush1.msra.mxu0 0.0
  %2349 = vmatprep.subr.mxu0 0.0
  %2350 = vmatpush1.msra.mxu0 0.0
  %2351 = vmatprep.subr.mxu0 0.0
  %2352 = vmatpush1.msra.mxu0 0.0
  %2353 = vmatprep.subr.mxu0 0.0
  %2354 = vmatpush1.msra.mxu0 0.0
  %2355 = vmatprep.subr.mxu0 0.0
  %2356 = vmatpush1.msra.mxu0 0.0
  %2357 = vmatprep.subr.mxu0 0.0
  %2358 = vmatpush1.msra.mxu0 0.0
  %2359 = vmatprep.subr.mxu0 0.0
  %2360 = vmatpush1.msra.mxu0 0.0
  %2361 = vmatprep.mubr.f32.mxu0 0.0
  %2362 = vmatmul.mubr.f32.gmra.mrb[0].mxu0 %v2295
  %v2363 = vpop.f32.mrb[0].mxu0
  %v2364 = vadd.f32 0.0, %v2363
  %v2365 = vpop.f32.mrb[0].mxu0
  %2366 = vdwg.mxu0
  %v2367 = vmul.f32 %v2364, %v1962
  %v2368 = vmax.f32 %v2287, %v2367
  %2369 = vset.pattern.permute.xlu0 4
  %2370 = vperm.xlu0 %2369, %v2045
  %v2371 = vpop.permute.xlu0 %2370
  %vm2372 = vcmp.eq.s32.totalorder %v2371, %v80
  %v2373 = vsel %vm2372, 1, 0
  %v2374 = vcvt.s32.f32 %v2373
  %v2376 = vsel %vm115, %v2374, 0
  %2378 = vmatprep.subr.mxu0 0.0
  %2379 = vmatpush1.msra.mxu0 %v1881
  %2380 = vmatprep.subr.mxu0 0.0
  %2381 = vmatpush1.msra.mxu0 %v1882
  %2382 = vmatprep.subr.mxu0 0.0
  %2383 = vmatpush1.msra.mxu0 %v1883
  %2384 = vmatprep.subr.mxu0 0.0
  %2385 = vmatpush1.msra.mxu0 %v1884
  %2386 = vmatprep.subr.mxu0 0.0
  %2387 = vmatpush1.msra.mxu0 0.0
  %2388 = vmatprep.subr.mxu0 0.0
  %2389 = vmatpush1.msra.mxu0 0.0
  %2390 = vmatprep.subr.mxu0 0.0
  %2391 = vmatpush1.msra.mxu0 0.0
  %2392 = vmatprep.subr.mxu0 0.0
  %2393 = vmatpush1.msra.mxu0 0.0
  %2394 = vmatprep.subr.mxu0 0.0
  %2395 = vmatpush1.msra.mxu0 0.0
  %2396 = vmatprep.subr.mxu0 0.0
  %2397 = vmatpush1.msra.mxu0 0.0
  %2398 = vmatprep.subr.mxu0 0.0
  %2399 = vmatpush1.msra.mxu0 0.0
  %2400 = vmatprep.subr.mxu0 0.0
  %2401 = vmatpush1.msra.mxu0 0.0
  %2402 = vmatprep.subr.mxu0 0.0
  %2403 = vmatpush1.msra.mxu0 0.0
  %2404 = vmatprep.subr.mxu0 0.0
  %2405 = vmatpush1.msra.mxu0 0.0
  %2406 = vmatprep.subr.mxu0 0.0
  %2407 = vmatpush1.msra.mxu0 0.0
  %2408 = vmatprep.subr.mxu0 0.0
  %2409 = vmatpush1.msra.mxu0 0.0
  %2410 = vmatprep.subr.mxu0 0.0
  %2411 = vmatpush1.msra.mxu0 0.0
  %2412 = vmatprep.subr.mxu0 0.0
  %2413 = vmatpush1.msra.mxu0 0.0
  %2414 = vmatprep.subr.mxu0 0.0
  %2415 = vmatpush1.msra.mxu0 0.0
  %2416 = vmatprep.subr.mxu0 0.0
  %2417 = vmatpush1.msra.mxu0 0.0
  %2418 = vmatprep.subr.mxu0 0.0
  %2419 = vmatpush1.msra.mxu0 0.0
  %2420 = vmatprep.subr.mxu0 0.0
  %2421 = vmatpush1.msra.mxu0 0.0
  %2422 = vmatprep.subr.mxu0 0.0
  %2423 = vmatpush1.msra.mxu0 0.0
  %2424 = vmatprep.subr.mxu0 0.0
  %2425 = vmatpush1.msra.mxu0 0.0
  %2426 = vmatprep.subr.mxu0 0.0
  %2427 = vmatpush1.msra.mxu0 0.0
  %2428 = vmatprep.subr.mxu0 0.0
  %2429 = vmatpush1.msra.mxu0 0.0
  %2430 = vmatprep.subr.mxu0 0.0
  %2431 = vmatpush1.msra.mxu0 0.0
  %2432 = vmatprep.subr.mxu0 0.0
  %2433 = vmatpush1.msra.mxu0 0.0
  %2434 = vmatprep.subr.mxu0 0.0
  %2435 = vmatpush1.msra.mxu0 0.0
  %2436 = vmatprep.subr.mxu0 0.0
  %2437 = vmatpush1.msra.mxu0 0.0
  %2438 = vmatprep.subr.mxu0 0.0
  %2439 = vmatpush1.msra.mxu0 0.0
  %2440 = vmatprep.subr.mxu0 0.0
  %2441 = vmatpush1.msra.mxu0 0.0
  %2442 = vmatprep.mubr.f32.mxu0 0.0
  %2443 = vmatmul.mubr.f32.gmra.mrb[0].mxu0 %v2376
  %v2444 = vpop.f32.mrb[0].mxu0
  %v2445 = vadd.f32 0.0, %v2444
  %v2446 = vpop.f32.mrb[0].mxu0
  %2447 = vdwg.mxu0
  %v2448 = vmul.f32 %v2445, %v1962
  %v2449 = vmax.f32 %v2368, %v2448
  %2450 = vset.pattern.permute.xlu0 5
  %2451 = vperm.xlu0 %2450, %v2045
  %v2452 = vpop.permute.xlu0 %2451
  %vm2453 = vcmp.eq.s32.totalorder %v2452, %v80
  %v2454 = vsel %vm2453, 1, 0
  %v2455 = vcvt.s32.f32 %v2454
  %v2457 = vsel %vm115, %v2455, 0
  %2459 = vmatprep.subr.mxu0 0.0
  %2460 = vmatpush1.msra.mxu0 %v1881
  %2461 = vmatprep.subr.mxu0 0.0
  %2462 = vmatpush1.msra.mxu0 %v1882
  %2463 = vmatprep.subr.mxu0 0.0
  %2464 = vmatpush1.msra.mxu0 %v1883
  %2465 = vmatprep.subr.mxu0 0.0
  %2466 = vmatpush1.msra.mxu0 %v1884
  %2467 = vmatprep.subr.mxu0 0.0
  %2468 = vmatpush1.msra.mxu0 0.0
  %2469 = vmatprep.subr.mxu0 0.0
  %2470 = vmatpush1.msra.mxu0 0.0
  %2471 = vmatprep.subr.mxu0 0.0
  %2472 = vmatpush1.msra.mxu0 0.0
  %2473 = vmatprep.subr.mxu0 0.0
  %2474 = vmatpush1.msra.mxu0 0.0
  %2475 = vmatprep.subr.mxu0 0.0
  %2476 = vmatpush1.msra.mxu0 0.0
  %2477 = vmatprep.subr.mxu0 0.0
  %2478 = vmatpush1.msra.mxu0 0.0
  %2479 = vmatprep.subr.mxu0 0.0
  %2480 = vmatpush1.msra.mxu0 0.0
  %2481 = vmatprep.subr.mxu0 0.0
  %2482 = vmatpush1.msra.mxu0 0.0
  %2483 = vmatprep.subr.mxu0 0.0
  %2484 = vmatpush1.msra.mxu0 0.0
  %2485 = vmatprep.subr.mxu0 0.0
  %2486 = vmatpush1.msra.mxu0 0.0
  %2487 = vmatprep.subr.mxu0 0.0
  %2488 = vmatpush1.msra.mxu0 0.0
  %2489 = vmatprep.subr.mxu0 0.0
  %2490 = vmatpush1.msra.mxu0 0.0
  %2491 = vmatprep.subr.mxu0 0.0
  %2492 = vmatpush1.msra.mxu0 0.0
  %2493 = vmatprep.subr.mxu0 0.0
  %2494 = vmatpush1.msra.mxu0 0.0
  %2495 = vmatprep.subr.mxu0 0.0
  %2496 = vmatpush1.msra.mxu0 0.0
  %2497 = vmatprep.subr.mxu0 0.0
  %2498 = vmatpush1.msra.mxu0 0.0
  %2499 = vmatprep.subr.mxu0 0.0
  %2500 = vmatpush1.msra.mxu0 0.0
  %2501 = vmatprep.subr.mxu0 0.0
  %2502 = vmatpush1.msra.mxu0 0.0
  %2503 = vmatprep.subr.mxu0 0.0
  %2504 = vmatpush1.msra.mxu0 0.0
  %2505 = vmatprep.subr.mxu0 0.0
  %2506 = vmatpush1.msra.mxu0 0.0
  %2507 = vmatprep.subr.mxu0 0.0
  %2508 = vmatpush1.msra.mxu0 0.0
  %2509 = vmatprep.subr.mxu0 0.0
  %2510 = vmatpush1.msra.mxu0 0.0
  %2511 = vmatprep.subr.mxu0 0.0
  %2512 = vmatpush1.msra.mxu0 0.0
  %2513 = vmatprep.subr.mxu0 0.0
  %2514 = vmatpush1.msra.mxu0 0.0
  %2515 = vmatprep.subr.mxu0 0.0
  %2516 = vmatpush1.msra.mxu0 0.0
  %2517 = vmatprep.subr.mxu0 0.0
  %2518 = vmatpush1.msra.mxu0 0.0
  %2519 = vmatprep.subr.mxu0 0.0
  %2520 = vmatpush1.msra.mxu0 0.0
  %2521 = vmatprep.subr.mxu0 0.0
  %2522 = vmatpush1.msra.mxu0 0.0
  %2523 = vmatprep.mubr.f32.mxu0 0.0
  %2524 = vmatmul.mubr.f32.gmra.mrb[0].mxu0 %v2457
  %v2525 = vpop.f32.mrb[0].mxu0
  %v2526 = vadd.f32 0.0, %v2525
  %v2527 = vpop.f32.mrb[0].mxu0
  %2528 = vdwg.mxu0
  %v2529 = vmul.f32 %v2526, %v1962
  %v2530 = vmax.f32 %v2449, %v2529
  %v2531 = vld [vmem:[%s10] sm:$0xf]
  %2532 = vset.pattern.permute.xlu0 0
  %2533 = vperm.xlu0 %2532, %v2531
  %v2534 = vpop.permute.xlu0 %2533
  %vm2535 = vcmp.eq.s32.totalorder %v2534, %v80
  %v2536 = vsel %vm2535, 1, 0
  %v2537 = vcvt.s32.f32 %v2536
  %v2539 = vsel %vm115, %v2537, 0
  %2541 = vmatprep.subr.mxu0 0.0
  %2542 = vmatpush1.msra.mxu0 %v1873
  %2543 = vmatprep.subr.mxu0 0.0
  %2544 = vmatpush1.msra.mxu0 %v1874
  %2545 = vmatprep.subr.mxu0 0.0
  %2546 = vmatpush1.msra.mxu0 %v1875
  %2547 = vmatprep.subr.mxu0 0.0
  %2548 = vmatpush1.msra.mxu0 %v1876
  %2549 = vmatprep.subr.mxu0 0.0
  %2550 = vmatpush1.msra.mxu0 0.0
  %2551 = vmatprep.subr.mxu0 0.0
  %2552 = vmatpush1.msra.mxu0 0.0
  %2553 = vmatprep.subr.mxu0 0.0
  %2554 = vmatpush1.msra.mxu0 0.0
  %2555 = vmatprep.subr.mxu0 0.0
  %2556 = vmatpush1.msra.mxu0 0.0
  %2557 = vmatprep.subr.mxu0 0.0
  %2558 = vmatpush1.msra.mxu0 0.0
  %2559 = vmatprep.subr.mxu0 0.0
  %2560 = vmatpush1.msra.mxu0 0.0
  %2561 = vmatprep.subr.mxu0 0.0
  %2562 = vmatpush1.msra.mxu0 0.0
  %2563 = vmatprep.subr.mxu0 0.0
  %2564 = vmatpush1.msra.mxu0 0.0
  %2565 = vmatprep.subr.mxu0 0.0
  %2566 = vmatpush1.msra.mxu0 0.0
  %2567 = vmatprep.subr.mxu0 0.0
  %2568 = vmatpush1.msra.mxu0 0.0
  %2569 = vmatprep.subr.mxu0 0.0
  %2570 = vmatpush1.msra.mxu0 0.0
  %2571 = vmatprep.subr.mxu0 0.0
  %2572 = vmatpush1.msra.mxu0 0.0
  %2573 = vmatprep.subr.mxu0 0.0
  %2574 = vmatpush1.msra.mxu0 0.0
  %2575 = vmatprep.subr.mxu0 0.0
  %2576 = vmatpush1.msra.mxu0 0.0
  %2577 = vmatprep.subr.mxu0 0.0
  %2578 = vmatpush1.msra.mxu0 0.0
  %2579 = vmatprep.subr.mxu0 0.0
  %2580 = vmatpush1.msra.mxu0 0.0
  %2581 = vmatprep.subr.mxu0 0.0
  %2582 = vmatpush1.msra.mxu0 0.0
  %2583 = vmatprep.subr.mxu0 0.0
  %2584 = vmatpush1.msra.mxu0 0.0
  %2585 = vmatprep.subr.mxu0 0.0
  %2586 = vmatpush1.msra.mxu0 0.0
  %2587 = vmatprep.subr.mxu0 0.0
  %2588 = vmatpush1.msra.mxu0 0.0
  %2589 = vmatprep.subr.mxu0 0.0
  %2590 = vmatpush1.msra.mxu0 0.0
  %2591 = vmatprep.subr.mxu0 0.0
  %2592 = vmatpush1.msra.mxu0 0.0
  %2593 = vmatprep.subr.mxu0 0.0
  %2594 = vmatpush1.msra.mxu0 0.0
  %2595 = vmatprep.subr.mxu0 0.0
  %2596 = vmatpush1.msra.mxu0 0.0
  %2597 = vmatprep.subr.mxu0 0.0
  %2598 = vmatpush1.msra.mxu0 0.0
  %2599 = vmatprep.subr.mxu0 0.0
  %2600 = vmatpush1.msra.mxu0 0.0
  %2601 = vmatprep.subr.mxu0 0.0
  %2602 = vmatpush1.msra.mxu0 0.0
  %2603 = vmatprep.subr.mxu0 0.0
  %2604 = vmatpush1.msra.mxu0 0.0
  %2605 = vmatprep.mubr.f32.mxu0 0.0
  %2606 = vmatmul.mubr.f32.gmra.mrb[0].mxu0 %v2539
  %v2607 = vpop.f32.mrb[0].mxu0
  %v2608 = vadd.f32 0.0, %v2607
  %v2609 = vpop.f32.mrb[0].mxu0
  %2610 = vdwg.mxu0
  %v2611 = vmul.f32 %v2608, %v2042
  %2612 = vset.pattern.permute.xlu0 1
  %2613 = vperm.xlu0 %2612, %v2531
  %v2614 = vpop.permute.xlu0 %2613
  %vm2615 = vcmp.eq.s32.totalorder %v2614, %v80
  %v2616 = vsel %vm2615, 1, 0
  %v2617 = vcvt.s32.f32 %v2616
  %v2619 = vsel %vm115, %v2617, 0
  %2621 = vmatprep.subr.mxu0 0.0
  %2622 = vmatpush1.msra.mxu0 %v1873
  %2623 = vmatprep.subr.mxu0 0.0
  %2624 = vmatpush1.msra.mxu0 %v1874
  %2625 = vmatprep.subr.mxu0 0.0
  %2626 = vmatpush1.msra.mxu0 %v1875
  %2627 = vmatprep.subr.mxu0 0.0
  %2628 = vmatpush1.msra.mxu0 %v1876
  %2629 = vmatprep.subr.mxu0 0.0
  %2630 = vmatpush1.msra.mxu0 0.0
  %2631 = vmatprep.subr.mxu0 0.0
  %2632 = vmatpush1.msra.mxu0 0.0
  %2633 = vmatprep.subr.mxu0 0.0
  %2634 = vmatpush1.msra.mxu0 0.0
  %2635 = vmatprep.subr.mxu0 0.0
  %2636 = vmatpush1.msra.mxu0 0.0
  %2637 = vmatprep.subr.mxu0 0.0
  %2638 = vmatpush1.msra.mxu0 0.0
  %2639 = vmatprep.subr.mxu0 0.0
  %2640 = vmatpush1.msra.mxu0 0.0
  %2641 = vmatprep.subr.mxu0 0.0
  %2642 = vmatpush1.msra.mxu0 0.0
  %2643 = vmatprep.subr.mxu0 0.0
  %2644 = vmatpush1.msra.mxu0 0.0
  %2645 = vmatprep.subr.mxu0 0.0
  %2646 = vmatpush1.msra.mxu0 0.0
  %2647 = vmatprep.subr.mxu0 0.0
  %2648 = vmatpush1.msra.mxu0 0.0
  %2649 = vmatprep.subr.mxu0 0.0
  %2650 = vmatpush1.msra.mxu0 0.0
  %2651 = vmatprep.subr.mxu0 0.0
  %2652 = vmatpush1.msra.mxu0 0.0
  %2653 = vmatprep.subr.mxu0 0.0
  %2654 = vmatpush1.msra.mxu0 0.0
  %2655 = vmatprep.subr.mxu0 0.0
  %2656 = vmatpush1.msra.mxu0 0.0
  %2657 = vmatprep.subr.mxu0 0.0
  %2658 = vmatpush1.msra.mxu0 0.0
  %2659 = vmatprep.subr.mxu0 0.0
  %2660 = vmatpush1.msra.mxu0 0.0
  %2661 = vmatprep.subr.mxu0 0.0
  %2662 = vmatpush1.msra.mxu0 0.0
  %2663 = vmatprep.subr.mxu0 0.0
  %2664 = vmatpush1.msra.mxu0 0.0
  %2665 = vmatprep.subr.mxu0 0.0
  %2666 = vmatpush1.msra.mxu0 0.0
  %2667 = vmatprep.subr.mxu0 0.0
  %2668 = vmatpush1.msra.mxu0 0.0
  %2669 = vmatprep.subr.mxu0 0.0
  %2670 = vmatpush1.msra.mxu0 0.0
  %2671 = vmatprep.subr.mxu0 0.0
  %2672 = vmatpush1.msra.mxu0 0.0
  %2673 = vmatprep.subr.mxu0 0.0
  %2674 = vmatpush1.msra.mxu0 0.0
  %2675 = vmatprep.subr.mxu0 0.0
  %2676 = vmatpush1.msra.mxu0 0.0
  %2677 = vmatprep.subr.mxu0 0.0
  %2678 = vmatpush1.msra.mxu0 0.0
  %2679 = vmatprep.subr.mxu0 0.0
  %2680 = vmatpush1.msra.mxu0 0.0
  %2681 = vmatprep.subr.mxu0 0.0
  %2682 = vmatpush1.msra.mxu0 0.0
  %2683 = vmatprep.subr.mxu0 0.0
  %2684 = vmatpush1.msra.mxu0 0.0
  %2685 = vmatprep.mubr.f32.mxu0 0.0
  %2686 = vmatmul.mubr.f32.gmra.mrb[0].mxu0 %v2619
  %v2687 = vpop.f32.mrb[0].mxu0
  %v2688 = vadd.f32 0.0, %v2687
  %v2689 = vpop.f32.mrb[0].mxu0
  %2690 = vdwg.mxu0
  %v2691 = vmul.f32 %v2688, %v2042
  %v2692 = vmax.f32 %v2611, %v2691
  %2693 = vset.pattern.permute.xlu0 2
  %2694 = vperm.xlu0 %2693, %v2531
  %v2695 = vpop.permute.xlu0 %2694
  %vm2696 = vcmp.eq.s32.totalorder %v2695, %v80
  %v2697 = vsel %vm2696, 1, 0
  %v2698 = vcvt.s32.f32 %v2697
  %v2700 = vsel %vm115, %v2698, 0
  %2702 = vmatprep.subr.mxu0 0.0
  %2703 = vmatpush1.msra.mxu0 %v1873
  %2704 = vmatprep.subr.mxu0 0.0
  %2705 = vmatpush1.msra.mxu0 %v1874
  %2706 = vmatprep.subr.mxu0 0.0
  %2707 = vmatpush1.msra.mxu0 %v1875
  %2708 = vmatprep.subr.mxu0 0.0
  %2709 = vmatpush1.msra.mxu0 %v1876
  %2710 = vmatprep.subr.mxu0 0.0
  %2711 = vmatpush1.msra.mxu0 0.0
  %2712 = vmatprep.subr.mxu0 0.0
  %2713 = vmatpush1.msra.mxu0 0.0
  %2714 = vmatprep.subr.mxu0 0.0
  %2715 = vmatpush1.msra.mxu0 0.0
  %2716 = vmatprep.subr.mxu0 0.0
  %2717 = vmatpush1.msra.mxu0 0.0
  %2718 = vmatprep.subr.mxu0 0.0
  %2719 = vmatpush1.msra.mxu0 0.0
  %2720 = vmatprep.subr.mxu0 0.0
  %2721 = vmatpush1.msra.mxu0 0.0
  %2722 = vmatprep.subr.mxu0 0.0
  %2723 = vmatpush1.msra.mxu0 0.0
  %2724 = vmatprep.subr.mxu0 0.0
  %2725 = vmatpush1.msra.mxu0 0.0
  %2726 = vmatprep.subr.mxu0 0.0
  %2727 = vmatpush1.msra.mxu0 0.0
  %2728 = vmatprep.subr.mxu0 0.0
  %2729 = vmatpush1.msra.mxu0 0.0
  %2730 = vmatprep.subr.mxu0 0.0
  %2731 = vmatpush1.msra.mxu0 0.0
  %2732 = vmatprep.subr.mxu0 0.0
  %2733 = vmatpush1.msra.mxu0 0.0
  %2734 = vmatprep.subr.mxu0 0.0
  %2735 = vmatpush1.msra.mxu0 0.0
  %2736 = vmatprep.subr.mxu0 0.0
  %2737 = vmatpush1.msra.mxu0 0.0
  %2738 = vmatprep.subr.mxu0 0.0
  %2739 = vmatpush1.msra.mxu0 0.0
  %2740 = vmatprep.subr.mxu0 0.0
  %2741 = vmatpush1.msra.mxu0 0.0
  %2742 = vmatprep.subr.mxu0 0.0
  %2743 = vmatpush1.msra.mxu0 0.0
  %2744 = vmatprep.subr.mxu0 0.0
  %2745 = vmatpush1.msra.mxu0 0.0
  %2746 = vmatprep.subr.mxu0 0.0
  %2747 = vmatpush1.msra.mxu0 0.0
  %2748 = vmatprep.subr.mxu0 0.0
  %2749 = vmatpush1.msra.mxu0 0.0
  %2750 = vmatprep.subr.mxu0 0.0
  %2751 = vmatpush1.msra.mxu0 0.0
  %2752 = vmatprep.subr.mxu0 0.0
  %2753 = vmatpush1.msra.mxu0 0.0
  %2754 = vmatprep.subr.mxu0 0.0
  %2755 = vmatpush1.msra.mxu0 0.0
  %2756 = vmatprep.subr.mxu0 0.0
  %2757 = vmatpush1.msra.mxu0 0.0
  %2758 = vmatprep.subr.mxu0 0.0
  %2759 = vmatpush1.msra.mxu0 0.0
  %2760 = vmatprep.subr.mxu0 0.0
  %2761 = vmatpush1.msra.mxu0 0.0
  %2762 = vmatprep.subr.mxu0 0.0
  %2763 = vmatpush1.msra.mxu0 0.0
  %2764 = vmatprep.subr.mxu0 0.0
  %2765 = vmatpush1.msra.mxu0 0.0
  %2766 = vmatprep.mubr.f32.mxu0 0.0
  %2767 = vmatmul.mubr.f32.gmra.mrb[0].mxu0 %v2700
  %v2768 = vpop.f32.mrb[0].mxu0
  %v2769 = vadd.f32 0.0, %v2768
  %v2770 = vpop.f32.mrb[0].mxu0
  %2771 = vdwg.mxu0
  %v2772 = vmul.f32 %v2769, %v2042
  %v2773 = vmax.f32 %v2692, %v2772
  %2774 = vset.pattern.permute.xlu0 3
  %2775 = vperm.xlu0 %2774, %v2531
  %v2776 = vpop.permute.xlu0 %2775
  %vm2777 = vcmp.eq.s32.totalorder %v2776, %v80
  %v2778 = vsel %vm2777, 1, 0
  %v2779 = vcvt.s32.f32 %v2778
  %v2781 = vsel %vm115, %v2779, 0
  %2783 = vmatprep.subr.mxu0 0.0
  %2784 = vmatpush1.msra.mxu0 %v1873
  %2785 = vmatprep.subr.mxu0 0.0
  %2786 = vmatpush1.msra.mxu0 %v1874
  %2787 = vmatprep.subr.mxu0 0.0
  %2788 = vmatpush1.msra.mxu0 %v1875
  %2789 = vmatprep.subr.mxu0 0.0
  %2790 = vmatpush1.msra.mxu0 %v1876
  %2791 = vmatprep.subr.mxu0 0.0
  %2792 = vmatpush1.msra.mxu0 0.0
  %2793 = vmatprep.subr.mxu0 0.0
  %2794 = vmatpush1.msra.mxu0 0.0
  %2795 = vmatprep.subr.mxu0 0.0
  %2796 = vmatpush1.msra.mxu0 0.0
  %2797 = vmatprep.subr.mxu0 0.0
  %2798 = vmatpush1.msra.mxu0 0.0
  %2799 = vmatprep.subr.mxu0 0.0
  %2800 = vmatpush1.msra.mxu0 0.0
  %2801 = vmatprep.subr.mxu0 0.0
  %2802 = vmatpush1.msra.mxu0 0.0
  %2803 = vmatprep.subr.mxu0 0.0
  %2804 = vmatpush1.msra.mxu0 0.0
  %2805 = vmatprep.subr.mxu0 0.0
  %2806 = vmatpush1.msra.mxu0 0.0
  %2807 = vmatprep.subr.mxu0 0.0
  %2808 = vmatpush1.msra.mxu0 0.0
  %2809 = vmatprep.subr.mxu0 0.0
  %2810 = vmatpush1.msra.mxu0 0.0
  %2811 = vmatprep.subr.mxu0 0.0
  %2812 = vmatpush1.msra.mxu0 0.0
  %2813 = vmatprep.subr.mxu0 0.0
  %2814 = vmatpush1.msra.mxu0 0.0
  %2815 = vmatprep.subr.mxu0 0.0
  %2816 = vmatpush1.msra.mxu0 0.0
  %2817 = vmatprep.subr.mxu0 0.0
  %2818 = vmatpush1.msra.mxu0 0.0
  %2819 = vmatprep.subr.mxu0 0.0
  %2820 = vmatpush1.msra.mxu0 0.0
  %2821 = vmatprep.subr.mxu0 0.0
  %2822 = vmatpush1.msra.mxu0 0.0
  %2823 = vmatprep.subr.mxu0 0.0
  %2824 = vmatpush1.msra.mxu0 0.0
  %2825 = vmatprep.subr.mxu0 0.0
  %2826 = vmatpush1.msra.mxu0 0.0
  %2827 = vmatprep.subr.mxu0 0.0
  %2828 = vmatpush1.msra.mxu0 0.0
  %2829 = vmatprep.subr.mxu0 0.0
  %2830 = vmatpush1.msra.mxu0 0.0
  %2831 = vmatprep.subr.mxu0 0.0
  %2832 = vmatpush1.msra.mxu0 0.0
  %2833 = vmatprep.subr.mxu0 0.0
  %2834 = vmatpush1.msra.mxu0 0.0
  %2835 = vmatprep.subr.mxu0 0.0
  %2836 = vmatpush1.msra.mxu0 0.0
  %2837 = vmatprep.subr.mxu0 0.0
  %2838 = vmatpush1.msra.mxu0 0.0
  %2839 = vmatprep.subr.mxu0 0.0
  %2840 = vmatpush1.msra.mxu0 0.0
  %2841 = vmatprep.subr.mxu0 0.0
  %2842 = vmatpush1.msra.mxu0 0.0
  %2843 = vmatprep.subr.mxu0 0.0
  %2844 = vmatpush1.msra.mxu0 0.0
  %2845 = vmatprep.subr.mxu0 0.0
  %2846 = vmatpush1.msra.mxu0 0.0
  %2847 = vmatprep.mubr.f32.mxu0 0.0
  %2848 = vmatmul.mubr.f32.gmra.mrb[0].mxu0 %v2781
  %v2849 = vpop.f32.mrb[0].mxu0
  %v2850 = vadd.f32 0.0, %v2849
  %v2851 = vpop.f32.mrb[0].mxu0
  %2852 = vdwg.mxu0
  %v2853 = vmul.f32 %v2850, %v2042
  %v2854 = vmax.f32 %v2773, %v2853
  %2855 = vset.pattern.permute.xlu0 4
  %2856 = vperm.xlu0 %2855, %v2531
  %v2857 = vpop.permute.xlu0 %2856
  %vm2858 = vcmp.eq.s32.totalorder %v2857, %v80
  %v2859 = vsel %vm2858, 1, 0
  %v2860 = vcvt.s32.f32 %v2859
  %v2862 = vsel %vm115, %v2860, 0
  %2864 = vmatprep.subr.mxu0 0.0
  %2865 = vmatpush1.msra.mxu0 %v1873
  %2866 = vmatprep.subr.mxu0 0.0
  %2867 = vmatpush1.msra.mxu0 %v1874
  %2868 = vmatprep.subr.mxu0 0.0
  %2869 = vmatpush1.msra.mxu0 %v1875
  %2870 = vmatprep.subr.mxu0 0.0
  %2871 = vmatpush1.msra.mxu0 %v1876
  %2872 = vmatprep.subr.mxu0 0.0
  %2873 = vmatpush1.msra.mxu0 0.0
  %2874 = vmatprep.subr.mxu0 0.0
  %2875 = vmatpush1.msra.mxu0 0.0
  %2876 = vmatprep.subr.mxu0 0.0
  %2877 = vmatpush1.msra.mxu0 0.0
  %2878 = vmatprep.subr.mxu0 0.0
  %2879 = vmatpush1.msra.mxu0 0.0
  %2880 = vmatprep.subr.mxu0 0.0
  %2881 = vmatpush1.msra.mxu0 0.0
  %2882 = vmatprep.subr.mxu0 0.0
  %2883 = vmatpush1.msra.mxu0 0.0
  %2884 = vmatprep.subr.mxu0 0.0
  %2885 = vmatpush1.msra.mxu0 0.0
  %2886 = vmatprep.subr.mxu0 0.0
  %2887 = vmatpush1.msra.mxu0 0.0
  %2888 = vmatprep.subr.mxu0 0.0
  %2889 = vmatpush1.msra.mxu0 0.0
  %2890 = vmatprep.subr.mxu0 0.0
  %2891 = vmatpush1.msra.mxu0 0.0
  %2892 = vmatprep.subr.mxu0 0.0
  %2893 = vmatpush1.msra.mxu0 0.0
  %2894 = vmatprep.subr.mxu0 0.0
  %2895 = vmatpush1.msra.mxu0 0.0
  %2896 = vmatprep.subr.mxu0 0.0
  %2897 = vmatpush1.msra.mxu0 0.0
  %2898 = vmatprep.subr.mxu0 0.0
  %2899 = vmatpush1.msra.mxu0 0.0
  %2900 = vmatprep.subr.mxu0 0.0
  %2901 = vmatpush1.msra.mxu0 0.0
  %2902 = vmatprep.subr.mxu0 0.0
  %2903 = vmatpush1.msra.mxu0 0.0
  %2904 = vmatprep.subr.mxu0 0.0
  %2905 = vmatpush1.msra.mxu0 0.0
  %2906 = vmatprep.subr.mxu0 0.0
  %2907 = vmatpush1.msra.mxu0 0.0
  %2908 = vmatprep.subr.mxu0 0.0
  %2909 = vmatpush1.msra.mxu0 0.0
  %2910 = vmatprep.subr.mxu0 0.0
  %2911 = vmatpush1.msra.mxu0 0.0
  %2912 = vmatprep.subr.mxu0 0.0
  %2913 = vmatpush1.msra.mxu0 0.0
  %2914 = vmatprep.subr.mxu0 0.0
  %2915 = vmatpush1.msra.mxu0 0.0
  %2916 = vmatprep.subr.mxu0 0.0
  %2917 = vmatpush1.msra.mxu0 0.0
  %2918 = vmatprep.subr.mxu0 0.0
  %2919 = vmatpush1.msra.mxu0 0.0
  %2920 = vmatprep.subr.mxu0 0.0
  %2921 = vmatpush1.msra.mxu0 0.0
  %2922 = vmatprep.subr.mxu0 0.0
  %2923 = vmatpush1.msra.mxu0 0.0
  %2924 = vmatprep.subr.mxu0 0.0
  %2925 = vmatpush1.msra.mxu0 0.0
  %2926 = vmatprep.subr.mxu0 0.0
  %2927 = vmatpush1.msra.mxu0 0.0
  %2928 = vmatprep.mubr.f32.mxu0 0.0
  %2929 = vmatmul.mubr.f32.gmra.mrb[0].mxu0 %v2862
  %v2930 = vpop.f32.mrb[0].mxu0
  %v2931 = vadd.f32 0.0, %v2930
  %v2932 = vpop.f32.mrb[0].mxu0
  %2933 = vdwg.mxu0
  %v2934 = vmul.f32 %v2931, %v2042
  %v2935 = vmax.f32 %v2854, %v2934
  %2936 = vset.pattern.permute.xlu0 5
  %2937 = vperm.xlu0 %2936, %v2531
  %v2938 = vpop.permute.xlu0 %2937
  %vm2939 = vcmp.eq.s32.totalorder %v2938, %v80
  %v2940 = vsel %vm2939, 1, 0
  %v2941 = vcvt.s32.f32 %v2940
  %v2943 = vsel %vm115, %v2941, 0
  %2945 = vmatprep.subr.mxu0 0.0
  %2946 = vmatpush1.msra.mxu0 %v1873
  %2947 = vmatprep.subr.mxu0 0.0
  %2948 = vmatpush1.msra.mxu0 %v1874
  %2949 = vmatprep.subr.mxu0 0.0
  %2950 = vmatpush1.msra.mxu0 %v1875
  %2951 = vmatprep.subr.mxu0 0.0
  %2952 = vmatpush1.msra.mxu0 %v1876
  %2953 = vmatprep.subr.mxu0 0.0
  %2954 = vmatpush1.msra.mxu0 0.0
  %2955 = vmatprep.subr.mxu0 0.0
  %2956 = vmatpush1.msra.mxu0 0.0
  %2957 = vmatprep.subr.mxu0 0.0
  %2958 = vmatpush1.msra.mxu0 0.0
  %2959 = vmatprep.subr.mxu0 0.0
  %2960 = vmatpush1.msra.mxu0 0.0
  %2961 = vmatprep.subr.mxu0 0.0
  %2962 = vmatpush1.msra.mxu0 0.0
  %2963 = vmatprep.subr.mxu0 0.0
  %2964 = vmatpush1.msra.mxu0 0.0
  %2965 = vmatprep.subr.mxu0 0.0
  %2966 = vmatpush1.msra.mxu0 0.0
  %2967 = vmatprep.subr.mxu0 0.0
  %2968 = vmatpush1.msra.mxu0 0.0
  %2969 = vmatprep.subr.mxu0 0.0
  %2970 = vmatpush1.msra.mxu0 0.0
  %2971 = vmatprep.subr.mxu0 0.0
  %2972 = vmatpush1.msra.mxu0 0.0
  %2973 = vmatprep.subr.mxu0 0.0
  %2974 = vmatpush1.msra.mxu0 0.0
  %2975 = vmatprep.subr.mxu0 0.0
  %2976 = vmatpush1.msra.mxu0 0.0
  %2977 = vmatprep.subr.mxu0 0.0
  %2978 = vmatpush1.msra.mxu0 0.0
  %2979 = vmatprep.subr.mxu0 0.0
  %2980 = vmatpush1.msra.mxu0 0.0
  %2981 = vmatprep.subr.mxu0 0.0
  %2982 = vmatpush1.msra.mxu0 0.0
  %2983 = vmatprep.subr.mxu0 0.0
  %2984 = vmatpush1.msra.mxu0 0.0
  %2985 = vmatprep.subr.mxu0 0.0
  %2986 = vmatpush1.msra.mxu0 0.0
  %2987 = vmatprep.subr.mxu0 0.0
  %2988 = vmatpush1.msra.mxu0 0.0
  %2989 = vmatprep.subr.mxu0 0.0
  %2990 = vmatpush1.msra.mxu0 0.0
  %2991 = vmatprep.subr.mxu0 0.0
  %2992 = vmatpush1.msra.mxu0 0.0
  %2993 = vmatprep.subr.mxu0 0.0
  %2994 = vmatpush1.msra.mxu0 0.0
  %2995 = vmatprep.subr.mxu0 0.0
  %2996 = vmatpush1.msra.mxu0 0.0
  %2997 = vmatprep.subr.mxu0 0.0
  %2998 = vmatpush1.msra.mxu0 0.0
  %2999 = vmatprep.subr.mxu0 0.0
  %3000 = vmatpush1.msra.mxu0 0.0
  %3001 = vmatprep.subr.mxu0 0.0
  %3002 = vmatpush1.msra.mxu0 0.0
  %3003 = vmatprep.subr.mxu0 0.0
  %3004 = vmatpush1.msra.mxu0 0.0
  %3005 = vmatprep.subr.mxu0 0.0
  %3006 = vmatpush1.msra.mxu0 0.0
  %3007 = vmatprep.subr.mxu0 0.0
  %3008 = vmatpush1.msra.mxu0 0.0
  %3009 = vmatprep.mubr.f32.mxu0 0.0
  %3010 = vmatmul.mubr.f32.gmra.mrb[0].mxu0 %v2943
  %v3011 = vpop.f32.mrb[0].mxu0
  %v3012 = vadd.f32 0.0, %v3011
  %v3013 = vpop.f32.mrb[0].mxu0
  %3014 = vdwg.mxu0
  %v3015 = vmul.f32 %v3012, %v2042
  %v3016 = vmax.f32 %v2935, %v3015
  %v3017 = vld [vmem:[%s13] sm:$0xff]
  %v3018 = vld [vmem:[%s13 + $0x8] sm:$0xff]
  %v3019 = vld [vmem:[%s13 + $0x10] sm:$0xff]
  %v3020 = vld [vmem:[%s13 + $0x18] sm:$0xff]
  %v3021 = vld [vmem:[%s13 + $0x20] sm:$0xff]
  %v3022 = vld [vmem:[%s13 + $0x28] sm:$0xff]
  %v3023 = vld [vmem:[%s13 + $0x30] sm:$0xff]
  %v3024 = vld [vmem:[%s13 + $0x38] sm:$0xff]
  %v3025 = vld [vmem:[%s13 + $0x40] sm:$0xff]
  %v3026 = vld [vmem:[%s13 + $0x48] sm:$0xff]
  %v3027 = vld [vmem:[%s13 + $0x50] sm:$0xff]
  %v3028 = vld [vmem:[%s13 + $0x58] sm:$0xff]
  %v3029 = vld [vmem:[%s13 + $0x60] sm:$0xff]
  %v3030 = vld [vmem:[%s13 + $0x68] sm:$0xff]
  %v3031 = vld [vmem:[%s13 + $0x70] sm:$0xff]
  %v3032 = vld [vmem:[%s13 + $0x78] sm:$0xff]
  %3033 = vmatprep.subr.mxu0 0.0
  %3034 = vmatpush1.msra.mxu0 %v3017
  %3035 = vmatprep.subr.mxu0 0.0
  %3036 = vmatpush1.msra.mxu0 %v3018
  %3037 = vmatprep.subr.mxu0 0.0
  %3038 = vmatpush1.msra.mxu0 %v3019
  %3039 = vmatprep.subr.mxu0 0.0
  %3040 = vmatpush1.msra.mxu0 %v3020
  %3041 = vmatprep.subr.mxu0 0.0
  %3042 = vmatpush1.msra.mxu0 %v3021
  %3043 = vmatprep.subr.mxu0 0.0
  %3044 = vmatpush1.msra.mxu0 %v3022
  %3045 = vmatprep.subr.mxu0 0.0
  %3046 = vmatpush1.msra.mxu0 %v3023
  %3047 = vmatprep.subr.mxu0 0.0
  %3048 = vmatpush1.msra.mxu0 %v3024
  %3049 = vmatprep.subr.mxu0 0.0
  %3050 = vmatpush1.msra.mxu0 %v3025
  %3051 = vmatprep.subr.mxu0 0.0
  %3052 = vmatpush1.msra.mxu0 %v3026
  %3053 = vmatprep.subr.mxu0 0.0
  %3054 = vmatpush1.msra.mxu0 %v3027
  %3055 = vmatprep.subr.mxu0 0.0
  %3056 = vmatpush1.msra.mxu0 %v3028
  %3057 = vmatprep.subr.mxu0 0.0
  %3058 = vmatpush1.msra.mxu0 %v3029
  %3059 = vmatprep.subr.mxu0 0.0
  %3060 = vmatpush1.msra.mxu0 %v3030
  %3061 = vmatprep.subr.mxu0 0.0
  %3062 = vmatpush1.msra.mxu0 %v3031
  %3063 = vmatprep.subr.mxu0 0.0
  %3064 = vmatpush1.msra.mxu0 %v3032
  %3065 = vmatprep.subr.mxu0 0.0
  %3066 = vmatpush1.msra.mxu0 0.0
  %3067 = vmatprep.subr.mxu0 0.0
  %3068 = vmatpush1.msra.mxu0 0.0
  %3069 = vmatprep.subr.mxu0 0.0
  %3070 = vmatpush1.msra.mxu0 0.0
  %3071 = vmatprep.subr.mxu0 0.0
  %3072 = vmatpush1.msra.mxu0 0.0
  %3073 = vmatprep.subr.mxu0 0.0
  %3074 = vmatpush1.msra.mxu0 0.0
  %3075 = vmatprep.subr.mxu0 0.0
  %3076 = vmatpush1.msra.mxu0 0.0
  %3077 = vmatprep.subr.mxu0 0.0
  %3078 = vmatpush1.msra.mxu0 0.0
  %3079 = vmatprep.subr.mxu0 0.0
  %3080 = vmatpush1.msra.mxu0 0.0
  %3081 = vmatprep.subr.mxu0 0.0
  %3082 = vmatpush1.msra.mxu0 0.0
  %3083 = vmatprep.subr.mxu0 0.0
  %3084 = vmatpush1.msra.mxu0 0.0
  %3085 = vmatprep.subr.mxu0 0.0
  %3086 = vmatpush1.msra.mxu0 0.0
  %3087 = vmatprep.subr.mxu0 0.0
  %3088 = vmatpush1.msra.mxu0 0.0
  %3089 = vmatprep.subr.mxu0 0.0
  %3090 = vmatpush1.msra.mxu0 0.0
  %3091 = vmatprep.subr.mxu0 0.0
  %3092 = vmatpush1.msra.mxu0 0.0
  %3093 = vmatprep.subr.mxu0 0.0
  %3094 = vmatpush1.msra.mxu0 0.0
  %3095 = vmatprep.subr.mxu0 0.0
  %3096 = vmatpush1.msra.mxu0 0.0
  %3097 = vmatprep.mubr.f32.mxu0 0.0
  %3098 = vmatmul.mubr.f32.gmra.mrb[0].mxu0 %v3016
  %v3099 = vpop.f32.mrb[0].mxu0
  %v3100 = vadd.f32 0.0, %v3099
  %v3101 = vpop.f32.mrb[0].mxu0
  %3102 = vdwg.mxu0
  %v3103 = vld [vmem:[%s12] sm:$0xf]
  %v3104 = vld [vmem:[%s11] sm:$0xf]
  %3105 = vset.pattern.permute.xlu0 0
  %3106 = vperm.xlu0 %3105, %v3104
  %v3107 = vpop.permute.xlu0 %3106
  %vm3108 = vcmp.eq.s32.totalorder %v3107, %v80
  %v3109 = vsel %vm3108, 1, 0
  %v3110 = vcvt.s32.f32 %v3109
  %v3112 = vsel %vm115, %v3110, 0
  %3114 = vmatprep.subr.mxu0 0.0
  %3115 = vmatpush1.msra.mxu0 %v1873
  %3116 = vmatprep.subr.mxu0 0.0
  %3117 = vmatpush1.msra.mxu0 %v1874
  %3118 = vmatprep.subr.mxu0 0.0
  %3119 = vmatpush1.msra.mxu0 %v1875
  %3120 = vmatprep.subr.mxu0 0.0
  %3121 = vmatpush1.msra.mxu0 %v1876
  %3122 = vmatprep.subr.mxu0 0.0
  %3123 = vmatpush1.msra.mxu0 0.0
  %3124 = vmatprep.subr.mxu0 0.0
  %3125 = vmatpush1.msra.mxu0 0.0
  %3126 = vmatprep.subr.mxu0 0.0
  %3127 = vmatpush1.msra.mxu0 0.0
  %3128 = vmatprep.subr.mxu0 0.0
  %3129 = vmatpush1.msra.mxu0 0.0
  %3130 = vmatprep.subr.mxu0 0.0
  %3131 = vmatpush1.msra.mxu0 0.0
  %3132 = vmatprep.subr.mxu0 0.0
  %3133 = vmatpush1.msra.mxu0 0.0
  %3134 = vmatprep.subr.mxu0 0.0
  %3135 = vmatpush1.msra.mxu0 0.0
  %3136 = vmatprep.subr.mxu0 0.0
  %3137 = vmatpush1.msra.mxu0 0.0
  %3138 = vmatprep.subr.mxu0 0.0
  %3139 = vmatpush1.msra.mxu0 0.0
  %3140 = vmatprep.subr.mxu0 0.0
  %3141 = vmatpush1.msra.mxu0 0.0
  %3142 = vmatprep.subr.mxu0 0.0
  %3143 = vmatpush1.msra.mxu0 0.0
  %3144 = vmatprep.subr.mxu0 0.0
  %3145 = vmatpush1.msra.mxu0 0.0
  %3146 = vmatprep.subr.mxu0 0.0
  %3147 = vmatpush1.msra.mxu0 0.0
  %3148 = vmatprep.subr.mxu0 0.0
  %3149 = vmatpush1.msra.mxu0 0.0
  %3150 = vmatprep.subr.mxu0 0.0
  %3151 = vmatpush1.msra.mxu0 0.0
  %3152 = vmatprep.subr.mxu0 0.0
  %3153 = vmatpush1.msra.mxu0 0.0
  %3154 = vmatprep.subr.mxu0 0.0
  %3155 = vmatpush1.msra.mxu0 0.0
  %3156 = vmatprep.subr.mxu0 0.0
  %3157 = vmatpush1.msra.mxu0 0.0
  %3158 = vmatprep.subr.mxu0 0.0
  %3159 = vmatpush1.msra.mxu0 0.0
  %3160 = vmatprep.subr.mxu0 0.0
  %3161 = vmatpush1.msra.mxu0 0.0
  %3162 = vmatprep.subr.mxu0 0.0
  %3163 = vmatpush1.msra.mxu0 0.0
  %3164 = vmatprep.subr.mxu0 0.0
  %3165 = vmatpush1.msra.mxu0 0.0
  %3166 = vmatprep.subr.mxu0 0.0
  %3167 = vmatpush1.msra.mxu0 0.0
  %3168 = vmatprep.subr.mxu0 0.0
  %3169 = vmatpush1.msra.mxu0 0.0
  %3170 = vmatprep.subr.mxu0 0.0
  %3171 = vmatpush1.msra.mxu0 0.0
  %3172 = vmatprep.subr.mxu0 0.0
  %3173 = vmatpush1.msra.mxu0 0.0
  %3174 = vmatprep.subr.mxu0 0.0
  %3175 = vmatpush1.msra.mxu0 0.0
  %3176 = vmatprep.subr.mxu0 0.0
  %3177 = vmatpush1.msra.mxu0 0.0
  %3178 = vmatprep.mubr.f32.mxu0 0.0
  %3179 = vmatmul.mubr.f32.gmra.mrb[0].mxu0 %v3112
  %v3180 = vpop.f32.mrb[0].mxu0
  %v3181 = vadd.f32 0.0, %v3180
  %v3182 = vpop.f32.mrb[0].mxu0
  %3183 = vdwg.mxu0
  %v3184 = vmul.f32 %v3181, %v2042
  %3185 = vset.pattern.permute.xlu0 1
  %3186 = vperm.xlu0 %3185, %v3104
  %v3187 = vpop.permute.xlu0 %3186
  %vm3188 = vcmp.eq.s32.totalorder %v3187, %v80
  %v3189 = vsel %vm3188, 1, 0
  %v3190 = vcvt.s32.f32 %v3189
  %v3192 = vsel %vm115, %v3190, 0
  %3194 = vmatprep.subr.mxu0 0.0
  %3195 = vmatpush1.msra.mxu0 %v1873
  %3196 = vmatprep.subr.mxu0 0.0
  %3197 = vmatpush1.msra.mxu0 %v1874
  %3198 = vmatprep.subr.mxu0 0.0
  %3199 = vmatpush1.msra.mxu0 %v1875
  %3200 = vmatprep.subr.mxu0 0.0
  %3201 = vmatpush1.msra.mxu0 %v1876
  %3202 = vmatprep.subr.mxu0 0.0
  %3203 = vmatpush1.msra.mxu0 0.0
  %3204 = vmatprep.subr.mxu0 0.0
  %3205 = vmatpush1.msra.mxu0 0.0
  %3206 = vmatprep.subr.mxu0 0.0
  %3207 = vmatpush1.msra.mxu0 0.0
  %3208 = vmatprep.subr.mxu0 0.0
  %3209 = vmatpush1.msra.mxu0 0.0
  %3210 = vmatprep.subr.mxu0 0.0
  %3211 = vmatpush1.msra.mxu0 0.0
  %3212 = vmatprep.subr.mxu0 0.0
  %3213 = vmatpush1.msra.mxu0 0.0
  %3214 = vmatprep.subr.mxu0 0.0
  %3215 = vmatpush1.msra.mxu0 0.0
  %3216 = vmatprep.subr.mxu0 0.0
  %3217 = vmatpush1.msra.mxu0 0.0
  %3218 = vmatprep.subr.mxu0 0.0
  %3219 = vmatpush1.msra.mxu0 0.0
  %3220 = vmatprep.subr.mxu0 0.0
  %3221 = vmatpush1.msra.mxu0 0.0
  %3222 = vmatprep.subr.mxu0 0.0
  %3223 = vmatpush1.msra.mxu0 0.0
  %3224 = vmatprep.subr.mxu0 0.0
  %3225 = vmatpush1.msra.mxu0 0.0
  %3226 = vmatprep.subr.mxu0 0.0
  %3227 = vmatpush1.msra.mxu0 0.0
  %3228 = vmatprep.subr.mxu0 0.0
  %3229 = vmatpush1.msra.mxu0 0.0
  %3230 = vmatprep.subr.mxu0 0.0
  %3231 = vmatpush1.msra.mxu0 0.0
  %3232 = vmatprep.subr.mxu0 0.0
  %3233 = vmatpush1.msra.mxu0 0.0
  %3234 = vmatprep.subr.mxu0 0.0
  %3235 = vmatpush1.msra.mxu0 0.0
  %3236 = vmatprep.subr.mxu0 0.0
  %3237 = vmatpush1.msra.mxu0 0.0
  %3238 = vmatprep.subr.mxu0 0.0
  %3239 = vmatpush1.msra.mxu0 0.0
  %3240 = vmatprep.subr.mxu0 0.0
  %3241 = vmatpush1.msra.mxu0 0.0
  %3242 = vmatprep.subr.mxu0 0.0
  %3243 = vmatpush1.msra.mxu0 0.0
  %3244 = vmatprep.subr.mxu0 0.0
  %3245 = vmatpush1.msra.mxu0 0.0
  %3246 = vmatprep.subr.mxu0 0.0
  %3247 = vmatpush1.msra.mxu0 0.0
  %3248 = vmatprep.subr.mxu0 0.0
  %3249 = vmatpush1.msra.mxu0 0.0
  %3250 = vmatprep.subr.mxu0 0.0
  %3251 = vmatpush1.msra.mxu0 0.0
  %3252 = vmatprep.subr.mxu0 0.0
  %3253 = vmatpush1.msra.mxu0 0.0
  %3254 = vmatprep.subr.mxu0 0.0
  %3255 = vmatpush1.msra.mxu0 0.0
  %3256 = vmatprep.subr.mxu0 0.0
  %3257 = vmatpush1.msra.mxu0 0.0
  %3258 = vmatprep.mubr.f32.mxu0 0.0
  %3259 = vmatmul.mubr.f32.gmra.mrb[0].mxu0 %v3192
  %v3260 = vpop.f32.mrb[0].mxu0
  %v3261 = vadd.f32 0.0, %v3260
  %v3262 = vpop.f32.mrb[0].mxu0
  %3263 = vdwg.mxu0
  %v3264 = vmul.f32 %v3261, %v2042
  %v3265 = vmax.f32 %v3184, %v3264
  %3266 = vset.pattern.permute.xlu0 2
  %3267 = vperm.xlu0 %3266, %v3104
  %v3268 = vpop.permute.xlu0 %3267
  %vm3269 = vcmp.eq.s32.totalorder %v3268, %v80
  %v3270 = vsel %vm3269, 1, 0
  %v3271 = vcvt.s32.f32 %v3270
  %v3273 = vsel %vm115, %v3271, 0
  %3275 = vmatprep.subr.mxu0 0.0
  %3276 = vmatpush1.msra.mxu0 %v1873
  %3277 = vmatprep.subr.mxu0 0.0
  %3278 = vmatpush1.msra.mxu0 %v1874
  %3279 = vmatprep.subr.mxu0 0.0
  %3280 = vmatpush1.msra.mxu0 %v1875
  %3281 = vmatprep.subr.mxu0 0.0
  %3282 = vmatpush1.msra.mxu0 %v1876
  %3283 = vmatprep.subr.mxu0 0.0
  %3284 = vmatpush1.msra.mxu0 0.0
  %3285 = vmatprep.subr.mxu0 0.0
  %3286 = vmatpush1.msra.mxu0 0.0
  %3287 = vmatprep.subr.mxu0 0.0
  %3288 = vmatpush1.msra.mxu0 0.0
  %3289 = vmatprep.subr.mxu0 0.0
  %3290 = vmatpush1.msra.mxu0 0.0
  %3291 = vmatprep.subr.mxu0 0.0
  %3292 = vmatpush1.msra.mxu0 0.0
  %3293 = vmatprep.subr.mxu0 0.0
  %3294 = vmatpush1.msra.mxu0 0.0
  %3295 = vmatprep.subr.mxu0 0.0
  %3296 = vmatpush1.msra.mxu0 0.0
  %3297 = vmatprep.subr.mxu0 0.0
  %3298 = vmatpush1.msra.mxu0 0.0
  %3299 = vmatprep.subr.mxu0 0.0
  %3300 = vmatpush1.msra.mxu0 0.0
  %3301 = vmatprep.subr.mxu0 0.0
  %3302 = vmatpush1.msra.mxu0 0.0
  %3303 = vmatprep.subr.mxu0 0.0
  %3304 = vmatpush1.msra.mxu0 0.0
  %3305 = vmatprep.subr.mxu0 0.0
  %3306 = vmatpush1.msra.mxu0 0.0
  %3307 = vmatprep.subr.mxu0 0.0
  %3308 = vmatpush1.msra.mxu0 0.0
  %3309 = vmatprep.subr.mxu0 0.0
  %3310 = vmatpush1.msra.mxu0 0.0
  %3311 = vmatprep.subr.mxu0 0.0
  %3312 = vmatpush1.msra.mxu0 0.0
  %3313 = vmatprep.subr.mxu0 0.0
  %3314 = vmatpush1.msra.mxu0 0.0
  %3315 = vmatprep.subr.mxu0 0.0
  %3316 = vmatpush1.msra.mxu0 0.0
  %3317 = vmatprep.subr.mxu0 0.0
  %3318 = vmatpush1.msra.mxu0 0.0
  %3319 = vmatprep.subr.mxu0 0.0
  %3320 = vmatpush1.msra.mxu0 0.0
  %3321 = vmatprep.subr.mxu0 0.0
  %3322 = vmatpush1.msra.mxu0 0.0
  %3323 = vmatprep.subr.mxu0 0.0
  %3324 = vmatpush1.msra.mxu0 0.0
  %3325 = vmatprep.subr.mxu0 0.0
  %3326 = vmatpush1.msra.mxu0 0.0
  %3327 = vmatprep.subr.mxu0 0.0
  %3328 = vmatpush1.msra.mxu0 0.0
  %3329 = vmatprep.subr.mxu0 0.0
  %3330 = vmatpush1.msra.mxu0 0.0
  %3331 = vmatprep.subr.mxu0 0.0
  %3332 = vmatpush1.msra.mxu0 0.0
  %3333 = vmatprep.subr.mxu0 0.0
  %3334 = vmatpush1.msra.mxu0 0.0
  %3335 = vmatprep.subr.mxu0 0.0
  %3336 = vmatpush1.msra.mxu0 0.0
  %3337 = vmatprep.subr.mxu0 0.0
  %3338 = vmatpush1.msra.mxu0 0.0
  %3339 = vmatprep.mubr.f32.mxu0 0.0
  %3340 = vmatmul.mubr.f32.gmra.mrb[0].mxu0 %v3273
  %v3341 = vpop.f32.mrb[0].mxu0
  %v3342 = vadd.f32 0.0, %v3341
  %v3343 = vpop.f32.mrb[0].mxu0
  %3344 = vdwg.mxu0
  %v3345 = vmul.f32 %v3342, %v2042
  %v3346 = vmax.f32 %v3265, %v3345
  %3347 = vset.pattern.permute.xlu0 3
  %3348 = vperm.xlu0 %3347, %v3104
  %v3349 = vpop.permute.xlu0 %3348
  %vm3350 = vcmp.eq.s32.totalorder %v3349, %v80
  %v3351 = vsel %vm3350, 1, 0
  %v3352 = vcvt.s32.f32 %v3351
  %v3354 = vsel %vm115, %v3352, 0
  %3356 = vmatprep.subr.mxu0 0.0
  %3357 = vmatpush1.msra.mxu0 %v1873
  %3358 = vmatprep.subr.mxu0 0.0
  %3359 = vmatpush1.msra.mxu0 %v1874
  %3360 = vmatprep.subr.mxu0 0.0
  %3361 = vmatpush1.msra.mxu0 %v1875
  %3362 = vmatprep.subr.mxu0 0.0
  %3363 = vmatpush1.msra.mxu0 %v1876
  %3364 = vmatprep.subr.mxu0 0.0
  %3365 = vmatpush1.msra.mxu0 0.0
  %3366 = vmatprep.subr.mxu0 0.0
  %3367 = vmatpush1.msra.mxu0 0.0
  %3368 = vmatprep.subr.mxu0 0.0
  %3369 = vmatpush1.msra.mxu0 0.0
  %3370 = vmatprep.subr.mxu0 0.0
  %3371 = vmatpush1.msra.mxu0 0.0
  %3372 = vmatprep.subr.mxu0 0.0
  %3373 = vmatpush1.msra.mxu0 0.0
  %3374 = vmatprep.subr.mxu0 0.0
  %3375 = vmatpush1.msra.mxu0 0.0
  %3376 = vmatprep.subr.mxu0 0.0
  %3377 = vmatpush1.msra.mxu0 0.0
  %3378 = vmatprep.subr.mxu0 0.0
  %3379 = vmatpush1.msra.mxu0 0.0
  %3380 = vmatprep.subr.mxu0 0.0
  %3381 = vmatpush1.msra.mxu0 0.0
  %3382 = vmatprep.subr.mxu0 0.0
  %3383 = vmatpush1.msra.mxu0 0.0
  %3384 = vmatprep.subr.mxu0 0.0
  %3385 = vmatpush1.msra.mxu0 0.0
  %3386 = vmatprep.subr.mxu0 0.0
  %3387 = vmatpush1.msra.mxu0 0.0
  %3388 = vmatprep.subr.mxu0 0.0
  %3389 = vmatpush1.msra.mxu0 0.0
  %3390 = vmatprep.subr.mxu0 0.0
  %3391 = vmatpush1.msra.mxu0 0.0
  %3392 = vmatprep.subr.mxu0 0.0
  %3393 = vmatpush1.msra.mxu0 0.0
  %3394 = vmatprep.subr.mxu0 0.0
  %3395 = vmatpush1.msra.mxu0 0.0
  %3396 = vmatprep.subr.mxu0 0.0
  %3397 = vmatpush1.msra.mxu0 0.0
  %3398 = vmatprep.subr.mxu0 0.0
  %3399 = vmatpush1.msra.mxu0 0.0
  %3400 = vmatprep.subr.mxu0 0.0
  %3401 = vmatpush1.msra.mxu0 0.0
  %3402 = vmatprep.subr.mxu0 0.0
  %3403 = vmatpush1.msra.mxu0 0.0
  %3404 = vmatprep.subr.mxu0 0.0
  %3405 = vmatpush1.msra.mxu0 0.0
  %3406 = vmatprep.subr.mxu0 0.0
  %3407 = vmatpush1.msra.mxu0 0.0
  %3408 = vmatprep.subr.mxu0 0.0
  %3409 = vmatpush1.msra.mxu0 0.0
  %3410 = vmatprep.subr.mxu0 0.0
  %3411 = vmatpush1.msra.mxu0 0.0
  %3412 = vmatprep.subr.mxu0 0.0
  %3413 = vmatpush1.msra.mxu0 0.0
  %3414 = vmatprep.subr.mxu0 0.0
  %3415 = vmatpush1.msra.mxu0 0.0
  %3416 = vmatprep.subr.mxu0 0.0
  %3417 = vmatpush1.msra.mxu0 0.0
  %3418 = vmatprep.subr.mxu0 0.0
  %3419 = vmatpush1.msra.mxu0 0.0
  %3420 = vmatprep.mubr.f32.mxu0 0.0
  %3421 = vmatmul.mubr.f32.gmra.mrb[0].mxu0 %v3354
  %v3422 = vpop.f32.mrb[0].mxu0
  %v3423 = vadd.f32 0.0, %v3422
  %v3424 = vpop.f32.mrb[0].mxu0
  %3425 = vdwg.mxu0
  %v3426 = vmul.f32 %v3423, %v2042
  %v3427 = vmax.f32 %v3346, %v3426
  %v3428 = vld [vmem:[%s14] sm:$0xff]
  %v3429 = vld [vmem:[%s14 + $0x8] sm:$0xff]
  %v3430 = vld [vmem:[%s14 + $0x10] sm:$0xff]
  %v3431 = vld [vmem:[%s14 + $0x18] sm:$0xff]
  %v3432 = vld [vmem:[%s14 + $0x20] sm:$0xff]
  %v3433 = vld [vmem:[%s14 + $0x28] sm:$0xff]
  %v3434 = vld [vmem:[%s14 + $0x30] sm:$0xff]
  %v3435 = vld [vmem:[%s14 + $0x38] sm:$0xff]
  %v3436 = vld [vmem:[%s14 + $0x40] sm:$0xff]
  %v3437 = vld [vmem:[%s14 + $0x48] sm:$0xff]
  %v3438 = vld [vmem:[%s14 + $0x50] sm:$0xff]
  %v3439 = vld [vmem:[%s14 + $0x58] sm:$0xff]
  %v3440 = vld [vmem:[%s14 + $0x60] sm:$0xff]
  %v3441 = vld [vmem:[%s14 + $0x68] sm:$0xff]
  %v3442 = vld [vmem:[%s14 + $0x70] sm:$0xff]
  %v3443 = vld [vmem:[%s14 + $0x78] sm:$0xff]
  %3444 = vmatprep.subr.mxu0 0.0
  %3445 = vmatpush1.msra.mxu0 %v3428
  %3446 = vmatprep.subr.mxu0 0.0
  %3447 = vmatpush1.msra.mxu0 %v3429
  %3448 = vmatprep.subr.mxu0 0.0
  %3449 = vmatpush1.msra.mxu0 %v3430
  %3450 = vmatprep.subr.mxu0 0.0
  %3451 = vmatpush1.msra.mxu0 %v3431
  %3452 = vmatprep.subr.mxu0 0.0
  %3453 = vmatpush1.msra.mxu0 %v3432
  %3454 = vmatprep.subr.mxu0 0.0
  %3455 = vmatpush1.msra.mxu0 %v3433
  %3456 = vmatprep.subr.mxu0 0.0
  %3457 = vmatpush1.msra.mxu0 %v3434
  %3458 = vmatprep.subr.mxu0 0.0
  %3459 = vmatpush1.msra.mxu0 %v3435
  %3460 = vmatprep.subr.mxu0 0.0
  %3461 = vmatpush1.msra.mxu0 %v3436
  %3462 = vmatprep.subr.mxu0 0.0
  %3463 = vmatpush1.msra.mxu0 %v3437
  %3464 = vmatprep.subr.mxu0 0.0
  %3465 = vmatpush1.msra.mxu0 %v3438
  %3466 = vmatprep.subr.mxu0 0.0
  %3467 = vmatpush1.msra.mxu0 %v3439
  %3468 = vmatprep.subr.mxu0 0.0
  %3469 = vmatpush1.msra.mxu0 %v3440
  %3470 = vmatprep.subr.mxu0 0.0
  %3471 = vmatpush1.msra.mxu0 %v3441
  %3472 = vmatprep.subr.mxu0 0.0
  %3473 = vmatpush1.msra.mxu0 %v3442
  %3474 = vmatprep.subr.mxu0 0.0
  %3475 = vmatpush1.msra.mxu0 %v3443
  %3476 = vmatprep.subr.mxu0 0.0
  %3477 = vmatpush1.msra.mxu0 0.0
  %3478 = vmatprep.subr.mxu0 0.0
  %3479 = vmatpush1.msra.mxu0 0.0
  %3480 = vmatprep.subr.mxu0 0.0
  %3481 = vmatpush1.msra.mxu0 0.0
  %3482 = vmatprep.subr.mxu0 0.0
  %3483 = vmatpush1.msra.mxu0 0.0
  %3484 = vmatprep.subr.mxu0 0.0
  %3485 = vmatpush1.msra.mxu0 0.0
  %3486 = vmatprep.subr.mxu0 0.0
  %3487 = vmatpush1.msra.mxu0 0.0
  %3488 = vmatprep.subr.mxu0 0.0
  %3489 = vmatpush1.msra.mxu0 0.0
  %3490 = vmatprep.subr.mxu0 0.0
  %3491 = vmatpush1.msra.mxu0 0.0
  %3492 = vmatprep.subr.mxu0 0.0
  %3493 = vmatpush1.msra.mxu0 0.0
  %3494 = vmatprep.subr.mxu0 0.0
  %3495 = vmatpush1.msra.mxu0 0.0
  %3496 = vmatprep.subr.mxu0 0.0
  %3497 = vmatpush1.msra.mxu0 0.0
  %3498 = vmatprep.subr.mxu0 0.0
  %3499 = vmatpush1.msra.mxu0 0.0
  %3500 = vmatprep.subr.mxu0 0.0
  %3501 = vmatpush1.msra.mxu0 0.0
  %3502 = vmatprep.subr.mxu0 0.0
  %3503 = vmatpush1.msra.mxu0 0.0
  %3504 = vmatprep.subr.mxu0 0.0
  %3505 = vmatpush1.msra.mxu0 0.0
  %3506 = vmatprep.subr.mxu0 0.0
  %3507 = vmatpush1.msra.mxu0 0.0
  %3508 = vmatprep.mubr.f32.mxu0 0.0
  %3509 = vmatmul.mubr.f32.gmra.mrb[0].mxu0 %v3427
  %v3510 = vpop.f32.mrb[0].mxu0
  %v3511 = vadd.f32 0.0, %v3510
  %v3512 = vpop.f32.mrb[0].mxu0
  %3513 = vdwg.mxu0
  %v3514 = vadd.f32 %v3100, %v3511
  %v3515 = vld [vmem:[%s15] sm:$0x1]
  %v3517 = vlaneseq
  %v3518 = vshrl.u32 %v3517, 7
  %v3519 = vsub.s32 0, %v3518
  %v3520 = vrot.slane %v3515, %v3519
  %v3522 = vadd.f32 %v3514, %v3520
  %vm3523 = vcmp.ge.f32.partialorder %v3522, 0.0
  %v3524 = vmul.f32 %v3522, 0.01
  %v3525 = vsel %vm3523, %v3522, %v3524
  %v3526 = vld [vmem:[%s16] sm:$0x1]
  %v3528 = vlaneseq
  %v3529 = vshrl.u32 %v3528, 7
  %v3530 = vsub.s32 0, %v3529
  %v3531 = vrot.slane %v3526, %v3530
  %v3533 = vmul.f32 %v3525, %v3531
  %vm3534 = vcmask 125952
  %v3535 = vsel %vm3534, %v3533, 0.0
  %3536 = vadd.xlane.f32.xlu0 %v3535
  %v3537 = vpop.xlane.xlu0 %3536
  %vm3538 = vcmp.gt.s32.totalorder %v3103, 0
  %v3539 = vsel %vm3538, %v3537, -1e+30
  %3540 = vset.pattern.permute.xlu0 4
  %3541 = vperm.xlu0 %3540, %v3104
  %v3542 = vpop.permute.xlu0 %3541
  %vm3543 = vcmp.eq.s32.totalorder %v3542, %v80
  %v3544 = vsel %vm3543, 1, 0
  %v3545 = vcvt.s32.f32 %v3544
  %v3547 = vsel %vm115, %v3545, 0
  %3549 = vmatprep.subr.mxu0 0.0
  %3550 = vmatpush1.msra.mxu0 %v1873
  %3551 = vmatprep.subr.mxu0 0.0
  %3552 = vmatpush1.msra.mxu0 %v1874
  %3553 = vmatprep.subr.mxu0 0.0
  %3554 = vmatpush1.msra.mxu0 %v1875
  %3555 = vmatprep.subr.mxu0 0.0
  %3556 = vmatpush1.msra.mxu0 %v1876
  %3557 = vmatprep.subr.mxu0 0.0
  %3558 = vmatpush1.msra.mxu0 0.0
  %3559 = vmatprep.subr.mxu0 0.0
  %3560 = vmatpush1.msra.mxu0 0.0
  %3561 = vmatprep.subr.mxu0 0.0
  %3562 = vmatpush1.msra.mxu0 0.0
  %3563 = vmatprep.subr.mxu0 0.0
  %3564 = vmatpush1.msra.mxu0 0.0
  %3565 = vmatprep.subr.mxu0 0.0
  %3566 = vmatpush1.msra.mxu0 0.0
  %3567 = vmatprep.subr.mxu0 0.0
  %3568 = vmatpush1.msra.mxu0 0.0
  %3569 = vmatprep.subr.mxu0 0.0
  %3570 = vmatpush1.msra.mxu0 0.0
  %3571 = vmatprep.subr.mxu0 0.0
  %3572 = vmatpush1.msra.mxu0 0.0
  %3573 = vmatprep.subr.mxu0 0.0
  %3574 = vmatpush1.msra.mxu0 0.0
  %3575 = vmatprep.subr.mxu0 0.0
  %3576 = vmatpush1.msra.mxu0 0.0
  %3577 = vmatprep.subr.mxu0 0.0
  %3578 = vmatpush1.msra.mxu0 0.0
  %3579 = vmatprep.subr.mxu0 0.0
  %3580 = vmatpush1.msra.mxu0 0.0
  %3581 = vmatprep.subr.mxu0 0.0
  %3582 = vmatpush1.msra.mxu0 0.0
  %3583 = vmatprep.subr.mxu0 0.0
  %3584 = vmatpush1.msra.mxu0 0.0
  %3585 = vmatprep.subr.mxu0 0.0
  %3586 = vmatpush1.msra.mxu0 0.0
  %3587 = vmatprep.subr.mxu0 0.0
  %3588 = vmatpush1.msra.mxu0 0.0
  %3589 = vmatprep.subr.mxu0 0.0
  %3590 = vmatpush1.msra.mxu0 0.0
  %3591 = vmatprep.subr.mxu0 0.0
  %3592 = vmatpush1.msra.mxu0 0.0
  %3593 = vmatprep.subr.mxu0 0.0
  %3594 = vmatpush1.msra.mxu0 0.0
  %3595 = vmatprep.subr.mxu0 0.0
  %3596 = vmatpush1.msra.mxu0 0.0
  %3597 = vmatprep.subr.mxu0 0.0
  %3598 = vmatpush1.msra.mxu0 0.0
  %3599 = vmatprep.subr.mxu0 0.0
  %3600 = vmatpush1.msra.mxu0 0.0
  %3601 = vmatprep.subr.mxu0 0.0
  %3602 = vmatpush1.msra.mxu0 0.0
  %3603 = vmatprep.subr.mxu0 0.0
  %3604 = vmatpush1.msra.mxu0 0.0
  %3605 = vmatprep.subr.mxu0 0.0
  %3606 = vmatpush1.msra.mxu0 0.0
  %3607 = vmatprep.subr.mxu0 0.0
  %3608 = vmatpush1.msra.mxu0 0.0
  %3609 = vmatprep.subr.mxu0 0.0
  %3610 = vmatpush1.msra.mxu0 0.0
  %3611 = vmatprep.subr.mxu0 0.0
  %3612 = vmatpush1.msra.mxu0 0.0
  %3613 = vmatprep.mubr.f32.mxu0 0.0
  %3614 = vmatmul.mubr.f32.gmra.mrb[0].mxu0 %v3547
  %v3615 = vpop.f32.mrb[0].mxu0
  %v3616 = vadd.f32 0.0, %v3615
  %v3617 = vpop.f32.mrb[0].mxu0
  %3618 = vdwg.mxu0
  %v3619 = vmul.f32 %v3616, %v2042
  %3620 = vset.pattern.permute.xlu0 5
  %3621 = vperm.xlu0 %3620, %v3104
  %v3622 = vpop.permute.xlu0 %3621
  %vm3623 = vcmp.eq.s32.totalorder %v3622, %v80
  %v3624 = vsel %vm3623, 1, 0
  %v3625 = vcvt.s32.f32 %v3624
  %v3627 = vsel %vm115, %v3625, 0
  %3629 = vmatprep.subr.mxu0 0.0
  %3630 = vmatpush1.msra.mxu0 %v1873
  %3631 = vmatprep.subr.mxu0 0.0
  %3632 = vmatpush1.msra.mxu0 %v1874
  %3633 = vmatprep.subr.mxu0 0.0
  %3634 = vmatpush1.msra.mxu0 %v1875
  %3635 = vmatprep.subr.mxu0 0.0
  %3636 = vmatpush1.msra.mxu0 %v1876
  %3637 = vmatprep.subr.mxu0 0.0
  %3638 = vmatpush1.msra.mxu0 0.0
  %3639 = vmatprep.subr.mxu0 0.0
  %3640 = vmatpush1.msra.mxu0 0.0
  %3641 = vmatprep.subr.mxu0 0.0
  %3642 = vmatpush1.msra.mxu0 0.0
  %3643 = vmatprep.subr.mxu0 0.0
  %3644 = vmatpush1.msra.mxu0 0.0
  %3645 = vmatprep.subr.mxu0 0.0
  %3646 = vmatpush1.msra.mxu0 0.0
  %3647 = vmatprep.subr.mxu0 0.0
  %3648 = vmatpush1.msra.mxu0 0.0
  %3649 = vmatprep.subr.mxu0 0.0
  %3650 = vmatpush1.msra.mxu0 0.0
  %3651 = vmatprep.subr.mxu0 0.0
  %3652 = vmatpush1.msra.mxu0 0.0
  %3653 = vmatprep.subr.mxu0 0.0
  %3654 = vmatpush1.msra.mxu0 0.0
  %3655 = vmatprep.subr.mxu0 0.0
  %3656 = vmatpush1.msra.mxu0 0.0
  %3657 = vmatprep.subr.mxu0 0.0
  %3658 = vmatpush1.msra.mxu0 0.0
  %3659 = vmatprep.subr.mxu0 0.0
  %3660 = vmatpush1.msra.mxu0 0.0
  %3661 = vmatprep.subr.mxu0 0.0
  %3662 = vmatpush1.msra.mxu0 0.0
  %3663 = vmatprep.subr.mxu0 0.0
  %3664 = vmatpush1.msra.mxu0 0.0
  %3665 = vmatprep.subr.mxu0 0.0
  %3666 = vmatpush1.msra.mxu0 0.0
  %3667 = vmatprep.subr.mxu0 0.0
  %3668 = vmatpush1.msra.mxu0 0.0
  %3669 = vmatprep.subr.mxu0 0.0
  %3670 = vmatpush1.msra.mxu0 0.0
  %3671 = vmatprep.subr.mxu0 0.0
  %3672 = vmatpush1.msra.mxu0 0.0
  %3673 = vmatprep.subr.mxu0 0.0
  %3674 = vmatpush1.msra.mxu0 0.0
  %3675 = vmatprep.subr.mxu0 0.0
  %3676 = vmatpush1.msra.mxu0 0.0
  %3677 = vmatprep.subr.mxu0 0.0
  %3678 = vmatpush1.msra.mxu0 0.0
  %3679 = vmatprep.subr.mxu0 0.0
  %3680 = vmatpush1.msra.mxu0 0.0
  %3681 = vmatprep.subr.mxu0 0.0
  %3682 = vmatpush1.msra.mxu0 0.0
  %3683 = vmatprep.subr.mxu0 0.0
  %3684 = vmatpush1.msra.mxu0 0.0
  %3685 = vmatprep.subr.mxu0 0.0
  %3686 = vmatpush1.msra.mxu0 0.0
  %3687 = vmatprep.subr.mxu0 0.0
  %3688 = vmatpush1.msra.mxu0 0.0
  %3689 = vmatprep.subr.mxu0 0.0
  %3690 = vmatpush1.msra.mxu0 0.0
  %3691 = vmatprep.subr.mxu0 0.0
  %3692 = vmatpush1.msra.mxu0 0.0
  %3693 = vmatprep.mubr.f32.mxu0 0.0
  %3694 = vmatmul.mubr.f32.gmra.mrb[0].mxu0 %v3627
  %v3695 = vpop.f32.mrb[0].mxu0
  %v3696 = vadd.f32 0.0, %v3695
  %v3697 = vpop.f32.mrb[0].mxu0
  %3698 = vdwg.mxu0
  %v3699 = vmul.f32 %v3696, %v2042
  %v3700 = vmax.f32 %v3619, %v3699
  %3701 = vset.pattern.permute.xlu0 6
  %3702 = vperm.xlu0 %3701, %v3104
  %v3703 = vpop.permute.xlu0 %3702
  %vm3704 = vcmp.eq.s32.totalorder %v3703, %v80
  %v3705 = vsel %vm3704, 1, 0
  %v3706 = vcvt.s32.f32 %v3705
  %v3708 = vsel %vm115, %v3706, 0
  %3710 = vmatprep.subr.mxu0 0.0
  %3711 = vmatpush1.msra.mxu0 %v1873
  %3712 = vmatprep.subr.mxu0 0.0
  %3713 = vmatpush1.msra.mxu0 %v1874
  %3714 = vmatprep.subr.mxu0 0.0
  %3715 = vmatpush1.msra.mxu0 %v1875
  %3716 = vmatprep.subr.mxu0 0.0
  %3717 = vmatpush1.msra.mxu0 %v1876
  %3718 = vmatprep.subr.mxu0 0.0
  %3719 = vmatpush1.msra.mxu0 0.0
  %3720 = vmatprep.subr.mxu0 0.0
  %3721 = vmatpush1.msra.mxu0 0.0
  %3722 = vmatprep.subr.mxu0 0.0
  %3723 = vmatpush1.msra.mxu0 0.0
  %3724 = vmatprep.subr.mxu0 0.0
  %3725 = vmatpush1.msra.mxu0 0.0
  %3726 = vmatprep.subr.mxu0 0.0
  %3727 = vmatpush1.msra.mxu0 0.0
  %3728 = vmatprep.subr.mxu0 0.0
  %3729 = vmatpush1.msra.mxu0 0.0
  %3730 = vmatprep.subr.mxu0 0.0
  %3731 = vmatpush1.msra.mxu0 0.0
  %3732 = vmatprep.subr.mxu0 0.0
  %3733 = vmatpush1.msra.mxu0 0.0
  %3734 = vmatprep.subr.mxu0 0.0
  %3735 = vmatpush1.msra.mxu0 0.0
  %3736 = vmatprep.subr.mxu0 0.0
  %3737 = vmatpush1.msra.mxu0 0.0
  %3738 = vmatprep.subr.mxu0 0.0
  %3739 = vmatpush1.msra.mxu0 0.0
  %3740 = vmatprep.subr.mxu0 0.0
  %3741 = vmatpush1.msra.mxu0 0.0
  %3742 = vmatprep.subr.mxu0 0.0
  %3743 = vmatpush1.msra.mxu0 0.0
  %3744 = vmatprep.subr.mxu0 0.0
  %3745 = vmatpush1.msra.mxu0 0.0
  %3746 = vmatprep.subr.mxu0 0.0
  %3747 = vmatpush1.msra.mxu0 0.0
  %3748 = vmatprep.subr.mxu0 0.0
  %3749 = vmatpush1.msra.mxu0 0.0
  %3750 = vmatprep.subr.mxu0 0.0
  %3751 = vmatpush1.msra.mxu0 0.0
  %3752 = vmatprep.subr.mxu0 0.0
  %3753 = vmatpush1.msra.mxu0 0.0
  %3754 = vmatprep.subr.mxu0 0.0
  %3755 = vmatpush1.msra.mxu0 0.0
  %3756 = vmatprep.subr.mxu0 0.0
  %3757 = vmatpush1.msra.mxu0 0.0
  %3758 = vmatprep.subr.mxu0 0.0
  %3759 = vmatpush1.msra.mxu0 0.0
  %3760 = vmatprep.subr.mxu0 0.0
  %3761 = vmatpush1.msra.mxu0 0.0
  %3762 = vmatprep.subr.mxu0 0.0
  %3763 = vmatpush1.msra.mxu0 0.0
  %3764 = vmatprep.subr.mxu0 0.0
  %3765 = vmatpush1.msra.mxu0 0.0
  %3766 = vmatprep.subr.mxu0 0.0
  %3767 = vmatpush1.msra.mxu0 0.0
  %3768 = vmatprep.subr.mxu0 0.0
  %3769 = vmatpush1.msra.mxu0 0.0
  %3770 = vmatprep.subr.mxu0 0.0
  %3771 = vmatpush1.msra.mxu0 0.0
  %3772 = vmatprep.subr.mxu0 0.0
  %3773 = vmatpush1.msra.mxu0 0.0
  %3774 = vmatprep.mubr.f32.mxu0 0.0
  %3775 = vmatmul.mubr.f32.gmra.mrb[0].mxu0 %v3708
  %v3776 = vpop.f32.mrb[0].mxu0
  %v3777 = vadd.f32 0.0, %v3776
  %v3778 = vpop.f32.mrb[0].mxu0
  %3779 = vdwg.mxu0
  %v3780 = vmul.f32 %v3777, %v2042
  %v3781 = vmax.f32 %v3700, %v3780
  %3782 = vset.pattern.permute.xlu0 7
  %3783 = vperm.xlu0 %3782, %v3104
  %v3784 = vpop.permute.xlu0 %3783
  %vm3785 = vcmp.eq.s32.totalorder %v3784, %v80
  %v3786 = vsel %vm3785, 1, 0
  %v3787 = vcvt.s32.f32 %v3786
  %v3789 = vsel %vm115, %v3787, 0
  %3791 = vmatprep.subr.mxu0 0.0
  %3792 = vmatpush1.msra.mxu0 %v1873
  %3793 = vmatprep.subr.mxu0 0.0
  %3794 = vmatpush1.msra.mxu0 %v1874
  %3795 = vmatprep.subr.mxu0 0.0
  %3796 = vmatpush1.msra.mxu0 %v1875
  %3797 = vmatprep.subr.mxu0 0.0
  %3798 = vmatpush1.msra.mxu0 %v1876
  %3799 = vmatprep.subr.mxu0 0.0
  %3800 = vmatpush1.msra.mxu0 0.0
  %3801 = vmatprep.subr.mxu0 0.0
  %3802 = vmatpush1.msra.mxu0 0.0
  %3803 = vmatprep.subr.mxu0 0.0
  %3804 = vmatpush1.msra.mxu0 0.0
  %3805 = vmatprep.subr.mxu0 0.0
  %3806 = vmatpush1.msra.mxu0 0.0
  %3807 = vmatprep.subr.mxu0 0.0
  %3808 = vmatpush1.msra.mxu0 0.0
  %3809 = vmatprep.subr.mxu0 0.0
  %3810 = vmatpush1.msra.mxu0 0.0
  %3811 = vmatprep.subr.mxu0 0.0
  %3812 = vmatpush1.msra.mxu0 0.0
  %3813 = vmatprep.subr.mxu0 0.0
  %3814 = vmatpush1.msra.mxu0 0.0
  %3815 = vmatprep.subr.mxu0 0.0
  %3816 = vmatpush1.msra.mxu0 0.0
  %3817 = vmatprep.subr.mxu0 0.0
  %3818 = vmatpush1.msra.mxu0 0.0
  %3819 = vmatprep.subr.mxu0 0.0
  %3820 = vmatpush1.msra.mxu0 0.0
  %3821 = vmatprep.subr.mxu0 0.0
  %3822 = vmatpush1.msra.mxu0 0.0
  %3823 = vmatprep.subr.mxu0 0.0
  %3824 = vmatpush1.msra.mxu0 0.0
  %3825 = vmatprep.subr.mxu0 0.0
  %3826 = vmatpush1.msra.mxu0 0.0
  %3827 = vmatprep.subr.mxu0 0.0
  %3828 = vmatpush1.msra.mxu0 0.0
  %3829 = vmatprep.subr.mxu0 0.0
  %3830 = vmatpush1.msra.mxu0 0.0
  %3831 = vmatprep.subr.mxu0 0.0
  %3832 = vmatpush1.msra.mxu0 0.0
  %3833 = vmatprep.subr.mxu0 0.0
  %3834 = vmatpush1.msra.mxu0 0.0
  %3835 = vmatprep.subr.mxu0 0.0
  %3836 = vmatpush1.msra.mxu0 0.0
  %3837 = vmatprep.subr.mxu0 0.0
  %3838 = vmatpush1.msra.mxu0 0.0
  %3839 = vmatprep.subr.mxu0 0.0
  %3840 = vmatpush1.msra.mxu0 0.0
  %3841 = vmatprep.subr.mxu0 0.0
  %3842 = vmatpush1.msra.mxu0 0.0
  %3843 = vmatprep.subr.mxu0 0.0
  %3844 = vmatpush1.msra.mxu0 0.0
  %3845 = vmatprep.subr.mxu0 0.0
  %3846 = vmatpush1.msra.mxu0 0.0
  %3847 = vmatprep.subr.mxu0 0.0
  %3848 = vmatpush1.msra.mxu0 0.0
  %3849 = vmatprep.subr.mxu0 0.0
  %3850 = vmatpush1.msra.mxu0 0.0
  %3851 = vmatprep.subr.mxu0 0.0
  %3852 = vmatpush1.msra.mxu0 0.0
  %3853 = vmatprep.subr.mxu0 0.0
  %3854 = vmatpush1.msra.mxu0 0.0
  %3855 = vmatprep.mubr.f32.mxu0 0.0
  %3856 = vmatmul.mubr.f32.gmra.mrb[0].mxu0 %v3789
  %v3857 = vpop.f32.mrb[0].mxu0
  %v3858 = vadd.f32 0.0, %v3857
  %v3859 = vpop.f32.mrb[0].mxu0
  %3860 = vdwg.mxu0
  %v3861 = vmul.f32 %v3858, %v2042
  %v3862 = vmax.f32 %v3781, %v3861
  %3863 = vmatprep.subr.mxu0 0.0
  %3864 = vmatpush1.msra.mxu0 %v3428
  %3865 = vmatprep.subr.mxu0 0.0
  %3866 = vmatpush1.msra.mxu0 %v3429
  %3867 = vmatprep.subr.mxu0 0.0
  %3868 = vmatpush1.msra.mxu0 %v3430
  %3869 = vmatprep.subr.mxu0 0.0
  %3870 = vmatpush1.msra.mxu0 %v3431
  %3871 = vmatprep.subr.mxu0 0.0
  %3872 = vmatpush1.msra.mxu0 %v3432
  %3873 = vmatprep.subr.mxu0 0.0
  %3874 = vmatpush1.msra.mxu0 %v3433
  %3875 = vmatprep.subr.mxu0 0.0
  %3876 = vmatpush1.msra.mxu0 %v3434
  %3877 = vmatprep.subr.mxu0 0.0
  %3878 = vmatpush1.msra.mxu0 %v3435
  %3879 = vmatprep.subr.mxu0 0.0
  %3880 = vmatpush1.msra.mxu0 %v3436
  %3881 = vmatprep.subr.mxu0 0.0
  %3882 = vmatpush1.msra.mxu0 %v3437
  %3883 = vmatprep.subr.mxu0 0.0
  %3884 = vmatpush1.msra.mxu0 %v3438
  %3885 = vmatprep.subr.mxu0 0.0
  %3886 = vmatpush1.msra.mxu0 %v3439
  %3887 = vmatprep.subr.mxu0 0.0
  %3888 = vmatpush1.msra.mxu0 %v3440
  %3889 = vmatprep.subr.mxu0 0.0
  %3890 = vmatpush1.msra.mxu0 %v3441
  %3891 = vmatprep.subr.mxu0 0.0
  %3892 = vmatpush1.msra.mxu0 %v3442
  %3893 = vmatprep.subr.mxu0 0.0
  %3894 = vmatpush1.msra.mxu0 %v3443
  %3895 = vmatprep.subr.mxu0 0.0
  %3896 = vmatpush1.msra.mxu0 0.0
  %3897 = vmatprep.subr.mxu0 0.0
  %3898 = vmatpush1.msra.mxu0 0.0
  %3899 = vmatprep.subr.mxu0 0.0
  %3900 = vmatpush1.msra.mxu0 0.0
  %3901 = vmatprep.subr.mxu0 0.0
  %3902 = vmatpush1.msra.mxu0 0.0
  %3903 = vmatprep.subr.mxu0 0.0
  %3904 = vmatpush1.msra.mxu0 0.0
  %3905 = vmatprep.subr.mxu0 0.0
  %3906 = vmatpush1.msra.mxu0 0.0
  %3907 = vmatprep.subr.mxu0 0.0
  %3908 = vmatpush1.msra.mxu0 0.0
  %3909 = vmatprep.subr.mxu0 0.0
  %3910 = vmatpush1.msra.mxu0 0.0
  %3911 = vmatprep.subr.mxu0 0.0
  %3912 = vmatpush1.msra.mxu0 0.0
  %3913 = vmatprep.subr.mxu0 0.0
  %3914 = vmatpush1.msra.mxu0 0.0
  %3915 = vmatprep.subr.mxu0 0.0
  %3916 = vmatpush1.msra.mxu0 0.0
  %3917 = vmatprep.subr.mxu0 0.0
  %3918 = vmatpush1.msra.mxu0 0.0
  %3919 = vmatprep.subr.mxu0 0.0
  %3920 = vmatpush1.msra.mxu0 0.0
  %3921 = vmatprep.subr.mxu0 0.0
  %3922 = vmatpush1.msra.mxu0 0.0
  %3923 = vmatprep.subr.mxu0 0.0
  %3924 = vmatpush1.msra.mxu0 0.0
  %3925 = vmatprep.subr.mxu0 0.0
  %3926 = vmatpush1.msra.mxu0 0.0
  %3927 = vmatprep.mubr.f32.mxu0 0.0
  %3928 = vmatmul.mubr.f32.gmra.mrb[0].mxu0 %v3862
  %v3929 = vpop.f32.mrb[0].mxu0
  %v3930 = vadd.f32 0.0, %v3929
  %v3931 = vpop.f32.mrb[0].mxu0
  %3932 = vdwg.mxu0
  %v3933 = vadd.f32 %v3100, %v3930
  %v3934 = vadd.f32 %v3933, %v3520
  %vm3935 = vcmp.ge.f32.partialorder %v3934, 0.0
  %v3936 = vmul.f32 %v3934, 0.01
  %v3937 = vsel %vm3935, %v3934, %v3936
  %v3938 = vmul.f32 %v3937, %v3531
  %v3939 = vsel %vm3534, %v3938, 0.0
  %3940 = vadd.xlane.f32.xlu0 %v3939
  %v3941 = vpop.xlane.xlu0 %3940
  %vm3942 = vcmp.gt.s32.totalorder %v3103, 1
  %v3943 = vsel %vm3942, %v3941, -1e+30
  %3944 = vset.pattern.permute.xlu0 8
  %3945 = vperm.xlu0 %3944, %v3104
  %v3946 = vpop.permute.xlu0 %3945
  %vm3947 = vcmp.eq.s32.totalorder %v3946, %v80
  %v3948 = vsel %vm3947, 1, 0
  %v3949 = vcvt.s32.f32 %v3948
  %v3951 = vsel %vm115, %v3949, 0
  %3953 = vmatprep.subr.mxu0 0.0
  %3954 = vmatpush1.msra.mxu0 %v1873
  %3955 = vmatprep.subr.mxu0 0.0
  %3956 = vmatpush1.msra.mxu0 %v1874
  %3957 = vmatprep.subr.mxu0 0.0
  %3958 = vmatpush1.msra.mxu0 %v1875
  %3959 = vmatprep.subr.mxu0 0.0
  %3960 = vmatpush1.msra.mxu0 %v1876
  %3961 = vmatprep.subr.mxu0 0.0
  %3962 = vmatpush1.msra.mxu0 0.0
  %3963 = vmatprep.subr.mxu0 0.0
  %3964 = vmatpush1.msra.mxu0 0.0
  %3965 = vmatprep.subr.mxu0 0.0
  %3966 = vmatpush1.msra.mxu0 0.0
  %3967 = vmatprep.subr.mxu0 0.0
  %3968 = vmatpush1.msra.mxu0 0.0
  %3969 = vmatprep.subr.mxu0 0.0
  %3970 = vmatpush1.msra.mxu0 0.0
  %3971 = vmatprep.subr.mxu0 0.0
  %3972 = vmatpush1.msra.mxu0 0.0
  %3973 = vmatprep.subr.mxu0 0.0
  %3974 = vmatpush1.msra.mxu0 0.0
  %3975 = vmatprep.subr.mxu0 0.0
  %3976 = vmatpush1.msra.mxu0 0.0
  %3977 = vmatprep.subr.mxu0 0.0
  %3978 = vmatpush1.msra.mxu0 0.0
  %3979 = vmatprep.subr.mxu0 0.0
  %3980 = vmatpush1.msra.mxu0 0.0
  %3981 = vmatprep.subr.mxu0 0.0
  %3982 = vmatpush1.msra.mxu0 0.0
  %3983 = vmatprep.subr.mxu0 0.0
  %3984 = vmatpush1.msra.mxu0 0.0
  %3985 = vmatprep.subr.mxu0 0.0
  %3986 = vmatpush1.msra.mxu0 0.0
  %3987 = vmatprep.subr.mxu0 0.0
  %3988 = vmatpush1.msra.mxu0 0.0
  %3989 = vmatprep.subr.mxu0 0.0
  %3990 = vmatpush1.msra.mxu0 0.0
  %3991 = vmatprep.subr.mxu0 0.0
  %3992 = vmatpush1.msra.mxu0 0.0
  %3993 = vmatprep.subr.mxu0 0.0
  %3994 = vmatpush1.msra.mxu0 0.0
  %3995 = vmatprep.subr.mxu0 0.0
  %3996 = vmatpush1.msra.mxu0 0.0
  %3997 = vmatprep.subr.mxu0 0.0
  %3998 = vmatpush1.msra.mxu0 0.0
  %3999 = vmatprep.subr.mxu0 0.0
  %4000 = vmatpush1.msra.mxu0 0.0
  %4001 = vmatprep.subr.mxu0 0.0
  %4002 = vmatpush1.msra.mxu0 0.0
  %4003 = vmatprep.subr.mxu0 0.0
  %4004 = vmatpush1.msra.mxu0 0.0
  %4005 = vmatprep.subr.mxu0 0.0
  %4006 = vmatpush1.msra.mxu0 0.0
  %4007 = vmatprep.subr.mxu0 0.0
  %4008 = vmatpush1.msra.mxu0 0.0
  %4009 = vmatprep.subr.mxu0 0.0
  %4010 = vmatpush1.msra.mxu0 0.0
  %4011 = vmatprep.subr.mxu0 0.0
  %4012 = vmatpush1.msra.mxu0 0.0
  %4013 = vmatprep.subr.mxu0 0.0
  %4014 = vmatpush1.msra.mxu0 0.0
  %4015 = vmatprep.subr.mxu0 0.0
  %4016 = vmatpush1.msra.mxu0 0.0
  %4017 = vmatprep.mubr.f32.mxu0 0.0
  %4018 = vmatmul.mubr.f32.gmra.mrb[0].mxu0 %v3951
  %v4019 = vpop.f32.mrb[0].mxu0
  %v4020 = vadd.f32 0.0, %v4019
  %v4021 = vpop.f32.mrb[0].mxu0
  %4022 = vdwg.mxu0
  %v4023 = vmul.f32 %v4020, %v2042
  %4024 = vset.pattern.permute.xlu0 9
  %4025 = vperm.xlu0 %4024, %v3104
  %v4026 = vpop.permute.xlu0 %4025
  %vm4027 = vcmp.eq.s32.totalorder %v4026, %v80
  %v4028 = vsel %vm4027, 1, 0
  %v4029 = vcvt.s32.f32 %v4028
  %v4031 = vsel %vm115, %v4029, 0
  %4033 = vmatprep.subr.mxu0 0.0
  %4034 = vmatpush1.msra.mxu0 %v1873
  %4035 = vmatprep.subr.mxu0 0.0
  %4036 = vmatpush1.msra.mxu0 %v1874
  %4037 = vmatprep.subr.mxu0 0.0
  %4038 = vmatpush1.msra.mxu0 %v1875
  %4039 = vmatprep.subr.mxu0 0.0
  %4040 = vmatpush1.msra.mxu0 %v1876
  %4041 = vmatprep.subr.mxu0 0.0
  %4042 = vmatpush1.msra.mxu0 0.0
  %4043 = vmatprep.subr.mxu0 0.0
  %4044 = vmatpush1.msra.mxu0 0.0
  %4045 = vmatprep.subr.mxu0 0.0
  %4046 = vmatpush1.msra.mxu0 0.0
  %4047 = vmatprep.subr.mxu0 0.0
  %4048 = vmatpush1.msra.mxu0 0.0
  %4049 = vmatprep.subr.mxu0 0.0
  %4050 = vmatpush1.msra.mxu0 0.0
  %4051 = vmatprep.subr.mxu0 0.0
  %4052 = vmatpush1.msra.mxu0 0.0
  %4053 = vmatprep.subr.mxu0 0.0
  %4054 = vmatpush1.msra.mxu0 0.0
  %4055 = vmatprep.subr.mxu0 0.0
  %4056 = vmatpush1.msra.mxu0 0.0
  %4057 = vmatprep.subr.mxu0 0.0
  %4058 = vmatpush1.msra.mxu0 0.0
  %4059 = vmatprep.subr.mxu0 0.0
  %4060 = vmatpush1.msra.mxu0 0.0
  %4061 = vmatprep.subr.mxu0 0.0
  %4062 = vmatpush1.msra.mxu0 0.0
  %4063 = vmatprep.subr.mxu0 0.0
  %4064 = vmatpush1.msra.mxu0 0.0
  %4065 = vmatprep.subr.mxu0 0.0
  %4066 = vmatpush1.msra.mxu0 0.0
  %4067 = vmatprep.subr.mxu0 0.0
  %4068 = vmatpush1.msra.mxu0 0.0
  %4069 = vmatprep.subr.mxu0 0.0
  %4070 = vmatpush1.msra.mxu0 0.0
  %4071 = vmatprep.subr.mxu0 0.0
  %4072 = vmatpush1.msra.mxu0 0.0
  %4073 = vmatprep.subr.mxu0 0.0
  %4074 = vmatpush1.msra.mxu0 0.0
  %4075 = vmatprep.subr.mxu0 0.0
  %4076 = vmatpush1.msra.mxu0 0.0
  %4077 = vmatprep.subr.mxu0 0.0
  %4078 = vmatpush1.msra.mxu0 0.0
  %4079 = vmatprep.subr.mxu0 0.0
  %4080 = vmatpush1.msra.mxu0 0.0
  %4081 = vmatprep.subr.mxu0 0.0
  %4082 = vmatpush1.msra.mxu0 0.0
  %4083 = vmatprep.subr.mxu0 0.0
  %4084 = vmatpush1.msra.mxu0 0.0
  %4085 = vmatprep.subr.mxu0 0.0
  %4086 = vmatpush1.msra.mxu0 0.0
  %4087 = vmatprep.subr.mxu0 0.0
  %4088 = vmatpush1.msra.mxu0 0.0
  %4089 = vmatprep.subr.mxu0 0.0
  %4090 = vmatpush1.msra.mxu0 0.0
  %4091 = vmatprep.subr.mxu0 0.0
  %4092 = vmatpush1.msra.mxu0 0.0
  %4093 = vmatprep.subr.mxu0 0.0
  %4094 = vmatpush1.msra.mxu0 0.0
  %4095 = vmatprep.subr.mxu0 0.0
  %4096 = vmatpush1.msra.mxu0 0.0
  %4097 = vmatprep.mubr.f32.mxu0 0.0
  %4098 = vmatmul.mubr.f32.gmra.mrb[0].mxu0 %v4031
  %v4099 = vpop.f32.mrb[0].mxu0
  %v4100 = vadd.f32 0.0, %v4099
  %v4101 = vpop.f32.mrb[0].mxu0
  %4102 = vdwg.mxu0
  %v4103 = vmul.f32 %v4100, %v2042
  %v4104 = vmax.f32 %v4023, %v4103
  %4105 = vset.pattern.permute.xlu0 10
  %4106 = vperm.xlu0 %4105, %v3104
  %v4107 = vpop.permute.xlu0 %4106
  %vm4108 = vcmp.eq.s32.totalorder %v4107, %v80
  %v4109 = vsel %vm4108, 1, 0
  %v4110 = vcvt.s32.f32 %v4109
  %v4112 = vsel %vm115, %v4110, 0
  %4114 = vmatprep.subr.mxu0 0.0
  %4115 = vmatpush1.msra.mxu0 %v1873
  %4116 = vmatprep.subr.mxu0 0.0
  %4117 = vmatpush1.msra.mxu0 %v1874
  %4118 = vmatprep.subr.mxu0 0.0
  %4119 = vmatpush1.msra.mxu0 %v1875
  %4120 = vmatprep.subr.mxu0 0.0
  %4121 = vmatpush1.msra.mxu0 %v1876
  %4122 = vmatprep.subr.mxu0 0.0
  %4123 = vmatpush1.msra.mxu0 0.0
  %4124 = vmatprep.subr.mxu0 0.0
  %4125 = vmatpush1.msra.mxu0 0.0
  %4126 = vmatprep.subr.mxu0 0.0
  %4127 = vmatpush1.msra.mxu0 0.0
  %4128 = vmatprep.subr.mxu0 0.0
  %4129 = vmatpush1.msra.mxu0 0.0
  %4130 = vmatprep.subr.mxu0 0.0
  %4131 = vmatpush1.msra.mxu0 0.0
  %4132 = vmatprep.subr.mxu0 0.0
  %4133 = vmatpush1.msra.mxu0 0.0
  %4134 = vmatprep.subr.mxu0 0.0
  %4135 = vmatpush1.msra.mxu0 0.0
  %4136 = vmatprep.subr.mxu0 0.0
  %4137 = vmatpush1.msra.mxu0 0.0
  %4138 = vmatprep.subr.mxu0 0.0
  %4139 = vmatpush1.msra.mxu0 0.0
  %4140 = vmatprep.subr.mxu0 0.0
  %4141 = vmatpush1.msra.mxu0 0.0
  %4142 = vmatprep.subr.mxu0 0.0
  %4143 = vmatpush1.msra.mxu0 0.0
  %4144 = vmatprep.subr.mxu0 0.0
  %4145 = vmatpush1.msra.mxu0 0.0
  %4146 = vmatprep.subr.mxu0 0.0
  %4147 = vmatpush1.msra.mxu0 0.0
  %4148 = vmatprep.subr.mxu0 0.0
  %4149 = vmatpush1.msra.mxu0 0.0
  %4150 = vmatprep.subr.mxu0 0.0
  %4151 = vmatpush1.msra.mxu0 0.0
  %4152 = vmatprep.subr.mxu0 0.0
  %4153 = vmatpush1.msra.mxu0 0.0
  %4154 = vmatprep.subr.mxu0 0.0
  %4155 = vmatpush1.msra.mxu0 0.0
  %4156 = vmatprep.subr.mxu0 0.0
  %4157 = vmatpush1.msra.mxu0 0.0
  %4158 = vmatprep.subr.mxu0 0.0
  %4159 = vmatpush1.msra.mxu0 0.0
  %4160 = vmatprep.subr.mxu0 0.0
  %4161 = vmatpush1.msra.mxu0 0.0
  %4162 = vmatprep.subr.mxu0 0.0
  %4163 = vmatpush1.msra.mxu0 0.0
  %4164 = vmatprep.subr.mxu0 0.0
  %4165 = vmatpush1.msra.mxu0 0.0
  %4166 = vmatprep.subr.mxu0 0.0
  %4167 = vmatpush1.msra.mxu0 0.0
  %4168 = vmatprep.subr.mxu0 0.0
  %4169 = vmatpush1.msra.mxu0 0.0
  %4170 = vmatprep.subr.mxu0 0.0
  %4171 = vmatpush1.msra.mxu0 0.0
  %4172 = vmatprep.subr.mxu0 0.0
  %4173 = vmatpush1.msra.mxu0 0.0
  %4174 = vmatprep.subr.mxu0 0.0
  %4175 = vmatpush1.msra.mxu0 0.0
  %4176 = vmatprep.subr.mxu0 0.0
  %4177 = vmatpush1.msra.mxu0 0.0
  %4178 = vmatprep.mubr.f32.mxu0 0.0
  %4179 = vmatmul.mubr.f32.gmra.mrb[0].mxu0 %v4112
  %v4180 = vpop.f32.mrb[0].mxu0
  %v4181 = vadd.f32 0.0, %v4180
  %v4182 = vpop.f32.mrb[0].mxu0
  %4183 = vdwg.mxu0
  %v4184 = vmul.f32 %v4181, %v2042
  %v4185 = vmax.f32 %v4104, %v4184
  %4186 = vset.pattern.permute.xlu0 11
  %4187 = vperm.xlu0 %4186, %v3104
  %v4188 = vpop.permute.xlu0 %4187
  %vm4189 = vcmp.eq.s32.totalorder %v4188, %v80
  %v4190 = vsel %vm4189, 1, 0
  %v4191 = vcvt.s32.f32 %v4190
  %v4193 = vsel %vm115, %v4191, 0
  %4195 = vmatprep.subr.mxu0 0.0
  %4196 = vmatpush1.msra.mxu0 %v1873
  %4197 = vmatprep.subr.mxu0 0.0
  %4198 = vmatpush1.msra.mxu0 %v1874
  %4199 = vmatprep.subr.mxu0 0.0
  %4200 = vmatpush1.msra.mxu0 %v1875
  %4201 = vmatprep.subr.mxu0 0.0
  %4202 = vmatpush1.msra.mxu0 %v1876
  %4203 = vmatprep.subr.mxu0 0.0
  %4204 = vmatpush1.msra.mxu0 0.0
  %4205 = vmatprep.subr.mxu0 0.0
  %4206 = vmatpush1.msra.mxu0 0.0
  %4207 = vmatprep.subr.mxu0 0.0
  %4208 = vmatpush1.msra.mxu0 0.0
  %4209 = vmatprep.subr.mxu0 0.0
  %4210 = vmatpush1.msra.mxu0 0.0
  %4211 = vmatprep.subr.mxu0 0.0
  %4212 = vmatpush1.msra.mxu0 0.0
  %4213 = vmatprep.subr.mxu0 0.0
  %4214 = vmatpush1.msra.mxu0 0.0
  %4215 = vmatprep.subr.mxu0 0.0
  %4216 = vmatpush1.msra.mxu0 0.0
  %4217 = vmatprep.subr.mxu0 0.0
  %4218 = vmatpush1.msra.mxu0 0.0
  %4219 = vmatprep.subr.mxu0 0.0
  %4220 = vmatpush1.msra.mxu0 0.0
  %4221 = vmatprep.subr.mxu0 0.0
  %4222 = vmatpush1.msra.mxu0 0.0
  %4223 = vmatprep.subr.mxu0 0.0
  %4224 = vmatpush1.msra.mxu0 0.0
  %4225 = vmatprep.subr.mxu0 0.0
  %4226 = vmatpush1.msra.mxu0 0.0
  %4227 = vmatprep.subr.mxu0 0.0
  %4228 = vmatpush1.msra.mxu0 0.0
  %4229 = vmatprep.subr.mxu0 0.0
  %4230 = vmatpush1.msra.mxu0 0.0
  %4231 = vmatprep.subr.mxu0 0.0
  %4232 = vmatpush1.msra.mxu0 0.0
  %4233 = vmatprep.subr.mxu0 0.0
  %4234 = vmatpush1.msra.mxu0 0.0
  %4235 = vmatprep.subr.mxu0 0.0
  %4236 = vmatpush1.msra.mxu0 0.0
  %4237 = vmatprep.subr.mxu0 0.0
  %4238 = vmatpush1.msra.mxu0 0.0
  %4239 = vmatprep.subr.mxu0 0.0
  %4240 = vmatpush1.msra.mxu0 0.0
  %4241 = vmatprep.subr.mxu0 0.0
  %4242 = vmatpush1.msra.mxu0 0.0
  %4243 = vmatprep.subr.mxu0 0.0
  %4244 = vmatpush1.msra.mxu0 0.0
  %4245 = vmatprep.subr.mxu0 0.0
  %4246 = vmatpush1.msra.mxu0 0.0
  %4247 = vmatprep.subr.mxu0 0.0
  %4248 = vmatpush1.msra.mxu0 0.0
  %4249 = vmatprep.subr.mxu0 0.0
  %4250 = vmatpush1.msra.mxu0 0.0
  %4251 = vmatprep.subr.mxu0 0.0
  %4252 = vmatpush1.msra.mxu0 0.0
  %4253 = vmatprep.subr.mxu0 0.0
  %4254 = vmatpush1.msra.mxu0 0.0
  %4255 = vmatprep.subr.mxu0 0.0
  %4256 = vmatpush1.msra.mxu0 0.0
  %4257 = vmatprep.subr.mxu0 0.0
  %4258 = vmatpush1.msra.mxu0 0.0
  %4259 = vmatprep.mubr.f32.mxu0 0.0
  %4260 = vmatmul.mubr.f32.gmra.mrb[0].mxu0 %v4193
  %v4261 = vpop.f32.mrb[0].mxu0
  %v4262 = vadd.f32 0.0, %v4261
  %v4263 = vpop.f32.mrb[0].mxu0
  %4264 = vdwg.mxu0
  %v4265 = vmul.f32 %v4262, %v2042
  %v4266 = vmax.f32 %v4185, %v4265
  %4267 = vmatprep.subr.mxu0 0.0
  %4268 = vmatpush1.msra.mxu0 %v3428
  %4269 = vmatprep.subr.mxu0 0.0
  %4270 = vmatpush1.msra.mxu0 %v3429
  %4271 = vmatprep.subr.mxu0 0.0
  %4272 = vmatpush1.msra.mxu0 %v3430
  %4273 = vmatprep.subr.mxu0 0.0
  %4274 = vmatpush1.msra.mxu0 %v3431
  %4275 = vmatprep.subr.mxu0 0.0
  %4276 = vmatpush1.msra.mxu0 %v3432
  %4277 = vmatprep.subr.mxu0 0.0
  %4278 = vmatpush1.msra.mxu0 %v3433
  %4279 = vmatprep.subr.mxu0 0.0
  %4280 = vmatpush1.msra.mxu0 %v3434
  %4281 = vmatprep.subr.mxu0 0.0
  %4282 = vmatpush1.msra.mxu0 %v3435
  %4283 = vmatprep.subr.mxu0 0.0
  %4284 = vmatpush1.msra.mxu0 %v3436
  %4285 = vmatprep.subr.mxu0 0.0
  %4286 = vmatpush1.msra.mxu0 %v3437
  %4287 = vmatprep.subr.mxu0 0.0
  %4288 = vmatpush1.msra.mxu0 %v3438
  %4289 = vmatprep.subr.mxu0 0.0
  %4290 = vmatpush1.msra.mxu0 %v3439
  %4291 = vmatprep.subr.mxu0 0.0
  %4292 = vmatpush1.msra.mxu0 %v3440
  %4293 = vmatprep.subr.mxu0 0.0
  %4294 = vmatpush1.msra.mxu0 %v3441
  %4295 = vmatprep.subr.mxu0 0.0
  %4296 = vmatpush1.msra.mxu0 %v3442
  %4297 = vmatprep.subr.mxu0 0.0
  %4298 = vmatpush1.msra.mxu0 %v3443
  %4299 = vmatprep.subr.mxu0 0.0
  %4300 = vmatpush1.msra.mxu0 0.0
  %4301 = vmatprep.subr.mxu0 0.0
  %4302 = vmatpush1.msra.mxu0 0.0
  %4303 = vmatprep.subr.mxu0 0.0
  %4304 = vmatpush1.msra.mxu0 0.0
  %4305 = vmatprep.subr.mxu0 0.0
  %4306 = vmatpush1.msra.mxu0 0.0
  %4307 = vmatprep.subr.mxu0 0.0
  %4308 = vmatpush1.msra.mxu0 0.0
  %4309 = vmatprep.subr.mxu0 0.0
  %4310 = vmatpush1.msra.mxu0 0.0
  %4311 = vmatprep.subr.mxu0 0.0
  %4312 = vmatpush1.msra.mxu0 0.0
  %4313 = vmatprep.subr.mxu0 0.0
  %4314 = vmatpush1.msra.mxu0 0.0
  %4315 = vmatprep.subr.mxu0 0.0
  %4316 = vmatpush1.msra.mxu0 0.0
  %4317 = vmatprep.subr.mxu0 0.0
  %4318 = vmatpush1.msra.mxu0 0.0
  %4319 = vmatprep.subr.mxu0 0.0
  %4320 = vmatpush1.msra.mxu0 0.0
  %4321 = vmatprep.subr.mxu0 0.0
  %4322 = vmatpush1.msra.mxu0 0.0
  %4323 = vmatprep.subr.mxu0 0.0
  %4324 = vmatpush1.msra.mxu0 0.0
  %4325 = vmatprep.subr.mxu0 0.0
  %4326 = vmatpush1.msra.mxu0 0.0
  %4327 = vmatprep.subr.mxu0 0.0
  %4328 = vmatpush1.msra.mxu0 0.0
  %4329 = vmatprep.subr.mxu0 0.0
  %4330 = vmatpush1.msra.mxu0 0.0
  %4331 = vmatprep.mubr.f32.mxu0 0.0
  %4332 = vmatmul.mubr.f32.gmra.mrb[0].mxu0 %v4266
  %v4333 = vpop.f32.mrb[0].mxu0
  %v4334 = vadd.f32 0.0, %v4333
  %v4335 = vpop.f32.mrb[0].mxu0
  %4336 = vdwg.mxu0
  %v4337 = vadd.f32 %v3100, %v4334
  %v4338 = vadd.f32 %v4337, %v3520
  %vm4339 = vcmp.ge.f32.partialorder %v4338, 0.0
  %v4340 = vmul.f32 %v4338, 0.01
  %v4341 = vsel %vm4339, %v4338, %v4340
  %v4342 = vmul.f32 %v4341, %v3531
  %v4343 = vsel %vm3534, %v4342, 0.0
  %4344 = vadd.xlane.f32.xlu0 %v4343
  %v4345 = vpop.xlane.xlu0 %4344
  %vm4346 = vcmp.gt.s32.totalorder %v3103, 2
  %v4347 = vsel %vm4346, %v4345, -1e+30
  %4348 = vset.pattern.permute.xlu0 12
  %4349 = vperm.xlu0 %4348, %v3104
  %v4350 = vpop.permute.xlu0 %4349
  %vm4351 = vcmp.eq.s32.totalorder %v4350, %v80
  %v4352 = vsel %vm4351, 1, 0
  %v4353 = vcvt.s32.f32 %v4352
  %v4355 = vsel %vm115, %v4353, 0
  %4357 = vmatprep.subr.mxu0 0.0
  %4358 = vmatpush1.msra.mxu0 %v1873
  %4359 = vmatprep.subr.mxu0 0.0
  %4360 = vmatpush1.msra.mxu0 %v1874
  %4361 = vmatprep.subr.mxu0 0.0
  %4362 = vmatpush1.msra.mxu0 %v1875
  %4363 = vmatprep.subr.mxu0 0.0
  %4364 = vmatpush1.msra.mxu0 %v1876
  %4365 = vmatprep.subr.mxu0 0.0
  %4366 = vmatpush1.msra.mxu0 0.0
  %4367 = vmatprep.subr.mxu0 0.0
  %4368 = vmatpush1.msra.mxu0 0.0
  %4369 = vmatprep.subr.mxu0 0.0
  %4370 = vmatpush1.msra.mxu0 0.0
  %4371 = vmatprep.subr.mxu0 0.0
  %4372 = vmatpush1.msra.mxu0 0.0
  %4373 = vmatprep.subr.mxu0 0.0
  %4374 = vmatpush1.msra.mxu0 0.0
  %4375 = vmatprep.subr.mxu0 0.0
  %4376 = vmatpush1.msra.mxu0 0.0
  %4377 = vmatprep.subr.mxu0 0.0
  %4378 = vmatpush1.msra.mxu0 0.0
  %4379 = vmatprep.subr.mxu0 0.0
  %4380 = vmatpush1.msra.mxu0 0.0
  %4381 = vmatprep.subr.mxu0 0.0
  %4382 = vmatpush1.msra.mxu0 0.0
  %4383 = vmatprep.subr.mxu0 0.0
  %4384 = vmatpush1.msra.mxu0 0.0
  %4385 = vmatprep.subr.mxu0 0.0
  %4386 = vmatpush1.msra.mxu0 0.0
  %4387 = vmatprep.subr.mxu0 0.0
  %4388 = vmatpush1.msra.mxu0 0.0
  %4389 = vmatprep.subr.mxu0 0.0
  %4390 = vmatpush1.msra.mxu0 0.0
  %4391 = vmatprep.subr.mxu0 0.0
  %4392 = vmatpush1.msra.mxu0 0.0
  %4393 = vmatprep.subr.mxu0 0.0
  %4394 = vmatpush1.msra.mxu0 0.0
  %4395 = vmatprep.subr.mxu0 0.0
  %4396 = vmatpush1.msra.mxu0 0.0
  %4397 = vmatprep.subr.mxu0 0.0
  %4398 = vmatpush1.msra.mxu0 0.0
  %4399 = vmatprep.subr.mxu0 0.0
  %4400 = vmatpush1.msra.mxu0 0.0
  %4401 = vmatprep.subr.mxu0 0.0
  %4402 = vmatpush1.msra.mxu0 0.0
  %4403 = vmatprep.subr.mxu0 0.0
  %4404 = vmatpush1.msra.mxu0 0.0
  %4405 = vmatprep.subr.mxu0 0.0
  %4406 = vmatpush1.msra.mxu0 0.0
  %4407 = vmatprep.subr.mxu0 0.0
  %4408 = vmatpush1.msra.mxu0 0.0
  %4409 = vmatprep.subr.mxu0 0.0
  %4410 = vmatpush1.msra.mxu0 0.0
  %4411 = vmatprep.subr.mxu0 0.0
  %4412 = vmatpush1.msra.mxu0 0.0
  %4413 = vmatprep.subr.mxu0 0.0
  %4414 = vmatpush1.msra.mxu0 0.0
  %4415 = vmatprep.subr.mxu0 0.0
  %4416 = vmatpush1.msra.mxu0 0.0
  %4417 = vmatprep.subr.mxu0 0.0
  %4418 = vmatpush1.msra.mxu0 0.0
  %4419 = vmatprep.subr.mxu0 0.0
  %4420 = vmatpush1.msra.mxu0 0.0
  %4421 = vmatprep.mubr.f32.mxu0 0.0
  %4422 = vmatmul.mubr.f32.gmra.mrb[0].mxu0 %v4355
  %v4423 = vpop.f32.mrb[0].mxu0
  %v4424 = vadd.f32 0.0, %v4423
  %v4425 = vpop.f32.mrb[0].mxu0
  %4426 = vdwg.mxu0
  %v4427 = vmul.f32 %v4424, %v2042
  %4428 = vset.pattern.permute.xlu0 13
  %4429 = vperm.xlu0 %4428, %v3104
  %v4430 = vpop.permute.xlu0 %4429
  %vm4431 = vcmp.eq.s32.totalorder %v4430, %v80
  %v4432 = vsel %vm4431, 1, 0
  %v4433 = vcvt.s32.f32 %v4432
  %v4435 = vsel %vm115, %v4433, 0
  %4437 = vmatprep.subr.mxu0 0.0
  %4438 = vmatpush1.msra.mxu0 %v1873
  %4439 = vmatprep.subr.mxu0 0.0
  %4440 = vmatpush1.msra.mxu0 %v1874
  %4441 = vmatprep.subr.mxu0 0.0
  %4442 = vmatpush1.msra.mxu0 %v1875
  %4443 = vmatprep.subr.mxu0 0.0
  %4444 = vmatpush1.msra.mxu0 %v1876
  %4445 = vmatprep.subr.mxu0 0.0
  %4446 = vmatpush1.msra.mxu0 0.0
  %4447 = vmatprep.subr.mxu0 0.0
  %4448 = vmatpush1.msra.mxu0 0.0
  %4449 = vmatprep.subr.mxu0 0.0
  %4450 = vmatpush1.msra.mxu0 0.0
  %4451 = vmatprep.subr.mxu0 0.0
  %4452 = vmatpush1.msra.mxu0 0.0
  %4453 = vmatprep.subr.mxu0 0.0
  %4454 = vmatpush1.msra.mxu0 0.0
  %4455 = vmatprep.subr.mxu0 0.0
  %4456 = vmatpush1.msra.mxu0 0.0
  %4457 = vmatprep.subr.mxu0 0.0
  %4458 = vmatpush1.msra.mxu0 0.0
  %4459 = vmatprep.subr.mxu0 0.0
  %4460 = vmatpush1.msra.mxu0 0.0
  %4461 = vmatprep.subr.mxu0 0.0
  %4462 = vmatpush1.msra.mxu0 0.0
  %4463 = vmatprep.subr.mxu0 0.0
  %4464 = vmatpush1.msra.mxu0 0.0
  %4465 = vmatprep.subr.mxu0 0.0
  %4466 = vmatpush1.msra.mxu0 0.0
  %4467 = vmatprep.subr.mxu0 0.0
  %4468 = vmatpush1.msra.mxu0 0.0
  %4469 = vmatprep.subr.mxu0 0.0
  %4470 = vmatpush1.msra.mxu0 0.0
  %4471 = vmatprep.subr.mxu0 0.0
  %4472 = vmatpush1.msra.mxu0 0.0
  %4473 = vmatprep.subr.mxu0 0.0
  %4474 = vmatpush1.msra.mxu0 0.0
  %4475 = vmatprep.subr.mxu0 0.0
  %4476 = vmatpush1.msra.mxu0 0.0
  %4477 = vmatprep.subr.mxu0 0.0
  %4478 = vmatpush1.msra.mxu0 0.0
  %4479 = vmatprep.subr.mxu0 0.0
  %4480 = vmatpush1.msra.mxu0 0.0
  %4481 = vmatprep.subr.mxu0 0.0
  %4482 = vmatpush1.msra.mxu0 0.0
  %4483 = vmatprep.subr.mxu0 0.0
  %4484 = vmatpush1.msra.mxu0 0.0
  %4485 = vmatprep.subr.mxu0 0.0
  %4486 = vmatpush1.msra.mxu0 0.0
  %4487 = vmatprep.subr.mxu0 0.0
  %4488 = vmatpush1.msra.mxu0 0.0
  %4489 = vmatprep.subr.mxu0 0.0
  %4490 = vmatpush1.msra.mxu0 0.0
  %4491 = vmatprep.subr.mxu0 0.0
  %4492 = vmatpush1.msra.mxu0 0.0
  %4493 = vmatprep.subr.mxu0 0.0
  %4494 = vmatpush1.msra.mxu0 0.0
  %4495 = vmatprep.subr.mxu0 0.0
  %4496 = vmatpush1.msra.mxu0 0.0
  %4497 = vmatprep.subr.mxu0 0.0
  %4498 = vmatpush1.msra.mxu0 0.0
  %4499 = vmatprep.subr.mxu0 0.0
  %4500 = vmatpush1.msra.mxu0 0.0
  %4501 = vmatprep.mubr.f32.mxu0 0.0
  %4502 = vmatmul.mubr.f32.gmra.mrb[0].mxu0 %v4435
  %v4503 = vpop.f32.mrb[0].mxu0
  %v4504 = vadd.f32 0.0, %v4503
  %v4505 = vpop.f32.mrb[0].mxu0
  %4506 = vdwg.mxu0
  %v4507 = vmul.f32 %v4504, %v2042
  %v4508 = vmax.f32 %v4427, %v4507
  %4509 = vset.pattern.permute.xlu0 14
  %4510 = vperm.xlu0 %4509, %v3104
  %v4511 = vpop.permute.xlu0 %4510
  %vm4512 = vcmp.eq.s32.totalorder %v4511, %v80
  %v4513 = vsel %vm4512, 1, 0
  %v4514 = vcvt.s32.f32 %v4513
  %v4516 = vsel %vm115, %v4514, 0
  %4518 = vmatprep.subr.mxu0 0.0
  %4519 = vmatpush1.msra.mxu0 %v1873
  %4520 = vmatprep.subr.mxu0 0.0
  %4521 = vmatpush1.msra.mxu0 %v1874
  %4522 = vmatprep.subr.mxu0 0.0
  %4523 = vmatpush1.msra.mxu0 %v1875
  %4524 = vmatprep.subr.mxu0 0.0
  %4525 = vmatpush1.msra.mxu0 %v1876
  %4526 = vmatprep.subr.mxu0 0.0
  %4527 = vmatpush1.msra.mxu0 0.0
  %4528 = vmatprep.subr.mxu0 0.0
  %4529 = vmatpush1.msra.mxu0 0.0
  %4530 = vmatprep.subr.mxu0 0.0
  %4531 = vmatpush1.msra.mxu0 0.0
  %4532 = vmatprep.subr.mxu0 0.0
  %4533 = vmatpush1.msra.mxu0 0.0
  %4534 = vmatprep.subr.mxu0 0.0
  %4535 = vmatpush1.msra.mxu0 0.0
  %4536 = vmatprep.subr.mxu0 0.0
  %4537 = vmatpush1.msra.mxu0 0.0
  %4538 = vmatprep.subr.mxu0 0.0
  %4539 = vmatpush1.msra.mxu0 0.0
  %4540 = vmatprep.subr.mxu0 0.0
  %4541 = vmatpush1.msra.mxu0 0.0
  %4542 = vmatprep.subr.mxu0 0.0
  %4543 = vmatpush1.msra.mxu0 0.0
  %4544 = vmatprep.subr.mxu0 0.0
  %4545 = vmatpush1.msra.mxu0 0.0
  %4546 = vmatprep.subr.mxu0 0.0
  %4547 = vmatpush1.msra.mxu0 0.0
  %4548 = vmatprep.subr.mxu0 0.0
  %4549 = vmatpush1.msra.mxu0 0.0
  %4550 = vmatprep.subr.mxu0 0.0
  %4551 = vmatpush1.msra.mxu0 0.0
  %4552 = vmatprep.subr.mxu0 0.0
  %4553 = vmatpush1.msra.mxu0 0.0
  %4554 = vmatprep.subr.mxu0 0.0
  %4555 = vmatpush1.msra.mxu0 0.0
  %4556 = vmatprep.subr.mxu0 0.0
  %4557 = vmatpush1.msra.mxu0 0.0
  %4558 = vmatprep.subr.mxu0 0.0
  %4559 = vmatpush1.msra.mxu0 0.0
  %4560 = vmatprep.subr.mxu0 0.0
  %4561 = vmatpush1.msra.mxu0 0.0
  %4562 = vmatprep.subr.mxu0 0.0
  %4563 = vmatpush1.msra.mxu0 0.0
  %4564 = vmatprep.subr.mxu0 0.0
  %4565 = vmatpush1.msra.mxu0 0.0
  %4566 = vmatprep.subr.mxu0 0.0
  %4567 = vmatpush1.msra.mxu0 0.0
  %4568 = vmatprep.subr.mxu0 0.0
  %4569 = vmatpush1.msra.mxu0 0.0
  %4570 = vmatprep.subr.mxu0 0.0
  %4571 = vmatpush1.msra.mxu0 0.0
  %4572 = vmatprep.subr.mxu0 0.0
  %4573 = vmatpush1.msra.mxu0 0.0
  %4574 = vmatprep.subr.mxu0 0.0
  %4575 = vmatpush1.msra.mxu0 0.0
  %4576 = vmatprep.subr.mxu0 0.0
  %4577 = vmatpush1.msra.mxu0 0.0
  %4578 = vmatprep.subr.mxu0 0.0
  %4579 = vmatpush1.msra.mxu0 0.0
  %4580 = vmatprep.subr.mxu0 0.0
  %4581 = vmatpush1.msra.mxu0 0.0
  %4582 = vmatprep.mubr.f32.mxu0 0.0
  %4583 = vmatmul.mubr.f32.gmra.mrb[0].mxu0 %v4516
  %v4584 = vpop.f32.mrb[0].mxu0
  %v4585 = vadd.f32 0.0, %v4584
  %v4586 = vpop.f32.mrb[0].mxu0
  %4587 = vdwg.mxu0
  %v4588 = vmul.f32 %v4585, %v2042
  %v4589 = vmax.f32 %v4508, %v4588
  %4590 = vset.pattern.permute.xlu0 15
  %4591 = vperm.xlu0 %4590, %v3104
  %v4592 = vpop.permute.xlu0 %4591
  %vm4593 = vcmp.eq.s32.totalorder %v4592, %v80
  %v4594 = vsel %vm4593, 1, 0
  %v4595 = vcvt.s32.f32 %v4594
  %v4597 = vsel %vm115, %v4595, 0
  %4599 = vmatprep.subr.mxu0 0.0
  %4600 = vmatpush1.msra.mxu0 %v1873
  %4601 = vmatprep.subr.mxu0 0.0
  %4602 = vmatpush1.msra.mxu0 %v1874
  %4603 = vmatprep.subr.mxu0 0.0
  %4604 = vmatpush1.msra.mxu0 %v1875
  %4605 = vmatprep.subr.mxu0 0.0
  %4606 = vmatpush1.msra.mxu0 %v1876
  %4607 = vmatprep.subr.mxu0 0.0
  %4608 = vmatpush1.msra.mxu0 0.0
  %4609 = vmatprep.subr.mxu0 0.0
  %4610 = vmatpush1.msra.mxu0 0.0
  %4611 = vmatprep.subr.mxu0 0.0
  %4612 = vmatpush1.msra.mxu0 0.0
  %4613 = vmatprep.subr.mxu0 0.0
  %4614 = vmatpush1.msra.mxu0 0.0
  %4615 = vmatprep.subr.mxu0 0.0
  %4616 = vmatpush1.msra.mxu0 0.0
  %4617 = vmatprep.subr.mxu0 0.0
  %4618 = vmatpush1.msra.mxu0 0.0
  %4619 = vmatprep.subr.mxu0 0.0
  %4620 = vmatpush1.msra.mxu0 0.0
  %4621 = vmatprep.subr.mxu0 0.0
  %4622 = vmatpush1.msra.mxu0 0.0
  %4623 = vmatprep.subr.mxu0 0.0
  %4624 = vmatpush1.msra.mxu0 0.0
  %4625 = vmatprep.subr.mxu0 0.0
  %4626 = vmatpush1.msra.mxu0 0.0
  %4627 = vmatprep.subr.mxu0 0.0
  %4628 = vmatpush1.msra.mxu0 0.0
  %4629 = vmatprep.subr.mxu0 0.0
  %4630 = vmatpush1.msra.mxu0 0.0
  %4631 = vmatprep.subr.mxu0 0.0
  %4632 = vmatpush1.msra.mxu0 0.0
  %4633 = vmatprep.subr.mxu0 0.0
  %4634 = vmatpush1.msra.mxu0 0.0
  %4635 = vmatprep.subr.mxu0 0.0
  %4636 = vmatpush1.msra.mxu0 0.0
  %4637 = vmatprep.subr.mxu0 0.0
  %4638 = vmatpush1.msra.mxu0 0.0
  %4639 = vmatprep.subr.mxu0 0.0
  %4640 = vmatpush1.msra.mxu0 0.0
  %4641 = vmatprep.subr.mxu0 0.0
  %4642 = vmatpush1.msra.mxu0 0.0
  %4643 = vmatprep.subr.mxu0 0.0
  %4644 = vmatpush1.msra.mxu0 0.0
  %4645 = vmatprep.subr.mxu0 0.0
  %4646 = vmatpush1.msra.mxu0 0.0
  %4647 = vmatprep.subr.mxu0 0.0
  %4648 = vmatpush1.msra.mxu0 0.0
  %4649 = vmatprep.subr.mxu0 0.0
  %4650 = vmatpush1.msra.mxu0 0.0
  %4651 = vmatprep.subr.mxu0 0.0
  %4652 = vmatpush1.msra.mxu0 0.0
  %4653 = vmatprep.subr.mxu0 0.0
  %4654 = vmatpush1.msra.mxu0 0.0
  %4655 = vmatprep.subr.mxu0 0.0
  %4656 = vmatpush1.msra.mxu0 0.0
  %4657 = vmatprep.subr.mxu0 0.0
  %4658 = vmatpush1.msra.mxu0 0.0
  %4659 = vmatprep.subr.mxu0 0.0
  %4660 = vmatpush1.msra.mxu0 0.0
  %4661 = vmatprep.subr.mxu0 0.0
  %4662 = vmatpush1.msra.mxu0 0.0
  %4663 = vmatprep.mubr.f32.mxu0 0.0
  %4664 = vmatmul.mubr.f32.gmra.mrb[0].mxu0 %v4597
  %v4665 = vpop.f32.mrb[0].mxu0
  %v4666 = vadd.f32 0.0, %v4665
  %v4667 = vpop.f32.mrb[0].mxu0
  %4668 = vdwg.mxu0
  %v4669 = vmul.f32 %v4666, %v2042
  %v4670 = vmax.f32 %v4589, %v4669
  %4671 = vmatprep.subr.mxu0 0.0
  %4672 = vmatpush1.msra.mxu0 %v3428
  %4673 = vmatprep.subr.mxu0 0.0
  %4674 = vmatpush1.msra.mxu0 %v3429
  %4675 = vmatprep.subr.mxu0 0.0
  %4676 = vmatpush1.msra.mxu0 %v3430
  %4677 = vmatprep.subr.mxu0 0.0
  %4678 = vmatpush1.msra.mxu0 %v3431
  %4679 = vmatprep.subr.mxu0 0.0
  %4680 = vmatpush1.msra.mxu0 %v3432
  %4681 = vmatprep.subr.mxu0 0.0
  %4682 = vmatpush1.msra.mxu0 %v3433
  %4683 = vmatprep.subr.mxu0 0.0
  %4684 = vmatpush1.msra.mxu0 %v3434
  %4685 = vmatprep.subr.mxu0 0.0
  %4686 = vmatpush1.msra.mxu0 %v3435
  %4687 = vmatprep.subr.mxu0 0.0
  %4688 = vmatpush1.msra.mxu0 %v3436
  %4689 = vmatprep.subr.mxu0 0.0
  %4690 = vmatpush1.msra.mxu0 %v3437
  %4691 = vmatprep.subr.mxu0 0.0
  %4692 = vmatpush1.msra.mxu0 %v3438
  %4693 = vmatprep.subr.mxu0 0.0
  %4694 = vmatpush1.msra.mxu0 %v3439
  %4695 = vmatprep.subr.mxu0 0.0
  %4696 = vmatpush1.msra.mxu0 %v3440
  %4697 = vmatprep.subr.mxu0 0.0
  %4698 = vmatpush1.msra.mxu0 %v3441
  %4699 = vmatprep.subr.mxu0 0.0
  %4700 = vmatpush1.msra.mxu0 %v3442
  %4701 = vmatprep.subr.mxu0 0.0
  %4702 = vmatpush1.msra.mxu0 %v3443
  %4703 = vmatprep.subr.mxu0 0.0
  %4704 = vmatpush1.msra.mxu0 0.0
  %4705 = vmatprep.subr.mxu0 0.0
  %4706 = vmatpush1.msra.mxu0 0.0
  %4707 = vmatprep.subr.mxu0 0.0
  %4708 = vmatpush1.msra.mxu0 0.0
  %4709 = vmatprep.subr.mxu0 0.0
  %4710 = vmatpush1.msra.mxu0 0.0
  %4711 = vmatprep.subr.mxu0 0.0
  %4712 = vmatpush1.msra.mxu0 0.0
  %4713 = vmatprep.subr.mxu0 0.0
  %4714 = vmatpush1.msra.mxu0 0.0
  %4715 = vmatprep.subr.mxu0 0.0
  %4716 = vmatpush1.msra.mxu0 0.0
  %4717 = vmatprep.subr.mxu0 0.0
  %4718 = vmatpush1.msra.mxu0 0.0
  %4719 = vmatprep.subr.mxu0 0.0
  %4720 = vmatpush1.msra.mxu0 0.0
  %4721 = vmatprep.subr.mxu0 0.0
  %4722 = vmatpush1.msra.mxu0 0.0
  %4723 = vmatprep.subr.mxu0 0.0
  %4724 = vmatpush1.msra.mxu0 0.0
  %4725 = vmatprep.subr.mxu0 0.0
  %4726 = vmatpush1.msra.mxu0 0.0
  %4727 = vmatprep.subr.mxu0 0.0
  %4728 = vmatpush1.msra.mxu0 0.0
  %4729 = vmatprep.subr.mxu0 0.0
  %4730 = vmatpush1.msra.mxu0 0.0
  %4731 = vmatprep.subr.mxu0 0.0
  %4732 = vmatpush1.msra.mxu0 0.0
  %4733 = vmatprep.subr.mxu0 0.0
  %4734 = vmatpush1.msra.mxu0 0.0
  %4735 = vmatprep.mubr.f32.mxu0 0.0
  %4736 = vmatmul.mubr.f32.gmra.mrb[0].mxu0 %v4670
  %v4737 = vpop.f32.mrb[0].mxu0
  %v4738 = vadd.f32 0.0, %v4737
  %v4739 = vpop.f32.mrb[0].mxu0
  %4740 = vdwg.mxu0
  %v4741 = vadd.f32 %v3100, %v4738
  %v4742 = vadd.f32 %v4741, %v3520
  %vm4743 = vcmp.ge.f32.partialorder %v4742, 0.0
  %v4744 = vmul.f32 %v4742, 0.01
  %v4745 = vsel %vm4743, %v4742, %v4744
  %v4746 = vmul.f32 %v4745, %v3531
  %v4747 = vsel %vm3534, %v4746, 0.0
  %4748 = vadd.xlane.f32.xlu0 %v4747
  %v4749 = vpop.xlane.xlu0 %4748
  %vm4750 = vcmp.gt.s32.totalorder %v3103, 3
  %v4751 = vsel %vm4750, %v4749, -1e+30
  %4752 = vset.pattern.permute.xlu0 16
  %4753 = vperm.xlu0 %4752, %v3104
  %v4754 = vpop.permute.xlu0 %4753
  %vm4755 = vcmp.eq.s32.totalorder %v4754, %v80
  %v4756 = vsel %vm4755, 1, 0
  %v4757 = vcvt.s32.f32 %v4756
  %v4759 = vsel %vm115, %v4757, 0
  %4761 = vmatprep.subr.mxu0 0.0
  %4762 = vmatpush1.msra.mxu0 %v1873
  %4763 = vmatprep.subr.mxu0 0.0
  %4764 = vmatpush1.msra.mxu0 %v1874
  %4765 = vmatprep.subr.mxu0 0.0
  %4766 = vmatpush1.msra.mxu0 %v1875
  %4767 = vmatprep.subr.mxu0 0.0
  %4768 = vmatpush1.msra.mxu0 %v1876
  %4769 = vmatprep.subr.mxu0 0.0
  %4770 = vmatpush1.msra.mxu0 0.0
  %4771 = vmatprep.subr.mxu0 0.0
  %4772 = vmatpush1.msra.mxu0 0.0
  %4773 = vmatprep.subr.mxu0 0.0
  %4774 = vmatpush1.msra.mxu0 0.0
  %4775 = vmatprep.subr.mxu0 0.0
  %4776 = vmatpush1.msra.mxu0 0.0
  %4777 = vmatprep.subr.mxu0 0.0
  %4778 = vmatpush1.msra.mxu0 0.0
  %4779 = vmatprep.subr.mxu0 0.0
  %4780 = vmatpush1.msra.mxu0 0.0
  %4781 = vmatprep.subr.mxu0 0.0
  %4782 = vmatpush1.msra.mxu0 0.0
  %4783 = vmatprep.subr.mxu0 0.0
  %4784 = vmatpush1.msra.mxu0 0.0
  %4785 = vmatprep.subr.mxu0 0.0
  %4786 = vmatpush1.msra.mxu0 0.0
  %4787 = vmatprep.subr.mxu0 0.0
  %4788 = vmatpush1.msra.mxu0 0.0
  %4789 = vmatprep.subr.mxu0 0.0
  %4790 = vmatpush1.msra.mxu0 0.0
  %4791 = vmatprep.subr.mxu0 0.0
  %4792 = vmatpush1.msra.mxu0 0.0
  %4793 = vmatprep.subr.mxu0 0.0
  %4794 = vmatpush1.msra.mxu0 0.0
  %4795 = vmatprep.subr.mxu0 0.0
  %4796 = vmatpush1.msra.mxu0 0.0
  %4797 = vmatprep.subr.mxu0 0.0
  %4798 = vmatpush1.msra.mxu0 0.0
  %4799 = vmatprep.subr.mxu0 0.0
  %4800 = vmatpush1.msra.mxu0 0.0
  %4801 = vmatprep.subr.mxu0 0.0
  %4802 = vmatpush1.msra.mxu0 0.0
  %4803 = vmatprep.subr.mxu0 0.0
  %4804 = vmatpush1.msra.mxu0 0.0
  %4805 = vmatprep.subr.mxu0 0.0
  %4806 = vmatpush1.msra.mxu0 0.0
  %4807 = vmatprep.subr.mxu0 0.0
  %4808 = vmatpush1.msra.mxu0 0.0
  %4809 = vmatprep.subr.mxu0 0.0
  %4810 = vmatpush1.msra.mxu0 0.0
  %4811 = vmatprep.subr.mxu0 0.0
  %4812 = vmatpush1.msra.mxu0 0.0
  %4813 = vmatprep.subr.mxu0 0.0
  %4814 = vmatpush1.msra.mxu0 0.0
  %4815 = vmatprep.subr.mxu0 0.0
  %4816 = vmatpush1.msra.mxu0 0.0
  %4817 = vmatprep.subr.mxu0 0.0
  %4818 = vmatpush1.msra.mxu0 0.0
  %4819 = vmatprep.subr.mxu0 0.0
  %4820 = vmatpush1.msra.mxu0 0.0
  %4821 = vmatprep.subr.mxu0 0.0
  %4822 = vmatpush1.msra.mxu0 0.0
  %4823 = vmatprep.subr.mxu0 0.0
  %4824 = vmatpush1.msra.mxu0 0.0
  %4825 = vmatprep.mubr.f32.mxu0 0.0
  %4826 = vmatmul.mubr.f32.gmra.mrb[0].mxu0 %v4759
  %v4827 = vpop.f32.mrb[0].mxu0
  %v4828 = vadd.f32 0.0, %v4827
  %v4829 = vpop.f32.mrb[0].mxu0
  %4830 = vdwg.mxu0
  %v4831 = vmul.f32 %v4828, %v2042
  %4832 = vset.pattern.permute.xlu0 17
  %4833 = vperm.xlu0 %4832, %v3104
  %v4834 = vpop.permute.xlu0 %4833
  %vm4835 = vcmp.eq.s32.totalorder %v4834, %v80
  %v4836 = vsel %vm4835, 1, 0
  %v4837 = vcvt.s32.f32 %v4836
  %v4839 = vsel %vm115, %v4837, 0
  %4841 = vmatprep.subr.mxu0 0.0
  %4842 = vmatpush1.msra.mxu0 %v1873
  %4843 = vmatprep.subr.mxu0 0.0
  %4844 = vmatpush1.msra.mxu0 %v1874
  %4845 = vmatprep.subr.mxu0 0.0
  %4846 = vmatpush1.msra.mxu0 %v1875
  %4847 = vmatprep.subr.mxu0 0.0
  %4848 = vmatpush1.msra.mxu0 %v1876
  %4849 = vmatprep.subr.mxu0 0.0
  %4850 = vmatpush1.msra.mxu0 0.0
  %4851 = vmatprep.subr.mxu0 0.0
  %4852 = vmatpush1.msra.mxu0 0.0
  %4853 = vmatprep.subr.mxu0 0.0
  %4854 = vmatpush1.msra.mxu0 0.0
  %4855 = vmatprep.subr.mxu0 0.0
  %4856 = vmatpush1.msra.mxu0 0.0
  %4857 = vmatprep.subr.mxu0 0.0
  %4858 = vmatpush1.msra.mxu0 0.0
  %4859 = vmatprep.subr.mxu0 0.0
  %4860 = vmatpush1.msra.mxu0 0.0
  %4861 = vmatprep.subr.mxu0 0.0
  %4862 = vmatpush1.msra.mxu0 0.0
  %4863 = vmatprep.subr.mxu0 0.0
  %4864 = vmatpush1.msra.mxu0 0.0
  %4865 = vmatprep.subr.mxu0 0.0
  %4866 = vmatpush1.msra.mxu0 0.0
  %4867 = vmatprep.subr.mxu0 0.0
  %4868 = vmatpush1.msra.mxu0 0.0
  %4869 = vmatprep.subr.mxu0 0.0
  %4870 = vmatpush1.msra.mxu0 0.0
  %4871 = vmatprep.subr.mxu0 0.0
  %4872 = vmatpush1.msra.mxu0 0.0
  %4873 = vmatprep.subr.mxu0 0.0
  %4874 = vmatpush1.msra.mxu0 0.0
  %4875 = vmatprep.subr.mxu0 0.0
  %4876 = vmatpush1.msra.mxu0 0.0
  %4877 = vmatprep.subr.mxu0 0.0
  %4878 = vmatpush1.msra.mxu0 0.0
  %4879 = vmatprep.subr.mxu0 0.0
  %4880 = vmatpush1.msra.mxu0 0.0
  %4881 = vmatprep.subr.mxu0 0.0
  %4882 = vmatpush1.msra.mxu0 0.0
  %4883 = vmatprep.subr.mxu0 0.0
  %4884 = vmatpush1.msra.mxu0 0.0
  %4885 = vmatprep.subr.mxu0 0.0
  %4886 = vmatpush1.msra.mxu0 0.0
  %4887 = vmatprep.subr.mxu0 0.0
  %4888 = vmatpush1.msra.mxu0 0.0
  %4889 = vmatprep.subr.mxu0 0.0
  %4890 = vmatpush1.msra.mxu0 0.0
  %4891 = vmatprep.subr.mxu0 0.0
  %4892 = vmatpush1.msra.mxu0 0.0
  %4893 = vmatprep.subr.mxu0 0.0
  %4894 = vmatpush1.msra.mxu0 0.0
  %4895 = vmatprep.subr.mxu0 0.0
  %4896 = vmatpush1.msra.mxu0 0.0
  %4897 = vmatprep.subr.mxu0 0.0
  %4898 = vmatpush1.msra.mxu0 0.0
  %4899 = vmatprep.subr.mxu0 0.0
  %4900 = vmatpush1.msra.mxu0 0.0
  %4901 = vmatprep.subr.mxu0 0.0
  %4902 = vmatpush1.msra.mxu0 0.0
  %4903 = vmatprep.subr.mxu0 0.0
  %4904 = vmatpush1.msra.mxu0 0.0
  %4905 = vmatprep.mubr.f32.mxu0 0.0
  %4906 = vmatmul.mubr.f32.gmra.mrb[0].mxu0 %v4839
  %v4907 = vpop.f32.mrb[0].mxu0
  %v4908 = vadd.f32 0.0, %v4907
  %v4909 = vpop.f32.mrb[0].mxu0
  %4910 = vdwg.mxu0
  %v4911 = vmul.f32 %v4908, %v2042
  %v4912 = vmax.f32 %v4831, %v4911
  %4913 = vset.pattern.permute.xlu0 18
  %4914 = vperm.xlu0 %4913, %v3104
  %v4915 = vpop.permute.xlu0 %4914
  %vm4916 = vcmp.eq.s32.totalorder %v4915, %v80
  %v4917 = vsel %vm4916, 1, 0
  %v4918 = vcvt.s32.f32 %v4917
  %v4920 = vsel %vm115, %v4918, 0
  %4922 = vmatprep.subr.mxu0 0.0
  %4923 = vmatpush1.msra.mxu0 %v1873
  %4924 = vmatprep.subr.mxu0 0.0
  %4925 = vmatpush1.msra.mxu0 %v1874
  %4926 = vmatprep.subr.mxu0 0.0
  %4927 = vmatpush1.msra.mxu0 %v1875
  %4928 = vmatprep.subr.mxu0 0.0
  %4929 = vmatpush1.msra.mxu0 %v1876
  %4930 = vmatprep.subr.mxu0 0.0
  %4931 = vmatpush1.msra.mxu0 0.0
  %4932 = vmatprep.subr.mxu0 0.0
  %4933 = vmatpush1.msra.mxu0 0.0
  %4934 = vmatprep.subr.mxu0 0.0
  %4935 = vmatpush1.msra.mxu0 0.0
  %4936 = vmatprep.subr.mxu0 0.0
  %4937 = vmatpush1.msra.mxu0 0.0
  %4938 = vmatprep.subr.mxu0 0.0
  %4939 = vmatpush1.msra.mxu0 0.0
  %4940 = vmatprep.subr.mxu0 0.0
  %4941 = vmatpush1.msra.mxu0 0.0
  %4942 = vmatprep.subr.mxu0 0.0
  %4943 = vmatpush1.msra.mxu0 0.0
  %4944 = vmatprep.subr.mxu0 0.0
  %4945 = vmatpush1.msra.mxu0 0.0
  %4946 = vmatprep.subr.mxu0 0.0
  %4947 = vmatpush1.msra.mxu0 0.0
  %4948 = vmatprep.subr.mxu0 0.0
  %4949 = vmatpush1.msra.mxu0 0.0
  %4950 = vmatprep.subr.mxu0 0.0
  %4951 = vmatpush1.msra.mxu0 0.0
  %4952 = vmatprep.subr.mxu0 0.0
  %4953 = vmatpush1.msra.mxu0 0.0
  %4954 = vmatprep.subr.mxu0 0.0
  %4955 = vmatpush1.msra.mxu0 0.0
  %4956 = vmatprep.subr.mxu0 0.0
  %4957 = vmatpush1.msra.mxu0 0.0
  %4958 = vmatprep.subr.mxu0 0.0
  %4959 = vmatpush1.msra.mxu0 0.0
  %4960 = vmatprep.subr.mxu0 0.0
  %4961 = vmatpush1.msra.mxu0 0.0
  %4962 = vmatprep.subr.mxu0 0.0
  %4963 = vmatpush1.msra.mxu0 0.0
  %4964 = vmatprep.subr.mxu0 0.0
  %4965 = vmatpush1.msra.mxu0 0.0
  %4966 = vmatprep.subr.mxu0 0.0
  %4967 = vmatpush1.msra.mxu0 0.0
  %4968 = vmatprep.subr.mxu0 0.0
  %4969 = vmatpush1.msra.mxu0 0.0
  %4970 = vmatprep.subr.mxu0 0.0
  %4971 = vmatpush1.msra.mxu0 0.0
  %4972 = vmatprep.subr.mxu0 0.0
  %4973 = vmatpush1.msra.mxu0 0.0
  %4974 = vmatprep.subr.mxu0 0.0
  %4975 = vmatpush1.msra.mxu0 0.0
  %4976 = vmatprep.subr.mxu0 0.0
  %4977 = vmatpush1.msra.mxu0 0.0
  %4978 = vmatprep.subr.mxu0 0.0
  %4979 = vmatpush1.msra.mxu0 0.0
  %4980 = vmatprep.subr.mxu0 0.0
  %4981 = vmatpush1.msra.mxu0 0.0
  %4982 = vmatprep.subr.mxu0 0.0
  %4983 = vmatpush1.msra.mxu0 0.0
  %4984 = vmatprep.subr.mxu0 0.0
  %4985 = vmatpush1.msra.mxu0 0.0
  %4986 = vmatprep.mubr.f32.mxu0 0.0
  %4987 = vmatmul.mubr.f32.gmra.mrb[0].mxu0 %v4920
  %v4988 = vpop.f32.mrb[0].mxu0
  %v4989 = vadd.f32 0.0, %v4988
  %v4990 = vpop.f32.mrb[0].mxu0
  %4991 = vdwg.mxu0
  %v4992 = vmul.f32 %v4989, %v2042
  %v4993 = vmax.f32 %v4912, %v4992
  %4994 = vset.pattern.permute.xlu0 19
  %4995 = vperm.xlu0 %4994, %v3104
  %v4996 = vpop.permute.xlu0 %4995
  %vm4997 = vcmp.eq.s32.totalorder %v4996, %v80
  %v4998 = vsel %vm4997, 1, 0
  %v4999 = vcvt.s32.f32 %v4998
  %v5001 = vsel %vm115, %v4999, 0
  %5003 = vmatprep.subr.mxu0 0.0
  %5004 = vmatpush1.msra.mxu0 %v1873
  %5005 = vmatprep.subr.mxu0 0.0
  %5006 = vmatpush1.msra.mxu0 %v1874
  %5007 = vmatprep.subr.mxu0 0.0
  %5008 = vmatpush1.msra.mxu0 %v1875
  %5009 = vmatprep.subr.mxu0 0.0
  %5010 = vmatpush1.msra.mxu0 %v1876
  %5011 = vmatprep.subr.mxu0 0.0
  %5012 = vmatpush1.msra.mxu0 0.0
  %5013 = vmatprep.subr.mxu0 0.0
  %5014 = vmatpush1.msra.mxu0 0.0
  %5015 = vmatprep.subr.mxu0 0.0
  %5016 = vmatpush1.msra.mxu0 0.0
  %5017 = vmatprep.subr.mxu0 0.0
  %5018 = vmatpush1.msra.mxu0 0.0
  %5019 = vmatprep.subr.mxu0 0.0
  %5020 = vmatpush1.msra.mxu0 0.0
  %5021 = vmatprep.subr.mxu0 0.0
  %5022 = vmatpush1.msra.mxu0 0.0
  %5023 = vmatprep.subr.mxu0 0.0
  %5024 = vmatpush1.msra.mxu0 0.0
  %5025 = vmatprep.subr.mxu0 0.0
  %5026 = vmatpush1.msra.mxu0 0.0
  %5027 = vmatprep.subr.mxu0 0.0
  %5028 = vmatpush1.msra.mxu0 0.0
  %5029 = vmatprep.subr.mxu0 0.0
  %5030 = vmatpush1.msra.mxu0 0.0
  %5031 = vmatprep.subr.mxu0 0.0
  %5032 = vmatpush1.msra.mxu0 0.0
  %5033 = vmatprep.subr.mxu0 0.0
  %5034 = vmatpush1.msra.mxu0 0.0
  %5035 = vmatprep.subr.mxu0 0.0
  %5036 = vmatpush1.msra.mxu0 0.0
  %5037 = vmatprep.subr.mxu0 0.0
  %5038 = vmatpush1.msra.mxu0 0.0
  %5039 = vmatprep.subr.mxu0 0.0
  %5040 = vmatpush1.msra.mxu0 0.0
  %5041 = vmatprep.subr.mxu0 0.0
  %5042 = vmatpush1.msra.mxu0 0.0
  %5043 = vmatprep.subr.mxu0 0.0
  %5044 = vmatpush1.msra.mxu0 0.0
  %5045 = vmatprep.subr.mxu0 0.0
  %5046 = vmatpush1.msra.mxu0 0.0
  %5047 = vmatprep.subr.mxu0 0.0
  %5048 = vmatpush1.msra.mxu0 0.0
  %5049 = vmatprep.subr.mxu0 0.0
  %5050 = vmatpush1.msra.mxu0 0.0
  %5051 = vmatprep.subr.mxu0 0.0
  %5052 = vmatpush1.msra.mxu0 0.0
  %5053 = vmatprep.subr.mxu0 0.0
  %5054 = vmatpush1.msra.mxu0 0.0
  %5055 = vmatprep.subr.mxu0 0.0
  %5056 = vmatpush1.msra.mxu0 0.0
  %5057 = vmatprep.subr.mxu0 0.0
  %5058 = vmatpush1.msra.mxu0 0.0
  %5059 = vmatprep.subr.mxu0 0.0
  %5060 = vmatpush1.msra.mxu0 0.0
  %5061 = vmatprep.subr.mxu0 0.0
  %5062 = vmatpush1.msra.mxu0 0.0
  %5063 = vmatprep.subr.mxu0 0.0
  %5064 = vmatpush1.msra.mxu0 0.0
  %5065 = vmatprep.subr.mxu0 0.0
  %5066 = vmatpush1.msra.mxu0 0.0
  %5067 = vmatprep.mubr.f32.mxu0 0.0
  %5068 = vmatmul.mubr.f32.gmra.mrb[0].mxu0 %v5001
  %v5069 = vpop.f32.mrb[0].mxu0
  %v5070 = vadd.f32 0.0, %v5069
  %v5071 = vpop.f32.mrb[0].mxu0
  %5072 = vdwg.mxu0
  %v5073 = vmul.f32 %v5070, %v2042
  %v5074 = vmax.f32 %v4993, %v5073
  %5075 = vmatprep.subr.mxu0 0.0
  %5076 = vmatpush1.msra.mxu0 %v3428
  %5077 = vmatprep.subr.mxu0 0.0
  %5078 = vmatpush1.msra.mxu0 %v3429
  %5079 = vmatprep.subr.mxu0 0.0
  %5080 = vmatpush1.msra.mxu0 %v3430
  %5081 = vmatprep.subr.mxu0 0.0
  %5082 = vmatpush1.msra.mxu0 %v3431
  %5083 = vmatprep.subr.mxu0 0.0
  %5084 = vmatpush1.msra.mxu0 %v3432
  %5085 = vmatprep.subr.mxu0 0.0
  %5086 = vmatpush1.msra.mxu0 %v3433
  %5087 = vmatprep.subr.mxu0 0.0
  %5088 = vmatpush1.msra.mxu0 %v3434
  %5089 = vmatprep.subr.mxu0 0.0
  %5090 = vmatpush1.msra.mxu0 %v3435
  %5091 = vmatprep.subr.mxu0 0.0
  %5092 = vmatpush1.msra.mxu0 %v3436
  %5093 = vmatprep.subr.mxu0 0.0
  %5094 = vmatpush1.msra.mxu0 %v3437
  %5095 = vmatprep.subr.mxu0 0.0
  %5096 = vmatpush1.msra.mxu0 %v3438
  %5097 = vmatprep.subr.mxu0 0.0
  %5098 = vmatpush1.msra.mxu0 %v3439
  %5099 = vmatprep.subr.mxu0 0.0
  %5100 = vmatpush1.msra.mxu0 %v3440
  %5101 = vmatprep.subr.mxu0 0.0
  %5102 = vmatpush1.msra.mxu0 %v3441
  %5103 = vmatprep.subr.mxu0 0.0
  %5104 = vmatpush1.msra.mxu0 %v3442
  %5105 = vmatprep.subr.mxu0 0.0
  %5106 = vmatpush1.msra.mxu0 %v3443
  %5107 = vmatprep.subr.mxu0 0.0
  %5108 = vmatpush1.msra.mxu0 0.0
  %5109 = vmatprep.subr.mxu0 0.0
  %5110 = vmatpush1.msra.mxu0 0.0
  %5111 = vmatprep.subr.mxu0 0.0
  %5112 = vmatpush1.msra.mxu0 0.0
  %5113 = vmatprep.subr.mxu0 0.0
  %5114 = vmatpush1.msra.mxu0 0.0
  %5115 = vmatprep.subr.mxu0 0.0
  %5116 = vmatpush1.msra.mxu0 0.0
  %5117 = vmatprep.subr.mxu0 0.0
  %5118 = vmatpush1.msra.mxu0 0.0
  %5119 = vmatprep.subr.mxu0 0.0
  %5120 = vmatpush1.msra.mxu0 0.0
  %5121 = vmatprep.subr.mxu0 0.0
  %5122 = vmatpush1.msra.mxu0 0.0
  %5123 = vmatprep.subr.mxu0 0.0
  %5124 = vmatpush1.msra.mxu0 0.0
  %5125 = vmatprep.subr.mxu0 0.0
  %5126 = vmatpush1.msra.mxu0 0.0
  %5127 = vmatprep.subr.mxu0 0.0
  %5128 = vmatpush1.msra.mxu0 0.0
  %5129 = vmatprep.subr.mxu0 0.0
  %5130 = vmatpush1.msra.mxu0 0.0
  %5131 = vmatprep.subr.mxu0 0.0
  %5132 = vmatpush1.msra.mxu0 0.0
  %5133 = vmatprep.subr.mxu0 0.0
  %5134 = vmatpush1.msra.mxu0 0.0
  %5135 = vmatprep.subr.mxu0 0.0
  %5136 = vmatpush1.msra.mxu0 0.0
  %5137 = vmatprep.subr.mxu0 0.0
  %5138 = vmatpush1.msra.mxu0 0.0
  %5139 = vmatprep.mubr.f32.mxu0 0.0
  %5140 = vmatmul.mubr.f32.gmra.mrb[0].mxu0 %v5074
  %v5141 = vpop.f32.mrb[0].mxu0
  %v5142 = vadd.f32 0.0, %v5141
  %v5143 = vpop.f32.mrb[0].mxu0
  %5144 = vdwg.mxu0
  %v5145 = vadd.f32 %v3100, %v5142
  %v5146 = vadd.f32 %v5145, %v3520
  %vm5147 = vcmp.ge.f32.partialorder %v5146, 0.0
  %v5148 = vmul.f32 %v5146, 0.01
  %v5149 = vsel %vm5147, %v5146, %v5148
  %v5150 = vmul.f32 %v5149, %v3531
  %v5151 = vsel %vm3534, %v5150, 0.0
  %5152 = vadd.xlane.f32.xlu0 %v5151
  %v5153 = vpop.xlane.xlu0 %5152
  %vm5154 = vcmp.gt.s32.totalorder %v3103, 4
  %v5155 = vsel %vm5154, %v5153, -1e+30
  %v5156 = vmax.f32 %v3539, %v3943
  %v5157 = vmax.f32 %v5156, %v4347
  %v5158 = vmax.f32 %v5157, %v4751
  %v5159 = vmax.f32 %v5158, %v5155
  %v5160 = vsub.f32 %v3539, %v5159
  %v5161 = vmul.f32 %v5160, 1.442695
  %v5162 = vpow.pop %v5161
  %v5163 = vsub.f32 %v3943, %v5159
  %v5164 = vmul.f32 %v5163, 1.442695
  %v5165 = vpow.pop %v5164
  %v5166 = vsub.f32 %v4347, %v5159
  %v5167 = vmul.f32 %v5166, 1.442695
  %v5168 = vpow.pop %v5167
  %v5169 = vsub.f32 %v4751, %v5159
  %v5170 = vmul.f32 %v5169, 1.442695
  %v5171 = vpow.pop %v5170
  %v5172 = vsub.f32 %v5155, %v5159
  %v5173 = vmul.f32 %v5172, 1.442695
  %v5174 = vpow.pop %v5173
  %v5175 = vadd.f32 %v5162, %v5165
  %v5176 = vadd.f32 %v5175, %v5168
  %v5177 = vadd.f32 %v5176, %v5171
  %v5178 = vadd.f32 %v5177, %v5174
  %v5179 = vrcp.pop %v5178
  %v5180 = vmul.f32 1.0, %v5179
  %v5181 = vmul.f32 %v5162, %v5180
  %5183 = vset.pattern.permute.xlu0 0
  %5184 = vperm.xlu0 %5183, %v5181
  %v5185 = vpop.permute.xlu0 %5184
  %v5187 = vmul.f32 %v5185, %v3427
  %v5188 = vadd.f32 %v5187, 0.0
  %v5189 = vmul.f32 %v5165, %v5180
  %5191 = vset.pattern.permute.xlu0 0
  %5192 = vperm.xlu0 %5191, %v5189
  %v5193 = vpop.permute.xlu0 %5192
  %v5195 = vmul.f32 %v5193, %v3862
  %v5196 = vadd.f32 %v5188, %v5195
  %v5197 = vmul.f32 %v5168, %v5180
  %5199 = vset.pattern.permute.xlu0 0
  %5200 = vperm.xlu0 %5199, %v5197
  %v5201 = vpop.permute.xlu0 %5200
  %v5203 = vmul.f32 %v5201, %v4266
  %v5204 = vadd.f32 %v5196, %v5203
  %v5205 = vmul.f32 %v5171, %v5180
  %5207 = vset.pattern.permute.xlu0 0
  %5208 = vperm.xlu0 %5207, %v5205
  %v5209 = vpop.permute.xlu0 %5208
  %v5211 = vmul.f32 %v5209, %v4670
  %v5212 = vadd.f32 %v5204, %v5211
  %v5213 = vmul.f32 %v5174, %v5180
  %5215 = vset.pattern.permute.xlu0 0
  %5216 = vperm.xlu0 %5215, %v5213
  %v5217 = vpop.permute.xlu0 %5216
  %v5219 = vmul.f32 %v5217, %v5074
  %v5220 = vadd.f32 %v5212, %v5219
  %v5221 = vadd.f32 %v3016, %v5220
  %v5222 = vmul.f32 %v5221, 0.5
  %v5223 = vld [vmem:[%s17] sm:$0xff]
  %v5224 = vld [vmem:[%s17 + $0x8] sm:$0xff]
  %v5225 = vld [vmem:[%s17 + $0x10] sm:$0xff]
  %v5226 = vld [vmem:[%s17 + $0x18] sm:$0xff]
  %v5227 = vld [vmem:[%s17 + $0x20] sm:$0xff]
  %v5228 = vld [vmem:[%s17 + $0x28] sm:$0xff]
  %v5229 = vld [vmem:[%s17 + $0x30] sm:$0xff]
  %v5230 = vld [vmem:[%s17 + $0x38] sm:$0xff]
  %v5231 = vld [vmem:[%s17 + $0x40] sm:$0xff]
  %v5232 = vld [vmem:[%s17 + $0x48] sm:$0xff]
  %v5233 = vld [vmem:[%s17 + $0x50] sm:$0xff]
  %v5234 = vld [vmem:[%s17 + $0x58] sm:$0xff]
  %v5235 = vld [vmem:[%s17 + $0x60] sm:$0xff]
  %v5236 = vld [vmem:[%s17 + $0x68] sm:$0xff]
  %v5237 = vld [vmem:[%s17 + $0x70] sm:$0xff]
  %v5238 = vld [vmem:[%s17 + $0x78] sm:$0xff]
  %v5239 = vld [vmem:[%s17 + $0x80] sm:$0xff]
  %v5240 = vld [vmem:[%s17 + $0x88] sm:$0xff]
  %v5241 = vld [vmem:[%s17 + $0x90] sm:$0xff]
  %v5242 = vld [vmem:[%s17 + $0x98] sm:$0xff]
  %v5243 = vld [vmem:[%s17 + $0xa0] sm:$0xff]
  %v5244 = vld [vmem:[%s17 + $0xa8] sm:$0xff]
  %v5245 = vld [vmem:[%s17 + $0xb0] sm:$0xff]
  %v5246 = vld [vmem:[%s17 + $0xb8] sm:$0xff]
  %v5247 = vld [vmem:[%s17 + $0xc0] sm:$0xff]
  %v5248 = vld [vmem:[%s17 + $0xc8] sm:$0xff]
  %v5249 = vld [vmem:[%s17 + $0xd0] sm:$0xff]
  %v5250 = vld [vmem:[%s17 + $0xd8] sm:$0xff]
  %v5251 = vld [vmem:[%s17 + $0xe0] sm:$0xff]
  %v5252 = vld [vmem:[%s17 + $0xe8] sm:$0xff]
  %v5253 = vld [vmem:[%s17 + $0xf0] sm:$0xff]
  %v5254 = vld [vmem:[%s17 + $0xf8] sm:$0xff]
  %v5255 = vld [vmem:[%s18] sm:$0xff]
  %v5256 = vld [vmem:[%s18 + $0x8] sm:$0xff]
  %v5257 = vld [vmem:[%s18 + $0x10] sm:$0xff]
  %v5258 = vld [vmem:[%s18 + $0x18] sm:$0xff]
  %v5259 = vld [vmem:[%s18 + $0x20] sm:$0xff]
  %v5260 = vld [vmem:[%s18 + $0x28] sm:$0xff]
  %v5261 = vld [vmem:[%s18 + $0x30] sm:$0xff]
  %v5262 = vld [vmem:[%s18 + $0x38] sm:$0xff]
  %v5263 = vld [vmem:[%s18 + $0x40] sm:$0xff]
  %v5264 = vld [vmem:[%s18 + $0x48] sm:$0xff]
  %v5265 = vld [vmem:[%s18 + $0x50] sm:$0xff]
  %v5266 = vld [vmem:[%s18 + $0x58] sm:$0xff]
  %v5267 = vld [vmem:[%s18 + $0x60] sm:$0xff]
  %v5268 = vld [vmem:[%s18 + $0x68] sm:$0xff]
  %v5269 = vld [vmem:[%s18 + $0x70] sm:$0xff]
  %v5270 = vld [vmem:[%s18 + $0x78] sm:$0xff]
  %v5271 = vld [vmem:[%s18 + $0x80] sm:$0xff]
  %v5272 = vld [vmem:[%s18 + $0x88] sm:$0xff]
  %v5273 = vld [vmem:[%s18 + $0x90] sm:$0xff]
  %v5274 = vld [vmem:[%s18 + $0x98] sm:$0xff]
  %v5275 = vld [vmem:[%s18 + $0xa0] sm:$0xff]
  %v5276 = vld [vmem:[%s18 + $0xa8] sm:$0xff]
  %v5277 = vld [vmem:[%s18 + $0xb0] sm:$0xff]
  %v5278 = vld [vmem:[%s18 + $0xb8] sm:$0xff]
  %v5279 = vld [vmem:[%s18 + $0xc0] sm:$0xff]
  %v5280 = vld [vmem:[%s18 + $0xc8] sm:$0xff]
  %v5281 = vld [vmem:[%s18 + $0xd0] sm:$0xff]
  %v5282 = vld [vmem:[%s18 + $0xd8] sm:$0xff]
  %v5283 = vld [vmem:[%s18 + $0xe0] sm:$0xff]
  %v5284 = vld [vmem:[%s18 + $0xe8] sm:$0xff]
  %v5285 = vld [vmem:[%s18 + $0xf0] sm:$0xff]
  %v5286 = vld [vmem:[%s18 + $0xf8] sm:$0xff]
  %5287 = vmatprep.subr.mxu0 %v5256
  %5288 = vmatpush1.msra.mxu0 %v5255
  %5289 = vmatprep.subr.mxu0 %v5258
  %5290 = vmatpush1.msra.mxu0 %v5257
  %5291 = vmatprep.subr.mxu0 %v5260
  %5292 = vmatpush1.msra.mxu0 %v5259
  %5293 = vmatprep.subr.mxu0 %v5262
  %5294 = vmatpush1.msra.mxu0 %v5261
  %5295 = vmatprep.subr.mxu0 %v5264
  %5296 = vmatpush1.msra.mxu0 %v5263
  %5297 = vmatprep.subr.mxu0 %v5266
  %5298 = vmatpush1.msra.mxu0 %v5265
  %5299 = vmatprep.subr.mxu0 %v5268
  %5300 = vmatpush1.msra.mxu0 %v5267
  %5301 = vmatprep.subr.mxu0 %v5270
  %5302 = vmatpush1.msra.mxu0 %v5269
  %5303 = vmatprep.subr.mxu0 %v5272
  %5304 = vmatpush1.msra.mxu0 %v5271
  %5305 = vmatprep.subr.mxu0 %v5274
  %5306 = vmatpush1.msra.mxu0 %v5273
  %5307 = vmatprep.subr.mxu0 %v5276
  %5308 = vmatpush1.msra.mxu0 %v5275
  %5309 = vmatprep.subr.mxu0 %v5278
  %5310 = vmatpush1.msra.mxu0 %v5277
  %5311 = vmatprep.subr.mxu0 %v5280
  %5312 = vmatpush1.msra.mxu0 %v5279
  %5313 = vmatprep.subr.mxu0 %v5282
  %5314 = vmatpush1.msra.mxu0 %v5281
  %5315 = vmatprep.subr.mxu0 %v5284
  %5316 = vmatpush1.msra.mxu0 %v5283
  %5317 = vmatprep.subr.mxu0 %v5286
  %5318 = vmatpush1.msra.mxu0 %v5285
  %5319 = vmatprep.subr.mxu0 0.0
  %5320 = vmatpush1.msra.mxu0 0.0
  %5321 = vmatprep.subr.mxu0 0.0
  %5322 = vmatpush1.msra.mxu0 0.0
  %5323 = vmatprep.subr.mxu0 0.0
  %5324 = vmatpush1.msra.mxu0 0.0
  %5325 = vmatprep.subr.mxu0 0.0
  %5326 = vmatpush1.msra.mxu0 0.0
  %5327 = vmatprep.subr.mxu0 0.0
  %5328 = vmatpush1.msra.mxu0 0.0
  %5329 = vmatprep.subr.mxu0 0.0
  %5330 = vmatpush1.msra.mxu0 0.0
  %5331 = vmatprep.subr.mxu0 0.0
  %5332 = vmatpush1.msra.mxu0 0.0
  %5333 = vmatprep.subr.mxu0 0.0
  %5334 = vmatpush1.msra.mxu0 0.0
  %5335 = vmatprep.subr.mxu0 0.0
  %5336 = vmatpush1.msra.mxu0 0.0
  %5337 = vmatprep.subr.mxu0 0.0
  %5338 = vmatpush1.msra.mxu0 0.0
  %5339 = vmatprep.subr.mxu0 0.0
  %5340 = vmatpush1.msra.mxu0 0.0
  %5341 = vmatprep.subr.mxu0 0.0
  %5342 = vmatpush1.msra.mxu0 0.0
  %5343 = vmatprep.subr.mxu0 0.0
  %5344 = vmatpush1.msra.mxu0 0.0
  %5345 = vmatprep.subr.mxu0 0.0
  %5346 = vmatpush1.msra.mxu0 0.0
  %5347 = vmatprep.subr.mxu0 0.0
  %5348 = vmatpush1.msra.mxu0 0.0
  %5349 = vmatprep.subr.mxu0 0.0
  %5350 = vmatpush1.msra.mxu0 0.0
  %5351 = vmatprep.mubr.f32.mxu0 0.0
  %5352 = vmatmul.mubr.f32.gmra.mrb[0].mxu0 %v5222
  %v5353 = vpop.f32.mrb[0].mxu0
  %v5354 = vadd.f32 0.0, %v5353
  %v5355 = vpop.f32.mrb[0].mxu0
  %v5356 = vadd.f32 0.0, %v5355
  %5357 = vdwg.mxu0
  %5358 = vmatprep.subr.mxu0 %v5224
  %5359 = vmatpush1.msra.mxu0 %v5223
  %5360 = vmatprep.subr.mxu0 %v5226
  %5361 = vmatpush1.msra.mxu0 %v5225
  %5362 = vmatprep.subr.mxu0 %v5228
  %5363 = vmatpush1.msra.mxu0 %v5227
  %5364 = vmatprep.subr.mxu0 %v5230
  %5365 = vmatpush1.msra.mxu0 %v5229
  %5366 = vmatprep.subr.mxu0 %v5232
  %5367 = vmatpush1.msra.mxu0 %v5231
  %5368 = vmatprep.subr.mxu0 %v5234
  %5369 = vmatpush1.msra.mxu0 %v5233
  %5370 = vmatprep.subr.mxu0 %v5236
  %5371 = vmatpush1.msra.mxu0 %v5235
  %5372 = vmatprep.subr.mxu0 %v5238
  %5373 = vmatpush1.msra.mxu0 %v5237
  %5374 = vmatprep.subr.mxu0 %v5240
  %5375 = vmatpush1.msra.mxu0 %v5239
  %5376 = vmatprep.subr.mxu0 %v5242
  %5377 = vmatpush1.msra.mxu0 %v5241
  %5378 = vmatprep.subr.mxu0 %v5244
  %5379 = vmatpush1.msra.mxu0 %v5243
  %5380 = vmatprep.subr.mxu0 %v5246
  %5381 = vmatpush1.msra.mxu0 %v5245
  %5382 = vmatprep.subr.mxu0 %v5248
  %5383 = vmatpush1.msra.mxu0 %v5247
  %5384 = vmatprep.subr.mxu0 %v5250
  %5385 = vmatpush1.msra.mxu0 %v5249
  %5386 = vmatprep.subr.mxu0 %v5252
  %5387 = vmatpush1.msra.mxu0 %v5251
  %5388 = vmatprep.subr.mxu0 %v5254
  %5389 = vmatpush1.msra.mxu0 %v5253
  %5390 = vmatprep.subr.mxu0 0.0
  %5391 = vmatpush1.msra.mxu0 0.0
  %5392 = vmatprep.subr.mxu0 0.0
  %5393 = vmatpush1.msra.mxu0 0.0
  %5394 = vmatprep.subr.mxu0 0.0
  %5395 = vmatpush1.msra.mxu0 0.0
  %5396 = vmatprep.subr.mxu0 0.0
  %5397 = vmatpush1.msra.mxu0 0.0
  %5398 = vmatprep.subr.mxu0 0.0
  %5399 = vmatpush1.msra.mxu0 0.0
  %5400 = vmatprep.subr.mxu0 0.0
  %5401 = vmatpush1.msra.mxu0 0.0
  %5402 = vmatprep.subr.mxu0 0.0
  %5403 = vmatpush1.msra.mxu0 0.0
  %5404 = vmatprep.subr.mxu0 0.0
  %5405 = vmatpush1.msra.mxu0 0.0
  %5406 = vmatprep.subr.mxu0 0.0
  %5407 = vmatpush1.msra.mxu0 0.0
  %5408 = vmatprep.subr.mxu0 0.0
  %5409 = vmatpush1.msra.mxu0 0.0
  %5410 = vmatprep.subr.mxu0 0.0
  %5411 = vmatpush1.msra.mxu0 0.0
  %5412 = vmatprep.subr.mxu0 0.0
  %5413 = vmatpush1.msra.mxu0 0.0
  %5414 = vmatprep.subr.mxu0 0.0
  %5415 = vmatpush1.msra.mxu0 0.0
  %5416 = vmatprep.subr.mxu0 0.0
  %5417 = vmatpush1.msra.mxu0 0.0
  %5418 = vmatprep.subr.mxu0 0.0
  %5419 = vmatpush1.msra.mxu0 0.0
  %5420 = vmatprep.subr.mxu0 0.0
  %5421 = vmatpush1.msra.mxu0 0.0
  %5422 = vmatprep.mubr.f32.mxu0 0.0
  %5423 = vmatmul.mubr.f32.gmra.mrb[0].mxu0 %v1962
  %v5424 = vpop.f32.mrb[0].mxu0
  %v5425 = vadd.f32 %v5354, %v5424
  %v5426 = vpop.f32.mrb[0].mxu0
  %v5427 = vadd.f32 %v5356, %v5426
  %5428 = vdwg.mxu0
  %v5429 = vld [vmem:[%s19] sm:$0xff]
  %v5430 = vld [vmem:[%s19 + $0x8] sm:$0xff]
  %v5431 = vld [vmem:[%s19 + $0x10] sm:$0xff]
  %v5432 = vld [vmem:[%s19 + $0x18] sm:$0xff]
  %v5433 = vld [vmem:[%s19 + $0x20] sm:$0xff]
  %v5434 = vld [vmem:[%s19 + $0x28] sm:$0xff]
  %v5435 = vld [vmem:[%s19 + $0x30] sm:$0xff]
  %v5436 = vld [vmem:[%s19 + $0x38] sm:$0xff]
  %v5437 = vld [vmem:[%s19 + $0x40] sm:$0xff]
  %v5438 = vld [vmem:[%s19 + $0x48] sm:$0xff]
  %v5439 = vld [vmem:[%s19 + $0x50] sm:$0xff]
  %v5440 = vld [vmem:[%s19 + $0x58] sm:$0xff]
  %v5441 = vld [vmem:[%s19 + $0x60] sm:$0xff]
  %v5442 = vld [vmem:[%s19 + $0x68] sm:$0xff]
  %v5443 = vld [vmem:[%s19 + $0x70] sm:$0xff]
  %v5444 = vld [vmem:[%s19 + $0x78] sm:$0xff]
  %v5445 = vld [vmem:[%s19 + $0x80] sm:$0xff]
  %v5446 = vld [vmem:[%s19 + $0x88] sm:$0xff]
  %v5447 = vld [vmem:[%s19 + $0x90] sm:$0xff]
  %v5448 = vld [vmem:[%s19 + $0x98] sm:$0xff]
  %v5449 = vld [vmem:[%s19 + $0xa0] sm:$0xff]
  %v5450 = vld [vmem:[%s19 + $0xa8] sm:$0xff]
  %v5451 = vld [vmem:[%s19 + $0xb0] sm:$0xff]
  %v5452 = vld [vmem:[%s19 + $0xb8] sm:$0xff]
  %v5453 = vld [vmem:[%s19 + $0xc0] sm:$0xff]
  %v5454 = vld [vmem:[%s19 + $0xc8] sm:$0xff]
  %v5455 = vld [vmem:[%s19 + $0xd0] sm:$0xff]
  %v5456 = vld [vmem:[%s19 + $0xd8] sm:$0xff]
  %v5457 = vld [vmem:[%s19 + $0xe0] sm:$0xff]
  %v5458 = vld [vmem:[%s19 + $0xe8] sm:$0xff]
  %v5459 = vld [vmem:[%s19 + $0xf0] sm:$0xff]
  %v5460 = vld [vmem:[%s19 + $0xf8] sm:$0xff]
  %5461 = vmatprep.subr.mxu0 %v5430
  %5462 = vmatpush1.msra.mxu0 %v5429
  %5463 = vmatprep.subr.mxu0 %v5432
  %5464 = vmatpush1.msra.mxu0 %v5431
  %5465 = vmatprep.subr.mxu0 %v5434
  %5466 = vmatpush1.msra.mxu0 %v5433
  %5467 = vmatprep.subr.mxu0 %v5436
  %5468 = vmatpush1.msra.mxu0 %v5435
  %5469 = vmatprep.subr.mxu0 %v5438
  %5470 = vmatpush1.msra.mxu0 %v5437
  %5471 = vmatprep.subr.mxu0 %v5440
  %5472 = vmatpush1.msra.mxu0 %v5439
  %5473 = vmatprep.subr.mxu0 %v5442
  %5474 = vmatpush1.msra.mxu0 %v5441
  %5475 = vmatprep.subr.mxu0 %v5444
  %5476 = vmatpush1.msra.mxu0 %v5443
  %5477 = vmatprep.subr.mxu0 %v5446
  %5478 = vmatpush1.msra.mxu0 %v5445
  %5479 = vmatprep.subr.mxu0 %v5448
  %5480 = vmatpush1.msra.mxu0 %v5447
  %5481 = vmatprep.subr.mxu0 %v5450
  %5482 = vmatpush1.msra.mxu0 %v5449
  %5483 = vmatprep.subr.mxu0 %v5452
  %5484 = vmatpush1.msra.mxu0 %v5451
  %5485 = vmatprep.subr.mxu0 %v5454
  %5486 = vmatpush1.msra.mxu0 %v5453
  %5487 = vmatprep.subr.mxu0 %v5456
  %5488 = vmatpush1.msra.mxu0 %v5455
  %5489 = vmatprep.subr.mxu0 %v5458
  %5490 = vmatpush1.msra.mxu0 %v5457
  %5491 = vmatprep.subr.mxu0 %v5460
  %5492 = vmatpush1.msra.mxu0 %v5459
  %5493 = vmatprep.subr.mxu0 0.0
  %5494 = vmatpush1.msra.mxu0 0.0
  %5495 = vmatprep.subr.mxu0 0.0
  %5496 = vmatpush1.msra.mxu0 0.0
  %5497 = vmatprep.subr.mxu0 0.0
  %5498 = vmatpush1.msra.mxu0 0.0
  %5499 = vmatprep.subr.mxu0 0.0
  %5500 = vmatpush1.msra.mxu0 0.0
  %5501 = vmatprep.subr.mxu0 0.0
  %5502 = vmatpush1.msra.mxu0 0.0
  %5503 = vmatprep.subr.mxu0 0.0
  %5504 = vmatpush1.msra.mxu0 0.0
  %5505 = vmatprep.subr.mxu0 0.0
  %5506 = vmatpush1.msra.mxu0 0.0
  %5507 = vmatprep.subr.mxu0 0.0
  %5508 = vmatpush1.msra.mxu0 0.0
  %5509 = vmatprep.subr.mxu0 0.0
  %5510 = vmatpush1.msra.mxu0 0.0
  %5511 = vmatprep.subr.mxu0 0.0
  %5512 = vmatpush1.msra.mxu0 0.0
  %5513 = vmatprep.subr.mxu0 0.0
  %5514 = vmatpush1.msra.mxu0 0.0
  %5515 = vmatprep.subr.mxu0 0.0
  %5516 = vmatpush1.msra.mxu0 0.0
  %5517 = vmatprep.subr.mxu0 0.0
  %5518 = vmatpush1.msra.mxu0 0.0
  %5519 = vmatprep.subr.mxu0 0.0
  %5520 = vmatpush1.msra.mxu0 0.0
  %5521 = vmatprep.subr.mxu0 0.0
  %5522 = vmatpush1.msra.mxu0 0.0
  %5523 = vmatprep.subr.mxu0 0.0
  %5524 = vmatpush1.msra.mxu0 0.0
  %5525 = vmatprep.mubr.f32.mxu0 0.0
  %5526 = vmatmul.mubr.f32.gmra.mrb[0].mxu0 %v2042
  %v5527 = vpop.f32.mrb[0].mxu0
  %v5528 = vadd.f32 0.0, %v5527
  %v5529 = vpop.f32.mrb[0].mxu0
  %v5530 = vadd.f32 0.0, %v5529
  %5531 = vdwg.mxu0
  %v5532 = vadd.f32 %v5425, %v5528
  %v5533 = vadd.f32 %v5427, %v5530
  %v5534 = vld [vmem:[%s20] sm:$0xff]
  %v5535 = vld [vmem:[%s20 + $0x8] sm:$0xff]
  %v5536 = vld [vmem:[%s20 + $0x10] sm:$0xff]
  %v5537 = vld [vmem:[%s20 + $0x18] sm:$0xff]
  %v5538 = vld [vmem:[%s20 + $0x20] sm:$0xff]
  %v5539 = vld [vmem:[%s20 + $0x28] sm:$0xff]
  %v5540 = vld [vmem:[%s20 + $0x30] sm:$0xff]
  %v5541 = vld [vmem:[%s20 + $0x38] sm:$0xff]
  %v5542 = vld [vmem:[%s20 + $0x40] sm:$0xff]
  %v5543 = vld [vmem:[%s20 + $0x48] sm:$0xff]
  %v5544 = vld [vmem:[%s20 + $0x50] sm:$0xff]
  %v5545 = vld [vmem:[%s20 + $0x58] sm:$0xff]
  %v5546 = vld [vmem:[%s20 + $0x60] sm:$0xff]
  %v5547 = vld [vmem:[%s20 + $0x68] sm:$0xff]
  %v5548 = vld [vmem:[%s20 + $0x70] sm:$0xff]
  %v5549 = vld [vmem:[%s20 + $0x78] sm:$0xff]
  %v5550 = vld [vmem:[%s20 + $0x80] sm:$0xff]
  %v5551 = vld [vmem:[%s20 + $0x88] sm:$0xff]
  %v5552 = vld [vmem:[%s20 + $0x90] sm:$0xff]
  %v5553 = vld [vmem:[%s20 + $0x98] sm:$0xff]
  %v5554 = vld [vmem:[%s20 + $0xa0] sm:$0xff]
  %v5555 = vld [vmem:[%s20 + $0xa8] sm:$0xff]
  %v5556 = vld [vmem:[%s20 + $0xb0] sm:$0xff]
  %v5557 = vld [vmem:[%s20 + $0xb8] sm:$0xff]
  %v5558 = vld [vmem:[%s20 + $0xc0] sm:$0xff]
  %v5559 = vld [vmem:[%s20 + $0xc8] sm:$0xff]
  %v5560 = vld [vmem:[%s20 + $0xd0] sm:$0xff]
  %v5561 = vld [vmem:[%s20 + $0xd8] sm:$0xff]
  %v5562 = vld [vmem:[%s20 + $0xe0] sm:$0xff]
  %v5563 = vld [vmem:[%s20 + $0xe8] sm:$0xff]
  %v5564 = vld [vmem:[%s20 + $0xf0] sm:$0xff]
  %v5565 = vld [vmem:[%s20 + $0xf8] sm:$0xff]
  %5566 = vmatprep.subr.mxu0 %v5535
  %5567 = vmatpush1.msra.mxu0 %v5534
  %5568 = vmatprep.subr.mxu0 %v5537
  %5569 = vmatpush1.msra.mxu0 %v5536
  %5570 = vmatprep.subr.mxu0 %v5539
  %5571 = vmatpush1.msra.mxu0 %v5538
  %5572 = vmatprep.subr.mxu0 %v5541
  %5573 = vmatpush1.msra.mxu0 %v5540
  %5574 = vmatprep.subr.mxu0 %v5543
  %5575 = vmatpush1.msra.mxu0 %v5542
  %5576 = vmatprep.subr.mxu0 %v5545
  %5577 = vmatpush1.msra.mxu0 %v5544
  %5578 = vmatprep.subr.mxu0 %v5547
  %5579 = vmatpush1.msra.mxu0 %v5546
  %5580 = vmatprep.subr.mxu0 %v5549
  %5581 = vmatpush1.msra.mxu0 %v5548
  %5582 = vmatprep.subr.mxu0 %v5551
  %5583 = vmatpush1.msra.mxu0 %v5550
  %5584 = vmatprep.subr.mxu0 %v5553
  %5585 = vmatpush1.msra.mxu0 %v5552
  %5586 = vmatprep.subr.mxu0 %v5555
  %5587 = vmatpush1.msra.mxu0 %v5554
  %5588 = vmatprep.subr.mxu0 %v5557
  %5589 = vmatpush1.msra.mxu0 %v5556
  %5590 = vmatprep.subr.mxu0 %v5559
  %5591 = vmatpush1.msra.mxu0 %v5558
  %5592 = vmatprep.subr.mxu0 %v5561
  %5593 = vmatpush1.msra.mxu0 %v5560
  %5594 = vmatprep.subr.mxu0 %v5563
  %5595 = vmatpush1.msra.mxu0 %v5562
  %5596 = vmatprep.subr.mxu0 %v5565
  %5597 = vmatpush1.msra.mxu0 %v5564
  %5598 = vmatprep.subr.mxu0 0.0
  %5599 = vmatpush1.msra.mxu0 0.0
  %5600 = vmatprep.subr.mxu0 0.0
  %5601 = vmatpush1.msra.mxu0 0.0
  %5602 = vmatprep.subr.mxu0 0.0
  %5603 = vmatpush1.msra.mxu0 0.0
  %5604 = vmatprep.subr.mxu0 0.0
  %5605 = vmatpush1.msra.mxu0 0.0
  %5606 = vmatprep.subr.mxu0 0.0
  %5607 = vmatpush1.msra.mxu0 0.0
  %5608 = vmatprep.subr.mxu0 0.0
  %5609 = vmatpush1.msra.mxu0 0.0
  %5610 = vmatprep.subr.mxu0 0.0
  %5611 = vmatpush1.msra.mxu0 0.0
  %5612 = vmatprep.subr.mxu0 0.0
  %5613 = vmatpush1.msra.mxu0 0.0
  %5614 = vmatprep.subr.mxu0 0.0
  %5615 = vmatpush1.msra.mxu0 0.0
  %5616 = vmatprep.subr.mxu0 0.0
  %5617 = vmatpush1.msra.mxu0 0.0
  %5618 = vmatprep.subr.mxu0 0.0
  %5619 = vmatpush1.msra.mxu0 0.0
  %5620 = vmatprep.subr.mxu0 0.0
  %5621 = vmatpush1.msra.mxu0 0.0
  %5622 = vmatprep.subr.mxu0 0.0
  %5623 = vmatpush1.msra.mxu0 0.0
  %5624 = vmatprep.subr.mxu0 0.0
  %5625 = vmatpush1.msra.mxu0 0.0
  %5626 = vmatprep.subr.mxu0 0.0
  %5627 = vmatpush1.msra.mxu0 0.0
  %5628 = vmatprep.subr.mxu0 0.0
  %5629 = vmatpush1.msra.mxu0 0.0
  %5630 = vmatprep.mubr.f32.mxu0 0.0
  %5631 = vmatmul.mubr.f32.gmra.mrb[0].mxu0 %v2530
  %v5632 = vpop.f32.mrb[0].mxu0
  %v5633 = vadd.f32 0.0, %v5632
  %v5634 = vpop.f32.mrb[0].mxu0
  %v5635 = vadd.f32 0.0, %v5634
  %5636 = vdwg.mxu0
  %v5637 = vadd.f32 %v5532, %v5633
  %v5638 = vadd.f32 %v5533, %v5635
  %v5639 = vld [vmem:[%s21] sm:$0x3]
  %v5641 = vlaneseq
  %v5642 = vshrl.u32 %v5641, 7
  %v5643 = vsub.s32 0, %v5642
  %v5644 = vrot.slane %v5639, %v5643
  %v5645 = vlaneseq
  %v5646 = vshrl.u32 %v5645, 7
  %v5647 = vsub.s32 1, %v5646
  %v5648 = vrot.slane %v5639, %v5647
  %v5651 = vadd.f32 %v5637, %v5644
  %v5652 = vadd.f32 %v5638, %v5648
  %vm5653 = vcmp.ge.f32.partialorder %v5651, 0.0
  %vm5654 = vcmp.ge.f32.partialorder %v5652, 0.0
  %v5655 = vmul.f32 %v5651, 0.01
  %v5656 = vmul.f32 %v5652, 0.01
  %v5657 = vsel %vm5653, %v5651, %v5655
  %v5658 = vsel %vm5654, %v5652, %v5656
  %v5659 = vld [vmem:[%s22] sm:$0x3]
  %v5661 = vlaneseq
  %v5662 = vshrl.u32 %v5661, 7
  %v5663 = vsub.s32 0, %v5662
  %v5664 = vrot.slane %v5659, %v5663
  %v5665 = vlaneseq
  %v5666 = vshrl.u32 %v5665, 7
  %v5667 = vsub.s32 1, %v5666
  %v5668 = vrot.slane %v5659, %v5667
  %v5671 = vmul.f32 %v5657, %v5664
  %v5672 = vmul.f32 %v5658, %v5668
  %vm5673 = vcmask 1043456
  %v5674 = vsel %vm5673, %v5671, 0.0
  %v5675 = vsel %vm3534, %v5672, 0.0
  %v5676 = vadd.f32 %v5674, %v5675
  %5677 = vadd.xlane.f32.xlu0 %v5676
  %v5678 = vpop.xlane.xlu0 %5677
  %v5679 = vld [vmem:[#allocation2] sm:$0x1]
  %v5681 = vlaneseq
  %v5682 = vshrl.u32 %v5681, 7
  %v5683 = vsub.s32 0, %v5682
  %v5684 = vrot.slane %v5679, %v5683
  %v5686 = vadd.f32 %v5678, %v5684
  %v5687 = vmul.f32 %v5686, 0.33333334
  %vm5688 = vcmask 3072
  %5689 = vst.msk [vmem:[%s24] sm:$0xf] %vm5688, %v5687
  // Predicated region
  $region98: #{final_net_forward.1} parent=0 // pred_check
    _
  $region99: #{final_net_forward.1} parent=0 // pred_check_branch
    %5691 = sbr.rel (0) target = $region101
  $region100: #{final_net_forward.1} parent=0 // pred_region
    _
  $region101: #{final_net_forward.1} parent=0 // pred_fallthru
    _
  // Predicated region
  $region102: #{final_net_forward.1} parent=0 // pred_check
    _
  $region103: #{final_net_forward.1} parent=0 // pred_check_branch
    %5693 = sbr.rel (0) target = $region105
  $region104: #{final_net_forward.1} parent=0 // pred_region
    _
  $region105: #{final_net_forward.1} parent=0 // pred_fallthru
    _

</llo_original>
